<compile_context>
chip_gen: v7x
topology: tpu7x:2x2x1
jax: 0.10.0
libtpu: 0.0.40
codegen_flags: <defaults>
</compile_context>

<pallas_src>
import functools

import jax
import jax.numpy as jnp
from jax.experimental import pallas as pl
from jax.experimental.pallas import tpu as pltpu

_VMEM = pl.BlockSpec(memory_space=pltpu.MemorySpace.VMEM)


def _round_up(x, m):
    return (x + m - 1) // m * m


# ---------------------------------------------------------------------------
# Pallas kernels
# ---------------------------------------------------------------------------
def _mm_bias_act_kernel(a_ref, w_ref, b_ref, o_ref, *, act):
    """o = act(a @ w + b).  a:(tm,K) bf16  w:(K,N) bf16  b:(1,N) f32  o:(tm,N) f32."""
    y = jnp.dot(a_ref[...], w_ref[...], preferred_element_type=jnp.float32)
    y = y + b_ref[...]                      # bias + activation kept in f32
    if act == "leaky_relu":
        y = jnp.where(y > 0, y, 0.01 * y)
    elif act == "sigmoid":
        # exp and the reciprocal both go to the (otherwise idle) EUP slot.
        y = pl.reciprocal(1.0 + jnp.exp(-y), approx=True)
    o_ref[...] = y.astype(o_ref.dtype)


def mm_bias_act(a, w, b, act="none", *, tm=512):
    """act(a @ w + b) with an M-tiled grid.

    * Operands cast to bf16 (f32 accumulation) -> MXU-throughput + DMA-bytes
      win on v6e/v7x, neutral on v5e.
    * Row tiles are balanced: choose the tile count first, then round the tile
      height to the bf16 sublane quantum (16).  Minimizes zero-padded rows
      (e.g. M=1568: 4x400 instead of 4x512).
    * M axis marked "parallel" so the v7x megacore splits row tiles and
      per-step VMEM stays bounded as batch grows.
    """
    m, k = a.shape
    k2, n = w.shape
    assert k == k2
    a = a.astype(jnp.bfloat16)
    w = w.astype(jnp.bfloat16)
    b = b.reshape(1, n).astype(jnp.float32)

    grid_m = max(1, pl.cdiv(m, tm))
    tm_eff = _round_up(pl.cdiv(m, grid_m), 16)   # 16: bf16 sublane packing
    m_pad = grid_m * tm_eff
    if m_pad != m:
        a = jnp.pad(a, ((0, m_pad - m), (0, 0)))

    out = pl.pallas_call(
        functools.partial(_mm_bias_act_kernel, act=act),
        out_shape=jax.ShapeDtypeStruct((m_pad, n), jnp.float32),
        grid=(grid_m,),
        in_specs=[pl.BlockSpec((tm_eff, k), lambda i: (i, 0)),
                  pl.BlockSpec((k, n), lambda i: (0, 0)),
                  pl.BlockSpec((1, n), lambda i: (0, 0))],
        out_specs=pl.BlockSpec((tm_eff, n), lambda i: (i, 0)),
        compiler_params=pltpu.CompilerParams(
            dimension_semantics=("parallel",)),
    )(a, w, b)
    return out[:m] if m_pad != m else out


def _z_head_decode_kernel(x_ref, wzz_ref, bzz_ref, eps_ref, wd_ref, bd_ref,
                          zm_ref, zv_ref, enc_ref, h_ref):
    """Fused z-head + reparameterization + decoder input linear.

    [z_mean | z_log_var] = x @ [wm | wv] + [bm | bv]   (ONE matmul, not two)
    encoded = z_mean + eps * exp(0.5 * z_log_var)
    h = encoded @ wd + bd                              (K=2 matmul, VMEM-resident)
    All z-path math stays in f32.
    """
    nz = wzz_ref.shape[1] // 2
    zz = jnp.dot(x_ref[...], wzz_ref[...],
                 preferred_element_type=jnp.float32) + bzz_ref[...]
    zm = zz[:, :nz]
    zv = zz[:, nz:]
    enc = zm + eps_ref[...] * jnp.exp(zv * 0.5)
    zm_ref[...] = zm
    zv_ref[...] = zv
    enc_ref[...] = enc
    h_ref[...] = jnp.dot(enc, wd_ref[...],
                         preferred_element_type=jnp.float32) + bd_ref[...]


def z_head_decode(feat, wm, bm, wv, bv, eps, wd, bd):
    """Single pallas_call producing (z_mean, z_log_var, encoded, decoder_lin)."""
    b_sz, _ = feat.shape
    nz = wm.shape[1]
    nd = wd.shape[1]
    wzz = jnp.concatenate([wm, wv], axis=1)                     # (K, 2*nz)
    bzz = jnp.concatenate([bm, bv]).reshape(1, 2 * nz)
    out_shape = (jax.ShapeDtypeStruct((b_sz, nz), jnp.float32),
                 jax.ShapeDtypeStruct((b_sz, nz), jnp.float32),
                 jax.ShapeDtypeStruct((b_sz, nz), jnp.float32),
                 jax.ShapeDtypeStruct((b_sz, nd), jnp.float32))
    return pl.pallas_call(
        _z_head_decode_kernel,
        out_shape=out_shape,
        in_specs=[_VMEM] * 6,
        out_specs=(_VMEM,) * 4,
    )(feat.astype(jnp.float32), wzz.astype(jnp.float32),
      bzz.astype(jnp.float32), eps.astype(jnp.float32),
      wd.astype(jnp.float32), bd.reshape(1, nd).astype(jnp.float32))


# ---------------------------------------------------------------------------
# Conv / ConvTranspose built on the Pallas matmul kernel (im2col is glue)
# ---------------------------------------------------------------------------
def conv2d(x, w, b, stride, pad, act):
    """x: (B,H,W,Cin) NHWC.  w: (Cout,Cin,kh,kw) (PyTorch Conv2d layout)."""
    bsz, h, wdt, cin = x.shape
    cout, cin2, kh, kw = w.shape
    assert cin == cin2
    xp = jnp.pad(x, ((0, 0), (pad, pad), (pad, pad), (0, 0)))
    ho = (h + 2 * pad - kh) // stride + 1
    wo = (wdt + 2 * pad - kw) // stride + 1
    cols = []
    for dy in range(kh):
        for dx in range(kw):
            cols.append(xp[:, dy:dy + stride * ho:stride, dx:dx + stride * wo:stride, :])
    patches = jnp.stack(cols, axis=3)                      # (B,Ho,Wo,kh*kw,Cin)
    a = patches.reshape(bsz * ho * wo, kh * kw * cin)
    w2 = jnp.transpose(w, (2, 3, 1, 0)).reshape(kh * kw * cin, cout)
    y = mm_bias_act(a, w2, b, act=act)                     # hot path in Pallas
    return y.reshape(bsz, ho, wo, cout)


def conv_transpose2d(x, w, b, stride, pad, act):
    """x: (B,H,W,Cin) NHWC.  w: (Cin,Cout,kh,kw) (PyTorch ConvTranspose2d layout).

    Zero-dilation + flipped-kernel convolution (exact PyTorch semantics for
    output_padding=0, dilation=1).
    """
    # TODO(synk): phase-decomposed (sub-pixel) conv-transpose would skip the
    # ~3/4 all-zero rows of the dilated im2col for stride=2; kept the simpler
    # zero-dilation form here for guaranteed correctness.
    bsz, h, wdt, cin = x.shape
    cin2, cout, kh, kw = w.shape
    assert cin == cin2
    if stride > 1:
        hd = (h - 1) * stride + 1
        wd = (wdt - 1) * stride + 1
        xd = jnp.zeros((bsz, hd, wd, cin), x.dtype)
        xd = xd.at[:, ::stride, ::stride, :].set(x)
    else:
        xd = x
    w_flip = jnp.flip(w, axis=(2, 3))                      # (Cin,Cout,kh,kw)
    w_conv = jnp.transpose(w_flip, (1, 0, 2, 3))           # (Cout,Cin,kh,kw)
    return conv2d(xd, w_conv, b, stride=1, pad=kh - 1 - pad, act=act)


# ---------------------------------------------------------------------------
# Parameter init (deterministic, synthetic)
# ---------------------------------------------------------------------------
def init_params(key):
    keys = iter(jax.random.split(key, 32))
    p = {}

    def conv_p(cout, cin, k):
        w = jax.random.normal(next(keys), (cout, cin, k, k), jnp.float32) / jnp.sqrt(cin * k * k)
        b = jax.random.normal(next(keys), (cout,), jnp.float32) * 0.01
        return w, b

    def convt_p(cin, cout, k):
        w = jax.random.normal(next(keys), (cin, cout, k, k), jnp.float32) / jnp.sqrt(cin * k * k)
        b = jax.random.normal(next(keys), (cout,), jnp.float32) * 0.01
        return w, b

    def lin_p(din, dout):
        # stored as (din, dout) == PyTorch weight.T (synthetic init, equivalent)
        w = jax.random.normal(next(keys), (din, dout), jnp.float32) / jnp.sqrt(din)
        b = jax.random.normal(next(keys), (dout,), jnp.float32) * 0.01
        return w, b

    p["e1_w"], p["e1_b"] = conv_p(32, 1, 3)
    p["e2_w"], p["e2_b"] = conv_p(64, 32, 3)
    p["e3_w"], p["e3_b"] = conv_p(64, 64, 3)
    p["e4_w"], p["e4_b"] = conv_p(64, 64, 3)
    p["wm"], p["bm"] = lin_p(3136, 2)
    p["wv"], p["bv"] = lin_p(3136, 2)
    p["d_lin_w"], p["d_lin_b"] = lin_p(2, 3136)
    p["d1_w"], p["d1_b"] = convt_p(64, 64, 3)
    p["d2_w"], p["d2_b"] = convt_p(64, 64, 3)
    p["d3_w"], p["d3_b"] = convt_p(64, 32, 3)
    p["d4_w"], p["d4_b"] = convt_p(32, 1, 3)

    # Fold the PyTorch C-major-flatten <-> NHWC-flatten permutation of the
    # 3136-dim axis into the linear weights (one-time, zero numerical cost):
    # this removes the two NCHW<->NHWC transposes around Flatten and
    # Reshape(-1,64,7,7) in the forward pass, so the in-graph reshape is a
    # pure view (matching torch.view semantics).
    perm = jnp.arange(64 * 7 * 7).reshape(64, 7, 7).transpose(1, 2, 0).reshape(-1)
    p["wm"] = p["wm"][perm, :]
    p["wv"] = p["wv"][perm, :]
    p["d_lin_w"] = p["d_lin_w"][:, perm]
    p["d_lin_b"] = p["d_lin_b"][perm]
    return p


# ---------------------------------------------------------------------------
# VAE forward (mirrors VAE.forward; Reshape(-1,64,7,7) semantics preserved)
# ---------------------------------------------------------------------------
def vae_forward(params, x_nchw, eps):
    x = jnp.transpose(x_nchw, (0, 2, 3, 1))                     # NCHW -> NHWC (once)
    # ---- encoder ----
    x = conv2d(x, params["e1_w"], params["e1_b"], 1, 1, "leaky_relu")   # (B,28,28,32)
    x = conv2d(x, params["e2_w"], params["e2_b"], 2, 1, "leaky_relu")   # (B,14,14,64)
    x = conv2d(x, params["e3_w"], params["e3_b"], 2, 1, "leaky_relu")   # (B,7,7,64)
    x = conv2d(x, params["e4_w"], params["e4_b"], 1, 1, "none")         # (B,7,7,64)
    bsz = x.shape[0]
    feat = x.reshape(bsz, -1)       # NHWC flatten; wm/wv rows pre-permuted at init
    # ---- fused z heads + reparameterize + decoder linear (one Pallas call) ----
    z_mean, z_log_var, encoded, h = z_head_decode(
        feat, params["wm"], params["bm"], params["wv"], params["bv"], eps,
        params["d_lin_w"], params["d_lin_b"])
    # ---- decoder ----
    h = h.reshape(bsz, 7, 7, 64)    # Reshape(-1,64,7,7): pure view (cols pre-permuted)
    h = conv_transpose2d(h, params["d1_w"], params["d1_b"], 1, 1, "leaky_relu")  # (B,7,7,64)
    h = conv_transpose2d(h, params["d2_w"], params["d2_b"], 2, 1, "leaky_relu")  # (B,13,13,64)
    h = conv_transpose2d(h, params["d3_w"], params["d3_b"], 2, 0, "leaky_relu")  # (B,27,27,32)
    h = conv_transpose2d(h, params["d4_w"], params["d4_b"], 1, 0, "sigmoid")     # (B,29,29,1)
    h = h[:, :28, :28, :]                                       # Trim
    decoded = jnp.transpose(h, (0, 3, 1, 2))                    # -> NCHW (B,1,28,28)
    return encoded, z_mean, z_log_var, decoded


if __name__ == "__main__":
    B = 2
    key = jax.random.PRNGKey(0)
    kx, keps = jax.random.split(key)
    x = jax.random.normal(kx, (B, 1, 28, 28), jnp.float32)
    # reparameterize's torch.randn(B, 2) equivalent (deterministic here)
    eps = jax.random.normal(keps, (B, 2), jnp.float32)
    params = init_params(jax.random.PRNGKey(42))

    encoded, z_mean, z_log_var, decoded = jax.jit(vae_forward)(params, x, eps)
    jax.block_until_ready((encoded, z_mean, z_log_var, decoded))

    assert encoded.shape == (B, 2)
    assert z_mean.shape == (B, 2)
    assert z_log_var.shape == (B, 2)
    assert decoded.shape == (B, 1, 28, 28)
    assert bool(jnp.all(jnp.isfinite(decoded)))
    assert bool(jnp.all(jnp.isfinite(encoded)))
    print("KERNEL_OK")
</pallas_src>

<mosaic_0001>
module attributes {stable_mosaic.version = 11 : i64} {
  func.func @_mm_bias_act_kernel(%arg0: i32, %arg1: memref<400x9xbf16, #tpu.memory_space<vmem>>, %arg2: memref<9x32xbf16, #tpu.memory_space<vmem>>, %arg3: memref<1x32xf32, #tpu.memory_space<vmem>>, %arg4: memref<400x32xf32, #tpu.memory_space<vmem>>) attributes {dimension_semantics = [#tpu.dimension_semantics<parallel>], iteration_bounds = array<i64: 4>, scalar_prefetch = 0 : i64, scratch_operands = 0 : i64, tpu.core_type = #tpu.core_type<tc>, window_params = [{transform_indices = @transform_0, window_bounds = array<i64: 400, 9>}, {pipeline_mode = #tpu.pipeline_mode<synchronous>, transform_indices = @transform_1, window_bounds = array<i64: 9, 32>}, {pipeline_mode = #tpu.pipeline_mode<synchronous>, transform_indices = @transform_2, window_bounds = array<i64: 1, 32>}, {transform_indices = @transform_3, window_bounds = array<i64: 400, 32>}]} {
    %c0 = arith.constant 0 : index
    %c0_0 = arith.constant 0 : index
    %0 = vector.load %arg1[%c0, %c0_0] : memref<400x9xbf16, #tpu.memory_space<vmem>>, vector<400x9xbf16>
    %c0_1 = arith.constant 0 : index
    %c0_2 = arith.constant 0 : index
    %1 = vector.load %arg2[%c0_1, %c0_2] : memref<9x32xbf16, #tpu.memory_space<vmem>>, vector<9x32xbf16>
    %cst = arith.constant dense<0.000000e+00> : vector<400x32xf32>
    %2 = tpu.matmul %0, %1, %cst {dimension_numbers = #tpu.dot_dimension_numbers<[1], [0], [0], [1], [0, 0, 1, 1], [], []>} : vector<400x9xbf16>, vector<9x32xbf16>, vector<400x32xf32> -> vector<400x32xf32>
    %c0_3 = arith.constant 0 : index
    %c0_4 = arith.constant 0 : index
    %3 = vector.load %arg3[%c0_3, %c0_4] : memref<1x32xf32, #tpu.memory_space<vmem>>, vector<1x32xf32>
    %4 = vector.broadcast %3 : vector<1x32xf32> to vector<400x32xf32>
    %5 = arith.addf %2, %4 : vector<400x32xf32>
    %cst_5 = arith.constant 0.000000e+00 : f32
    %6 = vector.broadcast %cst_5 : f32 to vector<400x32xf32>
    %7 = arith.cmpf ogt, %5, %6 : vector<400x32xf32>
    %cst_6 = arith.constant 0.00999999977 : f32
    %8 = vector.broadcast %cst_6 : f32 to vector<400x32xf32>
    %9 = arith.mulf %8, %5 : vector<400x32xf32>
    %10 = arith.select %7, %5, %9 : vector<400x32xi1>, vector<400x32xf32>
    %c0_7 = arith.constant 0 : index
    %c0_8 = arith.constant 0 : index
    %11 = vector.load %arg4[%c0_7, %c0_8] : memref<400x32xf32, #tpu.memory_space<vmem>>, vector<400x32xf32>
    tpu.vector_store %arg4[%c0_7, %c0_8], %10 {strides = array<i32>} : memref<400x32xf32, #tpu.memory_space<vmem>>, vector<400x32xf32>,
    return
  }
  func.func @transform_0(%arg0: i32) -> (i32, i32) {
    %c0_i32 = arith.constant 0 : i32
    %c0_i32_0 = arith.constant 0 : i32
    return %arg0, %c0_i32 : i32, i32
  }
  func.func @transform_1(%arg0: i32) -> (i32, i32) {
    %c0_i32 = arith.constant 0 : i32
    %c0_i32_0 = arith.constant 0 : i32
    %c0_i32_1 = arith.constant 0 : i32
    return %c0_i32, %c0_i32_0 : i32, i32
  }
  func.func @transform_2(%arg0: i32) -> (i32, i32) {
    %c0_i32 = arith.constant 0 : i32
    %c0_i32_0 = arith.constant 0 : i32
    %c0_i32_1 = arith.constant 0 : i32
    return %c0_i32, %c0_i32_0 : i32, i32
  }
  func.func @transform_3(%arg0: i32) -> (i32, i32) {
    %c0_i32 = arith.constant 0 : i32
    %c0_i32_0 = arith.constant 0 : i32
    return %arg0, %c0_i32 : i32, i32
  }
}

module attributes {stable_mosaic.version = 11 : i64} {
  func.func @_mm_bias_act_kernel(%arg0: i32, %arg1: memref<400x288xbf16, #tpu.memory_space<vmem>>, %arg2: memref<288x64xbf16, #tpu.memory_space<vmem>>, %arg3: memref<1x64xf32, #tpu.memory_space<vmem>>, %arg4: memref<400x64xf32, #tpu.memory_space<vmem>>) attributes {dimension_semantics = [#tpu.dimension_semantics<parallel>], iteration_bounds = array<i64: 1>, scalar_prefetch = 0 : i64, scratch_operands = 0 : i64, tpu.core_type = #tpu.core_type<tc>, window_params = [{transform_indices = @transform_0, window_bounds = array<i64: 400, 288>}, {pipeline_mode = #tpu.pipeline_mode<synchronous>, transform_indices = @transform_1, window_bounds = array<i64: 288, 64>}, {pipeline_mode = #tpu.pipeline_mode<synchronous>, transform_indices = @transform_2, window_bounds = array<i64: 1, 64>}, {transform_indices = @transform_3, window_bounds = array<i64: 400, 64>}]} {
    %c0 = arith.constant 0 : index
    %c0_0 = arith.constant 0 : index
    %0 = vector.load %arg1[%c0, %c0_0] : memref<400x288xbf16, #tpu.memory_space<vmem>>, vector<400x288xbf16>
    %c0_1 = arith.constant 0 : index
    %c0_2 = arith.constant 0 : index
    %1 = vector.load %arg2[%c0_1, %c0_2] : memref<288x64xbf16, #tpu.memory_space<vmem>>, vector<288x64xbf16>
    %cst = arith.constant dense<0.000000e+00> : vector<400x64xf32>
    %2 = tpu.matmul %0, %1, %cst {dimension_numbers = #tpu.dot_dimension_numbers<[1], [0], [0], [1], [0, 0, 1, 1], [], []>} : vector<400x288xbf16>, vector<288x64xbf16>, vector<400x64xf32> -> vector<400x64xf32>
    %c0_3 = arith.constant 0 : index
    %c0_4 = arith.constant 0 : index
    %3 = vector.load %arg3[%c0_3, %c0_4] : memref<1x64xf32, #tpu.memory_space<vmem>>, vector<1x64xf32>
    %4 = vector.broadcast %3 : vector<1x64xf32> to vector<400x64xf32>
    %5 = arith.addf %2, %4 : vector<400x64xf32>
    %cst_5 = arith.constant 0.000000e+00 : f32
    %6 = vector.broadcast %cst_5 : f32 to vector<400x64xf32>
    %7 = arith.cmpf ogt, %5, %6 : vector<400x64xf32>
    %cst_6 = arith.constant 0.00999999977 : f32
    %8 = vector.broadcast %cst_6 : f32 to vector<400x64xf32>
    %9 = arith.mulf %8, %5 : vector<400x64xf32>
    %10 = arith.select %7, %5, %9 : vector<400x64xi1>, vector<400x64xf32>
    %c0_7 = arith.constant 0 : index
    %c0_8 = arith.constant 0 : index
    %11 = vector.load %arg4[%c0_7, %c0_8] : memref<400x64xf32, #tpu.memory_space<vmem>>, vector<400x64xf32>
    tpu.vector_store %arg4[%c0_7, %c0_8], %10 {strides = array<i32>} : memref<400x64xf32, #tpu.memory_space<vmem>>, vector<400x64xf32>,
    return
  }
  func.func @transform_0(%arg0: i32) -> (i32, i32) {
    %c0_i32 = arith.constant 0 : i32
    %c0_i32_0 = arith.constant 0 : i32
    return %arg0, %c0_i32 : i32, i32
  }
  func.func @transform_1(%arg0: i32) -> (i32, i32) {
    %c0_i32 = arith.constant 0 : i32
    %c0_i32_0 = arith.constant 0 : i32
    %c0_i32_1 = arith.constant 0 : i32
    return %c0_i32, %c0_i32_0 : i32, i32
  }
  func.func @transform_2(%arg0: i32) -> (i32, i32) {
    %c0_i32 = arith.constant 0 : i32
    %c0_i32_0 = arith.constant 0 : i32
    %c0_i32_1 = arith.constant 0 : i32
    return %c0_i32, %c0_i32_0 : i32, i32
  }
  func.func @transform_3(%arg0: i32) -> (i32, i32) {
    %c0_i32 = arith.constant 0 : i32
    %c0_i32_0 = arith.constant 0 : i32
    return %arg0, %c0_i32 : i32, i32
  }
}

module attributes {stable_mosaic.version = 11 : i64} {
  func.func @_mm_bias_act_kernel(%arg0: i32, %arg1: memref<112x576xbf16, #tpu.memory_space<vmem>>, %arg2: memref<576x64xbf16, #tpu.memory_space<vmem>>, %arg3: memref<1x64xf32, #tpu.memory_space<vmem>>, %arg4: memref<112x64xf32, #tpu.memory_space<vmem>>) attributes {dimension_semantics = [#tpu.dimension_semantics<parallel>], iteration_bounds = array<i64: 1>, scalar_prefetch = 0 : i64, scratch_operands = 0 : i64, tpu.core_type = #tpu.core_type<tc>, window_params = [{transform_indices = @transform_0, window_bounds = array<i64: 112, 576>}, {pipeline_mode = #tpu.pipeline_mode<synchronous>, transform_indices = @transform_1, window_bounds = array<i64: 576, 64>}, {pipeline_mode = #tpu.pipeline_mode<synchronous>, transform_indices = @transform_2, window_bounds = array<i64: 1, 64>}, {transform_indices = @transform_3, window_bounds = array<i64: 112, 64>}]} {
    %c0 = arith.constant 0 : index
    %c0_0 = arith.constant 0 : index
    %0 = vector.load %arg1[%c0, %c0_0] : memref<112x576xbf16, #tpu.memory_space<vmem>>, vector<112x576xbf16>
    %c0_1 = arith.constant 0 : index
    %c0_2 = arith.constant 0 : index
    %1 = vector.load %arg2[%c0_1, %c0_2] : memref<576x64xbf16, #tpu.memory_space<vmem>>, vector<576x64xbf16>
    %cst = arith.constant dense<0.000000e+00> : vector<112x64xf32>
    %2 = tpu.matmul %0, %1, %cst {dimension_numbers = #tpu.dot_dimension_numbers<[1], [0], [0], [1], [0, 0, 1, 1], [], []>} : vector<112x576xbf16>, vector<576x64xbf16>, vector<112x64xf32> -> vector<112x64xf32>
    %c0_3 = arith.constant 0 : index
    %c0_4 = arith.constant 0 : index
    %3 = vector.load %arg3[%c0_3, %c0_4] : memref<1x64xf32, #tpu.memory_space<vmem>>, vector<1x64xf32>
    %4 = vector.broadcast %3 : vector<1x64xf32> to vector<112x64xf32>
    %5 = arith.addf %2, %4 : vector<112x64xf32>
    %cst_5 = arith.constant 0.000000e+00 : f32
    %6 = vector.broadcast %cst_5 : f32 to vector<112x64xf32>
    %7 = arith.cmpf ogt, %5, %6 : vector<112x64xf32>
    %cst_6 = arith.constant 0.00999999977 : f32
    %8 = vector.broadcast %cst_6 : f32 to vector<112x64xf32>
    %9 = arith.mulf %8, %5 : vector<112x64xf32>
    %10 = arith.select %7, %5, %9 : vector<112x64xi1>, vector<112x64xf32>
    %c0_7 = arith.constant 0 : index
    %c0_8 = arith.constant 0 : index
    %11 = vector.load %arg4[%c0_7, %c0_8] : memref<112x64xf32, #tpu.memory_space<vmem>>, vector<112x64xf32>
    tpu.vector_store %arg4[%c0_7, %c0_8], %10 {strides = array<i32>} : memref<112x64xf32, #tpu.memory_space<vmem>>, vector<112x64xf32>,
    return
  }
  func.func @transform_0(%arg0: i32) -> (i32, i32) {
    %c0_i32 = arith.constant 0 : i32
    %c0_i32_0 = arith.constant 0 : i32
    return %arg0, %c0_i32 : i32, i32
  }
  func.func @transform_1(%arg0: i32) -> (i32, i32) {
    %c0_i32 = arith.constant 0 : i32
    %c0_i32_0 = arith.constant 0 : i32
    %c0_i32_1 = arith.constant 0 : i32
    return %c0_i32, %c0_i32_0 : i32, i32
  }
  func.func @transform_2(%arg0: i32) -> (i32, i32) {
    %c0_i32 = arith.constant 0 : i32
    %c0_i32_0 = arith.constant 0 : i32
    %c0_i32_1 = arith.constant 0 : i32
    return %c0_i32, %c0_i32_0 : i32, i32
  }
  func.func @transform_3(%arg0: i32) -> (i32, i32) {
    %c0_i32 = arith.constant 0 : i32
    %c0_i32_0 = arith.constant 0 : i32
    return %arg0, %c0_i32 : i32, i32
  }
}

module attributes {stable_mosaic.version = 11 : i64} {
  func.func @_mm_bias_act_kernel(%arg0: i32, %arg1: memref<112x576xbf16, #tpu.memory_space<vmem>>, %arg2: memref<576x64xbf16, #tpu.memory_space<vmem>>, %arg3: memref<1x64xf32, #tpu.memory_space<vmem>>, %arg4: memref<112x64xf32, #tpu.memory_space<vmem>>) attributes {dimension_semantics = [#tpu.dimension_semantics<parallel>], iteration_bounds = array<i64: 1>, scalar_prefetch = 0 : i64, scratch_operands = 0 : i64, tpu.core_type = #tpu.core_type<tc>, window_params = [{transform_indices = @transform_0, window_bounds = array<i64: 112, 576>}, {pipeline_mode = #tpu.pipeline_mode<synchronous>, transform_indices = @transform_1, window_bounds = array<i64: 576, 64>}, {pipeline_mode = #tpu.pipeline_mode<synchronous>, transform_indices = @transform_2, window_bounds = array<i64: 1, 64>}, {transform_indices = @transform_3, window_bounds = array<i64: 112, 64>}]} {
    %c0 = arith.constant 0 : index
    %c0_0 = arith.constant 0 : index
    %0 = vector.load %arg1[%c0, %c0_0] : memref<112x576xbf16, #tpu.memory_space<vmem>>, vector<112x576xbf16>
    %c0_1 = arith.constant 0 : index
    %c0_2 = arith.constant 0 : index
    %1 = vector.load %arg2[%c0_1, %c0_2] : memref<576x64xbf16, #tpu.memory_space<vmem>>, vector<576x64xbf16>
    %cst = arith.constant dense<0.000000e+00> : vector<112x64xf32>
    %2 = tpu.matmul %0, %1, %cst {dimension_numbers = #tpu.dot_dimension_numbers<[1], [0], [0], [1], [0, 0, 1, 1], [], []>} : vector<112x576xbf16>, vector<576x64xbf16>, vector<112x64xf32> -> vector<112x64xf32>
    %c0_3 = arith.constant 0 : index
    %c0_4 = arith.constant 0 : index
    %3 = vector.load %arg3[%c0_3, %c0_4] : memref<1x64xf32, #tpu.memory_space<vmem>>, vector<1x64xf32>
    %4 = vector.broadcast %3 : vector<1x64xf32> to vector<112x64xf32>
    %5 = arith.addf %2, %4 : vector<112x64xf32>
    %c0_5 = arith.constant 0 : index
    %c0_6 = arith.constant 0 : index
    %6 = vector.load %arg4[%c0_5, %c0_6] : memref<112x64xf32, #tpu.memory_space<vmem>>, vector<112x64xf32>
    tpu.vector_store %arg4[%c0_5, %c0_6], %5 {strides = array<i32>} : memref<112x64xf32, #tpu.memory_space<vmem>>, vector<112x64xf32>,
    return
  }
  func.func @transform_0(%arg0: i32) -> (i32, i32) {
    %c0_i32 = arith.constant 0 : i32
    %c0_i32_0 = arith.constant 0 : i32
    return %arg0, %c0_i32 : i32, i32
  }
  func.func @transform_1(%arg0: i32) -> (i32, i32) {
    %c0_i32 = arith.constant 0 : i32
    %c0_i32_0 = arith.constant 0 : i32
    %c0_i32_1 = arith.constant 0 : i32
    return %c0_i32, %c0_i32_0 : i32, i32
  }
  func.func @transform_2(%arg0: i32) -> (i32, i32) {
    %c0_i32 = arith.constant 0 : i32
    %c0_i32_0 = arith.constant 0 : i32
    %c0_i32_1 = arith.constant 0 : i32
    return %c0_i32, %c0_i32_0 : i32, i32
  }
  func.func @transform_3(%arg0: i32) -> (i32, i32) {
    %c0_i32 = arith.constant 0 : i32
    %c0_i32_0 = arith.constant 0 : i32
    return %arg0, %c0_i32 : i32, i32
  }
}

module attributes {stable_mosaic.version = 11 : i64} {
  func.func @_z_head_decode_kernel(%arg0: memref<2x3136xf32, #tpu.memory_space<vmem>>, %arg1: memref<3136x4xf32, #tpu.memory_space<vmem>>, %arg2: memref<1x4xf32, #tpu.memory_space<vmem>>, %arg3: memref<2x2xf32, #tpu.memory_space<vmem>>, %arg4: memref<2x3136xf32, #tpu.memory_space<vmem>>, %arg5: memref<1x3136xf32, #tpu.memory_space<vmem>>, %arg6: memref<2x2xf32, #tpu.memory_space<vmem>>, %arg7: memref<2x2xf32, #tpu.memory_space<vmem>>, %arg8: memref<2x2xf32, #tpu.memory_space<vmem>>, %arg9: memref<2x3136xf32, #tpu.memory_space<vmem>>) attributes {dimension_semantics = [], scalar_prefetch = 0 : i64, scratch_operands = 0 : i64, tpu.core_type = #tpu.core_type<tc>} {
    %c0 = arith.constant 0 : index
    %c0_0 = arith.constant 0 : index
    %0 = vector.load %arg0[%c0, %c0_0] : memref<2x3136xf32, #tpu.memory_space<vmem>>, vector<2x3136xf32>
    %c0_1 = arith.constant 0 : index
    %c0_2 = arith.constant 0 : index
    %1 = vector.load %arg1[%c0_1, %c0_2] : memref<3136x4xf32, #tpu.memory_space<vmem>>, vector<3136x4xf32>
    %cst = arith.constant dense<0.000000e+00> : vector<2x4xf32>
    %2 = tpu.matmul %0, %1, %cst {dimension_numbers = #tpu.dot_dimension_numbers<[1], [0], [0], [1], [0, 0, 1, 1], [], []>} : vector<2x3136xf32>, vector<3136x4xf32>, vector<2x4xf32> -> vector<2x4xf32>
    %c0_3 = arith.constant 0 : index
    %c0_4 = arith.constant 0 : index
    %3 = vector.load %arg2[%c0_3, %c0_4] : memref<1x4xf32, #tpu.memory_space<vmem>>, vector<1x4xf32>
    %4 = vector.broadcast %3 : vector<1x4xf32> to vector<2x4xf32>
    %5 = arith.addf %2, %4 : vector<2x4xf32>
    %6 = vector.extract_strided_slice %5 {offsets = [0, 0], sizes = [2, 2], strides = [1, 1]} : vector<2x4xf32> to vector<2x2xf32>
    %7 = vector.extract_strided_slice %5 {offsets = [0, 2], sizes = [2, 2], strides = [1, 1]} : vector<2x4xf32> to vector<2x2xf32>
    %c0_5 = arith.constant 0 : index
    %c0_6 = arith.constant 0 : index
    %8 = vector.load %arg3[%c0_5, %c0_6] : memref<2x2xf32, #tpu.memory_space<vmem>>, vector<2x2xf32>
    %cst_7 = arith.constant 5.000000e-01 : f32
    %9 = vector.broadcast %cst_7 : f32 to vector<2x2xf32>
    %10 = arith.mulf %7, %9 : vector<2x2xf32>
    %11 = math.exp %10 : vector<2x2xf32>
    %12 = arith.mulf %8, %11 : vector<2x2xf32>
    %13 = arith.addf %6, %12 : vector<2x2xf32>
    %c0_8 = arith.constant 0 : index
    %c0_9 = arith.constant 0 : index
    %14 = vector.load %arg6[%c0_8, %c0_9] : memref<2x2xf32, #tpu.memory_space<vmem>>, vector<2x2xf32>
    tpu.vector_store %arg6[%c0_8, %c0_9], %6 {strides = array<i32>} : memref<2x2xf32, #tpu.memory_space<vmem>>, vector<2x2xf32>,
    %c0_10 = arith.constant 0 : index
    %c0_11 = arith.constant 0 : index
    %15 = vector.load %arg7[%c0_10, %c0_11] : memref<2x2xf32, #tpu.memory_space<vmem>>, vector<2x2xf32>
    tpu.vector_store %arg7[%c0_10, %c0_11], %7 {strides = array<i32>} : memref<2x2xf32, #tpu.memory_space<vmem>>, vector<2x2xf32>,
    %c0_12 = arith.constant 0 : index
    %c0_13 = arith.constant 0 : index
    %16 = vector.load %arg8[%c0_12, %c0_13] : memref<2x2xf32, #tpu.memory_space<vmem>>, vector<2x2xf32>
    tpu.vector_store %arg8[%c0_12, %c0_13], %13 {strides = array<i32>} : memref<2x2xf32, #tpu.memory_space<vmem>>, vector<2x2xf32>,
    %c0_14 = arith.constant 0 : index
    %c0_15 = arith.constant 0 : index
    %17 = vector.load %arg4[%c0_14, %c0_15] : memref<2x3136xf32, #tpu.memory_space<vmem>>, vector<2x3136xf32>
    %cst_16 = arith.constant dense<0.000000e+00> : vector<2x3136xf32>
    %18 = tpu.matmul %13, %17, %cst_16 {dimension_numbers = #tpu.dot_dimension_numbers<[1], [0], [0], [1], [0, 0, 1, 1], [], []>} : vector<2x2xf32>, vector<2x3136xf32>, vector<2x3136xf32> -> vector<2x3136xf32>
    %c0_17 = arith.constant 0 : index
    %c0_18 = arith.constant 0 : index
    %19 = vector.load %arg5[%c0_17, %c0_18] : memref<1x3136xf32, #tpu.memory_space<vmem>>, vector<1x3136xf32>
    %20 = vector.broadcast %19 : vector<1x3136xf32> to vector<2x3136xf32>
    %21 = arith.addf %18, %20 : vector<2x3136xf32>
    %c0_19 = arith.constant 0 : index
    %c0_20 = arith.constant 0 : index
    %22 = vector.load %arg9[%c0_19, %c0_20] : memref<2x3136xf32, #tpu.memory_space<vmem>>, vector<2x3136xf32>
    tpu.vector_store %arg9[%c0_19, %c0_20], %21 {strides = array<i32>} : memref<2x3136xf32, #tpu.memory_space<vmem>>, vector<2x3136xf32>,
    return
  }
}

module attributes {stable_mosaic.version = 11 : i64} {
  func.func @_mm_bias_act_kernel(%arg0: i32, %arg1: memref<352x576xbf16, #tpu.memory_space<vmem>>, %arg2: memref<576x64xbf16, #tpu.memory_space<vmem>>, %arg3: memref<1x64xf32, #tpu.memory_space<vmem>>, %arg4: memref<352x64xf32, #tpu.memory_space<vmem>>) attributes {dimension_semantics = [#tpu.dimension_semantics<parallel>], iteration_bounds = array<i64: 1>, scalar_prefetch = 0 : i64, scratch_operands = 0 : i64, tpu.core_type = #tpu.core_type<tc>, window_params = [{transform_indices = @transform_0, window_bounds = array<i64: 352, 576>}, {pipeline_mode = #tpu.pipeline_mode<synchronous>, transform_indices = @transform_1, window_bounds = array<i64: 576, 64>}, {pipeline_mode = #tpu.pipeline_mode<synchronous>, transform_indices = @transform_2, window_bounds = array<i64: 1, 64>}, {transform_indices = @transform_3, window_bounds = array<i64: 352, 64>}]} {
    %c0 = arith.constant 0 : index
    %c0_0 = arith.constant 0 : index
    %0 = vector.load %arg1[%c0, %c0_0] : memref<352x576xbf16, #tpu.memory_space<vmem>>, vector<352x576xbf16>
    %c0_1 = arith.constant 0 : index
    %c0_2 = arith.constant 0 : index
    %1 = vector.load %arg2[%c0_1, %c0_2] : memref<576x64xbf16, #tpu.memory_space<vmem>>, vector<576x64xbf16>
    %cst = arith.constant dense<0.000000e+00> : vector<352x64xf32>
    %2 = tpu.matmul %0, %1, %cst {dimension_numbers = #tpu.dot_dimension_numbers<[1], [0], [0], [1], [0, 0, 1, 1], [], []>} : vector<352x576xbf16>, vector<576x64xbf16>, vector<352x64xf32> -> vector<352x64xf32>
    %c0_3 = arith.constant 0 : index
    %c0_4 = arith.constant 0 : index
    %3 = vector.load %arg3[%c0_3, %c0_4] : memref<1x64xf32, #tpu.memory_space<vmem>>, vector<1x64xf32>
    %4 = vector.broadcast %3 : vector<1x64xf32> to vector<352x64xf32>
    %5 = arith.addf %2, %4 : vector<352x64xf32>
    %cst_5 = arith.constant 0.000000e+00 : f32
    %6 = vector.broadcast %cst_5 : f32 to vector<352x64xf32>
    %7 = arith.cmpf ogt, %5, %6 : vector<352x64xf32>
    %cst_6 = arith.constant 0.00999999977 : f32
    %8 = vector.broadcast %cst_6 : f32 to vector<352x64xf32>
    %9 = arith.mulf %8, %5 : vector<352x64xf32>
    %10 = arith.select %7, %5, %9 : vector<352x64xi1>, vector<352x64xf32>
    %c0_7 = arith.constant 0 : index
    %c0_8 = arith.constant 0 : index
    %11 = vector.load %arg4[%c0_7, %c0_8] : memref<352x64xf32, #tpu.memory_space<vmem>>, vector<352x64xf32>
    tpu.vector_store %arg4[%c0_7, %c0_8], %10 {strides = array<i32>} : memref<352x64xf32, #tpu.memory_space<vmem>>, vector<352x64xf32>,
    return
  }
  func.func @transform_0(%arg0: i32) -> (i32, i32) {
    %c0_i32 = arith.constant 0 : i32
    %c0_i32_0 = arith.constant 0 : i32
    return %arg0, %c0_i32 : i32, i32
  }
  func.func @transform_1(%arg0: i32) -> (i32, i32) {
    %c0_i32 = arith.constant 0 : i32
    %c0_i32_0 = arith.constant 0 : i32
    %c0_i32_1 = arith.constant 0 : i32
    return %c0_i32, %c0_i32_0 : i32, i32
  }
  func.func @transform_2(%arg0: i32) -> (i32, i32) {
    %c0_i32 = arith.constant 0 : i32
    %c0_i32_0 = arith.constant 0 : i32
    %c0_i32_1 = arith.constant 0 : i32
    return %c0_i32, %c0_i32_0 : i32, i32
  }
  func.func @transform_3(%arg0: i32) -> (i32, i32) {
    %c0_i32 = arith.constant 0 : i32
    %c0_i32_0 = arith.constant 0 : i32
    return %arg0, %c0_i32 : i32, i32
  }
}

module attributes {stable_mosaic.version = 11 : i64} {
  func.func @_mm_bias_act_kernel(%arg0: i32, %arg1: memref<496x576xbf16, #tpu.memory_space<vmem>>, %arg2: memref<576x32xbf16, #tpu.memory_space<vmem>>, %arg3: memref<1x32xf32, #tpu.memory_space<vmem>>, %arg4: memref<496x32xf32, #tpu.memory_space<vmem>>) attributes {dimension_semantics = [#tpu.dimension_semantics<parallel>], iteration_bounds = array<i64: 3>, scalar_prefetch = 0 : i64, scratch_operands = 0 : i64, tpu.core_type = #tpu.core_type<tc>, window_params = [{transform_indices = @transform_0, window_bounds = array<i64: 496, 576>}, {pipeline_mode = #tpu.pipeline_mode<synchronous>, transform_indices = @transform_1, window_bounds = array<i64: 576, 32>}, {pipeline_mode = #tpu.pipeline_mode<synchronous>, transform_indices = @transform_2, window_bounds = array<i64: 1, 32>}, {transform_indices = @transform_3, window_bounds = array<i64: 496, 32>}]} {
    %c0 = arith.constant 0 : index
    %c0_0 = arith.constant 0 : index
    %0 = vector.load %arg1[%c0, %c0_0] : memref<496x576xbf16, #tpu.memory_space<vmem>>, vector<496x576xbf16>
    %c0_1 = arith.constant 0 : index
    %c0_2 = arith.constant 0 : index
    %1 = vector.load %arg2[%c0_1, %c0_2] : memref<576x32xbf16, #tpu.memory_space<vmem>>, vector<576x32xbf16>
    %cst = arith.constant dense<0.000000e+00> : vector<496x32xf32>
    %2 = tpu.matmul %0, %1, %cst {dimension_numbers = #tpu.dot_dimension_numbers<[1], [0], [0], [1], [0, 0, 1, 1], [], []>} : vector<496x576xbf16>, vector<576x32xbf16>, vector<496x32xf32> -> vector<496x32xf32>
    %c0_3 = arith.constant 0 : index
    %c0_4 = arith.constant 0 : index
    %3 = vector.load %arg3[%c0_3, %c0_4] : memref<1x32xf32, #tpu.memory_space<vmem>>, vector<1x32xf32>
    %4 = vector.broadcast %3 : vector<1x32xf32> to vector<496x32xf32>
    %5 = arith.addf %2, %4 : vector<496x32xf32>
    %cst_5 = arith.constant 0.000000e+00 : f32
    %6 = vector.broadcast %cst_5 : f32 to vector<496x32xf32>
    %7 = arith.cmpf ogt, %5, %6 : vector<496x32xf32>
    %cst_6 = arith.constant 0.00999999977 : f32
    %8 = vector.broadcast %cst_6 : f32 to vector<496x32xf32>
    %9 = arith.mulf %8, %5 : vector<496x32xf32>
    %10 = arith.select %7, %5, %9 : vector<496x32xi1>, vector<496x32xf32>
    %c0_7 = arith.constant 0 : index
    %c0_8 = arith.constant 0 : index
    %11 = vector.load %arg4[%c0_7, %c0_8] : memref<496x32xf32, #tpu.memory_space<vmem>>, vector<496x32xf32>
    tpu.vector_store %arg4[%c0_7, %c0_8], %10 {strides = array<i32>} : memref<496x32xf32, #tpu.memory_space<vmem>>, vector<496x32xf32>,
    return
  }
  func.func @transform_0(%arg0: i32) -> (i32, i32) {
    %c0_i32 = arith.constant 0 : i32
    %c0_i32_0 = arith.constant 0 : i32
    return %arg0, %c0_i32 : i32, i32
  }
  func.func @transform_1(%arg0: i32) -> (i32, i32) {
    %c0_i32 = arith.constant 0 : i32
    %c0_i32_0 = arith.constant 0 : i32
    %c0_i32_1 = arith.constant 0 : i32
    return %c0_i32, %c0_i32_0 : i32, i32
  }
  func.func @transform_2(%arg0: i32) -> (i32, i32) {
    %c0_i32 = arith.constant 0 : i32
    %c0_i32_0 = arith.constant 0 : i32
    %c0_i32_1 = arith.constant 0 : i32
    return %c0_i32, %c0_i32_0 : i32, i32
  }
  func.func @transform_3(%arg0: i32) -> (i32, i32) {
    %c0_i32 = arith.constant 0 : i32
    %c0_i32_0 = arith.constant 0 : i32
    return %arg0, %c0_i32 : i32, i32
  }
}

module attributes {stable_mosaic.version = 11 : i64} {
  func.func @_mm_bias_act_kernel(%arg0: i32, %arg1: memref<432x288xbf16, #tpu.memory_space<vmem>>, %arg2: memref<288x1xbf16, #tpu.memory_space<vmem>>, %arg3: memref<1x1xf32, #tpu.memory_space<vmem>>, %arg4: memref<432x1xf32, #tpu.memory_space<vmem>>) attributes {dimension_semantics = [#tpu.dimension_semantics<parallel>], iteration_bounds = array<i64: 4>, scalar_prefetch = 0 : i64, scratch_operands = 0 : i64, tpu.core_type = #tpu.core_type<tc>, window_params = [{transform_indices = @transform_0, window_bounds = array<i64: 432, 288>}, {pipeline_mode = #tpu.pipeline_mode<synchronous>, transform_indices = @transform_1, window_bounds = array<i64: 288, 1>}, {pipeline_mode = #tpu.pipeline_mode<synchronous>, transform_indices = @transform_2, window_bounds = array<i64: 1, 1>}, {transform_indices = @transform_3, window_bounds = array<i64: 432, 1>}]} {
    %c0 = arith.constant 0 : index
    %c0_0 = arith.constant 0 : index
    %0 = vector.load %arg1[%c0, %c0_0] : memref<432x288xbf16, #tpu.memory_space<vmem>>, vector<432x288xbf16>
    %c0_1 = arith.constant 0 : index
    %c0_2 = arith.constant 0 : index
    %1 = vector.load %arg2[%c0_1, %c0_2] : memref<288x1xbf16, #tpu.memory_space<vmem>>, vector<288x1xbf16>
    %cst = arith.constant dense<0.000000e+00> : vector<432x1xf32>
    %2 = tpu.matmul %0, %1, %cst {dimension_numbers = #tpu.dot_dimension_numbers<[1], [0], [0], [1], [0, 0, 1, 1], [], []>} : vector<432x288xbf16>, vector<288x1xbf16>, vector<432x1xf32> -> vector<432x1xf32>
    %c0_3 = arith.constant 0 : index
    %c0_4 = arith.constant 0 : index
    %3 = vector.load %arg3[%c0_3, %c0_4] : memref<1x1xf32, #tpu.memory_space<vmem>>, vector<1x1xf32>
    %4 = vector.broadcast %3 : vector<1x1xf32> to vector<432x1xf32>
    %5 = arith.addf %2, %4 : vector<432x1xf32>
    %cst_5 = arith.constant 0.000000e+00 : f32
    %6 = vector.broadcast %cst_5 : f32 to vector<432x1xf32>
    %7 = arith.subf %6, %5 : vector<432x1xf32>
    %8 = math.exp %7 : vector<432x1xf32>
    %cst_6 = arith.constant 1.000000e+00 : f32
    %9 = vector.broadcast %cst_6 : f32 to vector<432x1xf32>
    %10 = arith.addf %9, %8 : vector<432x1xf32>
    %11 = tpu.reciprocal %10 {approx = true} : vector<432x1xf32> -> vector<432x1xf32>
    %c0_7 = arith.constant 0 : index
    %c0_8 = arith.constant 0 : index
    %12 = vector.load %arg4[%c0_7, %c0_8] : memref<432x1xf32, #tpu.memory_space<vmem>>, vector<432x1xf32>
    tpu.vector_store %arg4[%c0_7, %c0_8], %11 {strides = array<i32>} : memref<432x1xf32, #tpu.memory_space<vmem>>, vector<432x1xf32>,
    return
  }
  func.func @transform_0(%arg0: i32) -> (i32, i32) {
    %c0_i32 = arith.constant 0 : i32
    %c0_i32_0 = arith.constant 0 : i32
    return %arg0, %c0_i32 : i32, i32
  }
  func.func @transform_1(%arg0: i32) -> (i32, i32) {
    %c0_i32 = arith.constant 0 : i32
    %c0_i32_0 = arith.constant 0 : i32
    %c0_i32_1 = arith.constant 0 : i32
    return %c0_i32, %c0_i32_0 : i32, i32
  }
  func.func @transform_2(%arg0: i32) -> (i32, i32) {
    %c0_i32 = arith.constant 0 : i32
    %c0_i32_0 = arith.constant 0 : i32
    %c0_i32_1 = arith.constant 0 : i32
    return %c0_i32, %c0_i32_0 : i32, i32
  }
  func.func @transform_3(%arg0: i32) -> (i32, i32) {
    %c0_i32 = arith.constant 0 : i32
    %c0_i32_0 = arith.constant 0 : i32
    return %arg0, %c0_i32 : i32, i32
  }
}

</mosaic_0001>

<llo_original>
// kernel: vae_forward.9
$region0: #{vae_forward.9}
  #allocation0 [shape = 'u32[]', space=smem, size = 0x4, offset = 0x4, fixed_abs, tag = 'smem constant byte address 0x4 - core index']
  #allocation1 [shape = 'u32[144,128]{1,0:T(1,128)}', space=vmem, size = 0x12000, scoped, tag = 'internal scratch']
  %s0 = inlined_call_operand.vmem [shape: bf16[1600,9], index: 0, kind: input, shape index: {}]
  %s1 = inlined_call_operand.vmem [shape: bf16[9,32], index: 1, kind: input, shape index: {}]
  %s2 = inlined_call_operand.hbm [shape: f32[1,32], index: 2, kind: input, shape index: {}]
  %s3 = inlined_call_operand.vmem [shape: f32[1600,32], index: 3, kind: output, shape index: {}]
  %s4 = sld [smem:[#allocation0]]
  $region49: #{vae_forward.9} parent=0
    _
  %s6 = ssub.s32 1, %s4
  %s7 = scalar_select 0, %s6, %s4
  $region1: #{vae_forward.9} parent=0
    #allocation2 [shape = 'u8[512]{0}', space=vmem, size = 0x400, scoped, tag = 'input window, operand 2, single buffered']
    #allocation3 [shape = 's32[2]{0}', space=sflag, size = 0x8, scoped, tag = 'scoped memory for vae_forward.9']
    %8 = vsyncpa [#allocation3], 0
    loop: start=0, step=1, limit=6
    $region2: #{vae_forward.9} parent=1 // loop_pre_header
      _
    $region3: #{vae_forward.9} parent=1 // loop_header
      %s10 = sphi 0, %s14
      %p11 = scmp.ge.s32.totalorder %s10, 6
      %s20 = sphi 0, %s22
      %s23 = sphi 0, %s20
      %s24 = sphi 0, %s23
      %s40 = sphi 0, %s24
      %s44 = sphi 0, %s44
      %s46 = sphi 0, %s44
      %s47 = sphi 0, %s46
      %s61 = sphi 0, %s47
      %s65 = sphi 0, %s65
      %s67 = sphi 0, %s65
      %s68 = sphi 0, %s67
      %s82 = sphi 0, %s68
      %s88 = sphi 0, %s90
      %s91 = sphi 0, %s88
      %s92 = sphi 0, %s91
      %s108 = sphi 0, %s92
    $region4: #{vae_forward.9} parent=1 // loop_header_branch
      %13 = sbr.rel (%p11) target = $region8
    $region5: #{vae_forward.9} parent=1 // loop_body
      %s15 = ssub.s32 %s10, 1
      %s16 = ssub.s32 %s10, 2
      %s17 = sadd.s32 %s10, 1
      %s18 = ssub.s32 %s10, %s17
      %p19 = scmp.eq.s32.totalorder %s18, 0
      %s21 = sadd.s32 %s20, 1
      %s22 = scalar_select %p19, %s20, %s21
      %p25 = pneg %p19
      %p26 = scmp.eq.s32.totalorder %s10, 3
      %p27 = por %p25, %p26
      %p28 = scmp.ne.s32.totalorder %s20, %s23
      %p29 = scmp.eq.s32.totalorder %s10, 0
      %p30 = por %p28, %p29
      %p31 = scmp.ne.s32.totalorder %s20, %s23
      %p32 = scmp.eq.s32.totalorder %s15, 3
      %p33 = por %p31, %p32
      %p34 = scmp.ne.s32.totalorder %s23, %s24
      %p35 = scmp.eq.s32.totalorder %s15, 0
      %p36 = por %p34, %p35
      %p37 = scmp.ne.s32.totalorder %s23, %s24
      %p38 = scmp.eq.s32.totalorder %s16, 3
      %p39 = por %p37, %p38
      %p41 = scmp.ne.s32.totalorder %s24, %s40
      %p42 = scmp.eq.s32.totalorder %s16, 0
      %p43 = por %p41, %p42
      %s45 = sadd.s32 %s44, 1
      %p48 = scmp.eq.s32.totalorder %s10, 3
      %p49 = scmp.ne.s32.totalorder %s44, %s46
      %p50 = scmp.eq.s32.totalorder %s10, 0
      %p51 = por %p49, %p50
      %p52 = scmp.ne.s32.totalorder %s44, %s46
      %p53 = scmp.eq.s32.totalorder %s15, 3
      %p54 = por %p52, %p53
      %p55 = scmp.ne.s32.totalorder %s46, %s47
      %p56 = scmp.eq.s32.totalorder %s15, 0
      %p57 = por %p55, %p56
      %p58 = scmp.ne.s32.totalorder %s46, %s47
      %p59 = scmp.eq.s32.totalorder %s16, 3
      %p60 = por %p58, %p59
      %p62 = scmp.ne.s32.totalorder %s47, %s61
      %p63 = scmp.eq.s32.totalorder %s16, 0
      %p64 = por %p62, %p63
      %s66 = sadd.s32 %s65, 1
      %p69 = scmp.eq.s32.totalorder %s10, 3
      %p70 = scmp.ne.s32.totalorder %s65, %s67
      %p71 = scmp.eq.s32.totalorder %s10, 0
      %p72 = por %p70, %p71
      %p73 = scmp.ne.s32.totalorder %s65, %s67
      %p74 = scmp.eq.s32.totalorder %s15, 3
      %p75 = por %p73, %p74
      %p76 = scmp.ne.s32.totalorder %s67, %s68
      %p77 = scmp.eq.s32.totalorder %s15, 0
      %p78 = por %p76, %p77
      %p79 = scmp.ne.s32.totalorder %s67, %s68
      %p80 = scmp.eq.s32.totalorder %s16, 3
      %p81 = por %p79, %p80
      %p83 = scmp.ne.s32.totalorder %s68, %s82
      %p84 = scmp.eq.s32.totalorder %s16, 0
      %p85 = por %p83, %p84
      %s86 = ssub.s32 %s10, %s17
      %p87 = scmp.eq.s32.totalorder %s86, 0
      %s89 = sadd.s32 %s88, 1
      %s90 = scalar_select %p87, %s88, %s89
      %p93 = pneg %p87
      %p94 = scmp.eq.s32.totalorder %s10, 3
      %p95 = por %p93, %p94
      %p96 = scmp.ne.s32.totalorder %s88, %s91
      %p97 = scmp.eq.s32.totalorder %s10, 0
      %p98 = por %p96, %p97
      %p99 = scmp.ne.s32.totalorder %s88, %s91
      %p100 = scmp.eq.s32.totalorder %s15, 3
      %p101 = por %p99, %p100
      %p102 = scmp.ne.s32.totalorder %s91, %s92
      %p103 = scmp.eq.s32.totalorder %s15, 0
      %p104 = por %p102, %p103
      %p105 = scmp.ne.s32.totalorder %s91, %s92
      %p106 = scmp.eq.s32.totalorder %s16, 3
      %p107 = por %p105, %p106
      %p109 = scmp.ne.s32.totalorder %s92, %s108
      %p110 = scmp.eq.s32.totalorder %s16, 0
      %p111 = por %p109, %p110
      %p112 = scmp.le.s32.totalorder 1, %s10
      %p113 = scmp.lt.s32.totalorder %s10, 5
      %p114 = pnand %p112, %p113
      %p115 = pneg %p114
      // Predicated region
      $region9: #{vae_forward.9} parent=5 // pred_check
        _
      $region10: #{vae_forward.9} parent=5 // pred_check_branch
        %117 = sbr.rel (%p114) target = $region12
      $region11: #{vae_forward.9} parent=5 // pred_region
        %s118 = ssub.s32 %s10, 1
        // Predicated region
        $region13: #{vae_forward.9} parent=11 // pred_check
          %p119 = pneg %p57
        $region14: #{vae_forward.9} parent=11 // pred_check_branch
          %121 = sbr.rel (%p119) target = $region16
        $region15: #{vae_forward.9} parent=11 // pred_region
          _
        $region16: #{vae_forward.9} parent=11 // pred_fallthru
          _
        // Predicated region
        $region17: #{vae_forward.9} parent=11 // pred_check
          %p122 = pneg %p78
        $region18: #{vae_forward.9} parent=11 // pred_check_branch
          %124 = sbr.rel (%p122) target = $region20
        $region19: #{vae_forward.9} parent=11 // pred_region
          %s126 = ssub.s32 16, 16
          %127 = vsyncadd [#allocation3], %s126
          %s129 = sshll.u32 [#allocation2], 4
          %s130 = int_to_ptr.vmem [resolvable:$true] %s129
          %132 = dma.hbm_to_vmem [thread:$0]  %s2, 16, %s130, [#allocation3]
        $region20: #{vae_forward.9} parent=11 // pred_fallthru
          _
      $region12: #{vae_forward.9} parent=5 // pred_fallthru
        _
      %p133 = scmp.lt.s32.totalorder %s10, 4
      // Predicated region
      $region21: #{vae_forward.9} parent=5 // pred_check
        %p134 = pneg %p133
      $region22: #{vae_forward.9} parent=5 // pred_check_branch
        %136 = sbr.rel (%p134) target = $region24
      $region23: #{vae_forward.9} parent=5 // pred_region
        // Predicated region
        $region25: #{vae_forward.9} parent=23 // pred_check
          %p137 = pneg %p30
        $region26: #{vae_forward.9} parent=23 // pred_check_branch
          %139 = sbr.rel (%p137) target = $region28
        $region27: #{vae_forward.9} parent=23 // pred_region
          %s140 = smul.u32 50, %s10
          %p141 = scmp.lt.s32.totalorder %s140, 199
          %s142 = scalar_select %p141, %s140, 199
          %s143 = smul.addr %s142, 4
          %s144 = scalar_lea.vmem %s0, %s143
          %s145 = smul.u32 50, %s10
        $region28: #{vae_forward.9} parent=23 // pred_fallthru
          _
      $region24: #{vae_forward.9} parent=5 // pred_fallthru
        _
      %p146 = scmp.le.s32.totalorder 1, %s10
      %p147 = scmp.lt.s32.totalorder %s10, 5
      %p148 = pnand %p146, %p147
      %p149 = pneg %p148
      // Predicated region
      $region29: #{vae_forward.9} parent=5 // pred_check
        _
      $region30: #{vae_forward.9} parent=5 // pred_check_branch
        %151 = sbr.rel (%p148) target = $region32
      $region31: #{vae_forward.9} parent=5 // pred_region
        %s152 = ssub.s32 %s10, 1
        // Predicated region
        $region33: #{vae_forward.9} parent=31 // pred_check
          %p153 = pneg %p78
        $region34: #{vae_forward.9} parent=31 // pred_check_branch
          %155 = sbr.rel (%p153) target = $region36
        $region35: #{vae_forward.9} parent=31 // pred_region
          %156 = dma.done [#allocation3], 16
        $region36: #{vae_forward.9} parent=31 // pred_fallthru
          _
        %s157 = smul.u32 50, %s15
        %p158 = scmp.lt.s32.totalorder %s157, 199
        %s159 = scalar_select %p158, %s157, 199
        %s160 = smul.addr %s159, 4
        %s161 = scalar_lea.vmem %s0, %s160
        %p162 = pneg %p36
        %p163 = pneg %p33
        %p164 = pneg %p57
        %p165 = pneg %p54
        %p166 = pneg %p78
        %p167 = pneg %p75
        %p168 = pneg %p104
        %p169 = pneg %p101
        %s170 = smul.u32 50, %s15
        %p171 = scmp.lt.s32.totalorder %s170, 199
        %s172 = scalar_select %p171, %s170, 199
        %s173 = smul.addr %s172, 8
        %s174 = scalar_lea.vmem %s3, %s173
        %s175 = smul.u32 50, %s15
        %p176 = scmp.lt.s32.totalorder %s175, 199
        %s177 = scalar_select %p176, %s175, 199
        %s178 = smul.addr %s177, 4
        %s179 = scalar_lea.vmem %s0, %s178
        %s180 = smul.u32 50, %s15
        %s181 = smul.u32 50, %s15
        %p182 = scmp.lt.s32.totalorder %s181, 199
        %s183 = scalar_select %p182, %s181, 199
        %s184 = smul.addr %s183, 8
        %s185 = scalar_lea.vmem %s3, %s184
        %s186 = smul.u32 50, %s15
        %v188 = vld [vmem:[%s179] sm:$0xf]
        %v189 = vld [vmem:[%s179 + $0x4] sm:$0xf]
        %v190 = vld [vmem:[%s179 + $0x8] sm:$0xf]
        %v191 = vld [vmem:[%s179 + $0xc] sm:$0xf]
        %v192 = vld [vmem:[%s179 + $0x10] sm:$0xf]
        %v193 = vld [vmem:[%s179 + $0x14] sm:$0xf]
        %v194 = vld [vmem:[%s179 + $0x18] sm:$0xf]
        %v195 = vld [vmem:[%s179 + $0x1c] sm:$0xf]
        %v196 = vld [vmem:[%s179 + $0x20] sm:$0xf]
        %v197 = vld [vmem:[%s179 + $0x24] sm:$0xf]
        %v198 = vld [vmem:[%s179 + $0x28] sm:$0xf]
        %v199 = vld [vmem:[%s179 + $0x2c] sm:$0xf]
        %v200 = vld [vmem:[%s179 + $0x30] sm:$0xf]
        %v201 = vld [vmem:[%s179 + $0x34] sm:$0xf]
        %v202 = vld [vmem:[%s179 + $0x38] sm:$0xf]
        %v203 = vld [vmem:[%s179 + $0x3c] sm:$0xf]
        %v204 = vld [vmem:[%s179 + $0x40] sm:$0xf]
        %v205 = vld [vmem:[%s179 + $0x44] sm:$0xf]
        %v206 = vld [vmem:[%s179 + $0x48] sm:$0xf]
        %v207 = vld [vmem:[%s179 + $0x4c] sm:$0xf]
        %v208 = vld [vmem:[%s179 + $0x50] sm:$0xf]
        %v209 = vld [vmem:[%s179 + $0x54] sm:$0xf]
        %v210 = vld [vmem:[%s179 + $0x58] sm:$0xf]
        %v211 = vld [vmem:[%s179 + $0x5c] sm:$0xf]
        %v212 = vld [vmem:[%s179 + $0x60] sm:$0xf]
        %v213 = vld [vmem:[%s179 + $0x64] sm:$0xf]
        %v214 = vld [vmem:[%s179 + $0x68] sm:$0xf]
        %v215 = vld [vmem:[%s179 + $0x6c] sm:$0xf]
        %v216 = vld [vmem:[%s179 + $0x70] sm:$0xf]
        %v217 = vld [vmem:[%s179 + $0x74] sm:$0xf]
        %v218 = vld [vmem:[%s179 + $0x78] sm:$0xf]
        %v219 = vld [vmem:[%s179 + $0x7c] sm:$0xf]
        %v220 = vld [vmem:[%s179 + $0x80] sm:$0xf]
        %v221 = vld [vmem:[%s179 + $0x84] sm:$0xf]
        %v222 = vld [vmem:[%s179 + $0x88] sm:$0xf]
        %v223 = vld [vmem:[%s179 + $0x8c] sm:$0xf]
        %v224 = vld [vmem:[%s179 + $0x90] sm:$0xf]
        %v225 = vld [vmem:[%s179 + $0x94] sm:$0xf]
        %v226 = vld [vmem:[%s179 + $0x98] sm:$0xf]
        %v227 = vld [vmem:[%s179 + $0x9c] sm:$0xf]
        %v228 = vld [vmem:[%s179 + $0xa0] sm:$0xf]
        %v229 = vld [vmem:[%s179 + $0xa4] sm:$0xf]
        %v230 = vld [vmem:[%s179 + $0xa8] sm:$0xf]
        %v231 = vld [vmem:[%s179 + $0xac] sm:$0xf]
        %v232 = vld [vmem:[%s179 + $0xb0] sm:$0xf]
        %v233 = vld [vmem:[%s179 + $0xb4] sm:$0xf]
        %v234 = vld [vmem:[%s179 + $0xb8] sm:$0xf]
        %v235 = vld [vmem:[%s179 + $0xbc] sm:$0xf]
        %v236 = vld [vmem:[%s179 + $0xc0] sm:$0xf]
        %v237 = vld [vmem:[%s179 + $0xc4] sm:$0xf]
        %v238 = vld [vmem:[%s1] sm:$0xf]
        %v239 = vld [vmem:[%s1 + $0x4] sm:$0x1]
        %v240 = vld [vmem:[#allocation2] sm:$0x1]
        %v242 = vlaneseq
        %v243 = vshrl.u32 %v242, 7
        %v244 = vsub.s32 0, %v243
        %v245 = vrot.slane %v240, %v244
        %v297 = vunpack.c.l.b16 %v188
        %v298 = vunpack.c.l.b16 %v189
        %v299 = vunpack.c.l.b16 %v190
        %v300 = vunpack.c.l.b16 %v191
        %v301 = vunpack.c.l.b16 %v192
        %v302 = vunpack.c.l.b16 %v193
        %v303 = vunpack.c.l.b16 %v194
        %v304 = vunpack.c.l.b16 %v195
        %v305 = vunpack.c.l.b16 %v196
        %v306 = vunpack.c.l.b16 %v197
        %v307 = vunpack.c.l.b16 %v198
        %v308 = vunpack.c.l.b16 %v199
        %v309 = vunpack.c.l.b16 %v200
        %v310 = vunpack.c.l.b16 %v201
        %v311 = vunpack.c.l.b16 %v202
        %v312 = vunpack.c.l.b16 %v203
        %v313 = vunpack.c.l.b16 %v204
        %v314 = vunpack.c.l.b16 %v205
        %v315 = vunpack.c.l.b16 %v206
        %v316 = vunpack.c.l.b16 %v207
        %v317 = vunpack.c.l.b16 %v208
        %v318 = vunpack.c.l.b16 %v209
        %v319 = vunpack.c.l.b16 %v210
        %v320 = vunpack.c.l.b16 %v211
        %v321 = vunpack.c.l.b16 %v212
        %v322 = vunpack.c.l.b16 %v213
        %v323 = vunpack.c.l.b16 %v214
        %v324 = vunpack.c.l.b16 %v215
        %v325 = vunpack.c.l.b16 %v216
        %v326 = vunpack.c.l.b16 %v217
        %v327 = vunpack.c.l.b16 %v218
        %v328 = vunpack.c.l.b16 %v219
        %v329 = vunpack.c.l.b16 %v220
        %v330 = vunpack.c.l.b16 %v221
        %v331 = vunpack.c.l.b16 %v222
        %v332 = vunpack.c.l.b16 %v223
        %v333 = vunpack.c.l.b16 %v224
        %v334 = vunpack.c.l.b16 %v225
        %v335 = vunpack.c.l.b16 %v226
        %v336 = vunpack.c.l.b16 %v227
        %v337 = vunpack.c.l.b16 %v228
        %v338 = vunpack.c.l.b16 %v229
        %v339 = vunpack.c.l.b16 %v230
        %v340 = vunpack.c.l.b16 %v231
        %v341 = vunpack.c.l.b16 %v232
        %v342 = vunpack.c.l.b16 %v233
        %v343 = vunpack.c.l.b16 %v234
        %v344 = vunpack.c.l.b16 %v235
        %v345 = vunpack.c.l.b16 %v236
        %v346 = vunpack.c.l.b16 %v237
        %v347 = vpack.c.b16 %v298, %v297
        %v348 = vpack.c.b16 %v300, %v299
        %v349 = vpack.c.b16 %v302, %v301
        %v350 = vpack.c.b16 %v304, %v303
        %v351 = vpack.c.b16 %v306, %v305
        %v352 = vpack.c.b16 %v308, %v307
        %v353 = vpack.c.b16 %v310, %v309
        %v354 = vpack.c.b16 %v312, %v311
        %v355 = vpack.c.b16 %v314, %v313
        %v356 = vpack.c.b16 %v316, %v315
        %v357 = vpack.c.b16 %v318, %v317
        %v358 = vpack.c.b16 %v320, %v319
        %v359 = vpack.c.b16 %v322, %v321
        %v360 = vpack.c.b16 %v324, %v323
        %v361 = vpack.c.b16 %v326, %v325
        %v362 = vpack.c.b16 %v328, %v327
        %v363 = vpack.c.b16 %v330, %v329
        %v364 = vpack.c.b16 %v332, %v331
        %v365 = vpack.c.b16 %v334, %v333
        %v366 = vpack.c.b16 %v336, %v335
        %v367 = vpack.c.b16 %v338, %v337
        %v368 = vpack.c.b16 %v340, %v339
        %v369 = vpack.c.b16 %v342, %v341
        %v370 = vpack.c.b16 %v344, %v343
        %v371 = vpack.c.b16 %v346, %v345
        %v374 = vunpack.c.l.b16 %v238
        %v375 = vunpack.c.l.b16 %v239
        %v376 = vpack.c.b16 %v375, %v374
        %vm377 = vcmask 72704
        %v379 = vsel %vm377, %v347, 0
        %v382 = vsel %vm377, %v348, 0
        %v385 = vsel %vm377, %v349, 0
        %v388 = vsel %vm377, %v350, 0
        %v391 = vsel %vm377, %v351, 0
        %v394 = vsel %vm377, %v352, 0
        %v397 = vsel %vm377, %v353, 0
        %v400 = vsel %vm377, %v354, 0
        %v403 = vsel %vm377, %v355, 0
        %v406 = vsel %vm377, %v356, 0
        %v409 = vsel %vm377, %v357, 0
        %v412 = vsel %vm377, %v358, 0
        %v415 = vsel %vm377, %v359, 0
        %v418 = vsel %vm377, %v360, 0
        %v421 = vsel %vm377, %v361, 0
        %v424 = vsel %vm377, %v362, 0
        %v427 = vsel %vm377, %v363, 0
        %v430 = vsel %vm377, %v364, 0
        %v433 = vsel %vm377, %v365, 0
        %v436 = vsel %vm377, %v366, 0
        %v439 = vsel %vm377, %v367, 0
        %v442 = vsel %vm377, %v368, 0
        %v445 = vsel %vm377, %v369, 0
        %v448 = vsel %vm377, %v370, 0
        %v451 = vsel %vm377, %v371, 0
        %vm453 = vcmask 1043456
        %vm454 = vcmask 1044480
        %v455 = vsel %vm453, 4294967295, 65535
        %v456 = vsel %vm454, %v455, 0
        %v458 = vand.u32 %v376, %v456
        %460 = vmatprep.subr.bf16.mxu0 0
        %461 = vmatpush1.bf16.msra.mxu0 %v458
        %462 = vmatprep.subr.bf16.mxu0 0
        %463 = vmatpush1.bf16.msra.mxu0 0
        %464 = vmatprep.subr.bf16.mxu0 0
        %465 = vmatpush1.bf16.msra.mxu0 0
        %466 = vmatprep.subr.bf16.mxu0 0
        %467 = vmatpush1.bf16.msra.mxu0 0
        %468 = vmatprep.subr.bf16.mxu0 0
        %469 = vmatpush1.bf16.msra.mxu0 0
        %470 = vmatprep.subr.bf16.mxu0 0
        %471 = vmatpush1.bf16.msra.mxu0 0
        %472 = vmatprep.subr.bf16.mxu0 0
        %473 = vmatpush1.bf16.msra.mxu0 0
        %474 = vmatprep.subr.bf16.mxu0 0
        %475 = vmatpush1.bf16.msra.mxu0 0
        %476 = vmatprep.subr.bf16.mxu0 0
        %477 = vmatpush1.bf16.msra.mxu0 0
        %478 = vmatprep.subr.bf16.mxu0 0
        %479 = vmatpush1.bf16.msra.mxu0 0
        %480 = vmatprep.subr.bf16.mxu0 0
        %481 = vmatpush1.bf16.msra.mxu0 0
        %482 = vmatprep.subr.bf16.mxu0 0
        %483 = vmatpush1.bf16.msra.mxu0 0
        %484 = vmatprep.subr.bf16.mxu0 0
        %485 = vmatpush1.bf16.msra.mxu0 0
        %486 = vmatprep.subr.bf16.mxu0 0
        %487 = vmatpush1.bf16.msra.mxu0 0
        %488 = vmatprep.subr.bf16.mxu0 0
        %489 = vmatpush1.bf16.msra.mxu0 0
        %490 = vmatprep.subr.bf16.mxu0 0
        %491 = vmatpush1.bf16.msra.mxu0 0
        %492 = vmatprep.mubr.bf16.mxu0 0
        %493 = vmatmul.mubr.bf16.gmra.mrb[0].mxu0 %v379
        %v494 = vpop.f32.mrb[0].mxu0
        %v495 = vadd.f32 %v245, %v494
        %v496 = vpop.f32.mrb[0].mxu0
        %v497 = vpop.f32.mrb[0].mxu0
        %v498 = vadd.f32 %v245, %v497
        %v499 = vpop.f32.mrb[0].mxu0
        %500 = vmatprep.mubr.bf16.mxu0 0
        %501 = vmatmul.mubr.bf16.gmra.mrb[0].mxu0 %v382
        %v502 = vpop.f32.mrb[0].mxu0
        %v503 = vadd.f32 %v245, %v502
        %v504 = vpop.f32.mrb[0].mxu0
        %v505 = vpop.f32.mrb[0].mxu0
        %v506 = vadd.f32 %v245, %v505
        %v507 = vpop.f32.mrb[0].mxu0
        %508 = vmatprep.mubr.bf16.mxu0 0
        %509 = vmatmul.mubr.bf16.gmra.mrb[0].mxu0 %v385
        %v510 = vpop.f32.mrb[0].mxu0
        %v511 = vadd.f32 %v245, %v510
        %v512 = vpop.f32.mrb[0].mxu0
        %v513 = vpop.f32.mrb[0].mxu0
        %v514 = vadd.f32 %v245, %v513
        %v515 = vpop.f32.mrb[0].mxu0
        %516 = vmatprep.mubr.bf16.mxu0 0
        %517 = vmatmul.mubr.bf16.gmra.mrb[0].mxu0 %v388
        %v518 = vpop.f32.mrb[0].mxu0
        %v519 = vadd.f32 %v245, %v518
        %v520 = vpop.f32.mrb[0].mxu0
        %v521 = vpop.f32.mrb[0].mxu0
        %v522 = vadd.f32 %v245, %v521
        %v523 = vpop.f32.mrb[0].mxu0
        %524 = vmatprep.mubr.bf16.mxu0 0
        %525 = vmatmul.mubr.bf16.gmra.mrb[0].mxu0 %v391
        %v526 = vpop.f32.mrb[0].mxu0
        %v527 = vadd.f32 %v245, %v526
        %v528 = vpop.f32.mrb[0].mxu0
        %v529 = vpop.f32.mrb[0].mxu0
        %v530 = vadd.f32 %v245, %v529
        %v531 = vpop.f32.mrb[0].mxu0
        %532 = vmatprep.mubr.bf16.mxu0 0
        %533 = vmatmul.mubr.bf16.gmra.mrb[0].mxu0 %v394
        %v534 = vpop.f32.mrb[0].mxu0
        %v535 = vadd.f32 %v245, %v534
        %v536 = vpop.f32.mrb[0].mxu0
        %v537 = vpop.f32.mrb[0].mxu0
        %v538 = vadd.f32 %v245, %v537
        %v539 = vpop.f32.mrb[0].mxu0
        %540 = vmatprep.mubr.bf16.mxu0 0
        %541 = vmatmul.mubr.bf16.gmra.mrb[0].mxu0 %v397
        %v542 = vpop.f32.mrb[0].mxu0
        %v543 = vadd.f32 %v245, %v542
        %v544 = vpop.f32.mrb[0].mxu0
        %v545 = vpop.f32.mrb[0].mxu0
        %v546 = vadd.f32 %v245, %v545
        %v547 = vpop.f32.mrb[0].mxu0
        %548 = vmatprep.mubr.bf16.mxu0 0
        %549 = vmatmul.mubr.bf16.gmra.mrb[0].mxu0 %v400
        %v550 = vpop.f32.mrb[0].mxu0
        %v551 = vadd.f32 %v245, %v550
        %v552 = vpop.f32.mrb[0].mxu0
        %v553 = vpop.f32.mrb[0].mxu0
        %v554 = vadd.f32 %v245, %v553
        %v555 = vpop.f32.mrb[0].mxu0
        %556 = vmatprep.mubr.bf16.mxu0 0
        %557 = vmatmul.mubr.bf16.gmra.mrb[0].mxu0 %v403
        %v558 = vpop.f32.mrb[0].mxu0
        %v559 = vadd.f32 %v245, %v558
        %v560 = vpop.f32.mrb[0].mxu0
        %v561 = vpop.f32.mrb[0].mxu0
        %v562 = vadd.f32 %v245, %v561
        %v563 = vpop.f32.mrb[0].mxu0
        %564 = vmatprep.mubr.bf16.mxu0 0
        %565 = vmatmul.mubr.bf16.gmra.mrb[0].mxu0 %v406
        %v566 = vpop.f32.mrb[0].mxu0
        %v567 = vadd.f32 %v245, %v566
        %v568 = vpop.f32.mrb[0].mxu0
        %v569 = vpop.f32.mrb[0].mxu0
        %v570 = vadd.f32 %v245, %v569
        %v571 = vpop.f32.mrb[0].mxu0
        %572 = vmatprep.mubr.bf16.mxu0 0
        %573 = vmatmul.mubr.bf16.gmra.mrb[0].mxu0 %v409
        %v574 = vpop.f32.mrb[0].mxu0
        %v575 = vadd.f32 %v245, %v574
        %v576 = vpop.f32.mrb[0].mxu0
        %v577 = vpop.f32.mrb[0].mxu0
        %v578 = vadd.f32 %v245, %v577
        %v579 = vpop.f32.mrb[0].mxu0
        %580 = vmatprep.mubr.bf16.mxu0 0
        %581 = vmatmul.mubr.bf16.gmra.mrb[0].mxu0 %v412
        %v582 = vpop.f32.mrb[0].mxu0
        %v583 = vadd.f32 %v245, %v582
        %v584 = vpop.f32.mrb[0].mxu0
        %v585 = vpop.f32.mrb[0].mxu0
        %v586 = vadd.f32 %v245, %v585
        %v587 = vpop.f32.mrb[0].mxu0
        %588 = vmatprep.mubr.bf16.mxu0 0
        %589 = vmatmul.mubr.bf16.gmra.mrb[0].mxu0 %v415
        %v590 = vpop.f32.mrb[0].mxu0
        %v591 = vadd.f32 %v245, %v590
        %v592 = vpop.f32.mrb[0].mxu0
        %v593 = vpop.f32.mrb[0].mxu0
        %v594 = vadd.f32 %v245, %v593
        %v595 = vpop.f32.mrb[0].mxu0
        %596 = vmatprep.mubr.bf16.mxu0 0
        %597 = vmatmul.mubr.bf16.gmra.mrb[0].mxu0 %v418
        %v598 = vpop.f32.mrb[0].mxu0
        %v599 = vadd.f32 %v245, %v598
        %v600 = vpop.f32.mrb[0].mxu0
        %v601 = vpop.f32.mrb[0].mxu0
        %v602 = vadd.f32 %v245, %v601
        %v603 = vpop.f32.mrb[0].mxu0
        %604 = vmatprep.mubr.bf16.mxu0 0
        %605 = vmatmul.mubr.bf16.gmra.mrb[0].mxu0 %v421
        %v606 = vpop.f32.mrb[0].mxu0
        %v607 = vadd.f32 %v245, %v606
        %v608 = vpop.f32.mrb[0].mxu0
        %v609 = vpop.f32.mrb[0].mxu0
        %v610 = vadd.f32 %v245, %v609
        %v611 = vpop.f32.mrb[0].mxu0
        %612 = vmatprep.mubr.bf16.mxu0 0
        %613 = vmatmul.mubr.bf16.gmra.mrb[0].mxu0 %v424
        %v614 = vpop.f32.mrb[0].mxu0
        %v615 = vadd.f32 %v245, %v614
        %v616 = vpop.f32.mrb[0].mxu0
        %v617 = vpop.f32.mrb[0].mxu0
        %v618 = vadd.f32 %v245, %v617
        %v619 = vpop.f32.mrb[0].mxu0
        %620 = vmatprep.mubr.bf16.mxu0 0
        %621 = vmatmul.mubr.bf16.gmra.mrb[0].mxu0 %v427
        %v622 = vpop.f32.mrb[0].mxu0
        %v623 = vadd.f32 %v245, %v622
        %v624 = vpop.f32.mrb[0].mxu0
        %v625 = vpop.f32.mrb[0].mxu0
        %v626 = vadd.f32 %v245, %v625
        %v627 = vpop.f32.mrb[0].mxu0
        %628 = vmatprep.mubr.bf16.mxu0 0
        %629 = vmatmul.mubr.bf16.gmra.mrb[0].mxu0 %v430
        %v630 = vpop.f32.mrb[0].mxu0
        %v631 = vadd.f32 %v245, %v630
        %v632 = vpop.f32.mrb[0].mxu0
        %v633 = vpop.f32.mrb[0].mxu0
        %v634 = vadd.f32 %v245, %v633
        %v635 = vpop.f32.mrb[0].mxu0
        %636 = vmatprep.mubr.bf16.mxu0 0
        %637 = vmatmul.mubr.bf16.gmra.mrb[0].mxu0 %v433
        %v638 = vpop.f32.mrb[0].mxu0
        %v639 = vadd.f32 %v245, %v638
        %v640 = vpop.f32.mrb[0].mxu0
        %v641 = vpop.f32.mrb[0].mxu0
        %v642 = vadd.f32 %v245, %v641
        %v643 = vpop.f32.mrb[0].mxu0
        %644 = vmatprep.mubr.bf16.mxu0 0
        %645 = vmatmul.mubr.bf16.gmra.mrb[0].mxu0 %v436
        %v646 = vpop.f32.mrb[0].mxu0
        %v647 = vadd.f32 %v245, %v646
        %v648 = vpop.f32.mrb[0].mxu0
        %v649 = vpop.f32.mrb[0].mxu0
        %v650 = vadd.f32 %v245, %v649
        %v651 = vpop.f32.mrb[0].mxu0
        %652 = vmatprep.mubr.bf16.mxu0 0
        %653 = vmatmul.mubr.bf16.gmra.mrb[0].mxu0 %v439
        %v654 = vpop.f32.mrb[0].mxu0
        %v655 = vadd.f32 %v245, %v654
        %v656 = vpop.f32.mrb[0].mxu0
        %v657 = vpop.f32.mrb[0].mxu0
        %v658 = vadd.f32 %v245, %v657
        %v659 = vpop.f32.mrb[0].mxu0
        %660 = vmatprep.mubr.bf16.mxu0 0
        %661 = vmatmul.mubr.bf16.gmra.mrb[0].mxu0 %v442
        %v662 = vpop.f32.mrb[0].mxu0
        %v663 = vadd.f32 %v245, %v662
        %v664 = vpop.f32.mrb[0].mxu0
        %v665 = vpop.f32.mrb[0].mxu0
        %v666 = vadd.f32 %v245, %v665
        %v667 = vpop.f32.mrb[0].mxu0
        %668 = vmatprep.mubr.bf16.mxu0 0
        %669 = vmatmul.mubr.bf16.gmra.mrb[0].mxu0 %v445
        %v670 = vpop.f32.mrb[0].mxu0
        %v671 = vadd.f32 %v245, %v670
        %v672 = vpop.f32.mrb[0].mxu0
        %v673 = vpop.f32.mrb[0].mxu0
        %v674 = vadd.f32 %v245, %v673
        %v675 = vpop.f32.mrb[0].mxu0
        %676 = vmatprep.mubr.bf16.mxu0 0
        %677 = vmatmul.mubr.bf16.gmra.mrb[0].mxu0 %v448
        %v678 = vpop.f32.mrb[0].mxu0
        %v679 = vadd.f32 %v245, %v678
        %v680 = vpop.f32.mrb[0].mxu0
        %v681 = vpop.f32.mrb[0].mxu0
        %v682 = vadd.f32 %v245, %v681
        %v683 = vpop.f32.mrb[0].mxu0
        %684 = vmatprep.mubr.bf16.mxu0 0
        %685 = vmatmul.mubr.bf16.gmra.mrb[0].mxu0 %v451
        %v686 = vpop.f32.mrb[0].mxu0
        %v687 = vadd.f32 %v245, %v686
        %v688 = vpop.f32.mrb[0].mxu0
        %v689 = vpop.f32.mrb[0].mxu0
        %v690 = vadd.f32 %v245, %v689
        %v691 = vpop.f32.mrb[0].mxu0
        %692 = vdwg.mxu0
        %vm693 = vcmp.gt.f32.partialorder %v495, 0.0
        %vm694 = vcmp.gt.f32.partialorder %v498, 0.0
        %vm695 = vcmp.gt.f32.partialorder %v503, 0.0
        %vm696 = vcmp.gt.f32.partialorder %v506, 0.0
        %vm697 = vcmp.gt.f32.partialorder %v511, 0.0
        %vm698 = vcmp.gt.f32.partialorder %v514, 0.0
        %vm699 = vcmp.gt.f32.partialorder %v519, 0.0
        %vm700 = vcmp.gt.f32.partialorder %v522, 0.0
        %vm701 = vcmp.gt.f32.partialorder %v527, 0.0
        %vm702 = vcmp.gt.f32.partialorder %v530, 0.0
        %vm703 = vcmp.gt.f32.partialorder %v535, 0.0
        %vm704 = vcmp.gt.f32.partialorder %v538, 0.0
        %vm705 = vcmp.gt.f32.partialorder %v543, 0.0
        %vm706 = vcmp.gt.f32.partialorder %v546, 0.0
        %vm707 = vcmp.gt.f32.partialorder %v551, 0.0
        %vm708 = vcmp.gt.f32.partialorder %v554, 0.0
        %vm709 = vcmp.gt.f32.partialorder %v559, 0.0
        %vm710 = vcmp.gt.f32.partialorder %v562, 0.0
        %vm711 = vcmp.gt.f32.partialorder %v567, 0.0
        %vm712 = vcmp.gt.f32.partialorder %v570, 0.0
        %vm713 = vcmp.gt.f32.partialorder %v575, 0.0
        %vm714 = vcmp.gt.f32.partialorder %v578, 0.0
        %vm715 = vcmp.gt.f32.partialorder %v583, 0.0
        %vm716 = vcmp.gt.f32.partialorder %v586, 0.0
        %vm717 = vcmp.gt.f32.partialorder %v591, 0.0
        %vm718 = vcmp.gt.f32.partialorder %v594, 0.0
        %vm719 = vcmp.gt.f32.partialorder %v599, 0.0
        %vm720 = vcmp.gt.f32.partialorder %v602, 0.0
        %vm721 = vcmp.gt.f32.partialorder %v607, 0.0
        %vm722 = vcmp.gt.f32.partialorder %v610, 0.0
        %vm723 = vcmp.gt.f32.partialorder %v615, 0.0
        %vm724 = vcmp.gt.f32.partialorder %v618, 0.0
        %vm725 = vcmp.gt.f32.partialorder %v623, 0.0
        %vm726 = vcmp.gt.f32.partialorder %v626, 0.0
        %vm727 = vcmp.gt.f32.partialorder %v631, 0.0
        %vm728 = vcmp.gt.f32.partialorder %v634, 0.0
        %vm729 = vcmp.gt.f32.partialorder %v639, 0.0
        %vm730 = vcmp.gt.f32.partialorder %v642, 0.0
        %vm731 = vcmp.gt.f32.partialorder %v647, 0.0
        %vm732 = vcmp.gt.f32.partialorder %v650, 0.0
        %vm733 = vcmp.gt.f32.partialorder %v655, 0.0
        %vm734 = vcmp.gt.f32.partialorder %v658, 0.0
        %vm735 = vcmp.gt.f32.partialorder %v663, 0.0
        %vm736 = vcmp.gt.f32.partialorder %v666, 0.0
        %vm737 = vcmp.gt.f32.partialorder %v671, 0.0
        %vm738 = vcmp.gt.f32.partialorder %v674, 0.0
        %vm739 = vcmp.gt.f32.partialorder %v679, 0.0
        %vm740 = vcmp.gt.f32.partialorder %v682, 0.0
        %vm741 = vcmp.gt.f32.partialorder %v687, 0.0
        %vm742 = vcmp.gt.f32.partialorder %v690, 0.0
        %v743 = vmul.f32 %v495, 0.01
        %v744 = vmul.f32 %v498, 0.01
        %v745 = vmul.f32 %v503, 0.01
        %v746 = vmul.f32 %v506, 0.01
        %v747 = vmul.f32 %v511, 0.01
        %v748 = vmul.f32 %v514, 0.01
        %v749 = vmul.f32 %v519, 0.01
        %v750 = vmul.f32 %v522, 0.01
        %v751 = vmul.f32 %v527, 0.01
        %v752 = vmul.f32 %v530, 0.01
        %v753 = vmul.f32 %v535, 0.01
        %v754 = vmul.f32 %v538, 0.01
        %v755 = vmul.f32 %v543, 0.01
        %v756 = vmul.f32 %v546, 0.01
        %v757 = vmul.f32 %v551, 0.01
        %v758 = vmul.f32 %v554, 0.01
        %v759 = vmul.f32 %v559, 0.01
        %v760 = vmul.f32 %v562, 0.01
        %v761 = vmul.f32 %v567, 0.01
        %v762 = vmul.f32 %v570, 0.01
        %v763 = vmul.f32 %v575, 0.01
        %v764 = vmul.f32 %v578, 0.01
        %v765 = vmul.f32 %v583, 0.01
        %v766 = vmul.f32 %v586, 0.01
        %v767 = vmul.f32 %v591, 0.01
        %v768 = vmul.f32 %v594, 0.01
        %v769 = vmul.f32 %v599, 0.01
        %v770 = vmul.f32 %v602, 0.01
        %v771 = vmul.f32 %v607, 0.01
        %v772 = vmul.f32 %v610, 0.01
        %v773 = vmul.f32 %v615, 0.01
        %v774 = vmul.f32 %v618, 0.01
        %v775 = vmul.f32 %v623, 0.01
        %v776 = vmul.f32 %v626, 0.01
        %v777 = vmul.f32 %v631, 0.01
        %v778 = vmul.f32 %v634, 0.01
        %v779 = vmul.f32 %v639, 0.01
        %v780 = vmul.f32 %v642, 0.01
        %v781 = vmul.f32 %v647, 0.01
        %v782 = vmul.f32 %v650, 0.01
        %v783 = vmul.f32 %v655, 0.01
        %v784 = vmul.f32 %v658, 0.01
        %v785 = vmul.f32 %v663, 0.01
        %v786 = vmul.f32 %v666, 0.01
        %v787 = vmul.f32 %v671, 0.01
        %v788 = vmul.f32 %v674, 0.01
        %v789 = vmul.f32 %v679, 0.01
        %v790 = vmul.f32 %v682, 0.01
        %v791 = vmul.f32 %v687, 0.01
        %v792 = vmul.f32 %v690, 0.01
        %v793 = vsel %vm693, %v495, %v743
        %v794 = vsel %vm694, %v498, %v744
        %v795 = vsel %vm695, %v503, %v745
        %v796 = vsel %vm696, %v506, %v746
        %v797 = vsel %vm697, %v511, %v747
        %v798 = vsel %vm698, %v514, %v748
        %v799 = vsel %vm699, %v519, %v749
        %v800 = vsel %vm700, %v522, %v750
        %v801 = vsel %vm701, %v527, %v751
        %v802 = vsel %vm702, %v530, %v752
        %v803 = vsel %vm703, %v535, %v753
        %v804 = vsel %vm704, %v538, %v754
        %v805 = vsel %vm705, %v543, %v755
        %v806 = vsel %vm706, %v546, %v756
        %v807 = vsel %vm707, %v551, %v757
        %v808 = vsel %vm708, %v554, %v758
        %v809 = vsel %vm709, %v559, %v759
        %v810 = vsel %vm710, %v562, %v760
        %v811 = vsel %vm711, %v567, %v761
        %v812 = vsel %vm712, %v570, %v762
        %v813 = vsel %vm713, %v575, %v763
        %v814 = vsel %vm714, %v578, %v764
        %v815 = vsel %vm715, %v583, %v765
        %v816 = vsel %vm716, %v586, %v766
        %v817 = vsel %vm717, %v591, %v767
        %v818 = vsel %vm718, %v594, %v768
        %v819 = vsel %vm719, %v599, %v769
        %v820 = vsel %vm720, %v602, %v770
        %v821 = vsel %vm721, %v607, %v771
        %v822 = vsel %vm722, %v610, %v772
        %v823 = vsel %vm723, %v615, %v773
        %v824 = vsel %vm724, %v618, %v774
        %v825 = vsel %vm725, %v623, %v775
        %v826 = vsel %vm726, %v626, %v776
        %v827 = vsel %vm727, %v631, %v777
        %v828 = vsel %vm728, %v634, %v778
        %v829 = vsel %vm729, %v639, %v779
        %v830 = vsel %vm730, %v642, %v780
        %v831 = vsel %vm731, %v647, %v781
        %v832 = vsel %vm732, %v650, %v782
        %v833 = vsel %vm733, %v655, %v783
        %v834 = vsel %vm734, %v658, %v784
        %v835 = vsel %vm735, %v663, %v785
        %v836 = vsel %vm736, %v666, %v786
        %v837 = vsel %vm737, %v671, %v787
        %v838 = vsel %vm738, %v674, %v788
        %v839 = vsel %vm739, %v679, %v789
        %v840 = vsel %vm740, %v682, %v790
        %v841 = vsel %vm741, %v687, %v791
        %v842 = vsel %vm742, %v690, %v792
        %vm843 = vcmask 261120
        %844 = vst.msk [vmem:[%s185] sm:$0xff] %vm843, %v793
        %845 = vst.msk [vmem:[%s185 + $0x8] sm:$0xff] %vm843, %v794
        %846 = vst.msk [vmem:[%s185 + $0x10] sm:$0xff] %vm843, %v795
        %847 = vst.msk [vmem:[%s185 + $0x18] sm:$0xff] %vm843, %v796
        %848 = vst.msk [vmem:[%s185 + $0x20] sm:$0xff] %vm843, %v797
        %849 = vst.msk [vmem:[%s185 + $0x28] sm:$0xff] %vm843, %v798
        %850 = vst.msk [vmem:[%s185 + $0x30] sm:$0xff] %vm843, %v799
        %851 = vst.msk [vmem:[%s185 + $0x38] sm:$0xff] %vm843, %v800
        %852 = vst.msk [vmem:[%s185 + $0x40] sm:$0xff] %vm843, %v801
        %853 = vst.msk [vmem:[%s185 + $0x48] sm:$0xff] %vm843, %v802
        %854 = vst.msk [vmem:[%s185 + $0x50] sm:$0xff] %vm843, %v803
        %855 = vst.msk [vmem:[%s185 + $0x58] sm:$0xff] %vm843, %v804
        %856 = vst.msk [vmem:[%s185 + $0x60] sm:$0xff] %vm843, %v805
        %857 = vst.msk [vmem:[%s185 + $0x68] sm:$0xff] %vm843, %v806
        %858 = vst.msk [vmem:[%s185 + $0x70] sm:$0xff] %vm843, %v807
        %859 = vst.msk [vmem:[%s185 + $0x78] sm:$0xff] %vm843, %v808
        %860 = vst.msk [vmem:[%s185 + $0x80] sm:$0xff] %vm843, %v809
        %861 = vst.msk [vmem:[%s185 + $0x88] sm:$0xff] %vm843, %v810
        %862 = vst.msk [vmem:[%s185 + $0x90] sm:$0xff] %vm843, %v811
        %863 = vst.msk [vmem:[%s185 + $0x98] sm:$0xff] %vm843, %v812
        %864 = vst.msk [vmem:[%s185 + $0xa0] sm:$0xff] %vm843, %v813
        %865 = vst.msk [vmem:[%s185 + $0xa8] sm:$0xff] %vm843, %v814
        %866 = vst.msk [vmem:[%s185 + $0xb0] sm:$0xff] %vm843, %v815
        %867 = vst.msk [vmem:[%s185 + $0xb8] sm:$0xff] %vm843, %v816
        %868 = vst.msk [vmem:[%s185 + $0xc0] sm:$0xff] %vm843, %v817
        %869 = vst.msk [vmem:[%s185 + $0xc8] sm:$0xff] %vm843, %v818
        %870 = vst.msk [vmem:[%s185 + $0xd0] sm:$0xff] %vm843, %v819
        %871 = vst.msk [vmem:[%s185 + $0xd8] sm:$0xff] %vm843, %v820
        %872 = vst.msk [vmem:[%s185 + $0xe0] sm:$0xff] %vm843, %v821
        %873 = vst.msk [vmem:[%s185 + $0xe8] sm:$0xff] %vm843, %v822
        %874 = vst.msk [vmem:[%s185 + $0xf0] sm:$0xff] %vm843, %v823
        %875 = vst.msk [vmem:[%s185 + $0xf8] sm:$0xff] %vm843, %v824
        %876 = vst.msk [vmem:[%s185 + $0x100] sm:$0xff] %vm843, %v825
        %877 = vst.msk [vmem:[%s185 + $0x108] sm:$0xff] %vm843, %v826
        %878 = vst.msk [vmem:[%s185 + $0x110] sm:$0xff] %vm843, %v827
        %879 = vst.msk [vmem:[%s185 + $0x118] sm:$0xff] %vm843, %v828
        %880 = vst.msk [vmem:[%s185 + $0x120] sm:$0xff] %vm843, %v829
        %881 = vst.msk [vmem:[%s185 + $0x128] sm:$0xff] %vm843, %v830
        %882 = vst.msk [vmem:[%s185 + $0x130] sm:$0xff] %vm843, %v831
        %883 = vst.msk [vmem:[%s185 + $0x138] sm:$0xff] %vm843, %v832
        %884 = vst.msk [vmem:[%s185 + $0x140] sm:$0xff] %vm843, %v833
        %885 = vst.msk [vmem:[%s185 + $0x148] sm:$0xff] %vm843, %v834
        %886 = vst.msk [vmem:[%s185 + $0x150] sm:$0xff] %vm843, %v835
        %887 = vst.msk [vmem:[%s185 + $0x158] sm:$0xff] %vm843, %v836
        %888 = vst.msk [vmem:[%s185 + $0x160] sm:$0xff] %vm843, %v837
        %889 = vst.msk [vmem:[%s185 + $0x168] sm:$0xff] %vm843, %v838
        %890 = vst.msk [vmem:[%s185 + $0x170] sm:$0xff] %vm843, %v839
        %891 = vst.msk [vmem:[%s185 + $0x178] sm:$0xff] %vm843, %v840
        %892 = vst.msk [vmem:[%s185 + $0x180] sm:$0xff] %vm843, %v841
        %893 = vst.msk [vmem:[%s185 + $0x188] sm:$0xff] %vm843, %v842
        %s894 = smul.u32 50, %s15
        %p895 = scmp.lt.s32.totalorder %s894, 199
        %s896 = scalar_select %p895, %s894, 199
        %s897 = smul.addr %s896, 8
        %s898 = scalar_lea.vmem %s3, %s897
        // Predicated region
        $region37: #{vae_forward.9} parent=31 // pred_check
          %p899 = pneg %p101
        $region38: #{vae_forward.9} parent=31 // pred_check_branch
          %901 = sbr.rel (%p899) target = $region40
        $region39: #{vae_forward.9} parent=31 // pred_region
          %s902 = smul.u32 50, %s15
        $region40: #{vae_forward.9} parent=31 // pred_fallthru
          _
      $region32: #{vae_forward.9} parent=5 // pred_fallthru
        _
      %p903 = scmp.le.s32.totalorder 2, %s10
      // Predicated region
      $region41: #{vae_forward.9} parent=5 // pred_check
        %p904 = pneg %p903
      $region42: #{vae_forward.9} parent=5 // pred_check_branch
        %906 = sbr.rel (%p904) target = $region44
      $region43: #{vae_forward.9} parent=5 // pred_region
        %s907 = ssub.s32 %s10, 2
        // Predicated region
        $region45: #{vae_forward.9} parent=43 // pred_check
          %p908 = pneg %p107
        $region46: #{vae_forward.9} parent=43 // pred_check_branch
          %910 = sbr.rel (%p908) target = $region48
        $region47: #{vae_forward.9} parent=43 // pred_region
          %s911 = smul.u32 50, %s16
          %p912 = scmp.lt.s32.totalorder %s911, 199
          %s913 = scalar_select %p912, %s911, 199
          %s914 = smul.addr %s913, 8
          %s915 = scalar_lea.vmem %s3, %s914
        $region48: #{vae_forward.9} parent=43 // pred_fallthru
          _
      $region44: #{vae_forward.9} parent=5 // pred_fallthru
        _
    $region6: #{vae_forward.9} parent=1 // loop_footer
      %s14 = sadd.s32 1, %s10
    $region7: #{vae_forward.9} parent=1 // loop_footer_branch
      %9 = sbr.rel target = $region3
    $region8: #{vae_forward.9} parent=1 // loop_exit
      _
    %916 = vsyncpa [#allocation3], 1
    %s917 = scalar_lea.sflag [#allocation3], 1
    %918 = vsyncpa %s917, 1

// kernel: vae_forward.10
$region0: #{vae_forward.10}
  #allocation0 [shape = 'u32[]', space=smem, size = 0x4, offset = 0x4, fixed_abs, tag = 'smem constant byte address 0x4 - core index']
  #allocation1 [shape = 'u32[144,128]{1,0:T(1,128)}', space=vmem, size = 0x12000, scoped, tag = 'internal scratch']
  %s0 = inlined_call_operand.vmem [shape: bf16[400,288], index: 0, kind: input, shape index: {}]
  %s1 = inlined_call_operand.vmem [shape: bf16[288,64], index: 1, kind: input, shape index: {}]
  %s2 = inlined_call_operand.vmem [shape: f32[1,64], index: 2, kind: input, shape index: {}]
  %s3 = inlined_call_operand.vmem [shape: f32[400,64], index: 3, kind: output, shape index: {}]
  %s4 = sld [smem:[#allocation0]]
  $region22: #{vae_forward.10} parent=0
    _
  %s6 = ssub.s32 1, %s4
  %s7 = scalar_select 0, %s6, %s4
  // Predicated region
  $region2: #{vae_forward.10} parent=0 // pred_check
    _
  $region3: #{vae_forward.10} parent=0 // pred_check_branch
    %9 = sbr.rel (0) target = $region5
  $region4: #{vae_forward.10} parent=0 // pred_region
    _
  $region5: #{vae_forward.10} parent=0 // pred_fallthru
    _
  // Predicated region
  $region6: #{vae_forward.10} parent=0 // pred_check
    _
  $region7: #{vae_forward.10} parent=0 // pred_check_branch
    %11 = sbr.rel (0) target = $region9
  $region8: #{vae_forward.10} parent=0 // pred_region
    _
  $region9: #{vae_forward.10} parent=0 // pred_fallthru
    _
  // Predicated region
  $region10: #{vae_forward.10} parent=0 // pred_check
    _
  $region11: #{vae_forward.10} parent=0 // pred_check_branch
    %13 = sbr.rel (0) target = $region13
  $region12: #{vae_forward.10} parent=0 // pred_region
    _
  $region13: #{vae_forward.10} parent=0 // pred_fallthru
    _
  %v15 = vld [vmem:[%s0] sm:$0xff]
  %v16 = vld [vmem:[%s0 + $0x8] sm:$0xf]
  %v17 = vld [vmem:[%s0 + $0xc] sm:$0xff]
  %v18 = vld [vmem:[%s0 + $0x14] sm:$0xf]
  %v19 = vld [vmem:[%s0 + $0x18] sm:$0xff]
  %v20 = vld [vmem:[%s0 + $0x20] sm:$0xf]
  %v21 = vld [vmem:[%s0 + $0x24] sm:$0xff]
  %v22 = vld [vmem:[%s0 + $0x2c] sm:$0xf]
  %v23 = vld [vmem:[%s0 + $0x30] sm:$0xff]
  %v24 = vld [vmem:[%s0 + $0x38] sm:$0xf]
  %v25 = vld [vmem:[%s0 + $0x3c] sm:$0xff]
  %v26 = vld [vmem:[%s0 + $0x44] sm:$0xf]
  %v27 = vld [vmem:[%s0 + $0x48] sm:$0xff]
  %v28 = vld [vmem:[%s0 + $0x50] sm:$0xf]
  %v29 = vld [vmem:[%s0 + $0x54] sm:$0xff]
  %v30 = vld [vmem:[%s0 + $0x5c] sm:$0xf]
  %v31 = vld [vmem:[%s0 + $0x60] sm:$0xff]
  %v32 = vld [vmem:[%s0 + $0x68] sm:$0xf]
  %v33 = vld [vmem:[%s0 + $0x6c] sm:$0xff]
  %v34 = vld [vmem:[%s0 + $0x74] sm:$0xf]
  %v35 = vld [vmem:[%s0 + $0x78] sm:$0xff]
  %v36 = vld [vmem:[%s0 + $0x80] sm:$0xf]
  %v37 = vld [vmem:[%s0 + $0x84] sm:$0xff]
  %v38 = vld [vmem:[%s0 + $0x8c] sm:$0xf]
  %v39 = vld [vmem:[%s0 + $0x90] sm:$0xff]
  %v40 = vld [vmem:[%s0 + $0x98] sm:$0xf]
  %v41 = vld [vmem:[%s0 + $0x9c] sm:$0xff]
  %v42 = vld [vmem:[%s0 + $0xa4] sm:$0xf]
  %v43 = vld [vmem:[%s0 + $0xa8] sm:$0xff]
  %v44 = vld [vmem:[%s0 + $0xb0] sm:$0xf]
  %v45 = vld [vmem:[%s0 + $0xb4] sm:$0xff]
  %v46 = vld [vmem:[%s0 + $0xbc] sm:$0xf]
  %v47 = vld [vmem:[%s0 + $0xc0] sm:$0xff]
  %v48 = vld [vmem:[%s0 + $0xc8] sm:$0xf]
  %v49 = vld [vmem:[%s0 + $0xcc] sm:$0xff]
  %v50 = vld [vmem:[%s0 + $0xd4] sm:$0xf]
  %v51 = vld [vmem:[%s0 + $0xd8] sm:$0xff]
  %v52 = vld [vmem:[%s0 + $0xe0] sm:$0xf]
  %v53 = vld [vmem:[%s0 + $0xe4] sm:$0xff]
  %v54 = vld [vmem:[%s0 + $0xec] sm:$0xf]
  %v55 = vld [vmem:[%s0 + $0xf0] sm:$0xff]
  %v56 = vld [vmem:[%s0 + $0xf8] sm:$0xf]
  %v57 = vld [vmem:[%s0 + $0xfc] sm:$0xff]
  %v58 = vld [vmem:[%s0 + $0x104] sm:$0xf]
  %v59 = vld [vmem:[%s0 + $0x108] sm:$0xff]
  %v60 = vld [vmem:[%s0 + $0x110] sm:$0xf]
  %v61 = vld [vmem:[%s0 + $0x114] sm:$0xff]
  %v62 = vld [vmem:[%s0 + $0x11c] sm:$0xf]
  %v63 = vld [vmem:[%s0 + $0x120] sm:$0xff]
  %v64 = vld [vmem:[%s0 + $0x128] sm:$0xf]
  %v65 = vld [vmem:[%s0 + $0x12c] sm:$0xff]
  %v66 = vld [vmem:[%s0 + $0x134] sm:$0xf]
  %v67 = vld [vmem:[%s0 + $0x138] sm:$0xff]
  %v68 = vld [vmem:[%s0 + $0x140] sm:$0xf]
  %v69 = vld [vmem:[%s0 + $0x144] sm:$0xff]
  %v70 = vld [vmem:[%s0 + $0x14c] sm:$0xf]
  %v71 = vld [vmem:[%s0 + $0x150] sm:$0xff]
  %v72 = vld [vmem:[%s0 + $0x158] sm:$0xf]
  %v73 = vld [vmem:[%s0 + $0x15c] sm:$0xff]
  %v74 = vld [vmem:[%s0 + $0x164] sm:$0xf]
  %v75 = vld [vmem:[%s0 + $0x168] sm:$0xff]
  %v76 = vld [vmem:[%s0 + $0x170] sm:$0xf]
  %v77 = vld [vmem:[%s0 + $0x174] sm:$0xff]
  %v78 = vld [vmem:[%s0 + $0x17c] sm:$0xf]
  %v79 = vld [vmem:[%s0 + $0x180] sm:$0xff]
  %v80 = vld [vmem:[%s0 + $0x188] sm:$0xf]
  %v81 = vld [vmem:[%s0 + $0x18c] sm:$0xff]
  %v82 = vld [vmem:[%s0 + $0x194] sm:$0xf]
  %v83 = vld [vmem:[%s0 + $0x198] sm:$0xff]
  %v84 = vld [vmem:[%s0 + $0x1a0] sm:$0xf]
  %v85 = vld [vmem:[%s0 + $0x1a4] sm:$0xff]
  %v86 = vld [vmem:[%s0 + $0x1ac] sm:$0xf]
  %v87 = vld [vmem:[%s0 + $0x1b0] sm:$0xff]
  %v88 = vld [vmem:[%s0 + $0x1b8] sm:$0xf]
  %v89 = vld [vmem:[%s0 + $0x1bc] sm:$0xff]
  %v90 = vld [vmem:[%s0 + $0x1c4] sm:$0xf]
  %v91 = vld [vmem:[%s0 + $0x1c8] sm:$0xff]
  %v92 = vld [vmem:[%s0 + $0x1d0] sm:$0xf]
  %v93 = vld [vmem:[%s0 + $0x1d4] sm:$0xff]
  %v94 = vld [vmem:[%s0 + $0x1dc] sm:$0xf]
  %v95 = vld [vmem:[%s0 + $0x1e0] sm:$0xff]
  %v96 = vld [vmem:[%s0 + $0x1e8] sm:$0xf]
  %v97 = vld [vmem:[%s0 + $0x1ec] sm:$0xff]
  %v98 = vld [vmem:[%s0 + $0x1f4] sm:$0xf]
  %v99 = vld [vmem:[%s0 + $0x1f8] sm:$0xff]
  %v100 = vld [vmem:[%s0 + $0x200] sm:$0xf]
  %v101 = vld [vmem:[%s0 + $0x204] sm:$0xff]
  %v102 = vld [vmem:[%s0 + $0x20c] sm:$0xf]
  %v103 = vld [vmem:[%s0 + $0x210] sm:$0xff]
  %v104 = vld [vmem:[%s0 + $0x218] sm:$0xf]
  %v105 = vld [vmem:[%s0 + $0x21c] sm:$0xff]
  %v106 = vld [vmem:[%s0 + $0x224] sm:$0xf]
  %v107 = vld [vmem:[%s0 + $0x228] sm:$0xff]
  %v108 = vld [vmem:[%s0 + $0x230] sm:$0xf]
  %v109 = vld [vmem:[%s0 + $0x234] sm:$0xff]
  %v110 = vld [vmem:[%s0 + $0x23c] sm:$0xf]
  %v111 = vld [vmem:[%s0 + $0x240] sm:$0xff]
  %v112 = vld [vmem:[%s0 + $0x248] sm:$0xf]
  %v113 = vld [vmem:[%s0 + $0x24c] sm:$0xff]
  %v114 = vld [vmem:[%s0 + $0x254] sm:$0xf]
  %v115 = vld [vmem:[%s1] sm:$0xf]
  %v116 = vld [vmem:[%s1 + $0x4] sm:$0xf]
  %v117 = vld [vmem:[%s1 + $0x8] sm:$0xf]
  %v118 = vld [vmem:[%s1 + $0xc] sm:$0xf]
  %v119 = vld [vmem:[%s1 + $0x10] sm:$0xf]
  %v120 = vld [vmem:[%s1 + $0x14] sm:$0xf]
  %v121 = vld [vmem:[%s1 + $0x18] sm:$0xf]
  %v122 = vld [vmem:[%s1 + $0x1c] sm:$0xf]
  %v123 = vld [vmem:[%s1 + $0x20] sm:$0xf]
  %v124 = vld [vmem:[%s1 + $0x24] sm:$0xf]
  %v125 = vld [vmem:[%s1 + $0x28] sm:$0xf]
  %v126 = vld [vmem:[%s1 + $0x2c] sm:$0xf]
  %v127 = vld [vmem:[%s1 + $0x30] sm:$0xf]
  %v128 = vld [vmem:[%s1 + $0x34] sm:$0xf]
  %v129 = vld [vmem:[%s1 + $0x38] sm:$0xf]
  %v130 = vld [vmem:[%s1 + $0x3c] sm:$0xf]
  %v131 = vld [vmem:[%s1 + $0x40] sm:$0xf]
  %v132 = vld [vmem:[%s1 + $0x44] sm:$0xf]
  %v133 = vld [vmem:[%s1 + $0x48] sm:$0xf]
  %v134 = vld [vmem:[%s1 + $0x4c] sm:$0xf]
  %v135 = vld [vmem:[%s1 + $0x50] sm:$0xf]
  %v136 = vld [vmem:[%s1 + $0x54] sm:$0xf]
  %v137 = vld [vmem:[%s1 + $0x58] sm:$0xf]
  %v138 = vld [vmem:[%s1 + $0x5c] sm:$0xf]
  %v139 = vld [vmem:[%s1 + $0x60] sm:$0xf]
  %v140 = vld [vmem:[%s1 + $0x64] sm:$0xf]
  %v141 = vld [vmem:[%s1 + $0x68] sm:$0xf]
  %v142 = vld [vmem:[%s1 + $0x6c] sm:$0xf]
  %v143 = vld [vmem:[%s1 + $0x70] sm:$0xf]
  %v144 = vld [vmem:[%s1 + $0x74] sm:$0xf]
  %v145 = vld [vmem:[%s1 + $0x78] sm:$0xf]
  %v146 = vld [vmem:[%s1 + $0x7c] sm:$0xf]
  %v147 = vld [vmem:[%s1 + $0x80] sm:$0xf]
  %v148 = vld [vmem:[%s1 + $0x84] sm:$0xf]
  %v149 = vld [vmem:[%s1 + $0x88] sm:$0xf]
  %v150 = vld [vmem:[%s1 + $0x8c] sm:$0xf]
  %v151 = vld [vmem:[%s2] sm:$0x1]
  %v153 = vlaneseq
  %v154 = vshrl.u32 %v153, 7
  %v155 = vsub.s32 0, %v154
  %v156 = vrot.slane %v151, %v155
  %v258 = vunpack.c.l.b16 %v15
  %v259 = vunpack.c.h.b16 %v15
  %v260 = vunpack.c.l.b16 %v16
  %v261 = vunpack.c.l.b16 %v17
  %v262 = vunpack.c.h.b16 %v17
  %v263 = vunpack.c.l.b16 %v18
  %v264 = vunpack.c.l.b16 %v19
  %v265 = vunpack.c.h.b16 %v19
  %v266 = vunpack.c.l.b16 %v20
  %v267 = vunpack.c.l.b16 %v21
  %v268 = vunpack.c.h.b16 %v21
  %v269 = vunpack.c.l.b16 %v22
  %v270 = vunpack.c.l.b16 %v23
  %v271 = vunpack.c.h.b16 %v23
  %v272 = vunpack.c.l.b16 %v24
  %v273 = vunpack.c.l.b16 %v25
  %v274 = vunpack.c.h.b16 %v25
  %v275 = vunpack.c.l.b16 %v26
  %v276 = vunpack.c.l.b16 %v27
  %v277 = vunpack.c.h.b16 %v27
  %v278 = vunpack.c.l.b16 %v28
  %v279 = vunpack.c.l.b16 %v29
  %v280 = vunpack.c.h.b16 %v29
  %v281 = vunpack.c.l.b16 %v30
  %v282 = vunpack.c.l.b16 %v31
  %v283 = vunpack.c.h.b16 %v31
  %v284 = vunpack.c.l.b16 %v32
  %v285 = vunpack.c.l.b16 %v33
  %v286 = vunpack.c.h.b16 %v33
  %v287 = vunpack.c.l.b16 %v34
  %v288 = vunpack.c.l.b16 %v35
  %v289 = vunpack.c.h.b16 %v35
  %v290 = vunpack.c.l.b16 %v36
  %v291 = vunpack.c.l.b16 %v37
  %v292 = vunpack.c.h.b16 %v37
  %v293 = vunpack.c.l.b16 %v38
  %v294 = vunpack.c.l.b16 %v39
  %v295 = vunpack.c.h.b16 %v39
  %v296 = vunpack.c.l.b16 %v40
  %v297 = vunpack.c.l.b16 %v41
  %v298 = vunpack.c.h.b16 %v41
  %v299 = vunpack.c.l.b16 %v42
  %v300 = vunpack.c.l.b16 %v43
  %v301 = vunpack.c.h.b16 %v43
  %v302 = vunpack.c.l.b16 %v44
  %v303 = vunpack.c.l.b16 %v45
  %v304 = vunpack.c.h.b16 %v45
  %v305 = vunpack.c.l.b16 %v46
  %v306 = vunpack.c.l.b16 %v47
  %v307 = vunpack.c.h.b16 %v47
  %v308 = vunpack.c.l.b16 %v48
  %v309 = vunpack.c.l.b16 %v49
  %v310 = vunpack.c.h.b16 %v49
  %v311 = vunpack.c.l.b16 %v50
  %v312 = vunpack.c.l.b16 %v51
  %v313 = vunpack.c.h.b16 %v51
  %v314 = vunpack.c.l.b16 %v52
  %v315 = vunpack.c.l.b16 %v53
  %v316 = vunpack.c.h.b16 %v53
  %v317 = vunpack.c.l.b16 %v54
  %v318 = vunpack.c.l.b16 %v55
  %v319 = vunpack.c.h.b16 %v55
  %v320 = vunpack.c.l.b16 %v56
  %v321 = vunpack.c.l.b16 %v57
  %v322 = vunpack.c.h.b16 %v57
  %v323 = vunpack.c.l.b16 %v58
  %v324 = vunpack.c.l.b16 %v59
  %v325 = vunpack.c.h.b16 %v59
  %v326 = vunpack.c.l.b16 %v60
  %v327 = vunpack.c.l.b16 %v61
  %v328 = vunpack.c.h.b16 %v61
  %v329 = vunpack.c.l.b16 %v62
  %v330 = vunpack.c.l.b16 %v63
  %v331 = vunpack.c.h.b16 %v63
  %v332 = vunpack.c.l.b16 %v64
  %v333 = vunpack.c.l.b16 %v65
  %v334 = vunpack.c.h.b16 %v65
  %v335 = vunpack.c.l.b16 %v66
  %v336 = vunpack.c.l.b16 %v67
  %v337 = vunpack.c.h.b16 %v67
  %v338 = vunpack.c.l.b16 %v68
  %v339 = vunpack.c.l.b16 %v69
  %v340 = vunpack.c.h.b16 %v69
  %v341 = vunpack.c.l.b16 %v70
  %v342 = vunpack.c.l.b16 %v71
  %v343 = vunpack.c.h.b16 %v71
  %v344 = vunpack.c.l.b16 %v72
  %v345 = vunpack.c.l.b16 %v73
  %v346 = vunpack.c.h.b16 %v73
  %v347 = vunpack.c.l.b16 %v74
  %v348 = vunpack.c.l.b16 %v75
  %v349 = vunpack.c.h.b16 %v75
  %v350 = vunpack.c.l.b16 %v76
  %v351 = vunpack.c.l.b16 %v77
  %v352 = vunpack.c.h.b16 %v77
  %v353 = vunpack.c.l.b16 %v78
  %v354 = vunpack.c.l.b16 %v79
  %v355 = vunpack.c.h.b16 %v79
  %v356 = vunpack.c.l.b16 %v80
  %v357 = vunpack.c.l.b16 %v81
  %v358 = vunpack.c.h.b16 %v81
  %v359 = vunpack.c.l.b16 %v82
  %v360 = vunpack.c.l.b16 %v83
  %v361 = vunpack.c.h.b16 %v83
  %v362 = vunpack.c.l.b16 %v84
  %v363 = vunpack.c.l.b16 %v85
  %v364 = vunpack.c.h.b16 %v85
  %v365 = vunpack.c.l.b16 %v86
  %v366 = vunpack.c.l.b16 %v87
  %v367 = vunpack.c.h.b16 %v87
  %v368 = vunpack.c.l.b16 %v88
  %v369 = vunpack.c.l.b16 %v89
  %v370 = vunpack.c.h.b16 %v89
  %v371 = vunpack.c.l.b16 %v90
  %v372 = vunpack.c.l.b16 %v91
  %v373 = vunpack.c.h.b16 %v91
  %v374 = vunpack.c.l.b16 %v92
  %v375 = vunpack.c.l.b16 %v93
  %v376 = vunpack.c.h.b16 %v93
  %v377 = vunpack.c.l.b16 %v94
  %v378 = vunpack.c.l.b16 %v95
  %v379 = vunpack.c.h.b16 %v95
  %v380 = vunpack.c.l.b16 %v96
  %v381 = vunpack.c.l.b16 %v97
  %v382 = vunpack.c.h.b16 %v97
  %v383 = vunpack.c.l.b16 %v98
  %v384 = vunpack.c.l.b16 %v99
  %v385 = vunpack.c.h.b16 %v99
  %v386 = vunpack.c.l.b16 %v100
  %v387 = vunpack.c.l.b16 %v101
  %v388 = vunpack.c.h.b16 %v101
  %v389 = vunpack.c.l.b16 %v102
  %v390 = vunpack.c.l.b16 %v103
  %v391 = vunpack.c.h.b16 %v103
  %v392 = vunpack.c.l.b16 %v104
  %v393 = vunpack.c.l.b16 %v105
  %v394 = vunpack.c.h.b16 %v105
  %v395 = vunpack.c.l.b16 %v106
  %v396 = vunpack.c.l.b16 %v107
  %v397 = vunpack.c.h.b16 %v107
  %v398 = vunpack.c.l.b16 %v108
  %v399 = vunpack.c.l.b16 %v109
  %v400 = vunpack.c.h.b16 %v109
  %v401 = vunpack.c.l.b16 %v110
  %v402 = vunpack.c.l.b16 %v111
  %v403 = vunpack.c.h.b16 %v111
  %v404 = vunpack.c.l.b16 %v112
  %v405 = vunpack.c.l.b16 %v113
  %v406 = vunpack.c.h.b16 %v113
  %v407 = vunpack.c.l.b16 %v114
  %v408 = vpack.c.b16 %v261, %v258
  %v409 = vpack.c.b16 %v262, %v259
  %v410 = vpack.c.b16 %v263, %v260
  %v411 = vpack.c.b16 %v267, %v264
  %v412 = vpack.c.b16 %v268, %v265
  %v413 = vpack.c.b16 %v269, %v266
  %v414 = vpack.c.b16 %v273, %v270
  %v415 = vpack.c.b16 %v274, %v271
  %v416 = vpack.c.b16 %v275, %v272
  %v417 = vpack.c.b16 %v279, %v276
  %v418 = vpack.c.b16 %v280, %v277
  %v419 = vpack.c.b16 %v281, %v278
  %v420 = vpack.c.b16 %v285, %v282
  %v421 = vpack.c.b16 %v286, %v283
  %v422 = vpack.c.b16 %v287, %v284
  %v423 = vpack.c.b16 %v291, %v288
  %v424 = vpack.c.b16 %v292, %v289
  %v425 = vpack.c.b16 %v293, %v290
  %v426 = vpack.c.b16 %v297, %v294
  %v427 = vpack.c.b16 %v298, %v295
  %v428 = vpack.c.b16 %v299, %v296
  %v429 = vpack.c.b16 %v303, %v300
  %v430 = vpack.c.b16 %v304, %v301
  %v431 = vpack.c.b16 %v305, %v302
  %v432 = vpack.c.b16 %v309, %v306
  %v433 = vpack.c.b16 %v310, %v307
  %v434 = vpack.c.b16 %v311, %v308
  %v435 = vpack.c.b16 %v315, %v312
  %v436 = vpack.c.b16 %v316, %v313
  %v437 = vpack.c.b16 %v317, %v314
  %v438 = vpack.c.b16 %v321, %v318
  %v439 = vpack.c.b16 %v322, %v319
  %v440 = vpack.c.b16 %v323, %v320
  %v441 = vpack.c.b16 %v327, %v324
  %v442 = vpack.c.b16 %v328, %v325
  %v443 = vpack.c.b16 %v329, %v326
  %v444 = vpack.c.b16 %v333, %v330
  %v445 = vpack.c.b16 %v334, %v331
  %v446 = vpack.c.b16 %v335, %v332
  %v447 = vpack.c.b16 %v339, %v336
  %v448 = vpack.c.b16 %v340, %v337
  %v449 = vpack.c.b16 %v341, %v338
  %v450 = vpack.c.b16 %v345, %v342
  %v451 = vpack.c.b16 %v346, %v343
  %v452 = vpack.c.b16 %v347, %v344
  %v453 = vpack.c.b16 %v351, %v348
  %v454 = vpack.c.b16 %v352, %v349
  %v455 = vpack.c.b16 %v353, %v350
  %v456 = vpack.c.b16 %v357, %v354
  %v457 = vpack.c.b16 %v358, %v355
  %v458 = vpack.c.b16 %v359, %v356
  %v459 = vpack.c.b16 %v363, %v360
  %v460 = vpack.c.b16 %v364, %v361
  %v461 = vpack.c.b16 %v365, %v362
  %v462 = vpack.c.b16 %v369, %v366
  %v463 = vpack.c.b16 %v370, %v367
  %v464 = vpack.c.b16 %v371, %v368
  %v465 = vpack.c.b16 %v375, %v372
  %v466 = vpack.c.b16 %v376, %v373
  %v467 = vpack.c.b16 %v377, %v374
  %v468 = vpack.c.b16 %v381, %v378
  %v469 = vpack.c.b16 %v382, %v379
  %v470 = vpack.c.b16 %v383, %v380
  %v471 = vpack.c.b16 %v387, %v384
  %v472 = vpack.c.b16 %v388, %v385
  %v473 = vpack.c.b16 %v389, %v386
  %v474 = vpack.c.b16 %v393, %v390
  %v475 = vpack.c.b16 %v394, %v391
  %v476 = vpack.c.b16 %v395, %v392
  %v477 = vpack.c.b16 %v399, %v396
  %v478 = vpack.c.b16 %v400, %v397
  %v479 = vpack.c.b16 %v401, %v398
  %v480 = vpack.c.b16 %v405, %v402
  %v481 = vpack.c.b16 %v406, %v403
  %v482 = vpack.c.b16 %v407, %v404
  %v569 = vunpack.c.l.b16 %v115
  %v570 = vunpack.c.l.b16 %v116
  %v571 = vunpack.c.l.b16 %v117
  %v572 = vunpack.c.l.b16 %v118
  %v573 = vunpack.c.l.b16 %v119
  %v574 = vunpack.c.l.b16 %v120
  %v575 = vunpack.c.l.b16 %v121
  %v576 = vunpack.c.l.b16 %v122
  %v577 = vunpack.c.l.b16 %v123
  %v578 = vunpack.c.l.b16 %v124
  %v579 = vunpack.c.l.b16 %v125
  %v580 = vunpack.c.l.b16 %v126
  %v581 = vunpack.c.l.b16 %v127
  %v582 = vunpack.c.l.b16 %v128
  %v583 = vunpack.c.l.b16 %v129
  %v584 = vunpack.c.l.b16 %v130
  %v585 = vunpack.c.l.b16 %v131
  %v586 = vunpack.c.l.b16 %v132
  %v587 = vunpack.c.l.b16 %v133
  %v588 = vunpack.c.l.b16 %v134
  %v589 = vunpack.c.l.b16 %v135
  %v590 = vunpack.c.l.b16 %v136
  %v591 = vunpack.c.l.b16 %v137
  %v592 = vunpack.c.l.b16 %v138
  %v593 = vunpack.c.l.b16 %v139
  %v594 = vunpack.c.l.b16 %v140
  %v595 = vunpack.c.l.b16 %v141
  %v596 = vunpack.c.l.b16 %v142
  %v597 = vunpack.c.l.b16 %v143
  %v598 = vunpack.c.l.b16 %v144
  %v599 = vunpack.c.l.b16 %v145
  %v600 = vunpack.c.l.b16 %v146
  %v601 = vunpack.c.l.b16 %v147
  %v602 = vunpack.c.l.b16 %v148
  %v603 = vunpack.c.l.b16 %v149
  %v604 = vunpack.c.l.b16 %v150
  %v605 = vpack.c.b16 %v570, %v569
  %v606 = vpack.c.b16 %v572, %v571
  %v607 = vpack.c.b16 %v574, %v573
  %v608 = vpack.c.b16 %v576, %v575
  %v609 = vpack.c.b16 %v578, %v577
  %v610 = vpack.c.b16 %v580, %v579
  %v611 = vpack.c.b16 %v582, %v581
  %v612 = vpack.c.b16 %v584, %v583
  %v613 = vpack.c.b16 %v586, %v585
  %v614 = vpack.c.b16 %v588, %v587
  %v615 = vpack.c.b16 %v590, %v589
  %v616 = vpack.c.b16 %v592, %v591
  %v617 = vpack.c.b16 %v594, %v593
  %v618 = vpack.c.b16 %v596, %v595
  %v619 = vpack.c.b16 %v598, %v597
  %v620 = vpack.c.b16 %v600, %v599
  %v621 = vpack.c.b16 %v602, %v601
  %v622 = vpack.c.b16 %v604, %v603
  %vm641 = vcmask 261120
  %v643 = vsel %vm641, %v410, 0
  %v646 = vsel %vm641, %v413, 0
  %v649 = vsel %vm641, %v416, 0
  %v652 = vsel %vm641, %v419, 0
  %v655 = vsel %vm641, %v422, 0
  %v658 = vsel %vm641, %v425, 0
  %v661 = vsel %vm641, %v428, 0
  %v664 = vsel %vm641, %v431, 0
  %v667 = vsel %vm641, %v434, 0
  %v670 = vsel %vm641, %v437, 0
  %v673 = vsel %vm641, %v440, 0
  %v676 = vsel %vm641, %v443, 0
  %v679 = vsel %vm641, %v446, 0
  %v682 = vsel %vm641, %v449, 0
  %v685 = vsel %vm641, %v452, 0
  %v688 = vsel %vm641, %v455, 0
  %v691 = vsel %vm641, %v458, 0
  %v694 = vsel %vm641, %v461, 0
  %v697 = vsel %vm641, %v464, 0
  %v700 = vsel %vm641, %v467, 0
  %v703 = vsel %vm641, %v470, 0
  %v706 = vsel %vm641, %v473, 0
  %v709 = vsel %vm641, %v476, 0
  %v712 = vsel %vm641, %v479, 0
  %v715 = vsel %vm641, %v482, 0
  %717 = vmatprep.subr.bf16.mxu0 0
  %718 = vmatpush1.bf16.msra.mxu0 %v605
  %719 = vmatprep.subr.bf16.mxu0 0
  %720 = vmatpush1.bf16.msra.mxu0 %v606
  %721 = vmatprep.subr.bf16.mxu0 0
  %722 = vmatpush1.bf16.msra.mxu0 %v607
  %723 = vmatprep.subr.bf16.mxu0 0
  %724 = vmatpush1.bf16.msra.mxu0 %v608
  %725 = vmatprep.subr.bf16.mxu0 0
  %726 = vmatpush1.bf16.msra.mxu0 %v609
  %727 = vmatprep.subr.bf16.mxu0 0
  %728 = vmatpush1.bf16.msra.mxu0 %v610
  %729 = vmatprep.subr.bf16.mxu0 0
  %730 = vmatpush1.bf16.msra.mxu0 %v611
  %731 = vmatprep.subr.bf16.mxu0 0
  %732 = vmatpush1.bf16.msra.mxu0 %v612
  %733 = vmatprep.subr.bf16.mxu0 0
  %734 = vmatpush1.bf16.msra.mxu0 %v613
  %735 = vmatprep.subr.bf16.mxu0 0
  %736 = vmatpush1.bf16.msra.mxu0 %v614
  %737 = vmatprep.subr.bf16.mxu0 0
  %738 = vmatpush1.bf16.msra.mxu0 %v615
  %739 = vmatprep.subr.bf16.mxu0 0
  %740 = vmatpush1.bf16.msra.mxu0 %v616
  %741 = vmatprep.subr.bf16.mxu0 0
  %742 = vmatpush1.bf16.msra.mxu0 %v617
  %743 = vmatprep.subr.bf16.mxu0 0
  %744 = vmatpush1.bf16.msra.mxu0 %v618
  %745 = vmatprep.subr.bf16.mxu0 0
  %746 = vmatpush1.bf16.msra.mxu0 %v619
  %747 = vmatprep.subr.bf16.mxu0 0
  %748 = vmatpush1.bf16.msra.mxu0 %v620
  %749 = vmatprep.mubr.bf16.mxu0 %v409
  %750 = vmatmul.mubr.bf16.gmra.mrb[0].mxu0 %v408
  %v751 = vpop.f32.mrb[0].mxu0
  %v752 = vadd.f32 %v156, %v751
  %v753 = vpop.f32.mrb[0].mxu0
  %v754 = vpop.f32.mrb[0].mxu0
  %v755 = vadd.f32 %v156, %v754
  %v756 = vpop.f32.mrb[0].mxu0
  %757 = vmatprep.mubr.bf16.mxu0 %v412
  %758 = vmatmul.mubr.bf16.gmra.mrb[0].mxu0 %v411
  %v759 = vpop.f32.mrb[0].mxu0
  %v760 = vadd.f32 %v156, %v759
  %v761 = vpop.f32.mrb[0].mxu0
  %v762 = vpop.f32.mrb[0].mxu0
  %v763 = vadd.f32 %v156, %v762
  %v764 = vpop.f32.mrb[0].mxu0
  %765 = vmatprep.mubr.bf16.mxu0 %v415
  %766 = vmatmul.mubr.bf16.gmra.mrb[0].mxu0 %v414
  %v767 = vpop.f32.mrb[0].mxu0
  %v768 = vadd.f32 %v156, %v767
  %v769 = vpop.f32.mrb[0].mxu0
  %v770 = vpop.f32.mrb[0].mxu0
  %v771 = vadd.f32 %v156, %v770
  %v772 = vpop.f32.mrb[0].mxu0
  %773 = vmatprep.mubr.bf16.mxu0 %v418
  %774 = vmatmul.mubr.bf16.gmra.mrb[0].mxu0 %v417
  %v775 = vpop.f32.mrb[0].mxu0
  %v776 = vadd.f32 %v156, %v775
  %v777 = vpop.f32.mrb[0].mxu0
  %v778 = vpop.f32.mrb[0].mxu0
  %v779 = vadd.f32 %v156, %v778
  %v780 = vpop.f32.mrb[0].mxu0
  %781 = vmatprep.mubr.bf16.mxu0 %v421
  %782 = vmatmul.mubr.bf16.gmra.mrb[0].mxu0 %v420
  %v783 = vpop.f32.mrb[0].mxu0
  %v784 = vadd.f32 %v156, %v783
  %v785 = vpop.f32.mrb[0].mxu0
  %v786 = vpop.f32.mrb[0].mxu0
  %v787 = vadd.f32 %v156, %v786
  %v788 = vpop.f32.mrb[0].mxu0
  %789 = vmatprep.mubr.bf16.mxu0 %v424
  %790 = vmatmul.mubr.bf16.gmra.mrb[0].mxu0 %v423
  %v791 = vpop.f32.mrb[0].mxu0
  %v792 = vadd.f32 %v156, %v791
  %v793 = vpop.f32.mrb[0].mxu0
  %v794 = vpop.f32.mrb[0].mxu0
  %v795 = vadd.f32 %v156, %v794
  %v796 = vpop.f32.mrb[0].mxu0
  %797 = vmatprep.mubr.bf16.mxu0 %v427
  %798 = vmatmul.mubr.bf16.gmra.mrb[0].mxu0 %v426
  %v799 = vpop.f32.mrb[0].mxu0
  %v800 = vadd.f32 %v156, %v799
  %v801 = vpop.f32.mrb[0].mxu0
  %v802 = vpop.f32.mrb[0].mxu0
  %v803 = vadd.f32 %v156, %v802
  %v804 = vpop.f32.mrb[0].mxu0
  %805 = vmatprep.mubr.bf16.mxu0 %v430
  %806 = vmatmul.mubr.bf16.gmra.mrb[0].mxu0 %v429
  %v807 = vpop.f32.mrb[0].mxu0
  %v808 = vadd.f32 %v156, %v807
  %v809 = vpop.f32.mrb[0].mxu0
  %v810 = vpop.f32.mrb[0].mxu0
  %v811 = vadd.f32 %v156, %v810
  %v812 = vpop.f32.mrb[0].mxu0
  %813 = vmatprep.mubr.bf16.mxu0 %v433
  %814 = vmatmul.mubr.bf16.gmra.mrb[0].mxu0 %v432
  %v815 = vpop.f32.mrb[0].mxu0
  %v816 = vadd.f32 %v156, %v815
  %v817 = vpop.f32.mrb[0].mxu0
  %v818 = vpop.f32.mrb[0].mxu0
  %v819 = vadd.f32 %v156, %v818
  %v820 = vpop.f32.mrb[0].mxu0
  %821 = vmatprep.mubr.bf16.mxu0 %v436
  %822 = vmatmul.mubr.bf16.gmra.mrb[0].mxu0 %v435
  %v823 = vpop.f32.mrb[0].mxu0
  %v824 = vadd.f32 %v156, %v823
  %v825 = vpop.f32.mrb[0].mxu0
  %v826 = vpop.f32.mrb[0].mxu0
  %v827 = vadd.f32 %v156, %v826
  %v828 = vpop.f32.mrb[0].mxu0
  %829 = vmatprep.mubr.bf16.mxu0 %v439
  %830 = vmatmul.mubr.bf16.gmra.mrb[0].mxu0 %v438
  %v831 = vpop.f32.mrb[0].mxu0
  %v832 = vadd.f32 %v156, %v831
  %v833 = vpop.f32.mrb[0].mxu0
  %v834 = vpop.f32.mrb[0].mxu0
  %v835 = vadd.f32 %v156, %v834
  %v836 = vpop.f32.mrb[0].mxu0
  %837 = vmatprep.mubr.bf16.mxu0 %v442
  %838 = vmatmul.mubr.bf16.gmra.mrb[0].mxu0 %v441
  %v839 = vpop.f32.mrb[0].mxu0
  %v840 = vadd.f32 %v156, %v839
  %v841 = vpop.f32.mrb[0].mxu0
  %v842 = vpop.f32.mrb[0].mxu0
  %v843 = vadd.f32 %v156, %v842
  %v844 = vpop.f32.mrb[0].mxu0
  %845 = vmatprep.mubr.bf16.mxu0 %v445
  %846 = vmatmul.mubr.bf16.gmra.mrb[0].mxu0 %v444
  %v847 = vpop.f32.mrb[0].mxu0
  %v848 = vadd.f32 %v156, %v847
  %v849 = vpop.f32.mrb[0].mxu0
  %v850 = vpop.f32.mrb[0].mxu0
  %v851 = vadd.f32 %v156, %v850
  %v852 = vpop.f32.mrb[0].mxu0
  %853 = vmatprep.mubr.bf16.mxu0 %v448
  %854 = vmatmul.mubr.bf16.gmra.mrb[0].mxu0 %v447
  %v855 = vpop.f32.mrb[0].mxu0
  %v856 = vadd.f32 %v156, %v855
  %v857 = vpop.f32.mrb[0].mxu0
  %v858 = vpop.f32.mrb[0].mxu0
  %v859 = vadd.f32 %v156, %v858
  %v860 = vpop.f32.mrb[0].mxu0
  %861 = vmatprep.mubr.bf16.mxu0 %v451
  %862 = vmatmul.mubr.bf16.gmra.mrb[0].mxu0 %v450
  %v863 = vpop.f32.mrb[0].mxu0
  %v864 = vadd.f32 %v156, %v863
  %v865 = vpop.f32.mrb[0].mxu0
  %v866 = vpop.f32.mrb[0].mxu0
  %v867 = vadd.f32 %v156, %v866
  %v868 = vpop.f32.mrb[0].mxu0
  %869 = vmatprep.mubr.bf16.mxu0 %v454
  %870 = vmatmul.mubr.bf16.gmra.mrb[0].mxu0 %v453
  %v871 = vpop.f32.mrb[0].mxu0
  %v872 = vadd.f32 %v156, %v871
  %v873 = vpop.f32.mrb[0].mxu0
  %v874 = vpop.f32.mrb[0].mxu0
  %v875 = vadd.f32 %v156, %v874
  %v876 = vpop.f32.mrb[0].mxu0
  %877 = vmatprep.mubr.bf16.mxu0 %v457
  %878 = vmatmul.mubr.bf16.gmra.mrb[0].mxu0 %v456
  %v879 = vpop.f32.mrb[0].mxu0
  %v880 = vadd.f32 %v156, %v879
  %v881 = vpop.f32.mrb[0].mxu0
  %v882 = vpop.f32.mrb[0].mxu0
  %v883 = vadd.f32 %v156, %v882
  %v884 = vpop.f32.mrb[0].mxu0
  %885 = vmatprep.mubr.bf16.mxu0 %v460
  %886 = vmatmul.mubr.bf16.gmra.mrb[0].mxu0 %v459
  %v887 = vpop.f32.mrb[0].mxu0
  %v888 = vadd.f32 %v156, %v887
  %v889 = vpop.f32.mrb[0].mxu0
  %v890 = vpop.f32.mrb[0].mxu0
  %v891 = vadd.f32 %v156, %v890
  %v892 = vpop.f32.mrb[0].mxu0
  %893 = vmatprep.mubr.bf16.mxu0 %v463
  %894 = vmatmul.mubr.bf16.gmra.mrb[0].mxu0 %v462
  %v895 = vpop.f32.mrb[0].mxu0
  %v896 = vadd.f32 %v156, %v895
  %v897 = vpop.f32.mrb[0].mxu0
  %v898 = vpop.f32.mrb[0].mxu0
  %v899 = vadd.f32 %v156, %v898
  %v900 = vpop.f32.mrb[0].mxu0
  %901 = vmatprep.mubr.bf16.mxu0 %v466
  %902 = vmatmul.mubr.bf16.gmra.mrb[0].mxu0 %v465
  %v903 = vpop.f32.mrb[0].mxu0
  %v904 = vadd.f32 %v156, %v903
  %v905 = vpop.f32.mrb[0].mxu0
  %v906 = vpop.f32.mrb[0].mxu0
  %v907 = vadd.f32 %v156, %v906
  %v908 = vpop.f32.mrb[0].mxu0
  %909 = vmatprep.mubr.bf16.mxu0 %v469
  %910 = vmatmul.mubr.bf16.gmra.mrb[0].mxu0 %v468
  %v911 = vpop.f32.mrb[0].mxu0
  %v912 = vadd.f32 %v156, %v911
  %v913 = vpop.f32.mrb[0].mxu0
  %v914 = vpop.f32.mrb[0].mxu0
  %v915 = vadd.f32 %v156, %v914
  %v916 = vpop.f32.mrb[0].mxu0
  %917 = vmatprep.mubr.bf16.mxu0 %v472
  %918 = vmatmul.mubr.bf16.gmra.mrb[0].mxu0 %v471
  %v919 = vpop.f32.mrb[0].mxu0
  %v920 = vadd.f32 %v156, %v919
  %v921 = vpop.f32.mrb[0].mxu0
  %v922 = vpop.f32.mrb[0].mxu0
  %v923 = vadd.f32 %v156, %v922
  %v924 = vpop.f32.mrb[0].mxu0
  %925 = vmatprep.mubr.bf16.mxu0 %v475
  %926 = vmatmul.mubr.bf16.gmra.mrb[0].mxu0 %v474
  %v927 = vpop.f32.mrb[0].mxu0
  %v928 = vadd.f32 %v156, %v927
  %v929 = vpop.f32.mrb[0].mxu0
  %v930 = vpop.f32.mrb[0].mxu0
  %v931 = vadd.f32 %v156, %v930
  %v932 = vpop.f32.mrb[0].mxu0
  %933 = vmatprep.mubr.bf16.mxu0 %v478
  %934 = vmatmul.mubr.bf16.gmra.mrb[0].mxu0 %v477
  %v935 = vpop.f32.mrb[0].mxu0
  %v936 = vadd.f32 %v156, %v935
  %v937 = vpop.f32.mrb[0].mxu0
  %v938 = vpop.f32.mrb[0].mxu0
  %v939 = vadd.f32 %v156, %v938
  %v940 = vpop.f32.mrb[0].mxu0
  %941 = vmatprep.mubr.bf16.mxu0 %v481
  %942 = vmatmul.mubr.bf16.gmra.mrb[0].mxu0 %v480
  %v943 = vpop.f32.mrb[0].mxu0
  %v944 = vadd.f32 %v156, %v943
  %v945 = vpop.f32.mrb[0].mxu0
  %v946 = vpop.f32.mrb[0].mxu0
  %v947 = vadd.f32 %v156, %v946
  %v948 = vpop.f32.mrb[0].mxu0
  %949 = vdwg.mxu0
  %950 = vmatprep.subr.bf16.mxu0 0
  %951 = vmatpush1.bf16.msra.mxu0 %v621
  %952 = vmatprep.subr.bf16.mxu0 0
  %953 = vmatpush1.bf16.msra.mxu0 %v622
  %954 = vmatprep.subr.bf16.mxu0 0
  %955 = vmatpush1.bf16.msra.mxu0 0
  %956 = vmatprep.subr.bf16.mxu0 0
  %957 = vmatpush1.bf16.msra.mxu0 0
  %958 = vmatprep.subr.bf16.mxu0 0
  %959 = vmatpush1.bf16.msra.mxu0 0
  %960 = vmatprep.subr.bf16.mxu0 0
  %961 = vmatpush1.bf16.msra.mxu0 0
  %962 = vmatprep.subr.bf16.mxu0 0
  %963 = vmatpush1.bf16.msra.mxu0 0
  %964 = vmatprep.subr.bf16.mxu0 0
  %965 = vmatpush1.bf16.msra.mxu0 0
  %966 = vmatprep.subr.bf16.mxu0 0
  %967 = vmatpush1.bf16.msra.mxu0 0
  %968 = vmatprep.subr.bf16.mxu0 0
  %969 = vmatpush1.bf16.msra.mxu0 0
  %970 = vmatprep.subr.bf16.mxu0 0
  %971 = vmatpush1.bf16.msra.mxu0 0
  %972 = vmatprep.subr.bf16.mxu0 0
  %973 = vmatpush1.bf16.msra.mxu0 0
  %974 = vmatprep.subr.bf16.mxu0 0
  %975 = vmatpush1.bf16.msra.mxu0 0
  %976 = vmatprep.subr.bf16.mxu0 0
  %977 = vmatpush1.bf16.msra.mxu0 0
  %978 = vmatprep.subr.bf16.mxu0 0
  %979 = vmatpush1.bf16.msra.mxu0 0
  %980 = vmatprep.subr.bf16.mxu0 0
  %981 = vmatpush1.bf16.msra.mxu0 0
  %982 = vmatprep.mubr.bf16.mxu0 0
  %983 = vmatmul.mubr.bf16.gmra.mrb[0].mxu0 %v643
  %v984 = vpop.f32.mrb[0].mxu0
  %v985 = vadd.f32 %v752, %v984
  %v986 = vpop.f32.mrb[0].mxu0
  %v987 = vpop.f32.mrb[0].mxu0
  %v988 = vadd.f32 %v755, %v987
  %v989 = vpop.f32.mrb[0].mxu0
  %990 = vmatprep.mubr.bf16.mxu0 0
  %991 = vmatmul.mubr.bf16.gmra.mrb[0].mxu0 %v646
  %v992 = vpop.f32.mrb[0].mxu0
  %v993 = vadd.f32 %v760, %v992
  %v994 = vpop.f32.mrb[0].mxu0
  %v995 = vpop.f32.mrb[0].mxu0
  %v996 = vadd.f32 %v763, %v995
  %v997 = vpop.f32.mrb[0].mxu0
  %998 = vmatprep.mubr.bf16.mxu0 0
  %999 = vmatmul.mubr.bf16.gmra.mrb[0].mxu0 %v649
  %v1000 = vpop.f32.mrb[0].mxu0
  %v1001 = vadd.f32 %v768, %v1000
  %v1002 = vpop.f32.mrb[0].mxu0
  %v1003 = vpop.f32.mrb[0].mxu0
  %v1004 = vadd.f32 %v771, %v1003
  %v1005 = vpop.f32.mrb[0].mxu0
  %1006 = vmatprep.mubr.bf16.mxu0 0
  %1007 = vmatmul.mubr.bf16.gmra.mrb[0].mxu0 %v652
  %v1008 = vpop.f32.mrb[0].mxu0
  %v1009 = vadd.f32 %v776, %v1008
  %v1010 = vpop.f32.mrb[0].mxu0
  %v1011 = vpop.f32.mrb[0].mxu0
  %v1012 = vadd.f32 %v779, %v1011
  %v1013 = vpop.f32.mrb[0].mxu0
  %1014 = vmatprep.mubr.bf16.mxu0 0
  %1015 = vmatmul.mubr.bf16.gmra.mrb[0].mxu0 %v655
  %v1016 = vpop.f32.mrb[0].mxu0
  %v1017 = vadd.f32 %v784, %v1016
  %v1018 = vpop.f32.mrb[0].mxu0
  %v1019 = vpop.f32.mrb[0].mxu0
  %v1020 = vadd.f32 %v787, %v1019
  %v1021 = vpop.f32.mrb[0].mxu0
  %1022 = vmatprep.mubr.bf16.mxu0 0
  %1023 = vmatmul.mubr.bf16.gmra.mrb[0].mxu0 %v658
  %v1024 = vpop.f32.mrb[0].mxu0
  %v1025 = vadd.f32 %v792, %v1024
  %v1026 = vpop.f32.mrb[0].mxu0
  %v1027 = vpop.f32.mrb[0].mxu0
  %v1028 = vadd.f32 %v795, %v1027
  %v1029 = vpop.f32.mrb[0].mxu0
  %1030 = vmatprep.mubr.bf16.mxu0 0
  %1031 = vmatmul.mubr.bf16.gmra.mrb[0].mxu0 %v661
  %v1032 = vpop.f32.mrb[0].mxu0
  %v1033 = vadd.f32 %v800, %v1032
  %v1034 = vpop.f32.mrb[0].mxu0
  %v1035 = vpop.f32.mrb[0].mxu0
  %v1036 = vadd.f32 %v803, %v1035
  %v1037 = vpop.f32.mrb[0].mxu0
  %1038 = vmatprep.mubr.bf16.mxu0 0
  %1039 = vmatmul.mubr.bf16.gmra.mrb[0].mxu0 %v664
  %v1040 = vpop.f32.mrb[0].mxu0
  %v1041 = vadd.f32 %v808, %v1040
  %v1042 = vpop.f32.mrb[0].mxu0
  %v1043 = vpop.f32.mrb[0].mxu0
  %v1044 = vadd.f32 %v811, %v1043
  %v1045 = vpop.f32.mrb[0].mxu0
  %1046 = vmatprep.mubr.bf16.mxu0 0
  %1047 = vmatmul.mubr.bf16.gmra.mrb[0].mxu0 %v667
  %v1048 = vpop.f32.mrb[0].mxu0
  %v1049 = vadd.f32 %v816, %v1048
  %v1050 = vpop.f32.mrb[0].mxu0
  %v1051 = vpop.f32.mrb[0].mxu0
  %v1052 = vadd.f32 %v819, %v1051
  %v1053 = vpop.f32.mrb[0].mxu0
  %1054 = vmatprep.mubr.bf16.mxu0 0
  %1055 = vmatmul.mubr.bf16.gmra.mrb[0].mxu0 %v670
  %v1056 = vpop.f32.mrb[0].mxu0
  %v1057 = vadd.f32 %v824, %v1056
  %v1058 = vpop.f32.mrb[0].mxu0
  %v1059 = vpop.f32.mrb[0].mxu0
  %v1060 = vadd.f32 %v827, %v1059
  %v1061 = vpop.f32.mrb[0].mxu0
  %1062 = vmatprep.mubr.bf16.mxu0 0
  %1063 = vmatmul.mubr.bf16.gmra.mrb[0].mxu0 %v673
  %v1064 = vpop.f32.mrb[0].mxu0
  %v1065 = vadd.f32 %v832, %v1064
  %v1066 = vpop.f32.mrb[0].mxu0
  %v1067 = vpop.f32.mrb[0].mxu0
  %v1068 = vadd.f32 %v835, %v1067
  %v1069 = vpop.f32.mrb[0].mxu0
  %1070 = vmatprep.mubr.bf16.mxu0 0
  %1071 = vmatmul.mubr.bf16.gmra.mrb[0].mxu0 %v676
  %v1072 = vpop.f32.mrb[0].mxu0
  %v1073 = vadd.f32 %v840, %v1072
  %v1074 = vpop.f32.mrb[0].mxu0
  %v1075 = vpop.f32.mrb[0].mxu0
  %v1076 = vadd.f32 %v843, %v1075
  %v1077 = vpop.f32.mrb[0].mxu0
  %1078 = vmatprep.mubr.bf16.mxu0 0
  %1079 = vmatmul.mubr.bf16.gmra.mrb[0].mxu0 %v679
  %v1080 = vpop.f32.mrb[0].mxu0
  %v1081 = vadd.f32 %v848, %v1080
  %v1082 = vpop.f32.mrb[0].mxu0
  %v1083 = vpop.f32.mrb[0].mxu0
  %v1084 = vadd.f32 %v851, %v1083
  %v1085 = vpop.f32.mrb[0].mxu0
  %1086 = vmatprep.mubr.bf16.mxu0 0
  %1087 = vmatmul.mubr.bf16.gmra.mrb[0].mxu0 %v682
  %v1088 = vpop.f32.mrb[0].mxu0
  %v1089 = vadd.f32 %v856, %v1088
  %v1090 = vpop.f32.mrb[0].mxu0
  %v1091 = vpop.f32.mrb[0].mxu0
  %v1092 = vadd.f32 %v859, %v1091
  %v1093 = vpop.f32.mrb[0].mxu0
  %1094 = vmatprep.mubr.bf16.mxu0 0
  %1095 = vmatmul.mubr.bf16.gmra.mrb[0].mxu0 %v685
  %v1096 = vpop.f32.mrb[0].mxu0
  %v1097 = vadd.f32 %v864, %v1096
  %v1098 = vpop.f32.mrb[0].mxu0
  %v1099 = vpop.f32.mrb[0].mxu0
  %v1100 = vadd.f32 %v867, %v1099
  %v1101 = vpop.f32.mrb[0].mxu0
  %1102 = vmatprep.mubr.bf16.mxu0 0
  %1103 = vmatmul.mubr.bf16.gmra.mrb[0].mxu0 %v688
  %v1104 = vpop.f32.mrb[0].mxu0
  %v1105 = vadd.f32 %v872, %v1104
  %v1106 = vpop.f32.mrb[0].mxu0
  %v1107 = vpop.f32.mrb[0].mxu0
  %v1108 = vadd.f32 %v875, %v1107
  %v1109 = vpop.f32.mrb[0].mxu0
  %1110 = vmatprep.mubr.bf16.mxu0 0
  %1111 = vmatmul.mubr.bf16.gmra.mrb[0].mxu0 %v691
  %v1112 = vpop.f32.mrb[0].mxu0
  %v1113 = vadd.f32 %v880, %v1112
  %v1114 = vpop.f32.mrb[0].mxu0
  %v1115 = vpop.f32.mrb[0].mxu0
  %v1116 = vadd.f32 %v883, %v1115
  %v1117 = vpop.f32.mrb[0].mxu0
  %1118 = vmatprep.mubr.bf16.mxu0 0
  %1119 = vmatmul.mubr.bf16.gmra.mrb[0].mxu0 %v694
  %v1120 = vpop.f32.mrb[0].mxu0
  %v1121 = vadd.f32 %v888, %v1120
  %v1122 = vpop.f32.mrb[0].mxu0
  %v1123 = vpop.f32.mrb[0].mxu0
  %v1124 = vadd.f32 %v891, %v1123
  %v1125 = vpop.f32.mrb[0].mxu0
  %1126 = vmatprep.mubr.bf16.mxu0 0
  %1127 = vmatmul.mubr.bf16.gmra.mrb[0].mxu0 %v697
  %v1128 = vpop.f32.mrb[0].mxu0
  %v1129 = vadd.f32 %v896, %v1128
  %v1130 = vpop.f32.mrb[0].mxu0
  %v1131 = vpop.f32.mrb[0].mxu0
  %v1132 = vadd.f32 %v899, %v1131
  %v1133 = vpop.f32.mrb[0].mxu0
  %1134 = vmatprep.mubr.bf16.mxu0 0
  %1135 = vmatmul.mubr.bf16.gmra.mrb[0].mxu0 %v700
  %v1136 = vpop.f32.mrb[0].mxu0
  %v1137 = vadd.f32 %v904, %v1136
  %v1138 = vpop.f32.mrb[0].mxu0
  %v1139 = vpop.f32.mrb[0].mxu0
  %v1140 = vadd.f32 %v907, %v1139
  %v1141 = vpop.f32.mrb[0].mxu0
  %1142 = vmatprep.mubr.bf16.mxu0 0
  %1143 = vmatmul.mubr.bf16.gmra.mrb[0].mxu0 %v703
  %v1144 = vpop.f32.mrb[0].mxu0
  %v1145 = vadd.f32 %v912, %v1144
  %v1146 = vpop.f32.mrb[0].mxu0
  %v1147 = vpop.f32.mrb[0].mxu0
  %v1148 = vadd.f32 %v915, %v1147
  %v1149 = vpop.f32.mrb[0].mxu0
  %1150 = vmatprep.mubr.bf16.mxu0 0
  %1151 = vmatmul.mubr.bf16.gmra.mrb[0].mxu0 %v706
  %v1152 = vpop.f32.mrb[0].mxu0
  %v1153 = vadd.f32 %v920, %v1152
  %v1154 = vpop.f32.mrb[0].mxu0
  %v1155 = vpop.f32.mrb[0].mxu0
  %v1156 = vadd.f32 %v923, %v1155
  %v1157 = vpop.f32.mrb[0].mxu0
  %1158 = vmatprep.mubr.bf16.mxu0 0
  %1159 = vmatmul.mubr.bf16.gmra.mrb[0].mxu0 %v709
  %v1160 = vpop.f32.mrb[0].mxu0
  %v1161 = vadd.f32 %v928, %v1160
  %v1162 = vpop.f32.mrb[0].mxu0
  %v1163 = vpop.f32.mrb[0].mxu0
  %v1164 = vadd.f32 %v931, %v1163
  %v1165 = vpop.f32.mrb[0].mxu0
  %1166 = vmatprep.mubr.bf16.mxu0 0
  %1167 = vmatmul.mubr.bf16.gmra.mrb[0].mxu0 %v712
  %v1168 = vpop.f32.mrb[0].mxu0
  %v1169 = vadd.f32 %v936, %v1168
  %v1170 = vpop.f32.mrb[0].mxu0
  %v1171 = vpop.f32.mrb[0].mxu0
  %v1172 = vadd.f32 %v939, %v1171
  %v1173 = vpop.f32.mrb[0].mxu0
  %1174 = vmatprep.mubr.bf16.mxu0 0
  %1175 = vmatmul.mubr.bf16.gmra.mrb[0].mxu0 %v715
  %v1176 = vpop.f32.mrb[0].mxu0
  %v1177 = vadd.f32 %v944, %v1176
  %v1178 = vpop.f32.mrb[0].mxu0
  %v1179 = vpop.f32.mrb[0].mxu0
  %v1180 = vadd.f32 %v947, %v1179
  %v1181 = vpop.f32.mrb[0].mxu0
  %1182 = vdwg.mxu0
  %vm1183 = vcmp.gt.f32.partialorder %v985, 0.0
  %vm1184 = vcmp.gt.f32.partialorder %v988, 0.0
  %vm1185 = vcmp.gt.f32.partialorder %v993, 0.0
  %vm1186 = vcmp.gt.f32.partialorder %v996, 0.0
  %vm1187 = vcmp.gt.f32.partialorder %v1001, 0.0
  %vm1188 = vcmp.gt.f32.partialorder %v1004, 0.0
  %vm1189 = vcmp.gt.f32.partialorder %v1009, 0.0
  %vm1190 = vcmp.gt.f32.partialorder %v1012, 0.0
  %vm1191 = vcmp.gt.f32.partialorder %v1017, 0.0
  %vm1192 = vcmp.gt.f32.partialorder %v1020, 0.0
  %vm1193 = vcmp.gt.f32.partialorder %v1025, 0.0
  %vm1194 = vcmp.gt.f32.partialorder %v1028, 0.0
  %vm1195 = vcmp.gt.f32.partialorder %v1033, 0.0
  %vm1196 = vcmp.gt.f32.partialorder %v1036, 0.0
  %vm1197 = vcmp.gt.f32.partialorder %v1041, 0.0
  %vm1198 = vcmp.gt.f32.partialorder %v1044, 0.0
  %vm1199 = vcmp.gt.f32.partialorder %v1049, 0.0
  %vm1200 = vcmp.gt.f32.partialorder %v1052, 0.0
  %vm1201 = vcmp.gt.f32.partialorder %v1057, 0.0
  %vm1202 = vcmp.gt.f32.partialorder %v1060, 0.0
  %vm1203 = vcmp.gt.f32.partialorder %v1065, 0.0
  %vm1204 = vcmp.gt.f32.partialorder %v1068, 0.0
  %vm1205 = vcmp.gt.f32.partialorder %v1073, 0.0
  %vm1206 = vcmp.gt.f32.partialorder %v1076, 0.0
  %vm1207 = vcmp.gt.f32.partialorder %v1081, 0.0
  %vm1208 = vcmp.gt.f32.partialorder %v1084, 0.0
  %vm1209 = vcmp.gt.f32.partialorder %v1089, 0.0
  %vm1210 = vcmp.gt.f32.partialorder %v1092, 0.0
  %vm1211 = vcmp.gt.f32.partialorder %v1097, 0.0
  %vm1212 = vcmp.gt.f32.partialorder %v1100, 0.0
  %vm1213 = vcmp.gt.f32.partialorder %v1105, 0.0
  %vm1214 = vcmp.gt.f32.partialorder %v1108, 0.0
  %vm1215 = vcmp.gt.f32.partialorder %v1113, 0.0
  %vm1216 = vcmp.gt.f32.partialorder %v1116, 0.0
  %vm1217 = vcmp.gt.f32.partialorder %v1121, 0.0
  %vm1218 = vcmp.gt.f32.partialorder %v1124, 0.0
  %vm1219 = vcmp.gt.f32.partialorder %v1129, 0.0
  %vm1220 = vcmp.gt.f32.partialorder %v1132, 0.0
  %vm1221 = vcmp.gt.f32.partialorder %v1137, 0.0
  %vm1222 = vcmp.gt.f32.partialorder %v1140, 0.0
  %vm1223 = vcmp.gt.f32.partialorder %v1145, 0.0
  %vm1224 = vcmp.gt.f32.partialorder %v1148, 0.0
  %vm1225 = vcmp.gt.f32.partialorder %v1153, 0.0
  %vm1226 = vcmp.gt.f32.partialorder %v1156, 0.0
  %vm1227 = vcmp.gt.f32.partialorder %v1161, 0.0
  %vm1228 = vcmp.gt.f32.partialorder %v1164, 0.0
  %vm1229 = vcmp.gt.f32.partialorder %v1169, 0.0
  %vm1230 = vcmp.gt.f32.partialorder %v1172, 0.0
  %vm1231 = vcmp.gt.f32.partialorder %v1177, 0.0
  %vm1232 = vcmp.gt.f32.partialorder %v1180, 0.0
  %v1233 = vmul.f32 %v985, 0.01
  %v1234 = vmul.f32 %v988, 0.01
  %v1235 = vmul.f32 %v993, 0.01
  %v1236 = vmul.f32 %v996, 0.01
  %v1237 = vmul.f32 %v1001, 0.01
  %v1238 = vmul.f32 %v1004, 0.01
  %v1239 = vmul.f32 %v1009, 0.01
  %v1240 = vmul.f32 %v1012, 0.01
  %v1241 = vmul.f32 %v1017, 0.01
  %v1242 = vmul.f32 %v1020, 0.01
  %v1243 = vmul.f32 %v1025, 0.01
  %v1244 = vmul.f32 %v1028, 0.01
  %v1245 = vmul.f32 %v1033, 0.01
  %v1246 = vmul.f32 %v1036, 0.01
  %v1247 = vmul.f32 %v1041, 0.01
  %v1248 = vmul.f32 %v1044, 0.01
  %v1249 = vmul.f32 %v1049, 0.01
  %v1250 = vmul.f32 %v1052, 0.01
  %v1251 = vmul.f32 %v1057, 0.01
  %v1252 = vmul.f32 %v1060, 0.01
  %v1253 = vmul.f32 %v1065, 0.01
  %v1254 = vmul.f32 %v1068, 0.01
  %v1255 = vmul.f32 %v1073, 0.01
  %v1256 = vmul.f32 %v1076, 0.01
  %v1257 = vmul.f32 %v1081, 0.01
  %v1258 = vmul.f32 %v1084, 0.01
  %v1259 = vmul.f32 %v1089, 0.01
  %v1260 = vmul.f32 %v1092, 0.01
  %v1261 = vmul.f32 %v1097, 0.01
  %v1262 = vmul.f32 %v1100, 0.01
  %v1263 = vmul.f32 %v1105, 0.01
  %v1264 = vmul.f32 %v1108, 0.01
  %v1265 = vmul.f32 %v1113, 0.01
  %v1266 = vmul.f32 %v1116, 0.01
  %v1267 = vmul.f32 %v1121, 0.01
  %v1268 = vmul.f32 %v1124, 0.01
  %v1269 = vmul.f32 %v1129, 0.01
  %v1270 = vmul.f32 %v1132, 0.01
  %v1271 = vmul.f32 %v1137, 0.01
  %v1272 = vmul.f32 %v1140, 0.01
  %v1273 = vmul.f32 %v1145, 0.01
  %v1274 = vmul.f32 %v1148, 0.01
  %v1275 = vmul.f32 %v1153, 0.01
  %v1276 = vmul.f32 %v1156, 0.01
  %v1277 = vmul.f32 %v1161, 0.01
  %v1278 = vmul.f32 %v1164, 0.01
  %v1279 = vmul.f32 %v1169, 0.01
  %v1280 = vmul.f32 %v1172, 0.01
  %v1281 = vmul.f32 %v1177, 0.01
  %v1282 = vmul.f32 %v1180, 0.01
  %v1283 = vsel %vm1183, %v985, %v1233
  %v1284 = vsel %vm1184, %v988, %v1234
  %v1285 = vsel %vm1185, %v993, %v1235
  %v1286 = vsel %vm1186, %v996, %v1236
  %v1287 = vsel %vm1187, %v1001, %v1237
  %v1288 = vsel %vm1188, %v1004, %v1238
  %v1289 = vsel %vm1189, %v1009, %v1239
  %v1290 = vsel %vm1190, %v1012, %v1240
  %v1291 = vsel %vm1191, %v1017, %v1241
  %v1292 = vsel %vm1192, %v1020, %v1242
  %v1293 = vsel %vm1193, %v1025, %v1243
  %v1294 = vsel %vm1194, %v1028, %v1244
  %v1295 = vsel %vm1195, %v1033, %v1245
  %v1296 = vsel %vm1196, %v1036, %v1246
  %v1297 = vsel %vm1197, %v1041, %v1247
  %v1298 = vsel %vm1198, %v1044, %v1248
  %v1299 = vsel %vm1199, %v1049, %v1249
  %v1300 = vsel %vm1200, %v1052, %v1250
  %v1301 = vsel %vm1201, %v1057, %v1251
  %v1302 = vsel %vm1202, %v1060, %v1252
  %v1303 = vsel %vm1203, %v1065, %v1253
  %v1304 = vsel %vm1204, %v1068, %v1254
  %v1305 = vsel %vm1205, %v1073, %v1255
  %v1306 = vsel %vm1206, %v1076, %v1256
  %v1307 = vsel %vm1207, %v1081, %v1257
  %v1308 = vsel %vm1208, %v1084, %v1258
  %v1309 = vsel %vm1209, %v1089, %v1259
  %v1310 = vsel %vm1210, %v1092, %v1260
  %v1311 = vsel %vm1211, %v1097, %v1261
  %v1312 = vsel %vm1212, %v1100, %v1262
  %v1313 = vsel %vm1213, %v1105, %v1263
  %v1314 = vsel %vm1214, %v1108, %v1264
  %v1315 = vsel %vm1215, %v1113, %v1265
  %v1316 = vsel %vm1216, %v1116, %v1266
  %v1317 = vsel %vm1217, %v1121, %v1267
  %v1318 = vsel %vm1218, %v1124, %v1268
  %v1319 = vsel %vm1219, %v1129, %v1269
  %v1320 = vsel %vm1220, %v1132, %v1270
  %v1321 = vsel %vm1221, %v1137, %v1271
  %v1322 = vsel %vm1222, %v1140, %v1272
  %v1323 = vsel %vm1223, %v1145, %v1273
  %v1324 = vsel %vm1224, %v1148, %v1274
  %v1325 = vsel %vm1225, %v1153, %v1275
  %v1326 = vsel %vm1226, %v1156, %v1276
  %v1327 = vsel %vm1227, %v1161, %v1277
  %v1328 = vsel %vm1228, %v1164, %v1278
  %v1329 = vsel %vm1229, %v1169, %v1279
  %v1330 = vsel %vm1230, %v1172, %v1280
  %v1331 = vsel %vm1231, %v1177, %v1281
  %v1332 = vsel %vm1232, %v1180, %v1282
  %vm1333 = vcmask 523264
  %1334 = vst.msk [vmem:[%s3] sm:$0xff] %vm1333, %v1283
  %1335 = vst.msk [vmem:[%s3 + $0x8] sm:$0xff] %vm1333, %v1284
  %1336 = vst.msk [vmem:[%s3 + $0x10] sm:$0xff] %vm1333, %v1285
  %1337 = vst.msk [vmem:[%s3 + $0x18] sm:$0xff] %vm1333, %v1286
  %1338 = vst.msk [vmem:[%s3 + $0x20] sm:$0xff] %vm1333, %v1287
  %1339 = vst.msk [vmem:[%s3 + $0x28] sm:$0xff] %vm1333, %v1288
  %1340 = vst.msk [vmem:[%s3 + $0x30] sm:$0xff] %vm1333, %v1289
  %1341 = vst.msk [vmem:[%s3 + $0x38] sm:$0xff] %vm1333, %v1290
  %1342 = vst.msk [vmem:[%s3 + $0x40] sm:$0xff] %vm1333, %v1291
  %1343 = vst.msk [vmem:[%s3 + $0x48] sm:$0xff] %vm1333, %v1292
  %1344 = vst.msk [vmem:[%s3 + $0x50] sm:$0xff] %vm1333, %v1293
  %1345 = vst.msk [vmem:[%s3 + $0x58] sm:$0xff] %vm1333, %v1294
  %1346 = vst.msk [vmem:[%s3 + $0x60] sm:$0xff] %vm1333, %v1295
  %1347 = vst.msk [vmem:[%s3 + $0x68] sm:$0xff] %vm1333, %v1296
  %1348 = vst.msk [vmem:[%s3 + $0x70] sm:$0xff] %vm1333, %v1297
  %1349 = vst.msk [vmem:[%s3 + $0x78] sm:$0xff] %vm1333, %v1298
  %1350 = vst.msk [vmem:[%s3 + $0x80] sm:$0xff] %vm1333, %v1299
  %1351 = vst.msk [vmem:[%s3 + $0x88] sm:$0xff] %vm1333, %v1300
  %1352 = vst.msk [vmem:[%s3 + $0x90] sm:$0xff] %vm1333, %v1301
  %1353 = vst.msk [vmem:[%s3 + $0x98] sm:$0xff] %vm1333, %v1302
  %1354 = vst.msk [vmem:[%s3 + $0xa0] sm:$0xff] %vm1333, %v1303
  %1355 = vst.msk [vmem:[%s3 + $0xa8] sm:$0xff] %vm1333, %v1304
  %1356 = vst.msk [vmem:[%s3 + $0xb0] sm:$0xff] %vm1333, %v1305
  %1357 = vst.msk [vmem:[%s3 + $0xb8] sm:$0xff] %vm1333, %v1306
  %1358 = vst.msk [vmem:[%s3 + $0xc0] sm:$0xff] %vm1333, %v1307
  %1359 = vst.msk [vmem:[%s3 + $0xc8] sm:$0xff] %vm1333, %v1308
  %1360 = vst.msk [vmem:[%s3 + $0xd0] sm:$0xff] %vm1333, %v1309
  %1361 = vst.msk [vmem:[%s3 + $0xd8] sm:$0xff] %vm1333, %v1310
  %1362 = vst.msk [vmem:[%s3 + $0xe0] sm:$0xff] %vm1333, %v1311
  %1363 = vst.msk [vmem:[%s3 + $0xe8] sm:$0xff] %vm1333, %v1312
  %1364 = vst.msk [vmem:[%s3 + $0xf0] sm:$0xff] %vm1333, %v1313
  %1365 = vst.msk [vmem:[%s3 + $0xf8] sm:$0xff] %vm1333, %v1314
  %1366 = vst.msk [vmem:[%s3 + $0x100] sm:$0xff] %vm1333, %v1315
  %1367 = vst.msk [vmem:[%s3 + $0x108] sm:$0xff] %vm1333, %v1316
  %1368 = vst.msk [vmem:[%s3 + $0x110] sm:$0xff] %vm1333, %v1317
  %1369 = vst.msk [vmem:[%s3 + $0x118] sm:$0xff] %vm1333, %v1318
  %1370 = vst.msk [vmem:[%s3 + $0x120] sm:$0xff] %vm1333, %v1319
  %1371 = vst.msk [vmem:[%s3 + $0x128] sm:$0xff] %vm1333, %v1320
  %1372 = vst.msk [vmem:[%s3 + $0x130] sm:$0xff] %vm1333, %v1321
  %1373 = vst.msk [vmem:[%s3 + $0x138] sm:$0xff] %vm1333, %v1322
  %1374 = vst.msk [vmem:[%s3 + $0x140] sm:$0xff] %vm1333, %v1323
  %1375 = vst.msk [vmem:[%s3 + $0x148] sm:$0xff] %vm1333, %v1324
  %1376 = vst.msk [vmem:[%s3 + $0x150] sm:$0xff] %vm1333, %v1325
  %1377 = vst.msk [vmem:[%s3 + $0x158] sm:$0xff] %vm1333, %v1326
  %1378 = vst.msk [vmem:[%s3 + $0x160] sm:$0xff] %vm1333, %v1327
  %1379 = vst.msk [vmem:[%s3 + $0x168] sm:$0xff] %vm1333, %v1328
  %1380 = vst.msk [vmem:[%s3 + $0x170] sm:$0xff] %vm1333, %v1329
  %1381 = vst.msk [vmem:[%s3 + $0x178] sm:$0xff] %vm1333, %v1330
  %1382 = vst.msk [vmem:[%s3 + $0x180] sm:$0xff] %vm1333, %v1331
  %1383 = vst.msk [vmem:[%s3 + $0x188] sm:$0xff] %vm1333, %v1332
  // Predicated region
  $region14: #{vae_forward.10} parent=0 // pred_check
    _
  $region15: #{vae_forward.10} parent=0 // pred_check_branch
    %1385 = sbr.rel (0) target = $region17
  $region16: #{vae_forward.10} parent=0 // pred_region
    _
  $region17: #{vae_forward.10} parent=0 // pred_fallthru
    _
  // Predicated region
  $region18: #{vae_forward.10} parent=0 // pred_check
    _
  $region19: #{vae_forward.10} parent=0 // pred_check_branch
    %1387 = sbr.rel (0) target = $region21
  $region20: #{vae_forward.10} parent=0 // pred_region
    _
  $region21: #{vae_forward.10} parent=0 // pred_fallthru
    _

// kernel: vae_forward.11
$region0: #{vae_forward.11}
  #allocation0 [shape = 'u32[]', space=smem, size = 0x4, offset = 0x4, fixed_abs, tag = 'smem constant byte address 0x4 - core index']
  #allocation1 [shape = 'u32[144,128]{1,0:T(1,128)}', space=vmem, size = 0x12000, scoped, tag = 'internal scratch']
  %s0 = inlined_call_operand.vmem [shape: bf16[112,576], index: 0, kind: input, shape index: {}]
  %s1 = inlined_call_operand.vmem [shape: bf16[576,64], index: 1, kind: input, shape index: {}]
  %s2 = inlined_call_operand.vmem [shape: f32[1,64], index: 2, kind: input, shape index: {}]
  %s3 = inlined_call_operand.vmem [shape: f32[112,64], index: 3, kind: output, shape index: {}]
  %s4 = sld [smem:[#allocation0]]
  $region22: #{vae_forward.11} parent=0
    _
  %s6 = ssub.s32 1, %s4
  %s7 = scalar_select 0, %s6, %s4
  // Predicated region
  $region2: #{vae_forward.11} parent=0 // pred_check
    _
  $region3: #{vae_forward.11} parent=0 // pred_check_branch
    %9 = sbr.rel (0) target = $region5
  $region4: #{vae_forward.11} parent=0 // pred_region
    _
  $region5: #{vae_forward.11} parent=0 // pred_fallthru
    _
  // Predicated region
  $region6: #{vae_forward.11} parent=0 // pred_check
    _
  $region7: #{vae_forward.11} parent=0 // pred_check_branch
    %11 = sbr.rel (0) target = $region9
  $region8: #{vae_forward.11} parent=0 // pred_region
    _
  $region9: #{vae_forward.11} parent=0 // pred_fallthru
    _
  // Predicated region
  $region10: #{vae_forward.11} parent=0 // pred_check
    _
  $region11: #{vae_forward.11} parent=0 // pred_check_branch
    %13 = sbr.rel (0) target = $region13
  $region12: #{vae_forward.11} parent=0 // pred_region
    _
  $region13: #{vae_forward.11} parent=0 // pred_fallthru
    _
  %v15 = vld [vmem:[%s0] sm:$0xff]
  %v16 = vld [vmem:[%s0 + $0x8] sm:$0xff]
  %v17 = vld [vmem:[%s0 + $0x10] sm:$0xf]
  %v18 = vld [vmem:[%s0 + $0x14] sm:$0xff]
  %v19 = vld [vmem:[%s0 + $0x1c] sm:$0xff]
  %v20 = vld [vmem:[%s0 + $0x24] sm:$0xf]
  %v21 = vld [vmem:[%s0 + $0x28] sm:$0xff]
  %v22 = vld [vmem:[%s0 + $0x30] sm:$0xff]
  %v23 = vld [vmem:[%s0 + $0x38] sm:$0xf]
  %v24 = vld [vmem:[%s0 + $0x3c] sm:$0xff]
  %v25 = vld [vmem:[%s0 + $0x44] sm:$0xff]
  %v26 = vld [vmem:[%s0 + $0x4c] sm:$0xf]
  %v27 = vld [vmem:[%s0 + $0x50] sm:$0xff]
  %v28 = vld [vmem:[%s0 + $0x58] sm:$0xff]
  %v29 = vld [vmem:[%s0 + $0x60] sm:$0xf]
  %v30 = vld [vmem:[%s0 + $0x64] sm:$0xff]
  %v31 = vld [vmem:[%s0 + $0x6c] sm:$0xff]
  %v32 = vld [vmem:[%s0 + $0x74] sm:$0xf]
  %v33 = vld [vmem:[%s0 + $0x78] sm:$0xff]
  %v34 = vld [vmem:[%s0 + $0x80] sm:$0xff]
  %v35 = vld [vmem:[%s0 + $0x88] sm:$0xf]
  %v36 = vld [vmem:[%s0 + $0x8c] sm:$0xff]
  %v37 = vld [vmem:[%s0 + $0x94] sm:$0xff]
  %v38 = vld [vmem:[%s0 + $0x9c] sm:$0xf]
  %v39 = vld [vmem:[%s0 + $0xa0] sm:$0xff]
  %v40 = vld [vmem:[%s0 + $0xa8] sm:$0xff]
  %v41 = vld [vmem:[%s0 + $0xb0] sm:$0xf]
  %v42 = vld [vmem:[%s0 + $0xb4] sm:$0xff]
  %v43 = vld [vmem:[%s0 + $0xbc] sm:$0xff]
  %v44 = vld [vmem:[%s0 + $0xc4] sm:$0xf]
  %v45 = vld [vmem:[%s0 + $0xc8] sm:$0xff]
  %v46 = vld [vmem:[%s0 + $0xd0] sm:$0xff]
  %v47 = vld [vmem:[%s0 + $0xd8] sm:$0xf]
  %v48 = vld [vmem:[%s0 + $0xdc] sm:$0xff]
  %v49 = vld [vmem:[%s0 + $0xe4] sm:$0xff]
  %v50 = vld [vmem:[%s0 + $0xec] sm:$0xf]
  %v51 = vld [vmem:[%s0 + $0xf0] sm:$0xff]
  %v52 = vld [vmem:[%s0 + $0xf8] sm:$0xff]
  %v53 = vld [vmem:[%s0 + $0x100] sm:$0xf]
  %v54 = vld [vmem:[%s0 + $0x104] sm:$0xff]
  %v55 = vld [vmem:[%s0 + $0x10c] sm:$0xff]
  %v56 = vld [vmem:[%s0 + $0x114] sm:$0xf]
  %v57 = vld [vmem:[%s1] sm:$0xf]
  %v58 = vld [vmem:[%s1 + $0x4] sm:$0xf]
  %v59 = vld [vmem:[%s1 + $0x8] sm:$0xf]
  %v60 = vld [vmem:[%s1 + $0xc] sm:$0xf]
  %v61 = vld [vmem:[%s1 + $0x10] sm:$0xf]
  %v62 = vld [vmem:[%s1 + $0x14] sm:$0xf]
  %v63 = vld [vmem:[%s1 + $0x18] sm:$0xf]
  %v64 = vld [vmem:[%s1 + $0x1c] sm:$0xf]
  %v65 = vld [vmem:[%s1 + $0x20] sm:$0xf]
  %v66 = vld [vmem:[%s1 + $0x24] sm:$0xf]
  %v67 = vld [vmem:[%s1 + $0x28] sm:$0xf]
  %v68 = vld [vmem:[%s1 + $0x2c] sm:$0xf]
  %v69 = vld [vmem:[%s1 + $0x30] sm:$0xf]
  %v70 = vld [vmem:[%s1 + $0x34] sm:$0xf]
  %v71 = vld [vmem:[%s1 + $0x38] sm:$0xf]
  %v72 = vld [vmem:[%s1 + $0x3c] sm:$0xf]
  %v73 = vld [vmem:[%s1 + $0x40] sm:$0xf]
  %v74 = vld [vmem:[%s1 + $0x44] sm:$0xf]
  %v75 = vld [vmem:[%s1 + $0x48] sm:$0xf]
  %v76 = vld [vmem:[%s1 + $0x4c] sm:$0xf]
  %v77 = vld [vmem:[%s1 + $0x50] sm:$0xf]
  %v78 = vld [vmem:[%s1 + $0x54] sm:$0xf]
  %v79 = vld [vmem:[%s1 + $0x58] sm:$0xf]
  %v80 = vld [vmem:[%s1 + $0x5c] sm:$0xf]
  %v81 = vld [vmem:[%s1 + $0x60] sm:$0xf]
  %v82 = vld [vmem:[%s1 + $0x64] sm:$0xf]
  %v83 = vld [vmem:[%s1 + $0x68] sm:$0xf]
  %v84 = vld [vmem:[%s1 + $0x6c] sm:$0xf]
  %v85 = vld [vmem:[%s1 + $0x70] sm:$0xf]
  %v86 = vld [vmem:[%s1 + $0x74] sm:$0xf]
  %v87 = vld [vmem:[%s1 + $0x78] sm:$0xf]
  %v88 = vld [vmem:[%s1 + $0x7c] sm:$0xf]
  %v89 = vld [vmem:[%s1 + $0x80] sm:$0xf]
  %v90 = vld [vmem:[%s1 + $0x84] sm:$0xf]
  %v91 = vld [vmem:[%s1 + $0x88] sm:$0xf]
  %v92 = vld [vmem:[%s1 + $0x8c] sm:$0xf]
  %v93 = vld [vmem:[%s1 + $0x90] sm:$0xf]
  %v94 = vld [vmem:[%s1 + $0x94] sm:$0xf]
  %v95 = vld [vmem:[%s1 + $0x98] sm:$0xf]
  %v96 = vld [vmem:[%s1 + $0x9c] sm:$0xf]
  %v97 = vld [vmem:[%s1 + $0xa0] sm:$0xf]
  %v98 = vld [vmem:[%s1 + $0xa4] sm:$0xf]
  %v99 = vld [vmem:[%s1 + $0xa8] sm:$0xf]
  %v100 = vld [vmem:[%s1 + $0xac] sm:$0xf]
  %v101 = vld [vmem:[%s1 + $0xb0] sm:$0xf]
  %v102 = vld [vmem:[%s1 + $0xb4] sm:$0xf]
  %v103 = vld [vmem:[%s1 + $0xb8] sm:$0xf]
  %v104 = vld [vmem:[%s1 + $0xbc] sm:$0xf]
  %v105 = vld [vmem:[%s1 + $0xc0] sm:$0xf]
  %v106 = vld [vmem:[%s1 + $0xc4] sm:$0xf]
  %v107 = vld [vmem:[%s1 + $0xc8] sm:$0xf]
  %v108 = vld [vmem:[%s1 + $0xcc] sm:$0xf]
  %v109 = vld [vmem:[%s1 + $0xd0] sm:$0xf]
  %v110 = vld [vmem:[%s1 + $0xd4] sm:$0xf]
  %v111 = vld [vmem:[%s1 + $0xd8] sm:$0xf]
  %v112 = vld [vmem:[%s1 + $0xdc] sm:$0xf]
  %v113 = vld [vmem:[%s1 + $0xe0] sm:$0xf]
  %v114 = vld [vmem:[%s1 + $0xe4] sm:$0xf]
  %v115 = vld [vmem:[%s1 + $0xe8] sm:$0xf]
  %v116 = vld [vmem:[%s1 + $0xec] sm:$0xf]
  %v117 = vld [vmem:[%s1 + $0xf0] sm:$0xf]
  %v118 = vld [vmem:[%s1 + $0xf4] sm:$0xf]
  %v119 = vld [vmem:[%s1 + $0xf8] sm:$0xf]
  %v120 = vld [vmem:[%s1 + $0xfc] sm:$0xf]
  %v121 = vld [vmem:[%s1 + $0x100] sm:$0xf]
  %v122 = vld [vmem:[%s1 + $0x104] sm:$0xf]
  %v123 = vld [vmem:[%s1 + $0x108] sm:$0xf]
  %v124 = vld [vmem:[%s1 + $0x10c] sm:$0xf]
  %v125 = vld [vmem:[%s1 + $0x110] sm:$0xf]
  %v126 = vld [vmem:[%s1 + $0x114] sm:$0xf]
  %v127 = vld [vmem:[%s1 + $0x118] sm:$0xf]
  %v128 = vld [vmem:[%s1 + $0x11c] sm:$0xf]
  %v129 = vld [vmem:[%s2] sm:$0x1]
  %v131 = vlaneseq
  %v132 = vshrl.u32 %v131, 7
  %v133 = vsub.s32 0, %v132
  %v134 = vrot.slane %v129, %v133
  %v178 = vunpack.c.l.b16 %v15
  %v179 = vunpack.c.h.b16 %v15
  %v180 = vunpack.c.l.b16 %v16
  %v181 = vunpack.c.h.b16 %v16
  %v182 = vunpack.c.l.b16 %v17
  %v183 = vunpack.c.l.b16 %v18
  %v184 = vunpack.c.h.b16 %v18
  %v185 = vunpack.c.l.b16 %v19
  %v186 = vunpack.c.h.b16 %v19
  %v187 = vunpack.c.l.b16 %v20
  %v188 = vunpack.c.l.b16 %v21
  %v189 = vunpack.c.h.b16 %v21
  %v190 = vunpack.c.l.b16 %v22
  %v191 = vunpack.c.h.b16 %v22
  %v192 = vunpack.c.l.b16 %v23
  %v193 = vunpack.c.l.b16 %v24
  %v194 = vunpack.c.h.b16 %v24
  %v195 = vunpack.c.l.b16 %v25
  %v196 = vunpack.c.h.b16 %v25
  %v197 = vunpack.c.l.b16 %v26
  %v198 = vunpack.c.l.b16 %v27
  %v199 = vunpack.c.h.b16 %v27
  %v200 = vunpack.c.l.b16 %v28
  %v201 = vunpack.c.h.b16 %v28
  %v202 = vunpack.c.l.b16 %v29
  %v203 = vunpack.c.l.b16 %v30
  %v204 = vunpack.c.h.b16 %v30
  %v205 = vunpack.c.l.b16 %v31
  %v206 = vunpack.c.h.b16 %v31
  %v207 = vunpack.c.l.b16 %v32
  %v208 = vunpack.c.l.b16 %v33
  %v209 = vunpack.c.h.b16 %v33
  %v210 = vunpack.c.l.b16 %v34
  %v211 = vunpack.c.h.b16 %v34
  %v212 = vunpack.c.l.b16 %v35
  %v213 = vunpack.c.l.b16 %v36
  %v214 = vunpack.c.h.b16 %v36
  %v215 = vunpack.c.l.b16 %v37
  %v216 = vunpack.c.h.b16 %v37
  %v217 = vunpack.c.l.b16 %v38
  %v218 = vunpack.c.l.b16 %v39
  %v219 = vunpack.c.h.b16 %v39
  %v220 = vunpack.c.l.b16 %v40
  %v221 = vunpack.c.h.b16 %v40
  %v222 = vunpack.c.l.b16 %v41
  %v223 = vunpack.c.l.b16 %v42
  %v224 = vunpack.c.h.b16 %v42
  %v225 = vunpack.c.l.b16 %v43
  %v226 = vunpack.c.h.b16 %v43
  %v227 = vunpack.c.l.b16 %v44
  %v228 = vunpack.c.l.b16 %v45
  %v229 = vunpack.c.h.b16 %v45
  %v230 = vunpack.c.l.b16 %v46
  %v231 = vunpack.c.h.b16 %v46
  %v232 = vunpack.c.l.b16 %v47
  %v233 = vunpack.c.l.b16 %v48
  %v234 = vunpack.c.h.b16 %v48
  %v235 = vunpack.c.l.b16 %v49
  %v236 = vunpack.c.h.b16 %v49
  %v237 = vunpack.c.l.b16 %v50
  %v238 = vunpack.c.l.b16 %v51
  %v239 = vunpack.c.h.b16 %v51
  %v240 = vunpack.c.l.b16 %v52
  %v241 = vunpack.c.h.b16 %v52
  %v242 = vunpack.c.l.b16 %v53
  %v243 = vunpack.c.l.b16 %v54
  %v244 = vunpack.c.h.b16 %v54
  %v245 = vunpack.c.l.b16 %v55
  %v246 = vunpack.c.h.b16 %v55
  %v247 = vunpack.c.l.b16 %v56
  %v248 = vpack.c.b16 %v183, %v178
  %v249 = vpack.c.b16 %v184, %v179
  %v250 = vpack.c.b16 %v185, %v180
  %v251 = vpack.c.b16 %v186, %v181
  %v252 = vpack.c.b16 %v187, %v182
  %v253 = vpack.c.b16 %v193, %v188
  %v254 = vpack.c.b16 %v194, %v189
  %v255 = vpack.c.b16 %v195, %v190
  %v256 = vpack.c.b16 %v196, %v191
  %v257 = vpack.c.b16 %v197, %v192
  %v258 = vpack.c.b16 %v203, %v198
  %v259 = vpack.c.b16 %v204, %v199
  %v260 = vpack.c.b16 %v205, %v200
  %v261 = vpack.c.b16 %v206, %v201
  %v262 = vpack.c.b16 %v207, %v202
  %v263 = vpack.c.b16 %v213, %v208
  %v264 = vpack.c.b16 %v214, %v209
  %v265 = vpack.c.b16 %v215, %v210
  %v266 = vpack.c.b16 %v216, %v211
  %v267 = vpack.c.b16 %v217, %v212
  %v268 = vpack.c.b16 %v223, %v218
  %v269 = vpack.c.b16 %v224, %v219
  %v270 = vpack.c.b16 %v225, %v220
  %v271 = vpack.c.b16 %v226, %v221
  %v272 = vpack.c.b16 %v227, %v222
  %v273 = vpack.c.b16 %v233, %v228
  %v274 = vpack.c.b16 %v234, %v229
  %v275 = vpack.c.b16 %v235, %v230
  %v276 = vpack.c.b16 %v236, %v231
  %v277 = vpack.c.b16 %v237, %v232
  %v278 = vpack.c.b16 %v243, %v238
  %v279 = vpack.c.b16 %v244, %v239
  %v280 = vpack.c.b16 %v245, %v240
  %v281 = vpack.c.b16 %v246, %v241
  %v282 = vpack.c.b16 %v247, %v242
  %v383 = vunpack.c.l.b16 %v57
  %v384 = vunpack.c.l.b16 %v58
  %v385 = vunpack.c.l.b16 %v59
  %v386 = vunpack.c.l.b16 %v60
  %v387 = vunpack.c.l.b16 %v61
  %v388 = vunpack.c.l.b16 %v62
  %v389 = vunpack.c.l.b16 %v63
  %v390 = vunpack.c.l.b16 %v64
  %v391 = vunpack.c.l.b16 %v65
  %v392 = vunpack.c.l.b16 %v66
  %v393 = vunpack.c.l.b16 %v67
  %v394 = vunpack.c.l.b16 %v68
  %v395 = vunpack.c.l.b16 %v69
  %v396 = vunpack.c.l.b16 %v70
  %v397 = vunpack.c.l.b16 %v71
  %v398 = vunpack.c.l.b16 %v72
  %v399 = vunpack.c.l.b16 %v73
  %v400 = vunpack.c.l.b16 %v74
  %v401 = vunpack.c.l.b16 %v75
  %v402 = vunpack.c.l.b16 %v76
  %v403 = vunpack.c.l.b16 %v77
  %v404 = vunpack.c.l.b16 %v78
  %v405 = vunpack.c.l.b16 %v79
  %v406 = vunpack.c.l.b16 %v80
  %v407 = vunpack.c.l.b16 %v81
  %v408 = vunpack.c.l.b16 %v82
  %v409 = vunpack.c.l.b16 %v83
  %v410 = vunpack.c.l.b16 %v84
  %v411 = vunpack.c.l.b16 %v85
  %v412 = vunpack.c.l.b16 %v86
  %v413 = vunpack.c.l.b16 %v87
  %v414 = vunpack.c.l.b16 %v88
  %v415 = vunpack.c.l.b16 %v89
  %v416 = vunpack.c.l.b16 %v90
  %v417 = vunpack.c.l.b16 %v91
  %v418 = vunpack.c.l.b16 %v92
  %v419 = vunpack.c.l.b16 %v93
  %v420 = vunpack.c.l.b16 %v94
  %v421 = vunpack.c.l.b16 %v95
  %v422 = vunpack.c.l.b16 %v96
  %v423 = vunpack.c.l.b16 %v97
  %v424 = vunpack.c.l.b16 %v98
  %v425 = vunpack.c.l.b16 %v99
  %v426 = vunpack.c.l.b16 %v100
  %v427 = vunpack.c.l.b16 %v101
  %v428 = vunpack.c.l.b16 %v102
  %v429 = vunpack.c.l.b16 %v103
  %v430 = vunpack.c.l.b16 %v104
  %v431 = vunpack.c.l.b16 %v105
  %v432 = vunpack.c.l.b16 %v106
  %v433 = vunpack.c.l.b16 %v107
  %v434 = vunpack.c.l.b16 %v108
  %v435 = vunpack.c.l.b16 %v109
  %v436 = vunpack.c.l.b16 %v110
  %v437 = vunpack.c.l.b16 %v111
  %v438 = vunpack.c.l.b16 %v112
  %v439 = vunpack.c.l.b16 %v113
  %v440 = vunpack.c.l.b16 %v114
  %v441 = vunpack.c.l.b16 %v115
  %v442 = vunpack.c.l.b16 %v116
  %v443 = vunpack.c.l.b16 %v117
  %v444 = vunpack.c.l.b16 %v118
  %v445 = vunpack.c.l.b16 %v119
  %v446 = vunpack.c.l.b16 %v120
  %v447 = vunpack.c.l.b16 %v121
  %v448 = vunpack.c.l.b16 %v122
  %v449 = vunpack.c.l.b16 %v123
  %v450 = vunpack.c.l.b16 %v124
  %v451 = vunpack.c.l.b16 %v125
  %v452 = vunpack.c.l.b16 %v126
  %v453 = vunpack.c.l.b16 %v127
  %v454 = vunpack.c.l.b16 %v128
  %v455 = vpack.c.b16 %v384, %v383
  %v456 = vpack.c.b16 %v386, %v385
  %v457 = vpack.c.b16 %v388, %v387
  %v458 = vpack.c.b16 %v390, %v389
  %v459 = vpack.c.b16 %v392, %v391
  %v460 = vpack.c.b16 %v394, %v393
  %v461 = vpack.c.b16 %v396, %v395
  %v462 = vpack.c.b16 %v398, %v397
  %v463 = vpack.c.b16 %v400, %v399
  %v464 = vpack.c.b16 %v402, %v401
  %v465 = vpack.c.b16 %v404, %v403
  %v466 = vpack.c.b16 %v406, %v405
  %v467 = vpack.c.b16 %v408, %v407
  %v468 = vpack.c.b16 %v410, %v409
  %v469 = vpack.c.b16 %v412, %v411
  %v470 = vpack.c.b16 %v414, %v413
  %v471 = vpack.c.b16 %v416, %v415
  %v472 = vpack.c.b16 %v418, %v417
  %v473 = vpack.c.b16 %v420, %v419
  %v474 = vpack.c.b16 %v422, %v421
  %v475 = vpack.c.b16 %v424, %v423
  %v476 = vpack.c.b16 %v426, %v425
  %v477 = vpack.c.b16 %v428, %v427
  %v478 = vpack.c.b16 %v430, %v429
  %v479 = vpack.c.b16 %v432, %v431
  %v480 = vpack.c.b16 %v434, %v433
  %v481 = vpack.c.b16 %v436, %v435
  %v482 = vpack.c.b16 %v438, %v437
  %v483 = vpack.c.b16 %v440, %v439
  %v484 = vpack.c.b16 %v442, %v441
  %v485 = vpack.c.b16 %v444, %v443
  %v486 = vpack.c.b16 %v446, %v445
  %v487 = vpack.c.b16 %v448, %v447
  %v488 = vpack.c.b16 %v450, %v449
  %v489 = vpack.c.b16 %v452, %v451
  %v490 = vpack.c.b16 %v454, %v453
  %vm527 = vcmask 523264
  %v529 = vsel %vm527, %v252, 0
  %v532 = vsel %vm527, %v257, 0
  %v535 = vsel %vm527, %v262, 0
  %v538 = vsel %vm527, %v267, 0
  %v541 = vsel %vm527, %v272, 0
  %v544 = vsel %vm527, %v277, 0
  %v547 = vsel %vm527, %v282, 0
  %549 = vmatprep.subr.bf16.mxu0 0
  %550 = vmatpush1.bf16.msra.mxu0 %v455
  %551 = vmatprep.subr.bf16.mxu0 0
  %552 = vmatpush1.bf16.msra.mxu0 %v456
  %553 = vmatprep.subr.bf16.mxu0 0
  %554 = vmatpush1.bf16.msra.mxu0 %v457
  %555 = vmatprep.subr.bf16.mxu0 0
  %556 = vmatpush1.bf16.msra.mxu0 %v458
  %557 = vmatprep.subr.bf16.mxu0 0
  %558 = vmatpush1.bf16.msra.mxu0 %v459
  %559 = vmatprep.subr.bf16.mxu0 0
  %560 = vmatpush1.bf16.msra.mxu0 %v460
  %561 = vmatprep.subr.bf16.mxu0 0
  %562 = vmatpush1.bf16.msra.mxu0 %v461
  %563 = vmatprep.subr.bf16.mxu0 0
  %564 = vmatpush1.bf16.msra.mxu0 %v462
  %565 = vmatprep.subr.bf16.mxu0 0
  %566 = vmatpush1.bf16.msra.mxu0 %v463
  %567 = vmatprep.subr.bf16.mxu0 0
  %568 = vmatpush1.bf16.msra.mxu0 %v464
  %569 = vmatprep.subr.bf16.mxu0 0
  %570 = vmatpush1.bf16.msra.mxu0 %v465
  %571 = vmatprep.subr.bf16.mxu0 0
  %572 = vmatpush1.bf16.msra.mxu0 %v466
  %573 = vmatprep.subr.bf16.mxu0 0
  %574 = vmatpush1.bf16.msra.mxu0 %v467
  %575 = vmatprep.subr.bf16.mxu0 0
  %576 = vmatpush1.bf16.msra.mxu0 %v468
  %577 = vmatprep.subr.bf16.mxu0 0
  %578 = vmatpush1.bf16.msra.mxu0 %v469
  %579 = vmatprep.subr.bf16.mxu0 0
  %580 = vmatpush1.bf16.msra.mxu0 %v470
  %581 = vmatprep.mubr.bf16.mxu0 %v249
  %582 = vmatmul.mubr.bf16.gmra.mrb[0].mxu0 %v248
  %v583 = vpop.f32.mrb[0].mxu0
  %v584 = vadd.f32 %v134, %v583
  %v585 = vpop.f32.mrb[0].mxu0
  %v586 = vpop.f32.mrb[0].mxu0
  %v587 = vadd.f32 %v134, %v586
  %v588 = vpop.f32.mrb[0].mxu0
  %589 = vmatprep.mubr.bf16.mxu0 %v254
  %590 = vmatmul.mubr.bf16.gmra.mrb[0].mxu0 %v253
  %v591 = vpop.f32.mrb[0].mxu0
  %v592 = vadd.f32 %v134, %v591
  %v593 = vpop.f32.mrb[0].mxu0
  %v594 = vpop.f32.mrb[0].mxu0
  %v595 = vadd.f32 %v134, %v594
  %v596 = vpop.f32.mrb[0].mxu0
  %597 = vmatprep.mubr.bf16.mxu0 %v259
  %598 = vmatmul.mubr.bf16.gmra.mrb[0].mxu0 %v258
  %v599 = vpop.f32.mrb[0].mxu0
  %v600 = vadd.f32 %v134, %v599
  %v601 = vpop.f32.mrb[0].mxu0
  %v602 = vpop.f32.mrb[0].mxu0
  %v603 = vadd.f32 %v134, %v602
  %v604 = vpop.f32.mrb[0].mxu0
  %605 = vmatprep.mubr.bf16.mxu0 %v264
  %606 = vmatmul.mubr.bf16.gmra.mrb[0].mxu0 %v263
  %v607 = vpop.f32.mrb[0].mxu0
  %v608 = vadd.f32 %v134, %v607
  %v609 = vpop.f32.mrb[0].mxu0
  %v610 = vpop.f32.mrb[0].mxu0
  %v611 = vadd.f32 %v134, %v610
  %v612 = vpop.f32.mrb[0].mxu0
  %613 = vmatprep.mubr.bf16.mxu0 %v269
  %614 = vmatmul.mubr.bf16.gmra.mrb[0].mxu0 %v268
  %v615 = vpop.f32.mrb[0].mxu0
  %v616 = vadd.f32 %v134, %v615
  %v617 = vpop.f32.mrb[0].mxu0
  %v618 = vpop.f32.mrb[0].mxu0
  %v619 = vadd.f32 %v134, %v618
  %v620 = vpop.f32.mrb[0].mxu0
  %621 = vmatprep.mubr.bf16.mxu0 %v274
  %622 = vmatmul.mubr.bf16.gmra.mrb[0].mxu0 %v273
  %v623 = vpop.f32.mrb[0].mxu0
  %v624 = vadd.f32 %v134, %v623
  %v625 = vpop.f32.mrb[0].mxu0
  %v626 = vpop.f32.mrb[0].mxu0
  %v627 = vadd.f32 %v134, %v626
  %v628 = vpop.f32.mrb[0].mxu0
  %629 = vmatprep.mubr.bf16.mxu0 %v279
  %630 = vmatmul.mubr.bf16.gmra.mrb[0].mxu0 %v278
  %v631 = vpop.f32.mrb[0].mxu0
  %v632 = vadd.f32 %v134, %v631
  %v633 = vpop.f32.mrb[0].mxu0
  %v634 = vpop.f32.mrb[0].mxu0
  %v635 = vadd.f32 %v134, %v634
  %v636 = vpop.f32.mrb[0].mxu0
  %637 = vdwg.mxu0
  %638 = vmatprep.subr.bf16.mxu0 0
  %639 = vmatpush1.bf16.msra.mxu0 %v471
  %640 = vmatprep.subr.bf16.mxu0 0
  %641 = vmatpush1.bf16.msra.mxu0 %v472
  %642 = vmatprep.subr.bf16.mxu0 0
  %643 = vmatpush1.bf16.msra.mxu0 %v473
  %644 = vmatprep.subr.bf16.mxu0 0
  %645 = vmatpush1.bf16.msra.mxu0 %v474
  %646 = vmatprep.subr.bf16.mxu0 0
  %647 = vmatpush1.bf16.msra.mxu0 %v475
  %648 = vmatprep.subr.bf16.mxu0 0
  %649 = vmatpush1.bf16.msra.mxu0 %v476
  %650 = vmatprep.subr.bf16.mxu0 0
  %651 = vmatpush1.bf16.msra.mxu0 %v477
  %652 = vmatprep.subr.bf16.mxu0 0
  %653 = vmatpush1.bf16.msra.mxu0 %v478
  %654 = vmatprep.subr.bf16.mxu0 0
  %655 = vmatpush1.bf16.msra.mxu0 %v479
  %656 = vmatprep.subr.bf16.mxu0 0
  %657 = vmatpush1.bf16.msra.mxu0 %v480
  %658 = vmatprep.subr.bf16.mxu0 0
  %659 = vmatpush1.bf16.msra.mxu0 %v481
  %660 = vmatprep.subr.bf16.mxu0 0
  %661 = vmatpush1.bf16.msra.mxu0 %v482
  %662 = vmatprep.subr.bf16.mxu0 0
  %663 = vmatpush1.bf16.msra.mxu0 %v483
  %664 = vmatprep.subr.bf16.mxu0 0
  %665 = vmatpush1.bf16.msra.mxu0 %v484
  %666 = vmatprep.subr.bf16.mxu0 0
  %667 = vmatpush1.bf16.msra.mxu0 %v485
  %668 = vmatprep.subr.bf16.mxu0 0
  %669 = vmatpush1.bf16.msra.mxu0 %v486
  %670 = vmatprep.mubr.bf16.mxu0 %v251
  %671 = vmatmul.mubr.bf16.gmra.mrb[0].mxu0 %v250
  %v672 = vpop.f32.mrb[0].mxu0
  %v673 = vadd.f32 %v584, %v672
  %v674 = vpop.f32.mrb[0].mxu0
  %v675 = vpop.f32.mrb[0].mxu0
  %v676 = vadd.f32 %v587, %v675
  %v677 = vpop.f32.mrb[0].mxu0
  %678 = vmatprep.mubr.bf16.mxu0 %v256
  %679 = vmatmul.mubr.bf16.gmra.mrb[0].mxu0 %v255
  %v680 = vpop.f32.mrb[0].mxu0
  %v681 = vadd.f32 %v592, %v680
  %v682 = vpop.f32.mrb[0].mxu0
  %v683 = vpop.f32.mrb[0].mxu0
  %v684 = vadd.f32 %v595, %v683
  %v685 = vpop.f32.mrb[0].mxu0
  %686 = vmatprep.mubr.bf16.mxu0 %v261
  %687 = vmatmul.mubr.bf16.gmra.mrb[0].mxu0 %v260
  %v688 = vpop.f32.mrb[0].mxu0
  %v689 = vadd.f32 %v600, %v688
  %v690 = vpop.f32.mrb[0].mxu0
  %v691 = vpop.f32.mrb[0].mxu0
  %v692 = vadd.f32 %v603, %v691
  %v693 = vpop.f32.mrb[0].mxu0
  %694 = vmatprep.mubr.bf16.mxu0 %v266
  %695 = vmatmul.mubr.bf16.gmra.mrb[0].mxu0 %v265
  %v696 = vpop.f32.mrb[0].mxu0
  %v697 = vadd.f32 %v608, %v696
  %v698 = vpop.f32.mrb[0].mxu0
  %v699 = vpop.f32.mrb[0].mxu0
  %v700 = vadd.f32 %v611, %v699
  %v701 = vpop.f32.mrb[0].mxu0
  %702 = vmatprep.mubr.bf16.mxu0 %v271
  %703 = vmatmul.mubr.bf16.gmra.mrb[0].mxu0 %v270
  %v704 = vpop.f32.mrb[0].mxu0
  %v705 = vadd.f32 %v616, %v704
  %v706 = vpop.f32.mrb[0].mxu0
  %v707 = vpop.f32.mrb[0].mxu0
  %v708 = vadd.f32 %v619, %v707
  %v709 = vpop.f32.mrb[0].mxu0
  %710 = vmatprep.mubr.bf16.mxu0 %v276
  %711 = vmatmul.mubr.bf16.gmra.mrb[0].mxu0 %v275
  %v712 = vpop.f32.mrb[0].mxu0
  %v713 = vadd.f32 %v624, %v712
  %v714 = vpop.f32.mrb[0].mxu0
  %v715 = vpop.f32.mrb[0].mxu0
  %v716 = vadd.f32 %v627, %v715
  %v717 = vpop.f32.mrb[0].mxu0
  %718 = vmatprep.mubr.bf16.mxu0 %v281
  %719 = vmatmul.mubr.bf16.gmra.mrb[0].mxu0 %v280
  %v720 = vpop.f32.mrb[0].mxu0
  %v721 = vadd.f32 %v632, %v720
  %v722 = vpop.f32.mrb[0].mxu0
  %v723 = vpop.f32.mrb[0].mxu0
  %v724 = vadd.f32 %v635, %v723
  %v725 = vpop.f32.mrb[0].mxu0
  %726 = vdwg.mxu0
  %727 = vmatprep.subr.bf16.mxu0 0
  %728 = vmatpush1.bf16.msra.mxu0 %v487
  %729 = vmatprep.subr.bf16.mxu0 0
  %730 = vmatpush1.bf16.msra.mxu0 %v488
  %731 = vmatprep.subr.bf16.mxu0 0
  %732 = vmatpush1.bf16.msra.mxu0 %v489
  %733 = vmatprep.subr.bf16.mxu0 0
  %734 = vmatpush1.bf16.msra.mxu0 %v490
  %735 = vmatprep.subr.bf16.mxu0 0
  %736 = vmatpush1.bf16.msra.mxu0 0
  %737 = vmatprep.subr.bf16.mxu0 0
  %738 = vmatpush1.bf16.msra.mxu0 0
  %739 = vmatprep.subr.bf16.mxu0 0
  %740 = vmatpush1.bf16.msra.mxu0 0
  %741 = vmatprep.subr.bf16.mxu0 0
  %742 = vmatpush1.bf16.msra.mxu0 0
  %743 = vmatprep.subr.bf16.mxu0 0
  %744 = vmatpush1.bf16.msra.mxu0 0
  %745 = vmatprep.subr.bf16.mxu0 0
  %746 = vmatpush1.bf16.msra.mxu0 0
  %747 = vmatprep.subr.bf16.mxu0 0
  %748 = vmatpush1.bf16.msra.mxu0 0
  %749 = vmatprep.subr.bf16.mxu0 0
  %750 = vmatpush1.bf16.msra.mxu0 0
  %751 = vmatprep.subr.bf16.mxu0 0
  %752 = vmatpush1.bf16.msra.mxu0 0
  %753 = vmatprep.subr.bf16.mxu0 0
  %754 = vmatpush1.bf16.msra.mxu0 0
  %755 = vmatprep.subr.bf16.mxu0 0
  %756 = vmatpush1.bf16.msra.mxu0 0
  %757 = vmatprep.subr.bf16.mxu0 0
  %758 = vmatpush1.bf16.msra.mxu0 0
  %759 = vmatprep.mubr.bf16.mxu0 0
  %760 = vmatmul.mubr.bf16.gmra.mrb[0].mxu0 %v529
  %v761 = vpop.f32.mrb[0].mxu0
  %v762 = vadd.f32 %v673, %v761
  %v763 = vpop.f32.mrb[0].mxu0
  %v764 = vpop.f32.mrb[0].mxu0
  %v765 = vadd.f32 %v676, %v764
  %v766 = vpop.f32.mrb[0].mxu0
  %767 = vmatprep.mubr.bf16.mxu0 0
  %768 = vmatmul.mubr.bf16.gmra.mrb[0].mxu0 %v532
  %v769 = vpop.f32.mrb[0].mxu0
  %v770 = vadd.f32 %v681, %v769
  %v771 = vpop.f32.mrb[0].mxu0
  %v772 = vpop.f32.mrb[0].mxu0
  %v773 = vadd.f32 %v684, %v772
  %v774 = vpop.f32.mrb[0].mxu0
  %775 = vmatprep.mubr.bf16.mxu0 0
  %776 = vmatmul.mubr.bf16.gmra.mrb[0].mxu0 %v535
  %v777 = vpop.f32.mrb[0].mxu0
  %v778 = vadd.f32 %v689, %v777
  %v779 = vpop.f32.mrb[0].mxu0
  %v780 = vpop.f32.mrb[0].mxu0
  %v781 = vadd.f32 %v692, %v780
  %v782 = vpop.f32.mrb[0].mxu0
  %783 = vmatprep.mubr.bf16.mxu0 0
  %784 = vmatmul.mubr.bf16.gmra.mrb[0].mxu0 %v538
  %v785 = vpop.f32.mrb[0].mxu0
  %v786 = vadd.f32 %v697, %v785
  %v787 = vpop.f32.mrb[0].mxu0
  %v788 = vpop.f32.mrb[0].mxu0
  %v789 = vadd.f32 %v700, %v788
  %v790 = vpop.f32.mrb[0].mxu0
  %791 = vmatprep.mubr.bf16.mxu0 0
  %792 = vmatmul.mubr.bf16.gmra.mrb[0].mxu0 %v541
  %v793 = vpop.f32.mrb[0].mxu0
  %v794 = vadd.f32 %v705, %v793
  %v795 = vpop.f32.mrb[0].mxu0
  %v796 = vpop.f32.mrb[0].mxu0
  %v797 = vadd.f32 %v708, %v796
  %v798 = vpop.f32.mrb[0].mxu0
  %799 = vmatprep.mubr.bf16.mxu0 0
  %800 = vmatmul.mubr.bf16.gmra.mrb[0].mxu0 %v544
  %v801 = vpop.f32.mrb[0].mxu0
  %v802 = vadd.f32 %v713, %v801
  %v803 = vpop.f32.mrb[0].mxu0
  %v804 = vpop.f32.mrb[0].mxu0
  %v805 = vadd.f32 %v716, %v804
  %v806 = vpop.f32.mrb[0].mxu0
  %807 = vmatprep.mubr.bf16.mxu0 0
  %808 = vmatmul.mubr.bf16.gmra.mrb[0].mxu0 %v547
  %v809 = vpop.f32.mrb[0].mxu0
  %v810 = vadd.f32 %v721, %v809
  %v811 = vpop.f32.mrb[0].mxu0
  %v812 = vpop.f32.mrb[0].mxu0
  %v813 = vadd.f32 %v724, %v812
  %v814 = vpop.f32.mrb[0].mxu0
  %815 = vdwg.mxu0
  %vm816 = vcmp.gt.f32.partialorder %v762, 0.0
  %vm817 = vcmp.gt.f32.partialorder %v765, 0.0
  %vm818 = vcmp.gt.f32.partialorder %v770, 0.0
  %vm819 = vcmp.gt.f32.partialorder %v773, 0.0
  %vm820 = vcmp.gt.f32.partialorder %v778, 0.0
  %vm821 = vcmp.gt.f32.partialorder %v781, 0.0
  %vm822 = vcmp.gt.f32.partialorder %v786, 0.0
  %vm823 = vcmp.gt.f32.partialorder %v789, 0.0
  %vm824 = vcmp.gt.f32.partialorder %v794, 0.0
  %vm825 = vcmp.gt.f32.partialorder %v797, 0.0
  %vm826 = vcmp.gt.f32.partialorder %v802, 0.0
  %vm827 = vcmp.gt.f32.partialorder %v805, 0.0
  %vm828 = vcmp.gt.f32.partialorder %v810, 0.0
  %vm829 = vcmp.gt.f32.partialorder %v813, 0.0
  %v830 = vmul.f32 %v762, 0.01
  %v831 = vmul.f32 %v765, 0.01
  %v832 = vmul.f32 %v770, 0.01
  %v833 = vmul.f32 %v773, 0.01
  %v834 = vmul.f32 %v778, 0.01
  %v835 = vmul.f32 %v781, 0.01
  %v836 = vmul.f32 %v786, 0.01
  %v837 = vmul.f32 %v789, 0.01
  %v838 = vmul.f32 %v794, 0.01
  %v839 = vmul.f32 %v797, 0.01
  %v840 = vmul.f32 %v802, 0.01
  %v841 = vmul.f32 %v805, 0.01
  %v842 = vmul.f32 %v810, 0.01
  %v843 = vmul.f32 %v813, 0.01
  %v844 = vsel %vm816, %v762, %v830
  %v845 = vsel %vm817, %v765, %v831
  %v846 = vsel %vm818, %v770, %v832
  %v847 = vsel %vm819, %v773, %v833
  %v848 = vsel %vm820, %v778, %v834
  %v849 = vsel %vm821, %v781, %v835
  %v850 = vsel %vm822, %v786, %v836
  %v851 = vsel %vm823, %v789, %v837
  %v852 = vsel %vm824, %v794, %v838
  %v853 = vsel %vm825, %v797, %v839
  %v854 = vsel %vm826, %v802, %v840
  %v855 = vsel %vm827, %v805, %v841
  %v856 = vsel %vm828, %v810, %v842
  %v857 = vsel %vm829, %v813, %v843
  %858 = vst.msk [vmem:[%s3] sm:$0xff] %vm527, %v844
  %859 = vst.msk [vmem:[%s3 + $0x8] sm:$0xff] %vm527, %v845
  %860 = vst.msk [vmem:[%s3 + $0x10] sm:$0xff] %vm527, %v846
  %861 = vst.msk [vmem:[%s3 + $0x18] sm:$0xff] %vm527, %v847
  %862 = vst.msk [vmem:[%s3 + $0x20] sm:$0xff] %vm527, %v848
  %863 = vst.msk [vmem:[%s3 + $0x28] sm:$0xff] %vm527, %v849
  %864 = vst.msk [vmem:[%s3 + $0x30] sm:$0xff] %vm527, %v850
  %865 = vst.msk [vmem:[%s3 + $0x38] sm:$0xff] %vm527, %v851
  %866 = vst.msk [vmem:[%s3 + $0x40] sm:$0xff] %vm527, %v852
  %867 = vst.msk [vmem:[%s3 + $0x48] sm:$0xff] %vm527, %v853
  %868 = vst.msk [vmem:[%s3 + $0x50] sm:$0xff] %vm527, %v854
  %869 = vst.msk [vmem:[%s3 + $0x58] sm:$0xff] %vm527, %v855
  %870 = vst.msk [vmem:[%s3 + $0x60] sm:$0xff] %vm527, %v856
  %871 = vst.msk [vmem:[%s3 + $0x68] sm:$0xff] %vm527, %v857
  // Predicated region
  $region14: #{vae_forward.11} parent=0 // pred_check
    _
  $region15: #{vae_forward.11} parent=0 // pred_check_branch
    %873 = sbr.rel (0) target = $region17
  $region16: #{vae_forward.11} parent=0 // pred_region
    _
  $region17: #{vae_forward.11} parent=0 // pred_fallthru
    _
  // Predicated region
  $region18: #{vae_forward.11} parent=0 // pred_check
    _
  $region19: #{vae_forward.11} parent=0 // pred_check_branch
    %875 = sbr.rel (0) target = $region21
  $region20: #{vae_forward.11} parent=0 // pred_region
    _
  $region21: #{vae_forward.11} parent=0 // pred_fallthru
    _

// kernel: vae_forward.12
$region0: #{vae_forward.12}
  #allocation0 [shape = 'u32[]', space=smem, size = 0x4, offset = 0x4, fixed_abs, tag = 'smem constant byte address 0x4 - core index']
  #allocation1 [shape = 'u32[144,128]{1,0:T(1,128)}', space=vmem, size = 0x12000, scoped, tag = 'internal scratch']
  %s0 = inlined_call_operand.vmem [shape: bf16[112,576], index: 0, kind: input, shape index: {}]
  %s1 = inlined_call_operand.vmem [shape: bf16[576,64], index: 1, kind: input, shape index: {}]
  %s2 = inlined_call_operand.vmem [shape: f32[1,64], index: 2, kind: input, shape index: {}]
  %s3 = inlined_call_operand.vmem [shape: f32[112,64], index: 3, kind: output, shape index: {}]
  %s4 = sld [smem:[#allocation0]]
  $region22: #{vae_forward.12} parent=0
    _
  %s6 = ssub.s32 1, %s4
  %s7 = scalar_select 0, %s6, %s4
  // Predicated region
  $region2: #{vae_forward.12} parent=0 // pred_check
    _
  $region3: #{vae_forward.12} parent=0 // pred_check_branch
    %9 = sbr.rel (0) target = $region5
  $region4: #{vae_forward.12} parent=0 // pred_region
    _
  $region5: #{vae_forward.12} parent=0 // pred_fallthru
    _
  // Predicated region
  $region6: #{vae_forward.12} parent=0 // pred_check
    _
  $region7: #{vae_forward.12} parent=0 // pred_check_branch
    %11 = sbr.rel (0) target = $region9
  $region8: #{vae_forward.12} parent=0 // pred_region
    _
  $region9: #{vae_forward.12} parent=0 // pred_fallthru
    _
  // Predicated region
  $region10: #{vae_forward.12} parent=0 // pred_check
    _
  $region11: #{vae_forward.12} parent=0 // pred_check_branch
    %13 = sbr.rel (0) target = $region13
  $region12: #{vae_forward.12} parent=0 // pred_region
    _
  $region13: #{vae_forward.12} parent=0 // pred_fallthru
    _
  %v15 = vld [vmem:[%s0] sm:$0xff]
  %v16 = vld [vmem:[%s0 + $0x8] sm:$0xff]
  %v17 = vld [vmem:[%s0 + $0x10] sm:$0xf]
  %v18 = vld [vmem:[%s0 + $0x14] sm:$0xff]
  %v19 = vld [vmem:[%s0 + $0x1c] sm:$0xff]
  %v20 = vld [vmem:[%s0 + $0x24] sm:$0xf]
  %v21 = vld [vmem:[%s0 + $0x28] sm:$0xff]
  %v22 = vld [vmem:[%s0 + $0x30] sm:$0xff]
  %v23 = vld [vmem:[%s0 + $0x38] sm:$0xf]
  %v24 = vld [vmem:[%s0 + $0x3c] sm:$0xff]
  %v25 = vld [vmem:[%s0 + $0x44] sm:$0xff]
  %v26 = vld [vmem:[%s0 + $0x4c] sm:$0xf]
  %v27 = vld [vmem:[%s0 + $0x50] sm:$0xff]
  %v28 = vld [vmem:[%s0 + $0x58] sm:$0xff]
  %v29 = vld [vmem:[%s0 + $0x60] sm:$0xf]
  %v30 = vld [vmem:[%s0 + $0x64] sm:$0xff]
  %v31 = vld [vmem:[%s0 + $0x6c] sm:$0xff]
  %v32 = vld [vmem:[%s0 + $0x74] sm:$0xf]
  %v33 = vld [vmem:[%s0 + $0x78] sm:$0xff]
  %v34 = vld [vmem:[%s0 + $0x80] sm:$0xff]
  %v35 = vld [vmem:[%s0 + $0x88] sm:$0xf]
  %v36 = vld [vmem:[%s0 + $0x8c] sm:$0xff]
  %v37 = vld [vmem:[%s0 + $0x94] sm:$0xff]
  %v38 = vld [vmem:[%s0 + $0x9c] sm:$0xf]
  %v39 = vld [vmem:[%s0 + $0xa0] sm:$0xff]
  %v40 = vld [vmem:[%s0 + $0xa8] sm:$0xff]
  %v41 = vld [vmem:[%s0 + $0xb0] sm:$0xf]
  %v42 = vld [vmem:[%s0 + $0xb4] sm:$0xff]
  %v43 = vld [vmem:[%s0 + $0xbc] sm:$0xff]
  %v44 = vld [vmem:[%s0 + $0xc4] sm:$0xf]
  %v45 = vld [vmem:[%s0 + $0xc8] sm:$0xff]
  %v46 = vld [vmem:[%s0 + $0xd0] sm:$0xff]
  %v47 = vld [vmem:[%s0 + $0xd8] sm:$0xf]
  %v48 = vld [vmem:[%s0 + $0xdc] sm:$0xff]
  %v49 = vld [vmem:[%s0 + $0xe4] sm:$0xff]
  %v50 = vld [vmem:[%s0 + $0xec] sm:$0xf]
  %v51 = vld [vmem:[%s0 + $0xf0] sm:$0xff]
  %v52 = vld [vmem:[%s0 + $0xf8] sm:$0xff]
  %v53 = vld [vmem:[%s0 + $0x100] sm:$0xf]
  %v54 = vld [vmem:[%s0 + $0x104] sm:$0xff]
  %v55 = vld [vmem:[%s0 + $0x10c] sm:$0xff]
  %v56 = vld [vmem:[%s0 + $0x114] sm:$0xf]
  %v57 = vld [vmem:[%s1] sm:$0xf]
  %v58 = vld [vmem:[%s1 + $0x4] sm:$0xf]
  %v59 = vld [vmem:[%s1 + $0x8] sm:$0xf]
  %v60 = vld [vmem:[%s1 + $0xc] sm:$0xf]
  %v61 = vld [vmem:[%s1 + $0x10] sm:$0xf]
  %v62 = vld [vmem:[%s1 + $0x14] sm:$0xf]
  %v63 = vld [vmem:[%s1 + $0x18] sm:$0xf]
  %v64 = vld [vmem:[%s1 + $0x1c] sm:$0xf]
  %v65 = vld [vmem:[%s1 + $0x20] sm:$0xf]
  %v66 = vld [vmem:[%s1 + $0x24] sm:$0xf]
  %v67 = vld [vmem:[%s1 + $0x28] sm:$0xf]
  %v68 = vld [vmem:[%s1 + $0x2c] sm:$0xf]
  %v69 = vld [vmem:[%s1 + $0x30] sm:$0xf]
  %v70 = vld [vmem:[%s1 + $0x34] sm:$0xf]
  %v71 = vld [vmem:[%s1 + $0x38] sm:$0xf]
  %v72 = vld [vmem:[%s1 + $0x3c] sm:$0xf]
  %v73 = vld [vmem:[%s1 + $0x40] sm:$0xf]
  %v74 = vld [vmem:[%s1 + $0x44] sm:$0xf]
  %v75 = vld [vmem:[%s1 + $0x48] sm:$0xf]
  %v76 = vld [vmem:[%s1 + $0x4c] sm:$0xf]
  %v77 = vld [vmem:[%s1 + $0x50] sm:$0xf]
  %v78 = vld [vmem:[%s1 + $0x54] sm:$0xf]
  %v79 = vld [vmem:[%s1 + $0x58] sm:$0xf]
  %v80 = vld [vmem:[%s1 + $0x5c] sm:$0xf]
  %v81 = vld [vmem:[%s1 + $0x60] sm:$0xf]
  %v82 = vld [vmem:[%s1 + $0x64] sm:$0xf]
  %v83 = vld [vmem:[%s1 + $0x68] sm:$0xf]
  %v84 = vld [vmem:[%s1 + $0x6c] sm:$0xf]
  %v85 = vld [vmem:[%s1 + $0x70] sm:$0xf]
  %v86 = vld [vmem:[%s1 + $0x74] sm:$0xf]
  %v87 = vld [vmem:[%s1 + $0x78] sm:$0xf]
  %v88 = vld [vmem:[%s1 + $0x7c] sm:$0xf]
  %v89 = vld [vmem:[%s1 + $0x80] sm:$0xf]
  %v90 = vld [vmem:[%s1 + $0x84] sm:$0xf]
  %v91 = vld [vmem:[%s1 + $0x88] sm:$0xf]
  %v92 = vld [vmem:[%s1 + $0x8c] sm:$0xf]
  %v93 = vld [vmem:[%s1 + $0x90] sm:$0xf]
  %v94 = vld [vmem:[%s1 + $0x94] sm:$0xf]
  %v95 = vld [vmem:[%s1 + $0x98] sm:$0xf]
  %v96 = vld [vmem:[%s1 + $0x9c] sm:$0xf]
  %v97 = vld [vmem:[%s1 + $0xa0] sm:$0xf]
  %v98 = vld [vmem:[%s1 + $0xa4] sm:$0xf]
  %v99 = vld [vmem:[%s1 + $0xa8] sm:$0xf]
  %v100 = vld [vmem:[%s1 + $0xac] sm:$0xf]
  %v101 = vld [vmem:[%s1 + $0xb0] sm:$0xf]
  %v102 = vld [vmem:[%s1 + $0xb4] sm:$0xf]
  %v103 = vld [vmem:[%s1 + $0xb8] sm:$0xf]
  %v104 = vld [vmem:[%s1 + $0xbc] sm:$0xf]
  %v105 = vld [vmem:[%s1 + $0xc0] sm:$0xf]
  %v106 = vld [vmem:[%s1 + $0xc4] sm:$0xf]
  %v107 = vld [vmem:[%s1 + $0xc8] sm:$0xf]
  %v108 = vld [vmem:[%s1 + $0xcc] sm:$0xf]
  %v109 = vld [vmem:[%s1 + $0xd0] sm:$0xf]
  %v110 = vld [vmem:[%s1 + $0xd4] sm:$0xf]
  %v111 = vld [vmem:[%s1 + $0xd8] sm:$0xf]
  %v112 = vld [vmem:[%s1 + $0xdc] sm:$0xf]
  %v113 = vld [vmem:[%s1 + $0xe0] sm:$0xf]
  %v114 = vld [vmem:[%s1 + $0xe4] sm:$0xf]
  %v115 = vld [vmem:[%s1 + $0xe8] sm:$0xf]
  %v116 = vld [vmem:[%s1 + $0xec] sm:$0xf]
  %v117 = vld [vmem:[%s1 + $0xf0] sm:$0xf]
  %v118 = vld [vmem:[%s1 + $0xf4] sm:$0xf]
  %v119 = vld [vmem:[%s1 + $0xf8] sm:$0xf]
  %v120 = vld [vmem:[%s1 + $0xfc] sm:$0xf]
  %v121 = vld [vmem:[%s1 + $0x100] sm:$0xf]
  %v122 = vld [vmem:[%s1 + $0x104] sm:$0xf]
  %v123 = vld [vmem:[%s1 + $0x108] sm:$0xf]
  %v124 = vld [vmem:[%s1 + $0x10c] sm:$0xf]
  %v125 = vld [vmem:[%s1 + $0x110] sm:$0xf]
  %v126 = vld [vmem:[%s1 + $0x114] sm:$0xf]
  %v127 = vld [vmem:[%s1 + $0x118] sm:$0xf]
  %v128 = vld [vmem:[%s1 + $0x11c] sm:$0xf]
  %v129 = vld [vmem:[%s2] sm:$0x1]
  %v131 = vlaneseq
  %v132 = vshrl.u32 %v131, 7
  %v133 = vsub.s32 0, %v132
  %v134 = vrot.slane %v129, %v133
  %v178 = vunpack.c.l.b16 %v15
  %v179 = vunpack.c.h.b16 %v15
  %v180 = vunpack.c.l.b16 %v16
  %v181 = vunpack.c.h.b16 %v16
  %v182 = vunpack.c.l.b16 %v17
  %v183 = vunpack.c.l.b16 %v18
  %v184 = vunpack.c.h.b16 %v18
  %v185 = vunpack.c.l.b16 %v19
  %v186 = vunpack.c.h.b16 %v19
  %v187 = vunpack.c.l.b16 %v20
  %v188 = vunpack.c.l.b16 %v21
  %v189 = vunpack.c.h.b16 %v21
  %v190 = vunpack.c.l.b16 %v22
  %v191 = vunpack.c.h.b16 %v22
  %v192 = vunpack.c.l.b16 %v23
  %v193 = vunpack.c.l.b16 %v24
  %v194 = vunpack.c.h.b16 %v24
  %v195 = vunpack.c.l.b16 %v25
  %v196 = vunpack.c.h.b16 %v25
  %v197 = vunpack.c.l.b16 %v26
  %v198 = vunpack.c.l.b16 %v27
  %v199 = vunpack.c.h.b16 %v27
  %v200 = vunpack.c.l.b16 %v28
  %v201 = vunpack.c.h.b16 %v28
  %v202 = vunpack.c.l.b16 %v29
  %v203 = vunpack.c.l.b16 %v30
  %v204 = vunpack.c.h.b16 %v30
  %v205 = vunpack.c.l.b16 %v31
  %v206 = vunpack.c.h.b16 %v31
  %v207 = vunpack.c.l.b16 %v32
  %v208 = vunpack.c.l.b16 %v33
  %v209 = vunpack.c.h.b16 %v33
  %v210 = vunpack.c.l.b16 %v34
  %v211 = vunpack.c.h.b16 %v34
  %v212 = vunpack.c.l.b16 %v35
  %v213 = vunpack.c.l.b16 %v36
  %v214 = vunpack.c.h.b16 %v36
  %v215 = vunpack.c.l.b16 %v37
  %v216 = vunpack.c.h.b16 %v37
  %v217 = vunpack.c.l.b16 %v38
  %v218 = vunpack.c.l.b16 %v39
  %v219 = vunpack.c.h.b16 %v39
  %v220 = vunpack.c.l.b16 %v40
  %v221 = vunpack.c.h.b16 %v40
  %v222 = vunpack.c.l.b16 %v41
  %v223 = vunpack.c.l.b16 %v42
  %v224 = vunpack.c.h.b16 %v42
  %v225 = vunpack.c.l.b16 %v43
  %v226 = vunpack.c.h.b16 %v43
  %v227 = vunpack.c.l.b16 %v44
  %v228 = vunpack.c.l.b16 %v45
  %v229 = vunpack.c.h.b16 %v45
  %v230 = vunpack.c.l.b16 %v46
  %v231 = vunpack.c.h.b16 %v46
  %v232 = vunpack.c.l.b16 %v47
  %v233 = vunpack.c.l.b16 %v48
  %v234 = vunpack.c.h.b16 %v48
  %v235 = vunpack.c.l.b16 %v49
  %v236 = vunpack.c.h.b16 %v49
  %v237 = vunpack.c.l.b16 %v50
  %v238 = vunpack.c.l.b16 %v51
  %v239 = vunpack.c.h.b16 %v51
  %v240 = vunpack.c.l.b16 %v52
  %v241 = vunpack.c.h.b16 %v52
  %v242 = vunpack.c.l.b16 %v53
  %v243 = vunpack.c.l.b16 %v54
  %v244 = vunpack.c.h.b16 %v54
  %v245 = vunpack.c.l.b16 %v55
  %v246 = vunpack.c.h.b16 %v55
  %v247 = vunpack.c.l.b16 %v56
  %v248 = vpack.c.b16 %v183, %v178
  %v249 = vpack.c.b16 %v184, %v179
  %v250 = vpack.c.b16 %v185, %v180
  %v251 = vpack.c.b16 %v186, %v181
  %v252 = vpack.c.b16 %v187, %v182
  %v253 = vpack.c.b16 %v193, %v188
  %v254 = vpack.c.b16 %v194, %v189
  %v255 = vpack.c.b16 %v195, %v190
  %v256 = vpack.c.b16 %v196, %v191
  %v257 = vpack.c.b16 %v197, %v192
  %v258 = vpack.c.b16 %v203, %v198
  %v259 = vpack.c.b16 %v204, %v199
  %v260 = vpack.c.b16 %v205, %v200
  %v261 = vpack.c.b16 %v206, %v201
  %v262 = vpack.c.b16 %v207, %v202
  %v263 = vpack.c.b16 %v213, %v208
  %v264 = vpack.c.b16 %v214, %v209
  %v265 = vpack.c.b16 %v215, %v210
  %v266 = vpack.c.b16 %v216, %v211
  %v267 = vpack.c.b16 %v217, %v212
  %v268 = vpack.c.b16 %v223, %v218
  %v269 = vpack.c.b16 %v224, %v219
  %v270 = vpack.c.b16 %v225, %v220
  %v271 = vpack.c.b16 %v226, %v221
  %v272 = vpack.c.b16 %v227, %v222
  %v273 = vpack.c.b16 %v233, %v228
  %v274 = vpack.c.b16 %v234, %v229
  %v275 = vpack.c.b16 %v235, %v230
  %v276 = vpack.c.b16 %v236, %v231
  %v277 = vpack.c.b16 %v237, %v232
  %v278 = vpack.c.b16 %v243, %v238
  %v279 = vpack.c.b16 %v244, %v239
  %v280 = vpack.c.b16 %v245, %v240
  %v281 = vpack.c.b16 %v246, %v241
  %v282 = vpack.c.b16 %v247, %v242
  %v383 = vunpack.c.l.b16 %v57
  %v384 = vunpack.c.l.b16 %v58
  %v385 = vunpack.c.l.b16 %v59
  %v386 = vunpack.c.l.b16 %v60
  %v387 = vunpack.c.l.b16 %v61
  %v388 = vunpack.c.l.b16 %v62
  %v389 = vunpack.c.l.b16 %v63
  %v390 = vunpack.c.l.b16 %v64
  %v391 = vunpack.c.l.b16 %v65
  %v392 = vunpack.c.l.b16 %v66
  %v393 = vunpack.c.l.b16 %v67
  %v394 = vunpack.c.l.b16 %v68
  %v395 = vunpack.c.l.b16 %v69
  %v396 = vunpack.c.l.b16 %v70
  %v397 = vunpack.c.l.b16 %v71
  %v398 = vunpack.c.l.b16 %v72
  %v399 = vunpack.c.l.b16 %v73
  %v400 = vunpack.c.l.b16 %v74
  %v401 = vunpack.c.l.b16 %v75
  %v402 = vunpack.c.l.b16 %v76
  %v403 = vunpack.c.l.b16 %v77
  %v404 = vunpack.c.l.b16 %v78
  %v405 = vunpack.c.l.b16 %v79
  %v406 = vunpack.c.l.b16 %v80
  %v407 = vunpack.c.l.b16 %v81
  %v408 = vunpack.c.l.b16 %v82
  %v409 = vunpack.c.l.b16 %v83
  %v410 = vunpack.c.l.b16 %v84
  %v411 = vunpack.c.l.b16 %v85
  %v412 = vunpack.c.l.b16 %v86
  %v413 = vunpack.c.l.b16 %v87
  %v414 = vunpack.c.l.b16 %v88
  %v415 = vunpack.c.l.b16 %v89
  %v416 = vunpack.c.l.b16 %v90
  %v417 = vunpack.c.l.b16 %v91
  %v418 = vunpack.c.l.b16 %v92
  %v419 = vunpack.c.l.b16 %v93
  %v420 = vunpack.c.l.b16 %v94
  %v421 = vunpack.c.l.b16 %v95
  %v422 = vunpack.c.l.b16 %v96
  %v423 = vunpack.c.l.b16 %v97
  %v424 = vunpack.c.l.b16 %v98
  %v425 = vunpack.c.l.b16 %v99
  %v426 = vunpack.c.l.b16 %v100
  %v427 = vunpack.c.l.b16 %v101
  %v428 = vunpack.c.l.b16 %v102
  %v429 = vunpack.c.l.b16 %v103
  %v430 = vunpack.c.l.b16 %v104
  %v431 = vunpack.c.l.b16 %v105
  %v432 = vunpack.c.l.b16 %v106
  %v433 = vunpack.c.l.b16 %v107
  %v434 = vunpack.c.l.b16 %v108
  %v435 = vunpack.c.l.b16 %v109
  %v436 = vunpack.c.l.b16 %v110
  %v437 = vunpack.c.l.b16 %v111
  %v438 = vunpack.c.l.b16 %v112
  %v439 = vunpack.c.l.b16 %v113
  %v440 = vunpack.c.l.b16 %v114
  %v441 = vunpack.c.l.b16 %v115
  %v442 = vunpack.c.l.b16 %v116
  %v443 = vunpack.c.l.b16 %v117
  %v444 = vunpack.c.l.b16 %v118
  %v445 = vunpack.c.l.b16 %v119
  %v446 = vunpack.c.l.b16 %v120
  %v447 = vunpack.c.l.b16 %v121
  %v448 = vunpack.c.l.b16 %v122
  %v449 = vunpack.c.l.b16 %v123
  %v450 = vunpack.c.l.b16 %v124
  %v451 = vunpack.c.l.b16 %v125
  %v452 = vunpack.c.l.b16 %v126
  %v453 = vunpack.c.l.b16 %v127
  %v454 = vunpack.c.l.b16 %v128
  %v455 = vpack.c.b16 %v384, %v383
  %v456 = vpack.c.b16 %v386, %v385
  %v457 = vpack.c.b16 %v388, %v387
  %v458 = vpack.c.b16 %v390, %v389
  %v459 = vpack.c.b16 %v392, %v391
  %v460 = vpack.c.b16 %v394, %v393
  %v461 = vpack.c.b16 %v396, %v395
  %v462 = vpack.c.b16 %v398, %v397
  %v463 = vpack.c.b16 %v400, %v399
  %v464 = vpack.c.b16 %v402, %v401
  %v465 = vpack.c.b16 %v404, %v403
  %v466 = vpack.c.b16 %v406, %v405
  %v467 = vpack.c.b16 %v408, %v407
  %v468 = vpack.c.b16 %v410, %v409
  %v469 = vpack.c.b16 %v412, %v411
  %v470 = vpack.c.b16 %v414, %v413
  %v471 = vpack.c.b16 %v416, %v415
  %v472 = vpack.c.b16 %v418, %v417
  %v473 = vpack.c.b16 %v420, %v419
  %v474 = vpack.c.b16 %v422, %v421
  %v475 = vpack.c.b16 %v424, %v423
  %v476 = vpack.c.b16 %v426, %v425
  %v477 = vpack.c.b16 %v428, %v427
  %v478 = vpack.c.b16 %v430, %v429
  %v479 = vpack.c.b16 %v432, %v431
  %v480 = vpack.c.b16 %v434, %v433
  %v481 = vpack.c.b16 %v436, %v435
  %v482 = vpack.c.b16 %v438, %v437
  %v483 = vpack.c.b16 %v440, %v439
  %v484 = vpack.c.b16 %v442, %v441
  %v485 = vpack.c.b16 %v444, %v443
  %v486 = vpack.c.b16 %v446, %v445
  %v487 = vpack.c.b16 %v448, %v447
  %v488 = vpack.c.b16 %v450, %v449
  %v489 = vpack.c.b16 %v452, %v451
  %v490 = vpack.c.b16 %v454, %v453
  %vm527 = vcmask 523264
  %v529 = vsel %vm527, %v252, 0
  %v532 = vsel %vm527, %v257, 0
  %v535 = vsel %vm527, %v262, 0
  %v538 = vsel %vm527, %v267, 0
  %v541 = vsel %vm527, %v272, 0
  %v544 = vsel %vm527, %v277, 0
  %v547 = vsel %vm527, %v282, 0
  %549 = vmatprep.subr.bf16.mxu0 0
  %550 = vmatpush1.bf16.msra.mxu0 %v455
  %551 = vmatprep.subr.bf16.mxu0 0
  %552 = vmatpush1.bf16.msra.mxu0 %v456
  %553 = vmatprep.subr.bf16.mxu0 0
  %554 = vmatpush1.bf16.msra.mxu0 %v457
  %555 = vmatprep.subr.bf16.mxu0 0
  %556 = vmatpush1.bf16.msra.mxu0 %v458
  %557 = vmatprep.subr.bf16.mxu0 0
  %558 = vmatpush1.bf16.msra.mxu0 %v459
  %559 = vmatprep.subr.bf16.mxu0 0
  %560 = vmatpush1.bf16.msra.mxu0 %v460
  %561 = vmatprep.subr.bf16.mxu0 0
  %562 = vmatpush1.bf16.msra.mxu0 %v461
  %563 = vmatprep.subr.bf16.mxu0 0
  %564 = vmatpush1.bf16.msra.mxu0 %v462
  %565 = vmatprep.subr.bf16.mxu0 0
  %566 = vmatpush1.bf16.msra.mxu0 %v463
  %567 = vmatprep.subr.bf16.mxu0 0
  %568 = vmatpush1.bf16.msra.mxu0 %v464
  %569 = vmatprep.subr.bf16.mxu0 0
  %570 = vmatpush1.bf16.msra.mxu0 %v465
  %571 = vmatprep.subr.bf16.mxu0 0
  %572 = vmatpush1.bf16.msra.mxu0 %v466
  %573 = vmatprep.subr.bf16.mxu0 0
  %574 = vmatpush1.bf16.msra.mxu0 %v467
  %575 = vmatprep.subr.bf16.mxu0 0
  %576 = vmatpush1.bf16.msra.mxu0 %v468
  %577 = vmatprep.subr.bf16.mxu0 0
  %578 = vmatpush1.bf16.msra.mxu0 %v469
  %579 = vmatprep.subr.bf16.mxu0 0
  %580 = vmatpush1.bf16.msra.mxu0 %v470
  %581 = vmatprep.mubr.bf16.mxu0 %v249
  %582 = vmatmul.mubr.bf16.gmra.mrb[0].mxu0 %v248
  %v583 = vpop.f32.mrb[0].mxu0
  %v584 = vadd.f32 %v134, %v583
  %v585 = vpop.f32.mrb[0].mxu0
  %v586 = vpop.f32.mrb[0].mxu0
  %v587 = vadd.f32 %v134, %v586
  %v588 = vpop.f32.mrb[0].mxu0
  %589 = vmatprep.mubr.bf16.mxu0 %v254
  %590 = vmatmul.mubr.bf16.gmra.mrb[0].mxu0 %v253
  %v591 = vpop.f32.mrb[0].mxu0
  %v592 = vadd.f32 %v134, %v591
  %v593 = vpop.f32.mrb[0].mxu0
  %v594 = vpop.f32.mrb[0].mxu0
  %v595 = vadd.f32 %v134, %v594
  %v596 = vpop.f32.mrb[0].mxu0
  %597 = vmatprep.mubr.bf16.mxu0 %v259
  %598 = vmatmul.mubr.bf16.gmra.mrb[0].mxu0 %v258
  %v599 = vpop.f32.mrb[0].mxu0
  %v600 = vadd.f32 %v134, %v599
  %v601 = vpop.f32.mrb[0].mxu0
  %v602 = vpop.f32.mrb[0].mxu0
  %v603 = vadd.f32 %v134, %v602
  %v604 = vpop.f32.mrb[0].mxu0
  %605 = vmatprep.mubr.bf16.mxu0 %v264
  %606 = vmatmul.mubr.bf16.gmra.mrb[0].mxu0 %v263
  %v607 = vpop.f32.mrb[0].mxu0
  %v608 = vadd.f32 %v134, %v607
  %v609 = vpop.f32.mrb[0].mxu0
  %v610 = vpop.f32.mrb[0].mxu0
  %v611 = vadd.f32 %v134, %v610
  %v612 = vpop.f32.mrb[0].mxu0
  %613 = vmatprep.mubr.bf16.mxu0 %v269
  %614 = vmatmul.mubr.bf16.gmra.mrb[0].mxu0 %v268
  %v615 = vpop.f32.mrb[0].mxu0
  %v616 = vadd.f32 %v134, %v615
  %v617 = vpop.f32.mrb[0].mxu0
  %v618 = vpop.f32.mrb[0].mxu0
  %v619 = vadd.f32 %v134, %v618
  %v620 = vpop.f32.mrb[0].mxu0
  %621 = vmatprep.mubr.bf16.mxu0 %v274
  %622 = vmatmul.mubr.bf16.gmra.mrb[0].mxu0 %v273
  %v623 = vpop.f32.mrb[0].mxu0
  %v624 = vadd.f32 %v134, %v623
  %v625 = vpop.f32.mrb[0].mxu0
  %v626 = vpop.f32.mrb[0].mxu0
  %v627 = vadd.f32 %v134, %v626
  %v628 = vpop.f32.mrb[0].mxu0
  %629 = vmatprep.mubr.bf16.mxu0 %v279
  %630 = vmatmul.mubr.bf16.gmra.mrb[0].mxu0 %v278
  %v631 = vpop.f32.mrb[0].mxu0
  %v632 = vadd.f32 %v134, %v631
  %v633 = vpop.f32.mrb[0].mxu0
  %v634 = vpop.f32.mrb[0].mxu0
  %v635 = vadd.f32 %v134, %v634
  %v636 = vpop.f32.mrb[0].mxu0
  %637 = vdwg.mxu0
  %638 = vmatprep.subr.bf16.mxu0 0
  %639 = vmatpush1.bf16.msra.mxu0 %v471
  %640 = vmatprep.subr.bf16.mxu0 0
  %641 = vmatpush1.bf16.msra.mxu0 %v472
  %642 = vmatprep.subr.bf16.mxu0 0
  %643 = vmatpush1.bf16.msra.mxu0 %v473
  %644 = vmatprep.subr.bf16.mxu0 0
  %645 = vmatpush1.bf16.msra.mxu0 %v474
  %646 = vmatprep.subr.bf16.mxu0 0
  %647 = vmatpush1.bf16.msra.mxu0 %v475
  %648 = vmatprep.subr.bf16.mxu0 0
  %649 = vmatpush1.bf16.msra.mxu0 %v476
  %650 = vmatprep.subr.bf16.mxu0 0
  %651 = vmatpush1.bf16.msra.mxu0 %v477
  %652 = vmatprep.subr.bf16.mxu0 0
  %653 = vmatpush1.bf16.msra.mxu0 %v478
  %654 = vmatprep.subr.bf16.mxu0 0
  %655 = vmatpush1.bf16.msra.mxu0 %v479
  %656 = vmatprep.subr.bf16.mxu0 0
  %657 = vmatpush1.bf16.msra.mxu0 %v480
  %658 = vmatprep.subr.bf16.mxu0 0
  %659 = vmatpush1.bf16.msra.mxu0 %v481
  %660 = vmatprep.subr.bf16.mxu0 0
  %661 = vmatpush1.bf16.msra.mxu0 %v482
  %662 = vmatprep.subr.bf16.mxu0 0
  %663 = vmatpush1.bf16.msra.mxu0 %v483
  %664 = vmatprep.subr.bf16.mxu0 0
  %665 = vmatpush1.bf16.msra.mxu0 %v484
  %666 = vmatprep.subr.bf16.mxu0 0
  %667 = vmatpush1.bf16.msra.mxu0 %v485
  %668 = vmatprep.subr.bf16.mxu0 0
  %669 = vmatpush1.bf16.msra.mxu0 %v486
  %670 = vmatprep.mubr.bf16.mxu0 %v251
  %671 = vmatmul.mubr.bf16.gmra.mrb[0].mxu0 %v250
  %v672 = vpop.f32.mrb[0].mxu0
  %v673 = vadd.f32 %v584, %v672
  %v674 = vpop.f32.mrb[0].mxu0
  %v675 = vpop.f32.mrb[0].mxu0
  %v676 = vadd.f32 %v587, %v675
  %v677 = vpop.f32.mrb[0].mxu0
  %678 = vmatprep.mubr.bf16.mxu0 %v256
  %679 = vmatmul.mubr.bf16.gmra.mrb[0].mxu0 %v255
  %v680 = vpop.f32.mrb[0].mxu0
  %v681 = vadd.f32 %v592, %v680
  %v682 = vpop.f32.mrb[0].mxu0
  %v683 = vpop.f32.mrb[0].mxu0
  %v684 = vadd.f32 %v595, %v683
  %v685 = vpop.f32.mrb[0].mxu0
  %686 = vmatprep.mubr.bf16.mxu0 %v261
  %687 = vmatmul.mubr.bf16.gmra.mrb[0].mxu0 %v260
  %v688 = vpop.f32.mrb[0].mxu0
  %v689 = vadd.f32 %v600, %v688
  %v690 = vpop.f32.mrb[0].mxu0
  %v691 = vpop.f32.mrb[0].mxu0
  %v692 = vadd.f32 %v603, %v691
  %v693 = vpop.f32.mrb[0].mxu0
  %694 = vmatprep.mubr.bf16.mxu0 %v266
  %695 = vmatmul.mubr.bf16.gmra.mrb[0].mxu0 %v265
  %v696 = vpop.f32.mrb[0].mxu0
  %v697 = vadd.f32 %v608, %v696
  %v698 = vpop.f32.mrb[0].mxu0
  %v699 = vpop.f32.mrb[0].mxu0
  %v700 = vadd.f32 %v611, %v699
  %v701 = vpop.f32.mrb[0].mxu0
  %702 = vmatprep.mubr.bf16.mxu0 %v271
  %703 = vmatmul.mubr.bf16.gmra.mrb[0].mxu0 %v270
  %v704 = vpop.f32.mrb[0].mxu0
  %v705 = vadd.f32 %v616, %v704
  %v706 = vpop.f32.mrb[0].mxu0
  %v707 = vpop.f32.mrb[0].mxu0
  %v708 = vadd.f32 %v619, %v707
  %v709 = vpop.f32.mrb[0].mxu0
  %710 = vmatprep.mubr.bf16.mxu0 %v276
  %711 = vmatmul.mubr.bf16.gmra.mrb[0].mxu0 %v275
  %v712 = vpop.f32.mrb[0].mxu0
  %v713 = vadd.f32 %v624, %v712
  %v714 = vpop.f32.mrb[0].mxu0
  %v715 = vpop.f32.mrb[0].mxu0
  %v716 = vadd.f32 %v627, %v715
  %v717 = vpop.f32.mrb[0].mxu0
  %718 = vmatprep.mubr.bf16.mxu0 %v281
  %719 = vmatmul.mubr.bf16.gmra.mrb[0].mxu0 %v280
  %v720 = vpop.f32.mrb[0].mxu0
  %v721 = vadd.f32 %v632, %v720
  %v722 = vpop.f32.mrb[0].mxu0
  %v723 = vpop.f32.mrb[0].mxu0
  %v724 = vadd.f32 %v635, %v723
  %v725 = vpop.f32.mrb[0].mxu0
  %726 = vdwg.mxu0
  %727 = vmatprep.subr.bf16.mxu0 0
  %728 = vmatpush1.bf16.msra.mxu0 %v487
  %729 = vmatprep.subr.bf16.mxu0 0
  %730 = vmatpush1.bf16.msra.mxu0 %v488
  %731 = vmatprep.subr.bf16.mxu0 0
  %732 = vmatpush1.bf16.msra.mxu0 %v489
  %733 = vmatprep.subr.bf16.mxu0 0
  %734 = vmatpush1.bf16.msra.mxu0 %v490
  %735 = vmatprep.subr.bf16.mxu0 0
  %736 = vmatpush1.bf16.msra.mxu0 0
  %737 = vmatprep.subr.bf16.mxu0 0
  %738 = vmatpush1.bf16.msra.mxu0 0
  %739 = vmatprep.subr.bf16.mxu0 0
  %740 = vmatpush1.bf16.msra.mxu0 0
  %741 = vmatprep.subr.bf16.mxu0 0
  %742 = vmatpush1.bf16.msra.mxu0 0
  %743 = vmatprep.subr.bf16.mxu0 0
  %744 = vmatpush1.bf16.msra.mxu0 0
  %745 = vmatprep.subr.bf16.mxu0 0
  %746 = vmatpush1.bf16.msra.mxu0 0
  %747 = vmatprep.subr.bf16.mxu0 0
  %748 = vmatpush1.bf16.msra.mxu0 0
  %749 = vmatprep.subr.bf16.mxu0 0
  %750 = vmatpush1.bf16.msra.mxu0 0
  %751 = vmatprep.subr.bf16.mxu0 0
  %752 = vmatpush1.bf16.msra.mxu0 0
  %753 = vmatprep.subr.bf16.mxu0 0
  %754 = vmatpush1.bf16.msra.mxu0 0
  %755 = vmatprep.subr.bf16.mxu0 0
  %756 = vmatpush1.bf16.msra.mxu0 0
  %757 = vmatprep.subr.bf16.mxu0 0
  %758 = vmatpush1.bf16.msra.mxu0 0
  %759 = vmatprep.mubr.bf16.mxu0 0
  %760 = vmatmul.mubr.bf16.gmra.mrb[0].mxu0 %v529
  %v761 = vpop.f32.mrb[0].mxu0
  %v762 = vadd.f32 %v673, %v761
  %v763 = vpop.f32.mrb[0].mxu0
  %v764 = vpop.f32.mrb[0].mxu0
  %v765 = vadd.f32 %v676, %v764
  %v766 = vpop.f32.mrb[0].mxu0
  %767 = vmatprep.mubr.bf16.mxu0 0
  %768 = vmatmul.mubr.bf16.gmra.mrb[0].mxu0 %v532
  %v769 = vpop.f32.mrb[0].mxu0
  %v770 = vadd.f32 %v681, %v769
  %v771 = vpop.f32.mrb[0].mxu0
  %v772 = vpop.f32.mrb[0].mxu0
  %v773 = vadd.f32 %v684, %v772
  %v774 = vpop.f32.mrb[0].mxu0
  %775 = vmatprep.mubr.bf16.mxu0 0
  %776 = vmatmul.mubr.bf16.gmra.mrb[0].mxu0 %v535
  %v777 = vpop.f32.mrb[0].mxu0
  %v778 = vadd.f32 %v689, %v777
  %v779 = vpop.f32.mrb[0].mxu0
  %v780 = vpop.f32.mrb[0].mxu0
  %v781 = vadd.f32 %v692, %v780
  %v782 = vpop.f32.mrb[0].mxu0
  %783 = vmatprep.mubr.bf16.mxu0 0
  %784 = vmatmul.mubr.bf16.gmra.mrb[0].mxu0 %v538
  %v785 = vpop.f32.mrb[0].mxu0
  %v786 = vadd.f32 %v697, %v785
  %v787 = vpop.f32.mrb[0].mxu0
  %v788 = vpop.f32.mrb[0].mxu0
  %v789 = vadd.f32 %v700, %v788
  %v790 = vpop.f32.mrb[0].mxu0
  %791 = vmatprep.mubr.bf16.mxu0 0
  %792 = vmatmul.mubr.bf16.gmra.mrb[0].mxu0 %v541
  %v793 = vpop.f32.mrb[0].mxu0
  %v794 = vadd.f32 %v705, %v793
  %v795 = vpop.f32.mrb[0].mxu0
  %v796 = vpop.f32.mrb[0].mxu0
  %v797 = vadd.f32 %v708, %v796
  %v798 = vpop.f32.mrb[0].mxu0
  %799 = vmatprep.mubr.bf16.mxu0 0
  %800 = vmatmul.mubr.bf16.gmra.mrb[0].mxu0 %v544
  %v801 = vpop.f32.mrb[0].mxu0
  %v802 = vadd.f32 %v713, %v801
  %v803 = vpop.f32.mrb[0].mxu0
  %v804 = vpop.f32.mrb[0].mxu0
  %v805 = vadd.f32 %v716, %v804
  %v806 = vpop.f32.mrb[0].mxu0
  %807 = vmatprep.mubr.bf16.mxu0 0
  %808 = vmatmul.mubr.bf16.gmra.mrb[0].mxu0 %v547
  %v809 = vpop.f32.mrb[0].mxu0
  %v810 = vadd.f32 %v721, %v809
  %v811 = vpop.f32.mrb[0].mxu0
  %v812 = vpop.f32.mrb[0].mxu0
  %v813 = vadd.f32 %v724, %v812
  %v814 = vpop.f32.mrb[0].mxu0
  %815 = vdwg.mxu0
  %816 = vst.msk [vmem:[%s3] sm:$0xff] %vm527, %v762
  %817 = vst.msk [vmem:[%s3 + $0x8] sm:$0xff] %vm527, %v765
  %818 = vst.msk [vmem:[%s3 + $0x10] sm:$0xff] %vm527, %v770
  %819 = vst.msk [vmem:[%s3 + $0x18] sm:$0xff] %vm527, %v773
  %820 = vst.msk [vmem:[%s3 + $0x20] sm:$0xff] %vm527, %v778
  %821 = vst.msk [vmem:[%s3 + $0x28] sm:$0xff] %vm527, %v781
  %822 = vst.msk [vmem:[%s3 + $0x30] sm:$0xff] %vm527, %v786
  %823 = vst.msk [vmem:[%s3 + $0x38] sm:$0xff] %vm527, %v789
  %824 = vst.msk [vmem:[%s3 + $0x40] sm:$0xff] %vm527, %v794
  %825 = vst.msk [vmem:[%s3 + $0x48] sm:$0xff] %vm527, %v797
  %826 = vst.msk [vmem:[%s3 + $0x50] sm:$0xff] %vm527, %v802
  %827 = vst.msk [vmem:[%s3 + $0x58] sm:$0xff] %vm527, %v805
  %828 = vst.msk [vmem:[%s3 + $0x60] sm:$0xff] %vm527, %v810
  %829 = vst.msk [vmem:[%s3 + $0x68] sm:$0xff] %vm527, %v813
  // Predicated region
  $region14: #{vae_forward.12} parent=0 // pred_check
    _
  $region15: #{vae_forward.12} parent=0 // pred_check_branch
    %831 = sbr.rel (0) target = $region17
  $region16: #{vae_forward.12} parent=0 // pred_region
    _
  $region17: #{vae_forward.12} parent=0 // pred_fallthru
    _
  // Predicated region
  $region18: #{vae_forward.12} parent=0 // pred_check
    _
  $region19: #{vae_forward.12} parent=0 // pred_check_branch
    %833 = sbr.rel (0) target = $region21
  $region20: #{vae_forward.12} parent=0 // pred_region
    _
  $region21: #{vae_forward.12} parent=0 // pred_fallthru
    _

// kernel: vae_forward.13
$region0: #{vae_forward.13}
  #allocation0 [shape = 'u32[]', space=smem, size = 0x4, offset = 0x4, fixed_abs, tag = 'smem constant byte address 0x4 - core index']
  #allocation1 [shape = 'u32[144,128]{1,0:T(1,128)}', space=vmem, size = 0x12000, scoped, tag = 'internal scratch']
  %s0 = inlined_call_operand.vmem [shape: f32[2,3136], index: 0, kind: input, shape index: {}]
  %s1 = inlined_call_operand.vmem [shape: f32[3136,4], index: 1, kind: input, shape index: {}]
  %s2 = inlined_call_operand.vmem [shape: f32[1,4], index: 2, kind: input, shape index: {}]
  %s3 = inlined_call_operand.vmem [shape: f32[2,2], index: 3, kind: input, shape index: {}]
  %s4 = inlined_call_operand.vmem [shape: f32[2,3136], index: 4, kind: input, shape index: {}]
  %s5 = inlined_call_operand.vmem [shape: f32[1,3136], index: 5, kind: input, shape index: {}]
  %s6 = inlined_call_operand.hbm [shape: f32[2,2], index: 6, kind: output, shape index: {0}]
  %s7 = inlined_call_operand.hbm [shape: f32[2,2], index: 7, kind: output, shape index: {1}]
  %s8 = inlined_call_operand.hbm [shape: f32[2,2], index: 8, kind: output, shape index: {2}]
  %s9 = inlined_call_operand.vmem [shape: f32[2,3136], index: 9, kind: output, shape index: {3}]
  %10 = xla_tuple %s6, %s7, %s8, %s9
  %s11 = sld [smem:[#allocation0]]
  $region58: #{vae_forward.13} parent=0
    _
  %s13 = ssub.s32 1, %s11
  %s14 = scalar_select 0, %s13, %s11
  $region1: #{vae_forward.13} parent=0
    #allocation2 [shape = 'u8[1024]{0}', space=vmem, size = 0x400, scoped, tag = 'output window, operand 0, single buffered']
    #allocation3 [shape = 's32[1]{0}', space=sflag, size = 0x4, scoped, tag = 'scoped memory for vae_forward.13']
    #allocation4 [shape = 'u8[1024]{0}', space=vmem, size = 0x400, scoped, tag = 'output window, operand 1, single buffered']
    #allocation5 [shape = 's32[1]{0}', space=sflag, size = 0x4, scoped, tag = 'scoped memory for vae_forward.13']
    #allocation6 [shape = 'u8[1024]{0}', space=vmem, size = 0x400, scoped, tag = 'output window, operand 2, single buffered']
    %15 = vsyncpa [#allocation3], 0
    %16 = vsyncpa [#allocation5], 0
    // Predicated region
    $region2: #{vae_forward.13} parent=1 // pred_check
      _
    $region3: #{vae_forward.13} parent=1 // pred_check_branch
      %18 = sbr.rel (0) target = $region5
    $region4: #{vae_forward.13} parent=1 // pred_region
      _
    $region5: #{vae_forward.13} parent=1 // pred_fallthru
      _
    // Predicated region
    $region6: #{vae_forward.13} parent=1 // pred_check
      _
    $region7: #{vae_forward.13} parent=1 // pred_check_branch
      %20 = sbr.rel (0) target = $region9
    $region8: #{vae_forward.13} parent=1 // pred_region
      _
    $region9: #{vae_forward.13} parent=1 // pred_fallthru
      _
    // Predicated region
    $region10: #{vae_forward.13} parent=1 // pred_check
      _
    $region11: #{vae_forward.13} parent=1 // pred_check_branch
      %22 = sbr.rel (0) target = $region13
    $region12: #{vae_forward.13} parent=1 // pred_region
      _
    $region13: #{vae_forward.13} parent=1 // pred_fallthru
      _
    // Predicated region
    $region14: #{vae_forward.13} parent=1 // pred_check
      _
    $region15: #{vae_forward.13} parent=1 // pred_check_branch
      %24 = sbr.rel (0) target = $region17
    $region16: #{vae_forward.13} parent=1 // pred_region
      _
    $region17: #{vae_forward.13} parent=1 // pred_fallthru
      _
    // Predicated region
    $region18: #{vae_forward.13} parent=1 // pred_check
      _
    $region19: #{vae_forward.13} parent=1 // pred_check_branch
      %26 = sbr.rel (0) target = $region21
    $region20: #{vae_forward.13} parent=1 // pred_region
      _
    $region21: #{vae_forward.13} parent=1 // pred_fallthru
      _
    // Predicated region
    $region22: #{vae_forward.13} parent=1 // pred_check
      _
    $region23: #{vae_forward.13} parent=1 // pred_check_branch
      %28 = sbr.rel (0) target = $region25
    $region24: #{vae_forward.13} parent=1 // pred_region
      _
    $region25: #{vae_forward.13} parent=1 // pred_fallthru
      _
    %v29 = vld [vmem:[%s0] sm:$0xff]
    %v30 = vld [vmem:[%s0 + $0x8] sm:$0xff]
    %v31 = vld [vmem:[%s0 + $0x10] sm:$0xff]
    %v32 = vld [vmem:[%s0 + $0x18] sm:$0xff]
    %v33 = vld [vmem:[%s0 + $0x20] sm:$0xff]
    %v34 = vld [vmem:[%s0 + $0x28] sm:$0xff]
    %v35 = vld [vmem:[%s0 + $0x30] sm:$0x3]
    %v36 = vld [vmem:[%s1] sm:$0xff]
    %v37 = vld [vmem:[%s1 + $0x8] sm:$0xff]
    %v38 = vld [vmem:[%s1 + $0x10] sm:$0xff]
    %v39 = vld [vmem:[%s1 + $0x18] sm:$0xff]
    %v40 = vld [vmem:[%s1 + $0x20] sm:$0xff]
    %v41 = vld [vmem:[%s1 + $0x28] sm:$0xff]
    %v42 = vld [vmem:[%s1 + $0x30] sm:$0xff]
    %v43 = vld [vmem:[%s1 + $0x38] sm:$0xff]
    %v44 = vld [vmem:[%s1 + $0x40] sm:$0xff]
    %v45 = vld [vmem:[%s1 + $0x48] sm:$0xff]
    %v46 = vld [vmem:[%s1 + $0x50] sm:$0xff]
    %v47 = vld [vmem:[%s1 + $0x58] sm:$0xff]
    %v48 = vld [vmem:[%s1 + $0x60] sm:$0xff]
    %v49 = vld [vmem:[%s1 + $0x68] sm:$0xff]
    %v50 = vld [vmem:[%s1 + $0x70] sm:$0xff]
    %v51 = vld [vmem:[%s1 + $0x78] sm:$0xff]
    %v52 = vld [vmem:[%s1 + $0x80] sm:$0xff]
    %v53 = vld [vmem:[%s1 + $0x88] sm:$0xff]
    %v54 = vld [vmem:[%s1 + $0x90] sm:$0xff]
    %v55 = vld [vmem:[%s1 + $0x98] sm:$0xff]
    %v56 = vld [vmem:[%s1 + $0xa0] sm:$0xff]
    %v57 = vld [vmem:[%s1 + $0xa8] sm:$0xff]
    %v58 = vld [vmem:[%s1 + $0xb0] sm:$0xff]
    %v59 = vld [vmem:[%s1 + $0xb8] sm:$0xff]
    %v60 = vld [vmem:[%s1 + $0xc0] sm:$0xff]
    %v61 = vld [vmem:[%s1 + $0xc8] sm:$0xff]
    %v62 = vld [vmem:[%s1 + $0xd0] sm:$0xff]
    %v63 = vld [vmem:[%s1 + $0xd8] sm:$0xff]
    %v64 = vld [vmem:[%s1 + $0xe0] sm:$0xff]
    %v65 = vld [vmem:[%s1 + $0xe8] sm:$0xff]
    %v66 = vld [vmem:[%s1 + $0xf0] sm:$0xff]
    %v67 = vld [vmem:[%s1 + $0xf8] sm:$0xff]
    %v68 = vld [vmem:[%s1 + $0x100] sm:$0xff]
    %v69 = vld [vmem:[%s1 + $0x108] sm:$0xff]
    %v70 = vld [vmem:[%s1 + $0x110] sm:$0xff]
    %v71 = vld [vmem:[%s1 + $0x118] sm:$0xff]
    %v72 = vld [vmem:[%s1 + $0x120] sm:$0xff]
    %v73 = vld [vmem:[%s1 + $0x128] sm:$0xff]
    %v74 = vld [vmem:[%s1 + $0x130] sm:$0xff]
    %v75 = vld [vmem:[%s1 + $0x138] sm:$0xff]
    %v76 = vld [vmem:[%s1 + $0x140] sm:$0xff]
    %v77 = vld [vmem:[%s1 + $0x148] sm:$0xff]
    %v78 = vld [vmem:[%s1 + $0x150] sm:$0xff]
    %v79 = vld [vmem:[%s1 + $0x158] sm:$0xff]
    %v80 = vld [vmem:[%s1 + $0x160] sm:$0xff]
    %v81 = vld [vmem:[%s1 + $0x168] sm:$0xff]
    %v82 = vld [vmem:[%s1 + $0x170] sm:$0xff]
    %v83 = vld [vmem:[%s1 + $0x178] sm:$0xff]
    %v84 = vld [vmem:[%s1 + $0x180] sm:$0xff]
    %v85 = vld [vmem:[%s1 + $0x188] sm:$0xff]
    %v86 = vld [vmem:[%s1 + $0x190] sm:$0xff]
    %v87 = vld [vmem:[%s1 + $0x198] sm:$0xff]
    %v88 = vld [vmem:[%s1 + $0x1a0] sm:$0xff]
    %v89 = vld [vmem:[%s1 + $0x1a8] sm:$0xff]
    %v90 = vld [vmem:[%s1 + $0x1b0] sm:$0xff]
    %v91 = vld [vmem:[%s1 + $0x1b8] sm:$0xff]
    %v92 = vld [vmem:[%s1 + $0x1c0] sm:$0xff]
    %v93 = vld [vmem:[%s1 + $0x1c8] sm:$0xff]
    %v94 = vld [vmem:[%s1 + $0x1d0] sm:$0xff]
    %v95 = vld [vmem:[%s1 + $0x1d8] sm:$0xff]
    %v96 = vld [vmem:[%s1 + $0x1e0] sm:$0xff]
    %v97 = vld [vmem:[%s1 + $0x1e8] sm:$0xff]
    %v98 = vld [vmem:[%s1 + $0x1f0] sm:$0xff]
    %v99 = vld [vmem:[%s1 + $0x1f8] sm:$0xff]
    %v100 = vld [vmem:[%s1 + $0x200] sm:$0xff]
    %v101 = vld [vmem:[%s1 + $0x208] sm:$0xff]
    %v102 = vld [vmem:[%s1 + $0x210] sm:$0xff]
    %v103 = vld [vmem:[%s1 + $0x218] sm:$0xff]
    %v104 = vld [vmem:[%s1 + $0x220] sm:$0xff]
    %v105 = vld [vmem:[%s1 + $0x228] sm:$0xff]
    %v106 = vld [vmem:[%s1 + $0x230] sm:$0xff]
    %v107 = vld [vmem:[%s1 + $0x238] sm:$0xff]
    %v108 = vld [vmem:[%s1 + $0x240] sm:$0xff]
    %v109 = vld [vmem:[%s1 + $0x248] sm:$0xff]
    %v110 = vld [vmem:[%s1 + $0x250] sm:$0xff]
    %v111 = vld [vmem:[%s1 + $0x258] sm:$0xff]
    %v112 = vld [vmem:[%s1 + $0x260] sm:$0xff]
    %v113 = vld [vmem:[%s1 + $0x268] sm:$0xff]
    %v114 = vld [vmem:[%s1 + $0x270] sm:$0xff]
    %v115 = vld [vmem:[%s1 + $0x278] sm:$0xff]
    %v116 = vld [vmem:[%s1 + $0x280] sm:$0xff]
    %v117 = vld [vmem:[%s1 + $0x288] sm:$0xff]
    %v118 = vld [vmem:[%s1 + $0x290] sm:$0xff]
    %v119 = vld [vmem:[%s1 + $0x298] sm:$0xff]
    %v120 = vld [vmem:[%s1 + $0x2a0] sm:$0xff]
    %v121 = vld [vmem:[%s1 + $0x2a8] sm:$0xff]
    %v122 = vld [vmem:[%s1 + $0x2b0] sm:$0xff]
    %v123 = vld [vmem:[%s1 + $0x2b8] sm:$0xff]
    %v124 = vld [vmem:[%s1 + $0x2c0] sm:$0xff]
    %v125 = vld [vmem:[%s1 + $0x2c8] sm:$0xff]
    %v126 = vld [vmem:[%s1 + $0x2d0] sm:$0xff]
    %v127 = vld [vmem:[%s1 + $0x2d8] sm:$0xff]
    %v128 = vld [vmem:[%s1 + $0x2e0] sm:$0xff]
    %v129 = vld [vmem:[%s1 + $0x2e8] sm:$0xff]
    %v130 = vld [vmem:[%s1 + $0x2f0] sm:$0xff]
    %v131 = vld [vmem:[%s1 + $0x2f8] sm:$0xff]
    %v132 = vld [vmem:[%s1 + $0x300] sm:$0xff]
    %v133 = vld [vmem:[%s1 + $0x308] sm:$0xff]
    %v134 = vld [vmem:[%s1 + $0x310] sm:$0xff]
    %v135 = vld [vmem:[%s1 + $0x318] sm:$0xff]
    %v136 = vld [vmem:[%s1 + $0x320] sm:$0xff]
    %v137 = vld [vmem:[%s1 + $0x328] sm:$0xff]
    %v138 = vld [vmem:[%s1 + $0x330] sm:$0xff]
    %v139 = vld [vmem:[%s1 + $0x338] sm:$0xff]
    %v140 = vld [vmem:[%s1 + $0x340] sm:$0xff]
    %v141 = vld [vmem:[%s1 + $0x348] sm:$0xff]
    %v142 = vld [vmem:[%s1 + $0x350] sm:$0xff]
    %v143 = vld [vmem:[%s1 + $0x358] sm:$0xff]
    %v144 = vld [vmem:[%s1 + $0x360] sm:$0xff]
    %v145 = vld [vmem:[%s1 + $0x368] sm:$0xff]
    %v146 = vld [vmem:[%s1 + $0x370] sm:$0xff]
    %v147 = vld [vmem:[%s1 + $0x378] sm:$0xff]
    %v148 = vld [vmem:[%s1 + $0x380] sm:$0xff]
    %v149 = vld [vmem:[%s1 + $0x388] sm:$0xff]
    %v150 = vld [vmem:[%s1 + $0x390] sm:$0xff]
    %v151 = vld [vmem:[%s1 + $0x398] sm:$0xff]
    %v152 = vld [vmem:[%s1 + $0x3a0] sm:$0xff]
    %v153 = vld [vmem:[%s1 + $0x3a8] sm:$0xff]
    %v154 = vld [vmem:[%s1 + $0x3b0] sm:$0xff]
    %v155 = vld [vmem:[%s1 + $0x3b8] sm:$0xff]
    %v156 = vld [vmem:[%s1 + $0x3c0] sm:$0xff]
    %v157 = vld [vmem:[%s1 + $0x3c8] sm:$0xff]
    %v158 = vld [vmem:[%s1 + $0x3d0] sm:$0xff]
    %v159 = vld [vmem:[%s1 + $0x3d8] sm:$0xff]
    %v160 = vld [vmem:[%s1 + $0x3e0] sm:$0xff]
    %v161 = vld [vmem:[%s1 + $0x3e8] sm:$0xff]
    %v162 = vld [vmem:[%s1 + $0x3f0] sm:$0xff]
    %v163 = vld [vmem:[%s1 + $0x3f8] sm:$0xff]
    %v164 = vld [vmem:[%s1 + $0x400] sm:$0xff]
    %v165 = vld [vmem:[%s1 + $0x408] sm:$0xff]
    %v166 = vld [vmem:[%s1 + $0x410] sm:$0xff]
    %v167 = vld [vmem:[%s1 + $0x418] sm:$0xff]
    %v168 = vld [vmem:[%s1 + $0x420] sm:$0xff]
    %v169 = vld [vmem:[%s1 + $0x428] sm:$0xff]
    %v170 = vld [vmem:[%s1 + $0x430] sm:$0xff]
    %v171 = vld [vmem:[%s1 + $0x438] sm:$0xff]
    %v172 = vld [vmem:[%s1 + $0x440] sm:$0xff]
    %v173 = vld [vmem:[%s1 + $0x448] sm:$0xff]
    %v174 = vld [vmem:[%s1 + $0x450] sm:$0xff]
    %v175 = vld [vmem:[%s1 + $0x458] sm:$0xff]
    %v176 = vld [vmem:[%s1 + $0x460] sm:$0xff]
    %v177 = vld [vmem:[%s1 + $0x468] sm:$0xff]
    %v178 = vld [vmem:[%s1 + $0x470] sm:$0xff]
    %v179 = vld [vmem:[%s1 + $0x478] sm:$0xff]
    %v180 = vld [vmem:[%s1 + $0x480] sm:$0xff]
    %v181 = vld [vmem:[%s1 + $0x488] sm:$0xff]
    %v182 = vld [vmem:[%s1 + $0x490] sm:$0xff]
    %v183 = vld [vmem:[%s1 + $0x498] sm:$0xff]
    %v184 = vld [vmem:[%s1 + $0x4a0] sm:$0xff]
    %v185 = vld [vmem:[%s1 + $0x4a8] sm:$0xff]
    %v186 = vld [vmem:[%s1 + $0x4b0] sm:$0xff]
    %v187 = vld [vmem:[%s1 + $0x4b8] sm:$0xff]
    %v188 = vld [vmem:[%s1 + $0x4c0] sm:$0xff]
    %v189 = vld [vmem:[%s1 + $0x4c8] sm:$0xff]
    %v190 = vld [vmem:[%s1 + $0x4d0] sm:$0xff]
    %v191 = vld [vmem:[%s1 + $0x4d8] sm:$0xff]
    %v192 = vld [vmem:[%s1 + $0x4e0] sm:$0xff]
    %v193 = vld [vmem:[%s1 + $0x4e8] sm:$0xff]
    %v194 = vld [vmem:[%s1 + $0x4f0] sm:$0xff]
    %v195 = vld [vmem:[%s1 + $0x4f8] sm:$0xff]
    %v196 = vld [vmem:[%s1 + $0x500] sm:$0xff]
    %v197 = vld [vmem:[%s1 + $0x508] sm:$0xff]
    %v198 = vld [vmem:[%s1 + $0x510] sm:$0xff]
    %v199 = vld [vmem:[%s1 + $0x518] sm:$0xff]
    %v200 = vld [vmem:[%s1 + $0x520] sm:$0xff]
    %v201 = vld [vmem:[%s1 + $0x528] sm:$0xff]
    %v202 = vld [vmem:[%s1 + $0x530] sm:$0xff]
    %v203 = vld [vmem:[%s1 + $0x538] sm:$0xff]
    %v204 = vld [vmem:[%s1 + $0x540] sm:$0xff]
    %v205 = vld [vmem:[%s1 + $0x548] sm:$0xff]
    %v206 = vld [vmem:[%s1 + $0x550] sm:$0xff]
    %v207 = vld [vmem:[%s1 + $0x558] sm:$0xff]
    %v208 = vld [vmem:[%s1 + $0x560] sm:$0xff]
    %v209 = vld [vmem:[%s1 + $0x568] sm:$0xff]
    %v210 = vld [vmem:[%s1 + $0x570] sm:$0xff]
    %v211 = vld [vmem:[%s1 + $0x578] sm:$0xff]
    %v212 = vld [vmem:[%s1 + $0x580] sm:$0xff]
    %v213 = vld [vmem:[%s1 + $0x588] sm:$0xff]
    %v214 = vld [vmem:[%s1 + $0x590] sm:$0xff]
    %v215 = vld [vmem:[%s1 + $0x598] sm:$0xff]
    %v216 = vld [vmem:[%s1 + $0x5a0] sm:$0xff]
    %v217 = vld [vmem:[%s1 + $0x5a8] sm:$0xff]
    %v218 = vld [vmem:[%s1 + $0x5b0] sm:$0xff]
    %v219 = vld [vmem:[%s1 + $0x5b8] sm:$0xff]
    %v220 = vld [vmem:[%s1 + $0x5c0] sm:$0xff]
    %v221 = vld [vmem:[%s1 + $0x5c8] sm:$0xff]
    %v222 = vld [vmem:[%s1 + $0x5d0] sm:$0xff]
    %v223 = vld [vmem:[%s1 + $0x5d8] sm:$0xff]
    %v224 = vld [vmem:[%s1 + $0x5e0] sm:$0xff]
    %v225 = vld [vmem:[%s1 + $0x5e8] sm:$0xff]
    %v226 = vld [vmem:[%s1 + $0x5f0] sm:$0xff]
    %v227 = vld [vmem:[%s1 + $0x5f8] sm:$0xff]
    %v228 = vld [vmem:[%s1 + $0x600] sm:$0xff]
    %v229 = vld [vmem:[%s1 + $0x608] sm:$0xff]
    %v230 = vld [vmem:[%s1 + $0x610] sm:$0xff]
    %v231 = vld [vmem:[%s1 + $0x618] sm:$0xff]
    %v232 = vld [vmem:[%s1 + $0x620] sm:$0xff]
    %v233 = vld [vmem:[%s1 + $0x628] sm:$0xff]
    %v234 = vld [vmem:[%s1 + $0x630] sm:$0xff]
    %v235 = vld [vmem:[%s1 + $0x638] sm:$0xff]
    %v236 = vld [vmem:[%s1 + $0x640] sm:$0xff]
    %v237 = vld [vmem:[%s1 + $0x648] sm:$0xff]
    %v238 = vld [vmem:[%s1 + $0x650] sm:$0xff]
    %v239 = vld [vmem:[%s1 + $0x658] sm:$0xff]
    %v240 = vld [vmem:[%s1 + $0x660] sm:$0xff]
    %v241 = vld [vmem:[%s1 + $0x668] sm:$0xff]
    %v242 = vld [vmem:[%s1 + $0x670] sm:$0xff]
    %v243 = vld [vmem:[%s1 + $0x678] sm:$0xff]
    %v244 = vld [vmem:[%s1 + $0x680] sm:$0xff]
    %v245 = vld [vmem:[%s1 + $0x688] sm:$0xff]
    %v246 = vld [vmem:[%s1 + $0x690] sm:$0xff]
    %v247 = vld [vmem:[%s1 + $0x698] sm:$0xff]
    %v248 = vld [vmem:[%s1 + $0x6a0] sm:$0xff]
    %v249 = vld [vmem:[%s1 + $0x6a8] sm:$0xff]
    %v250 = vld [vmem:[%s1 + $0x6b0] sm:$0xff]
    %v251 = vld [vmem:[%s1 + $0x6b8] sm:$0xff]
    %v252 = vld [vmem:[%s1 + $0x6c0] sm:$0xff]
    %v253 = vld [vmem:[%s1 + $0x6c8] sm:$0xff]
    %v254 = vld [vmem:[%s1 + $0x6d0] sm:$0xff]
    %v255 = vld [vmem:[%s1 + $0x6d8] sm:$0xff]
    %v256 = vld [vmem:[%s1 + $0x6e0] sm:$0xff]
    %v257 = vld [vmem:[%s1 + $0x6e8] sm:$0xff]
    %v258 = vld [vmem:[%s1 + $0x6f0] sm:$0xff]
    %v259 = vld [vmem:[%s1 + $0x6f8] sm:$0xff]
    %v260 = vld [vmem:[%s1 + $0x700] sm:$0xff]
    %v261 = vld [vmem:[%s1 + $0x708] sm:$0xff]
    %v262 = vld [vmem:[%s1 + $0x710] sm:$0xff]
    %v263 = vld [vmem:[%s1 + $0x718] sm:$0xff]
    %v264 = vld [vmem:[%s1 + $0x720] sm:$0xff]
    %v265 = vld [vmem:[%s1 + $0x728] sm:$0xff]
    %v266 = vld [vmem:[%s1 + $0x730] sm:$0xff]
    %v267 = vld [vmem:[%s1 + $0x738] sm:$0xff]
    %v268 = vld [vmem:[%s1 + $0x740] sm:$0xff]
    %v269 = vld [vmem:[%s1 + $0x748] sm:$0xff]
    %v270 = vld [vmem:[%s1 + $0x750] sm:$0xff]
    %v271 = vld [vmem:[%s1 + $0x758] sm:$0xff]
    %v272 = vld [vmem:[%s1 + $0x760] sm:$0xff]
    %v273 = vld [vmem:[%s1 + $0x768] sm:$0xff]
    %v274 = vld [vmem:[%s1 + $0x770] sm:$0xff]
    %v275 = vld [vmem:[%s1 + $0x778] sm:$0xff]
    %v276 = vld [vmem:[%s1 + $0x780] sm:$0xff]
    %v277 = vld [vmem:[%s1 + $0x788] sm:$0xff]
    %v278 = vld [vmem:[%s1 + $0x790] sm:$0xff]
    %v279 = vld [vmem:[%s1 + $0x798] sm:$0xff]
    %v280 = vld [vmem:[%s1 + $0x7a0] sm:$0xff]
    %v281 = vld [vmem:[%s1 + $0x7a8] sm:$0xff]
    %v282 = vld [vmem:[%s1 + $0x7b0] sm:$0xff]
    %v283 = vld [vmem:[%s1 + $0x7b8] sm:$0xff]
    %v284 = vld [vmem:[%s1 + $0x7c0] sm:$0xff]
    %v285 = vld [vmem:[%s1 + $0x7c8] sm:$0xff]
    %v286 = vld [vmem:[%s1 + $0x7d0] sm:$0xff]
    %v287 = vld [vmem:[%s1 + $0x7d8] sm:$0xff]
    %v288 = vld [vmem:[%s1 + $0x7e0] sm:$0xff]
    %v289 = vld [vmem:[%s1 + $0x7e8] sm:$0xff]
    %v290 = vld [vmem:[%s1 + $0x7f0] sm:$0xff]
    %v291 = vld [vmem:[%s1 + $0x7f8] sm:$0xff]
    %v292 = vld [vmem:[%s1 + $0x800] sm:$0xff]
    %v293 = vld [vmem:[%s1 + $0x808] sm:$0xff]
    %v294 = vld [vmem:[%s1 + $0x810] sm:$0xff]
    %v295 = vld [vmem:[%s1 + $0x818] sm:$0xff]
    %v296 = vld [vmem:[%s1 + $0x820] sm:$0xff]
    %v297 = vld [vmem:[%s1 + $0x828] sm:$0xff]
    %v298 = vld [vmem:[%s1 + $0x830] sm:$0xff]
    %v299 = vld [vmem:[%s1 + $0x838] sm:$0xff]
    %v300 = vld [vmem:[%s1 + $0x840] sm:$0xff]
    %v301 = vld [vmem:[%s1 + $0x848] sm:$0xff]
    %v302 = vld [vmem:[%s1 + $0x850] sm:$0xff]
    %v303 = vld [vmem:[%s1 + $0x858] sm:$0xff]
    %v304 = vld [vmem:[%s1 + $0x860] sm:$0xff]
    %v305 = vld [vmem:[%s1 + $0x868] sm:$0xff]
    %v306 = vld [vmem:[%s1 + $0x870] sm:$0xff]
    %v307 = vld [vmem:[%s1 + $0x878] sm:$0xff]
    %v308 = vld [vmem:[%s1 + $0x880] sm:$0xff]
    %v309 = vld [vmem:[%s1 + $0x888] sm:$0xff]
    %v310 = vld [vmem:[%s1 + $0x890] sm:$0xff]
    %v311 = vld [vmem:[%s1 + $0x898] sm:$0xff]
    %v312 = vld [vmem:[%s1 + $0x8a0] sm:$0xff]
    %v313 = vld [vmem:[%s1 + $0x8a8] sm:$0xff]
    %v314 = vld [vmem:[%s1 + $0x8b0] sm:$0xff]
    %v315 = vld [vmem:[%s1 + $0x8b8] sm:$0xff]
    %v316 = vld [vmem:[%s1 + $0x8c0] sm:$0xff]
    %v317 = vld [vmem:[%s1 + $0x8c8] sm:$0xff]
    %v318 = vld [vmem:[%s1 + $0x8d0] sm:$0xff]
    %v319 = vld [vmem:[%s1 + $0x8d8] sm:$0xff]
    %v320 = vld [vmem:[%s1 + $0x8e0] sm:$0xff]
    %v321 = vld [vmem:[%s1 + $0x8e8] sm:$0xff]
    %v322 = vld [vmem:[%s1 + $0x8f0] sm:$0xff]
    %v323 = vld [vmem:[%s1 + $0x8f8] sm:$0xff]
    %v324 = vld [vmem:[%s1 + $0x900] sm:$0xff]
    %v325 = vld [vmem:[%s1 + $0x908] sm:$0xff]
    %v326 = vld [vmem:[%s1 + $0x910] sm:$0xff]
    %v327 = vld [vmem:[%s1 + $0x918] sm:$0xff]
    %v328 = vld [vmem:[%s1 + $0x920] sm:$0xff]
    %v329 = vld [vmem:[%s1 + $0x928] sm:$0xff]
    %v330 = vld [vmem:[%s1 + $0x930] sm:$0xff]
    %v331 = vld [vmem:[%s1 + $0x938] sm:$0xff]
    %v332 = vld [vmem:[%s1 + $0x940] sm:$0xff]
    %v333 = vld [vmem:[%s1 + $0x948] sm:$0xff]
    %v334 = vld [vmem:[%s1 + $0x950] sm:$0xff]
    %v335 = vld [vmem:[%s1 + $0x958] sm:$0xff]
    %v336 = vld [vmem:[%s1 + $0x960] sm:$0xff]
    %v337 = vld [vmem:[%s1 + $0x968] sm:$0xff]
    %v338 = vld [vmem:[%s1 + $0x970] sm:$0xff]
    %v339 = vld [vmem:[%s1 + $0x978] sm:$0xff]
    %v340 = vld [vmem:[%s1 + $0x980] sm:$0xff]
    %v341 = vld [vmem:[%s1 + $0x988] sm:$0xff]
    %v342 = vld [vmem:[%s1 + $0x990] sm:$0xff]
    %v343 = vld [vmem:[%s1 + $0x998] sm:$0xff]
    %v344 = vld [vmem:[%s1 + $0x9a0] sm:$0xff]
    %v345 = vld [vmem:[%s1 + $0x9a8] sm:$0xff]
    %v346 = vld [vmem:[%s1 + $0x9b0] sm:$0xff]
    %v347 = vld [vmem:[%s1 + $0x9b8] sm:$0xff]
    %v348 = vld [vmem:[%s1 + $0x9c0] sm:$0xff]
    %v349 = vld [vmem:[%s1 + $0x9c8] sm:$0xff]
    %v350 = vld [vmem:[%s1 + $0x9d0] sm:$0xff]
    %v351 = vld [vmem:[%s1 + $0x9d8] sm:$0xff]
    %v352 = vld [vmem:[%s1 + $0x9e0] sm:$0xff]
    %v353 = vld [vmem:[%s1 + $0x9e8] sm:$0xff]
    %v354 = vld [vmem:[%s1 + $0x9f0] sm:$0xff]
    %v355 = vld [vmem:[%s1 + $0x9f8] sm:$0xff]
    %v356 = vld [vmem:[%s1 + $0xa00] sm:$0xff]
    %v357 = vld [vmem:[%s1 + $0xa08] sm:$0xff]
    %v358 = vld [vmem:[%s1 + $0xa10] sm:$0xff]
    %v359 = vld [vmem:[%s1 + $0xa18] sm:$0xff]
    %v360 = vld [vmem:[%s1 + $0xa20] sm:$0xff]
    %v361 = vld [vmem:[%s1 + $0xa28] sm:$0xff]
    %v362 = vld [vmem:[%s1 + $0xa30] sm:$0xff]
    %v363 = vld [vmem:[%s1 + $0xa38] sm:$0xff]
    %v364 = vld [vmem:[%s1 + $0xa40] sm:$0xff]
    %v365 = vld [vmem:[%s1 + $0xa48] sm:$0xff]
    %v366 = vld [vmem:[%s1 + $0xa50] sm:$0xff]
    %v367 = vld [vmem:[%s1 + $0xa58] sm:$0xff]
    %v368 = vld [vmem:[%s1 + $0xa60] sm:$0xff]
    %v369 = vld [vmem:[%s1 + $0xa68] sm:$0xff]
    %v370 = vld [vmem:[%s1 + $0xa70] sm:$0xff]
    %v371 = vld [vmem:[%s1 + $0xa78] sm:$0xff]
    %v372 = vld [vmem:[%s1 + $0xa80] sm:$0xff]
    %v373 = vld [vmem:[%s1 + $0xa88] sm:$0xff]
    %v374 = vld [vmem:[%s1 + $0xa90] sm:$0xff]
    %v375 = vld [vmem:[%s1 + $0xa98] sm:$0xff]
    %v376 = vld [vmem:[%s1 + $0xaa0] sm:$0xff]
    %v377 = vld [vmem:[%s1 + $0xaa8] sm:$0xff]
    %v378 = vld [vmem:[%s1 + $0xab0] sm:$0xff]
    %v379 = vld [vmem:[%s1 + $0xab8] sm:$0xff]
    %v380 = vld [vmem:[%s1 + $0xac0] sm:$0xff]
    %v381 = vld [vmem:[%s1 + $0xac8] sm:$0xff]
    %v382 = vld [vmem:[%s1 + $0xad0] sm:$0xff]
    %v383 = vld [vmem:[%s1 + $0xad8] sm:$0xff]
    %v384 = vld [vmem:[%s1 + $0xae0] sm:$0xff]
    %v385 = vld [vmem:[%s1 + $0xae8] sm:$0xff]
    %v386 = vld [vmem:[%s1 + $0xaf0] sm:$0xff]
    %v387 = vld [vmem:[%s1 + $0xaf8] sm:$0xff]
    %v388 = vld [vmem:[%s1 + $0xb00] sm:$0xff]
    %v389 = vld [vmem:[%s1 + $0xb08] sm:$0xff]
    %v390 = vld [vmem:[%s1 + $0xb10] sm:$0xff]
    %v391 = vld [vmem:[%s1 + $0xb18] sm:$0xff]
    %v392 = vld [vmem:[%s1 + $0xb20] sm:$0xff]
    %v393 = vld [vmem:[%s1 + $0xb28] sm:$0xff]
    %v394 = vld [vmem:[%s1 + $0xb30] sm:$0xff]
    %v395 = vld [vmem:[%s1 + $0xb38] sm:$0xff]
    %v396 = vld [vmem:[%s1 + $0xb40] sm:$0xff]
    %v397 = vld [vmem:[%s1 + $0xb48] sm:$0xff]
    %v398 = vld [vmem:[%s1 + $0xb50] sm:$0xff]
    %v399 = vld [vmem:[%s1 + $0xb58] sm:$0xff]
    %v400 = vld [vmem:[%s1 + $0xb60] sm:$0xff]
    %v401 = vld [vmem:[%s1 + $0xb68] sm:$0xff]
    %v402 = vld [vmem:[%s1 + $0xb70] sm:$0xff]
    %v403 = vld [vmem:[%s1 + $0xb78] sm:$0xff]
    %v404 = vld [vmem:[%s1 + $0xb80] sm:$0xff]
    %v405 = vld [vmem:[%s1 + $0xb88] sm:$0xff]
    %v406 = vld [vmem:[%s1 + $0xb90] sm:$0xff]
    %v407 = vld [vmem:[%s1 + $0xb98] sm:$0xff]
    %v408 = vld [vmem:[%s1 + $0xba0] sm:$0xff]
    %v409 = vld [vmem:[%s1 + $0xba8] sm:$0xff]
    %v410 = vld [vmem:[%s1 + $0xbb0] sm:$0xff]
    %v411 = vld [vmem:[%s1 + $0xbb8] sm:$0xff]
    %v412 = vld [vmem:[%s1 + $0xbc0] sm:$0xff]
    %v413 = vld [vmem:[%s1 + $0xbc8] sm:$0xff]
    %v414 = vld [vmem:[%s1 + $0xbd0] sm:$0xff]
    %v415 = vld [vmem:[%s1 + $0xbd8] sm:$0xff]
    %v416 = vld [vmem:[%s1 + $0xbe0] sm:$0xff]
    %v417 = vld [vmem:[%s1 + $0xbe8] sm:$0xff]
    %v418 = vld [vmem:[%s1 + $0xbf0] sm:$0xff]
    %v419 = vld [vmem:[%s1 + $0xbf8] sm:$0xff]
    %v420 = vld [vmem:[%s1 + $0xc00] sm:$0xff]
    %v421 = vld [vmem:[%s1 + $0xc08] sm:$0xff]
    %v422 = vld [vmem:[%s1 + $0xc10] sm:$0xff]
    %v423 = vld [vmem:[%s1 + $0xc18] sm:$0xff]
    %v424 = vld [vmem:[%s1 + $0xc20] sm:$0xff]
    %v425 = vld [vmem:[%s1 + $0xc28] sm:$0xff]
    %v426 = vld [vmem:[%s1 + $0xc30] sm:$0xff]
    %v427 = vld [vmem:[%s1 + $0xc38] sm:$0xff]
    %v428 = vld [vmem:[%s2] sm:$0x1]
    %v430 = vlaneseq
    %v431 = vshrl.u32 %v430, 7
    %v432 = vsub.s32 0, %v431
    %v433 = vrot.slane %v428, %v432
    %v442 = vcombine.high %v29, %v29
    %v444 = vunpack.c.l.s4 1983009808
    %v445 = vunpack.c.0.s8 %v444
    %v446 = vlaneseq
    %v447 = vshrl.u32 %v446, 7
    %v448 = vsub.s32 %v445, %v447
    %v449 = vrot.slane %v29, %v448
    %v451 = vunpack.c.l.s4 1983009808
    %v452 = vunpack.c.0.s8 %v451
    %v453 = vlaneseq
    %v454 = vshrl.u32 %v453, 7
    %v455 = vsub.s32 %v452, %v454
    %v456 = vrot.slane %v442, %v455
    %v457 = vcombine.high %v449, %v449
    %v458 = vcombine.high %v456, %v456
    %v459 = vcombine.high %v30, %v30
    %v461 = vunpack.c.l.s4 1983009808
    %v462 = vunpack.c.0.s8 %v461
    %v463 = vlaneseq
    %v464 = vshrl.u32 %v463, 7
    %v465 = vsub.s32 %v462, %v464
    %v466 = vrot.slane %v30, %v465
    %v468 = vunpack.c.l.s4 1983009808
    %v469 = vunpack.c.0.s8 %v468
    %v470 = vlaneseq
    %v471 = vshrl.u32 %v470, 7
    %v472 = vsub.s32 %v469, %v471
    %v473 = vrot.slane %v459, %v472
    %v474 = vcombine.high %v466, %v466
    %v475 = vcombine.high %v473, %v473
    %v476 = vcombine.high %v31, %v31
    %v478 = vunpack.c.l.s4 1983009808
    %v479 = vunpack.c.0.s8 %v478
    %v480 = vlaneseq
    %v481 = vshrl.u32 %v480, 7
    %v482 = vsub.s32 %v479, %v481
    %v483 = vrot.slane %v31, %v482
    %v485 = vunpack.c.l.s4 1983009808
    %v486 = vunpack.c.0.s8 %v485
    %v487 = vlaneseq
    %v488 = vshrl.u32 %v487, 7
    %v489 = vsub.s32 %v486, %v488
    %v490 = vrot.slane %v476, %v489
    %v491 = vcombine.high %v483, %v483
    %v492 = vcombine.high %v490, %v490
    %v493 = vcombine.high %v32, %v32
    %v495 = vunpack.c.l.s4 1983009808
    %v496 = vunpack.c.0.s8 %v495
    %v497 = vlaneseq
    %v498 = vshrl.u32 %v497, 7
    %v499 = vsub.s32 %v496, %v498
    %v500 = vrot.slane %v32, %v499
    %v502 = vunpack.c.l.s4 1983009808
    %v503 = vunpack.c.0.s8 %v502
    %v504 = vlaneseq
    %v505 = vshrl.u32 %v504, 7
    %v506 = vsub.s32 %v503, %v505
    %v507 = vrot.slane %v493, %v506
    %v508 = vcombine.high %v500, %v500
    %v509 = vcombine.high %v507, %v507
    %v510 = vcombine.high %v33, %v33
    %v512 = vunpack.c.l.s4 1983009808
    %v513 = vunpack.c.0.s8 %v512
    %v514 = vlaneseq
    %v515 = vshrl.u32 %v514, 7
    %v516 = vsub.s32 %v513, %v515
    %v517 = vrot.slane %v33, %v516
    %v519 = vunpack.c.l.s4 1983009808
    %v520 = vunpack.c.0.s8 %v519
    %v521 = vlaneseq
    %v522 = vshrl.u32 %v521, 7
    %v523 = vsub.s32 %v520, %v522
    %v524 = vrot.slane %v510, %v523
    %v525 = vcombine.high %v517, %v517
    %v526 = vcombine.high %v524, %v524
    %v527 = vcombine.high %v34, %v34
    %v529 = vunpack.c.l.s4 1983009808
    %v530 = vunpack.c.0.s8 %v529
    %v531 = vlaneseq
    %v532 = vshrl.u32 %v531, 7
    %v533 = vsub.s32 %v530, %v532
    %v534 = vrot.slane %v34, %v533
    %v536 = vunpack.c.l.s4 1983009808
    %v537 = vunpack.c.0.s8 %v536
    %v538 = vlaneseq
    %v539 = vshrl.u32 %v538, 7
    %v540 = vsub.s32 %v537, %v539
    %v541 = vrot.slane %v527, %v540
    %v542 = vcombine.high %v534, %v534
    %v543 = vcombine.high %v541, %v541
    %v545 = vunpack.c.l.s4 1983009808
    %v546 = vunpack.c.0.s8 %v545
    %v547 = vlaneseq
    %v548 = vshrl.u32 %v547, 7
    %v549 = vsub.s32 %v546, %v548
    %v550 = vrot.slane %v35, %v549
    %vm575 = vcmask 523264
    %v576 = vsel %vm575, %v550, 0
    %578 = vmatprep.subr.mxu0 0.0
    %579 = vmatpush1.msra.mxu0 %v36
    %580 = vmatprep.subr.mxu0 0.0
    %581 = vmatpush1.msra.mxu0 %v37
    %582 = vmatprep.subr.mxu0 0.0
    %583 = vmatpush1.msra.mxu0 %v38
    %584 = vmatprep.subr.mxu0 0.0
    %585 = vmatpush1.msra.mxu0 %v39
    %586 = vmatprep.subr.mxu0 0.0
    %587 = vmatpush1.msra.mxu0 %v40
    %588 = vmatprep.subr.mxu0 0.0
    %589 = vmatpush1.msra.mxu0 %v41
    %590 = vmatprep.subr.mxu0 0.0
    %591 = vmatpush1.msra.mxu0 %v42
    %592 = vmatprep.subr.mxu0 0.0
    %593 = vmatpush1.msra.mxu0 %v43
    %594 = vmatprep.subr.mxu0 0.0
    %595 = vmatpush1.msra.mxu0 %v44
    %596 = vmatprep.subr.mxu0 0.0
    %597 = vmatpush1.msra.mxu0 %v45
    %598 = vmatprep.subr.mxu0 0.0
    %599 = vmatpush1.msra.mxu0 %v46
    %600 = vmatprep.subr.mxu0 0.0
    %601 = vmatpush1.msra.mxu0 %v47
    %602 = vmatprep.subr.mxu0 0.0
    %603 = vmatpush1.msra.mxu0 %v48
    %604 = vmatprep.subr.mxu0 0.0
    %605 = vmatpush1.msra.mxu0 %v49
    %606 = vmatprep.subr.mxu0 0.0
    %607 = vmatpush1.msra.mxu0 %v50
    %608 = vmatprep.subr.mxu0 0.0
    %609 = vmatpush1.msra.mxu0 %v51
    %610 = vmatprep.subr.mxu0 0.0
    %611 = vmatpush1.msra.mxu0 %v52
    %612 = vmatprep.subr.mxu0 0.0
    %613 = vmatpush1.msra.mxu0 %v53
    %614 = vmatprep.subr.mxu0 0.0
    %615 = vmatpush1.msra.mxu0 %v54
    %616 = vmatprep.subr.mxu0 0.0
    %617 = vmatpush1.msra.mxu0 %v55
    %618 = vmatprep.subr.mxu0 0.0
    %619 = vmatpush1.msra.mxu0 %v56
    %620 = vmatprep.subr.mxu0 0.0
    %621 = vmatpush1.msra.mxu0 %v57
    %622 = vmatprep.subr.mxu0 0.0
    %623 = vmatpush1.msra.mxu0 %v58
    %624 = vmatprep.subr.mxu0 0.0
    %625 = vmatpush1.msra.mxu0 %v59
    %626 = vmatprep.subr.mxu0 0.0
    %627 = vmatpush1.msra.mxu0 %v60
    %628 = vmatprep.subr.mxu0 0.0
    %629 = vmatpush1.msra.mxu0 %v61
    %630 = vmatprep.subr.mxu0 0.0
    %631 = vmatpush1.msra.mxu0 %v62
    %632 = vmatprep.subr.mxu0 0.0
    %633 = vmatpush1.msra.mxu0 %v63
    %634 = vmatprep.subr.mxu0 0.0
    %635 = vmatpush1.msra.mxu0 %v64
    %636 = vmatprep.subr.mxu0 0.0
    %637 = vmatpush1.msra.mxu0 %v65
    %638 = vmatprep.subr.mxu0 0.0
    %639 = vmatpush1.msra.mxu0 %v66
    %640 = vmatprep.subr.mxu0 0.0
    %641 = vmatpush1.msra.mxu0 %v67
    %642 = vmatprep.mubr.f32.mxu0 %v457
    %643 = vmatmul.mubr.f32.gmra.mrb[0].mxu0 %v449
    %v644 = vpop.f32.mrb[0].mxu0
    %v645 = vadd.f32 %v433, %v644
    %v646 = vpop.f32.mrb[0].mxu0
    %647 = vdwg.mxu0
    %648 = vmatprep.subr.mxu0 0.0
    %649 = vmatpush1.msra.mxu0 %v68
    %650 = vmatprep.subr.mxu0 0.0
    %651 = vmatpush1.msra.mxu0 %v69
    %652 = vmatprep.subr.mxu0 0.0
    %653 = vmatpush1.msra.mxu0 %v70
    %654 = vmatprep.subr.mxu0 0.0
    %655 = vmatpush1.msra.mxu0 %v71
    %656 = vmatprep.subr.mxu0 0.0
    %657 = vmatpush1.msra.mxu0 %v72
    %658 = vmatprep.subr.mxu0 0.0
    %659 = vmatpush1.msra.mxu0 %v73
    %660 = vmatprep.subr.mxu0 0.0
    %661 = vmatpush1.msra.mxu0 %v74
    %662 = vmatprep.subr.mxu0 0.0
    %663 = vmatpush1.msra.mxu0 %v75
    %664 = vmatprep.subr.mxu0 0.0
    %665 = vmatpush1.msra.mxu0 %v76
    %666 = vmatprep.subr.mxu0 0.0
    %667 = vmatpush1.msra.mxu0 %v77
    %668 = vmatprep.subr.mxu0 0.0
    %669 = vmatpush1.msra.mxu0 %v78
    %670 = vmatprep.subr.mxu0 0.0
    %671 = vmatpush1.msra.mxu0 %v79
    %672 = vmatprep.subr.mxu0 0.0
    %673 = vmatpush1.msra.mxu0 %v80
    %674 = vmatprep.subr.mxu0 0.0
    %675 = vmatpush1.msra.mxu0 %v81
    %676 = vmatprep.subr.mxu0 0.0
    %677 = vmatpush1.msra.mxu0 %v82
    %678 = vmatprep.subr.mxu0 0.0
    %679 = vmatpush1.msra.mxu0 %v83
    %680 = vmatprep.subr.mxu0 0.0
    %681 = vmatpush1.msra.mxu0 %v84
    %682 = vmatprep.subr.mxu0 0.0
    %683 = vmatpush1.msra.mxu0 %v85
    %684 = vmatprep.subr.mxu0 0.0
    %685 = vmatpush1.msra.mxu0 %v86
    %686 = vmatprep.subr.mxu0 0.0
    %687 = vmatpush1.msra.mxu0 %v87
    %688 = vmatprep.subr.mxu0 0.0
    %689 = vmatpush1.msra.mxu0 %v88
    %690 = vmatprep.subr.mxu0 0.0
    %691 = vmatpush1.msra.mxu0 %v89
    %692 = vmatprep.subr.mxu0 0.0
    %693 = vmatpush1.msra.mxu0 %v90
    %694 = vmatprep.subr.mxu0 0.0
    %695 = vmatpush1.msra.mxu0 %v91
    %696 = vmatprep.subr.mxu0 0.0
    %697 = vmatpush1.msra.mxu0 %v92
    %698 = vmatprep.subr.mxu0 0.0
    %699 = vmatpush1.msra.mxu0 %v93
    %700 = vmatprep.subr.mxu0 0.0
    %701 = vmatpush1.msra.mxu0 %v94
    %702 = vmatprep.subr.mxu0 0.0
    %703 = vmatpush1.msra.mxu0 %v95
    %704 = vmatprep.subr.mxu0 0.0
    %705 = vmatpush1.msra.mxu0 %v96
    %706 = vmatprep.subr.mxu0 0.0
    %707 = vmatpush1.msra.mxu0 %v97
    %708 = vmatprep.subr.mxu0 0.0
    %709 = vmatpush1.msra.mxu0 %v98
    %710 = vmatprep.subr.mxu0 0.0
    %711 = vmatpush1.msra.mxu0 %v99
    %712 = vmatprep.mubr.f32.mxu0 %v458
    %713 = vmatmul.mubr.f32.gmra.mrb[0].mxu0 %v456
    %v714 = vpop.f32.mrb[0].mxu0
    %v715 = vadd.f32 %v645, %v714
    %v716 = vpop.f32.mrb[0].mxu0
    %717 = vdwg.mxu0
    %718 = vmatprep.subr.mxu0 0.0
    %719 = vmatpush1.msra.mxu0 %v100
    %720 = vmatprep.subr.mxu0 0.0
    %721 = vmatpush1.msra.mxu0 %v101
    %722 = vmatprep.subr.mxu0 0.0
    %723 = vmatpush1.msra.mxu0 %v102
    %724 = vmatprep.subr.mxu0 0.0
    %725 = vmatpush1.msra.mxu0 %v103
    %726 = vmatprep.subr.mxu0 0.0
    %727 = vmatpush1.msra.mxu0 %v104
    %728 = vmatprep.subr.mxu0 0.0
    %729 = vmatpush1.msra.mxu0 %v105
    %730 = vmatprep.subr.mxu0 0.0
    %731 = vmatpush1.msra.mxu0 %v106
    %732 = vmatprep.subr.mxu0 0.0
    %733 = vmatpush1.msra.mxu0 %v107
    %734 = vmatprep.subr.mxu0 0.0
    %735 = vmatpush1.msra.mxu0 %v108
    %736 = vmatprep.subr.mxu0 0.0
    %737 = vmatpush1.msra.mxu0 %v109
    %738 = vmatprep.subr.mxu0 0.0
    %739 = vmatpush1.msra.mxu0 %v110
    %740 = vmatprep.subr.mxu0 0.0
    %741 = vmatpush1.msra.mxu0 %v111
    %742 = vmatprep.subr.mxu0 0.0
    %743 = vmatpush1.msra.mxu0 %v112
    %744 = vmatprep.subr.mxu0 0.0
    %745 = vmatpush1.msra.mxu0 %v113
    %746 = vmatprep.subr.mxu0 0.0
    %747 = vmatpush1.msra.mxu0 %v114
    %748 = vmatprep.subr.mxu0 0.0
    %749 = vmatpush1.msra.mxu0 %v115
    %750 = vmatprep.subr.mxu0 0.0
    %751 = vmatpush1.msra.mxu0 %v116
    %752 = vmatprep.subr.mxu0 0.0
    %753 = vmatpush1.msra.mxu0 %v117
    %754 = vmatprep.subr.mxu0 0.0
    %755 = vmatpush1.msra.mxu0 %v118
    %756 = vmatprep.subr.mxu0 0.0
    %757 = vmatpush1.msra.mxu0 %v119
    %758 = vmatprep.subr.mxu0 0.0
    %759 = vmatpush1.msra.mxu0 %v120
    %760 = vmatprep.subr.mxu0 0.0
    %761 = vmatpush1.msra.mxu0 %v121
    %762 = vmatprep.subr.mxu0 0.0
    %763 = vmatpush1.msra.mxu0 %v122
    %764 = vmatprep.subr.mxu0 0.0
    %765 = vmatpush1.msra.mxu0 %v123
    %766 = vmatprep.subr.mxu0 0.0
    %767 = vmatpush1.msra.mxu0 %v124
    %768 = vmatprep.subr.mxu0 0.0
    %769 = vmatpush1.msra.mxu0 %v125
    %770 = vmatprep.subr.mxu0 0.0
    %771 = vmatpush1.msra.mxu0 %v126
    %772 = vmatprep.subr.mxu0 0.0
    %773 = vmatpush1.msra.mxu0 %v127
    %774 = vmatprep.subr.mxu0 0.0
    %775 = vmatpush1.msra.mxu0 %v128
    %776 = vmatprep.subr.mxu0 0.0
    %777 = vmatpush1.msra.mxu0 %v129
    %778 = vmatprep.subr.mxu0 0.0
    %779 = vmatpush1.msra.mxu0 %v130
    %780 = vmatprep.subr.mxu0 0.0
    %781 = vmatpush1.msra.mxu0 %v131
    %782 = vmatprep.mubr.f32.mxu0 %v474
    %783 = vmatmul.mubr.f32.gmra.mrb[0].mxu0 %v466
    %v784 = vpop.f32.mrb[0].mxu0
    %v785 = vadd.f32 %v715, %v784
    %v786 = vpop.f32.mrb[0].mxu0
    %787 = vdwg.mxu0
    %788 = vmatprep.subr.mxu0 0.0
    %789 = vmatpush1.msra.mxu0 %v132
    %790 = vmatprep.subr.mxu0 0.0
    %791 = vmatpush1.msra.mxu0 %v133
    %792 = vmatprep.subr.mxu0 0.0
    %793 = vmatpush1.msra.mxu0 %v134
    %794 = vmatprep.subr.mxu0 0.0
    %795 = vmatpush1.msra.mxu0 %v135
    %796 = vmatprep.subr.mxu0 0.0
    %797 = vmatpush1.msra.mxu0 %v136
    %798 = vmatprep.subr.mxu0 0.0
    %799 = vmatpush1.msra.mxu0 %v137
    %800 = vmatprep.subr.mxu0 0.0
    %801 = vmatpush1.msra.mxu0 %v138
    %802 = vmatprep.subr.mxu0 0.0
    %803 = vmatpush1.msra.mxu0 %v139
    %804 = vmatprep.subr.mxu0 0.0
    %805 = vmatpush1.msra.mxu0 %v140
    %806 = vmatprep.subr.mxu0 0.0
    %807 = vmatpush1.msra.mxu0 %v141
    %808 = vmatprep.subr.mxu0 0.0
    %809 = vmatpush1.msra.mxu0 %v142
    %810 = vmatprep.subr.mxu0 0.0
    %811 = vmatpush1.msra.mxu0 %v143
    %812 = vmatprep.subr.mxu0 0.0
    %813 = vmatpush1.msra.mxu0 %v144
    %814 = vmatprep.subr.mxu0 0.0
    %815 = vmatpush1.msra.mxu0 %v145
    %816 = vmatprep.subr.mxu0 0.0
    %817 = vmatpush1.msra.mxu0 %v146
    %818 = vmatprep.subr.mxu0 0.0
    %819 = vmatpush1.msra.mxu0 %v147
    %820 = vmatprep.subr.mxu0 0.0
    %821 = vmatpush1.msra.mxu0 %v148
    %822 = vmatprep.subr.mxu0 0.0
    %823 = vmatpush1.msra.mxu0 %v149
    %824 = vmatprep.subr.mxu0 0.0
    %825 = vmatpush1.msra.mxu0 %v150
    %826 = vmatprep.subr.mxu0 0.0
    %827 = vmatpush1.msra.mxu0 %v151
    %828 = vmatprep.subr.mxu0 0.0
    %829 = vmatpush1.msra.mxu0 %v152
    %830 = vmatprep.subr.mxu0 0.0
    %831 = vmatpush1.msra.mxu0 %v153
    %832 = vmatprep.subr.mxu0 0.0
    %833 = vmatpush1.msra.mxu0 %v154
    %834 = vmatprep.subr.mxu0 0.0
    %835 = vmatpush1.msra.mxu0 %v155
    %836 = vmatprep.subr.mxu0 0.0
    %837 = vmatpush1.msra.mxu0 %v156
    %838 = vmatprep.subr.mxu0 0.0
    %839 = vmatpush1.msra.mxu0 %v157
    %840 = vmatprep.subr.mxu0 0.0
    %841 = vmatpush1.msra.mxu0 %v158
    %842 = vmatprep.subr.mxu0 0.0
    %843 = vmatpush1.msra.mxu0 %v159
    %844 = vmatprep.subr.mxu0 0.0
    %845 = vmatpush1.msra.mxu0 %v160
    %846 = vmatprep.subr.mxu0 0.0
    %847 = vmatpush1.msra.mxu0 %v161
    %848 = vmatprep.subr.mxu0 0.0
    %849 = vmatpush1.msra.mxu0 %v162
    %850 = vmatprep.subr.mxu0 0.0
    %851 = vmatpush1.msra.mxu0 %v163
    %852 = vmatprep.mubr.f32.mxu0 %v475
    %853 = vmatmul.mubr.f32.gmra.mrb[0].mxu0 %v473
    %v854 = vpop.f32.mrb[0].mxu0
    %v855 = vadd.f32 %v785, %v854
    %v856 = vpop.f32.mrb[0].mxu0
    %857 = vdwg.mxu0
    %858 = vmatprep.subr.mxu0 0.0
    %859 = vmatpush1.msra.mxu0 %v164
    %860 = vmatprep.subr.mxu0 0.0
    %861 = vmatpush1.msra.mxu0 %v165
    %862 = vmatprep.subr.mxu0 0.0
    %863 = vmatpush1.msra.mxu0 %v166
    %864 = vmatprep.subr.mxu0 0.0
    %865 = vmatpush1.msra.mxu0 %v167
    %866 = vmatprep.subr.mxu0 0.0
    %867 = vmatpush1.msra.mxu0 %v168
    %868 = vmatprep.subr.mxu0 0.0
    %869 = vmatpush1.msra.mxu0 %v169
    %870 = vmatprep.subr.mxu0 0.0
    %871 = vmatpush1.msra.mxu0 %v170
    %872 = vmatprep.subr.mxu0 0.0
    %873 = vmatpush1.msra.mxu0 %v171
    %874 = vmatprep.subr.mxu0 0.0
    %875 = vmatpush1.msra.mxu0 %v172
    %876 = vmatprep.subr.mxu0 0.0
    %877 = vmatpush1.msra.mxu0 %v173
    %878 = vmatprep.subr.mxu0 0.0
    %879 = vmatpush1.msra.mxu0 %v174
    %880 = vmatprep.subr.mxu0 0.0
    %881 = vmatpush1.msra.mxu0 %v175
    %882 = vmatprep.subr.mxu0 0.0
    %883 = vmatpush1.msra.mxu0 %v176
    %884 = vmatprep.subr.mxu0 0.0
    %885 = vmatpush1.msra.mxu0 %v177
    %886 = vmatprep.subr.mxu0 0.0
    %887 = vmatpush1.msra.mxu0 %v178
    %888 = vmatprep.subr.mxu0 0.0
    %889 = vmatpush1.msra.mxu0 %v179
    %890 = vmatprep.subr.mxu0 0.0
    %891 = vmatpush1.msra.mxu0 %v180
    %892 = vmatprep.subr.mxu0 0.0
    %893 = vmatpush1.msra.mxu0 %v181
    %894 = vmatprep.subr.mxu0 0.0
    %895 = vmatpush1.msra.mxu0 %v182
    %896 = vmatprep.subr.mxu0 0.0
    %897 = vmatpush1.msra.mxu0 %v183
    %898 = vmatprep.subr.mxu0 0.0
    %899 = vmatpush1.msra.mxu0 %v184
    %900 = vmatprep.subr.mxu0 0.0
    %901 = vmatpush1.msra.mxu0 %v185
    %902 = vmatprep.subr.mxu0 0.0
    %903 = vmatpush1.msra.mxu0 %v186
    %904 = vmatprep.subr.mxu0 0.0
    %905 = vmatpush1.msra.mxu0 %v187
    %906 = vmatprep.subr.mxu0 0.0
    %907 = vmatpush1.msra.mxu0 %v188
    %908 = vmatprep.subr.mxu0 0.0
    %909 = vmatpush1.msra.mxu0 %v189
    %910 = vmatprep.subr.mxu0 0.0
    %911 = vmatpush1.msra.mxu0 %v190
    %912 = vmatprep.subr.mxu0 0.0
    %913 = vmatpush1.msra.mxu0 %v191
    %914 = vmatprep.subr.mxu0 0.0
    %915 = vmatpush1.msra.mxu0 %v192
    %916 = vmatprep.subr.mxu0 0.0
    %917 = vmatpush1.msra.mxu0 %v193
    %918 = vmatprep.subr.mxu0 0.0
    %919 = vmatpush1.msra.mxu0 %v194
    %920 = vmatprep.subr.mxu0 0.0
    %921 = vmatpush1.msra.mxu0 %v195
    %922 = vmatprep.mubr.f32.mxu0 %v491
    %923 = vmatmul.mubr.f32.gmra.mrb[0].mxu0 %v483
    %v924 = vpop.f32.mrb[0].mxu0
    %v925 = vadd.f32 %v855, %v924
    %v926 = vpop.f32.mrb[0].mxu0
    %927 = vdwg.mxu0
    %928 = vmatprep.subr.mxu0 0.0
    %929 = vmatpush1.msra.mxu0 %v196
    %930 = vmatprep.subr.mxu0 0.0
    %931 = vmatpush1.msra.mxu0 %v197
    %932 = vmatprep.subr.mxu0 0.0
    %933 = vmatpush1.msra.mxu0 %v198
    %934 = vmatprep.subr.mxu0 0.0
    %935 = vmatpush1.msra.mxu0 %v199
    %936 = vmatprep.subr.mxu0 0.0
    %937 = vmatpush1.msra.mxu0 %v200
    %938 = vmatprep.subr.mxu0 0.0
    %939 = vmatpush1.msra.mxu0 %v201
    %940 = vmatprep.subr.mxu0 0.0
    %941 = vmatpush1.msra.mxu0 %v202
    %942 = vmatprep.subr.mxu0 0.0
    %943 = vmatpush1.msra.mxu0 %v203
    %944 = vmatprep.subr.mxu0 0.0
    %945 = vmatpush1.msra.mxu0 %v204
    %946 = vmatprep.subr.mxu0 0.0
    %947 = vmatpush1.msra.mxu0 %v205
    %948 = vmatprep.subr.mxu0 0.0
    %949 = vmatpush1.msra.mxu0 %v206
    %950 = vmatprep.subr.mxu0 0.0
    %951 = vmatpush1.msra.mxu0 %v207
    %952 = vmatprep.subr.mxu0 0.0
    %953 = vmatpush1.msra.mxu0 %v208
    %954 = vmatprep.subr.mxu0 0.0
    %955 = vmatpush1.msra.mxu0 %v209
    %956 = vmatprep.subr.mxu0 0.0
    %957 = vmatpush1.msra.mxu0 %v210
    %958 = vmatprep.subr.mxu0 0.0
    %959 = vmatpush1.msra.mxu0 %v211
    %960 = vmatprep.subr.mxu0 0.0
    %961 = vmatpush1.msra.mxu0 %v212
    %962 = vmatprep.subr.mxu0 0.0
    %963 = vmatpush1.msra.mxu0 %v213
    %964 = vmatprep.subr.mxu0 0.0
    %965 = vmatpush1.msra.mxu0 %v214
    %966 = vmatprep.subr.mxu0 0.0
    %967 = vmatpush1.msra.mxu0 %v215
    %968 = vmatprep.subr.mxu0 0.0
    %969 = vmatpush1.msra.mxu0 %v216
    %970 = vmatprep.subr.mxu0 0.0
    %971 = vmatpush1.msra.mxu0 %v217
    %972 = vmatprep.subr.mxu0 0.0
    %973 = vmatpush1.msra.mxu0 %v218
    %974 = vmatprep.subr.mxu0 0.0
    %975 = vmatpush1.msra.mxu0 %v219
    %976 = vmatprep.subr.mxu0 0.0
    %977 = vmatpush1.msra.mxu0 %v220
    %978 = vmatprep.subr.mxu0 0.0
    %979 = vmatpush1.msra.mxu0 %v221
    %980 = vmatprep.subr.mxu0 0.0
    %981 = vmatpush1.msra.mxu0 %v222
    %982 = vmatprep.subr.mxu0 0.0
    %983 = vmatpush1.msra.mxu0 %v223
    %984 = vmatprep.subr.mxu0 0.0
    %985 = vmatpush1.msra.mxu0 %v224
    %986 = vmatprep.subr.mxu0 0.0
    %987 = vmatpush1.msra.mxu0 %v225
    %988 = vmatprep.subr.mxu0 0.0
    %989 = vmatpush1.msra.mxu0 %v226
    %990 = vmatprep.subr.mxu0 0.0
    %991 = vmatpush1.msra.mxu0 %v227
    %992 = vmatprep.mubr.f32.mxu0 %v492
    %993 = vmatmul.mubr.f32.gmra.mrb[0].mxu0 %v490
    %v994 = vpop.f32.mrb[0].mxu0
    %v995 = vadd.f32 %v925, %v994
    %v996 = vpop.f32.mrb[0].mxu0
    %997 = vdwg.mxu0
    %998 = vmatprep.subr.mxu0 0.0
    %999 = vmatpush1.msra.mxu0 %v228
    %1000 = vmatprep.subr.mxu0 0.0
    %1001 = vmatpush1.msra.mxu0 %v229
    %1002 = vmatprep.subr.mxu0 0.0
    %1003 = vmatpush1.msra.mxu0 %v230
    %1004 = vmatprep.subr.mxu0 0.0
    %1005 = vmatpush1.msra.mxu0 %v231
    %1006 = vmatprep.subr.mxu0 0.0
    %1007 = vmatpush1.msra.mxu0 %v232
    %1008 = vmatprep.subr.mxu0 0.0
    %1009 = vmatpush1.msra.mxu0 %v233
    %1010 = vmatprep.subr.mxu0 0.0
    %1011 = vmatpush1.msra.mxu0 %v234
    %1012 = vmatprep.subr.mxu0 0.0
    %1013 = vmatpush1.msra.mxu0 %v235
    %1014 = vmatprep.subr.mxu0 0.0
    %1015 = vmatpush1.msra.mxu0 %v236
    %1016 = vmatprep.subr.mxu0 0.0
    %1017 = vmatpush1.msra.mxu0 %v237
    %1018 = vmatprep.subr.mxu0 0.0
    %1019 = vmatpush1.msra.mxu0 %v238
    %1020 = vmatprep.subr.mxu0 0.0
    %1021 = vmatpush1.msra.mxu0 %v239
    %1022 = vmatprep.subr.mxu0 0.0
    %1023 = vmatpush1.msra.mxu0 %v240
    %1024 = vmatprep.subr.mxu0 0.0
    %1025 = vmatpush1.msra.mxu0 %v241
    %1026 = vmatprep.subr.mxu0 0.0
    %1027 = vmatpush1.msra.mxu0 %v242
    %1028 = vmatprep.subr.mxu0 0.0
    %1029 = vmatpush1.msra.mxu0 %v243
    %1030 = vmatprep.subr.mxu0 0.0
    %1031 = vmatpush1.msra.mxu0 %v244
    %1032 = vmatprep.subr.mxu0 0.0
    %1033 = vmatpush1.msra.mxu0 %v245
    %1034 = vmatprep.subr.mxu0 0.0
    %1035 = vmatpush1.msra.mxu0 %v246
    %1036 = vmatprep.subr.mxu0 0.0
    %1037 = vmatpush1.msra.mxu0 %v247
    %1038 = vmatprep.subr.mxu0 0.0
    %1039 = vmatpush1.msra.mxu0 %v248
    %1040 = vmatprep.subr.mxu0 0.0
    %1041 = vmatpush1.msra.mxu0 %v249
    %1042 = vmatprep.subr.mxu0 0.0
    %1043 = vmatpush1.msra.mxu0 %v250
    %1044 = vmatprep.subr.mxu0 0.0
    %1045 = vmatpush1.msra.mxu0 %v251
    %1046 = vmatprep.subr.mxu0 0.0
    %1047 = vmatpush1.msra.mxu0 %v252
    %1048 = vmatprep.subr.mxu0 0.0
    %1049 = vmatpush1.msra.mxu0 %v253
    %1050 = vmatprep.subr.mxu0 0.0
    %1051 = vmatpush1.msra.mxu0 %v254
    %1052 = vmatprep.subr.mxu0 0.0
    %1053 = vmatpush1.msra.mxu0 %v255
    %1054 = vmatprep.subr.mxu0 0.0
    %1055 = vmatpush1.msra.mxu0 %v256
    %1056 = vmatprep.subr.mxu0 0.0
    %1057 = vmatpush1.msra.mxu0 %v257
    %1058 = vmatprep.subr.mxu0 0.0
    %1059 = vmatpush1.msra.mxu0 %v258
    %1060 = vmatprep.subr.mxu0 0.0
    %1061 = vmatpush1.msra.mxu0 %v259
    %1062 = vmatprep.mubr.f32.mxu0 %v508
    %1063 = vmatmul.mubr.f32.gmra.mrb[0].mxu0 %v500
    %v1064 = vpop.f32.mrb[0].mxu0
    %v1065 = vadd.f32 %v995, %v1064
    %v1066 = vpop.f32.mrb[0].mxu0
    %1067 = vdwg.mxu0
    %1068 = vmatprep.subr.mxu0 0.0
    %1069 = vmatpush1.msra.mxu0 %v260
    %1070 = vmatprep.subr.mxu0 0.0
    %1071 = vmatpush1.msra.mxu0 %v261
    %1072 = vmatprep.subr.mxu0 0.0
    %1073 = vmatpush1.msra.mxu0 %v262
    %1074 = vmatprep.subr.mxu0 0.0
    %1075 = vmatpush1.msra.mxu0 %v263
    %1076 = vmatprep.subr.mxu0 0.0
    %1077 = vmatpush1.msra.mxu0 %v264
    %1078 = vmatprep.subr.mxu0 0.0
    %1079 = vmatpush1.msra.mxu0 %v265
    %1080 = vmatprep.subr.mxu0 0.0
    %1081 = vmatpush1.msra.mxu0 %v266
    %1082 = vmatprep.subr.mxu0 0.0
    %1083 = vmatpush1.msra.mxu0 %v267
    %1084 = vmatprep.subr.mxu0 0.0
    %1085 = vmatpush1.msra.mxu0 %v268
    %1086 = vmatprep.subr.mxu0 0.0
    %1087 = vmatpush1.msra.mxu0 %v269
    %1088 = vmatprep.subr.mxu0 0.0
    %1089 = vmatpush1.msra.mxu0 %v270
    %1090 = vmatprep.subr.mxu0 0.0
    %1091 = vmatpush1.msra.mxu0 %v271
    %1092 = vmatprep.subr.mxu0 0.0
    %1093 = vmatpush1.msra.mxu0 %v272
    %1094 = vmatprep.subr.mxu0 0.0
    %1095 = vmatpush1.msra.mxu0 %v273
    %1096 = vmatprep.subr.mxu0 0.0
    %1097 = vmatpush1.msra.mxu0 %v274
    %1098 = vmatprep.subr.mxu0 0.0
    %1099 = vmatpush1.msra.mxu0 %v275
    %1100 = vmatprep.subr.mxu0 0.0
    %1101 = vmatpush1.msra.mxu0 %v276
    %1102 = vmatprep.subr.mxu0 0.0
    %1103 = vmatpush1.msra.mxu0 %v277
    %1104 = vmatprep.subr.mxu0 0.0
    %1105 = vmatpush1.msra.mxu0 %v278
    %1106 = vmatprep.subr.mxu0 0.0
    %1107 = vmatpush1.msra.mxu0 %v279
    %1108 = vmatprep.subr.mxu0 0.0
    %1109 = vmatpush1.msra.mxu0 %v280
    %1110 = vmatprep.subr.mxu0 0.0
    %1111 = vmatpush1.msra.mxu0 %v281
    %1112 = vmatprep.subr.mxu0 0.0
    %1113 = vmatpush1.msra.mxu0 %v282
    %1114 = vmatprep.subr.mxu0 0.0
    %1115 = vmatpush1.msra.mxu0 %v283
    %1116 = vmatprep.subr.mxu0 0.0
    %1117 = vmatpush1.msra.mxu0 %v284
    %1118 = vmatprep.subr.mxu0 0.0
    %1119 = vmatpush1.msra.mxu0 %v285
    %1120 = vmatprep.subr.mxu0 0.0
    %1121 = vmatpush1.msra.mxu0 %v286
    %1122 = vmatprep.subr.mxu0 0.0
    %1123 = vmatpush1.msra.mxu0 %v287
    %1124 = vmatprep.subr.mxu0 0.0
    %1125 = vmatpush1.msra.mxu0 %v288
    %1126 = vmatprep.subr.mxu0 0.0
    %1127 = vmatpush1.msra.mxu0 %v289
    %1128 = vmatprep.subr.mxu0 0.0
    %1129 = vmatpush1.msra.mxu0 %v290
    %1130 = vmatprep.subr.mxu0 0.0
    %1131 = vmatpush1.msra.mxu0 %v291
    %1132 = vmatprep.mubr.f32.mxu0 %v509
    %1133 = vmatmul.mubr.f32.gmra.mrb[0].mxu0 %v507
    %v1134 = vpop.f32.mrb[0].mxu0
    %v1135 = vadd.f32 %v1065, %v1134
    %v1136 = vpop.f32.mrb[0].mxu0
    %1137 = vdwg.mxu0
    %1138 = vmatprep.subr.mxu0 0.0
    %1139 = vmatpush1.msra.mxu0 %v292
    %1140 = vmatprep.subr.mxu0 0.0
    %1141 = vmatpush1.msra.mxu0 %v293
    %1142 = vmatprep.subr.mxu0 0.0
    %1143 = vmatpush1.msra.mxu0 %v294
    %1144 = vmatprep.subr.mxu0 0.0
    %1145 = vmatpush1.msra.mxu0 %v295
    %1146 = vmatprep.subr.mxu0 0.0
    %1147 = vmatpush1.msra.mxu0 %v296
    %1148 = vmatprep.subr.mxu0 0.0
    %1149 = vmatpush1.msra.mxu0 %v297
    %1150 = vmatprep.subr.mxu0 0.0
    %1151 = vmatpush1.msra.mxu0 %v298
    %1152 = vmatprep.subr.mxu0 0.0
    %1153 = vmatpush1.msra.mxu0 %v299
    %1154 = vmatprep.subr.mxu0 0.0
    %1155 = vmatpush1.msra.mxu0 %v300
    %1156 = vmatprep.subr.mxu0 0.0
    %1157 = vmatpush1.msra.mxu0 %v301
    %1158 = vmatprep.subr.mxu0 0.0
    %1159 = vmatpush1.msra.mxu0 %v302
    %1160 = vmatprep.subr.mxu0 0.0
    %1161 = vmatpush1.msra.mxu0 %v303
    %1162 = vmatprep.subr.mxu0 0.0
    %1163 = vmatpush1.msra.mxu0 %v304
    %1164 = vmatprep.subr.mxu0 0.0
    %1165 = vmatpush1.msra.mxu0 %v305
    %1166 = vmatprep.subr.mxu0 0.0
    %1167 = vmatpush1.msra.mxu0 %v306
    %1168 = vmatprep.subr.mxu0 0.0
    %1169 = vmatpush1.msra.mxu0 %v307
    %1170 = vmatprep.subr.mxu0 0.0
    %1171 = vmatpush1.msra.mxu0 %v308
    %1172 = vmatprep.subr.mxu0 0.0
    %1173 = vmatpush1.msra.mxu0 %v309
    %1174 = vmatprep.subr.mxu0 0.0
    %1175 = vmatpush1.msra.mxu0 %v310
    %1176 = vmatprep.subr.mxu0 0.0
    %1177 = vmatpush1.msra.mxu0 %v311
    %1178 = vmatprep.subr.mxu0 0.0
    %1179 = vmatpush1.msra.mxu0 %v312
    %1180 = vmatprep.subr.mxu0 0.0
    %1181 = vmatpush1.msra.mxu0 %v313
    %1182 = vmatprep.subr.mxu0 0.0
    %1183 = vmatpush1.msra.mxu0 %v314
    %1184 = vmatprep.subr.mxu0 0.0
    %1185 = vmatpush1.msra.mxu0 %v315
    %1186 = vmatprep.subr.mxu0 0.0
    %1187 = vmatpush1.msra.mxu0 %v316
    %1188 = vmatprep.subr.mxu0 0.0
    %1189 = vmatpush1.msra.mxu0 %v317
    %1190 = vmatprep.subr.mxu0 0.0
    %1191 = vmatpush1.msra.mxu0 %v318
    %1192 = vmatprep.subr.mxu0 0.0
    %1193 = vmatpush1.msra.mxu0 %v319
    %1194 = vmatprep.subr.mxu0 0.0
    %1195 = vmatpush1.msra.mxu0 %v320
    %1196 = vmatprep.subr.mxu0 0.0
    %1197 = vmatpush1.msra.mxu0 %v321
    %1198 = vmatprep.subr.mxu0 0.0
    %1199 = vmatpush1.msra.mxu0 %v322
    %1200 = vmatprep.subr.mxu0 0.0
    %1201 = vmatpush1.msra.mxu0 %v323
    %1202 = vmatprep.mubr.f32.mxu0 %v525
    %1203 = vmatmul.mubr.f32.gmra.mrb[0].mxu0 %v517
    %v1204 = vpop.f32.mrb[0].mxu0
    %v1205 = vadd.f32 %v1135, %v1204
    %v1206 = vpop.f32.mrb[0].mxu0
    %1207 = vdwg.mxu0
    %1208 = vmatprep.subr.mxu0 0.0
    %1209 = vmatpush1.msra.mxu0 %v324
    %1210 = vmatprep.subr.mxu0 0.0
    %1211 = vmatpush1.msra.mxu0 %v325
    %1212 = vmatprep.subr.mxu0 0.0
    %1213 = vmatpush1.msra.mxu0 %v326
    %1214 = vmatprep.subr.mxu0 0.0
    %1215 = vmatpush1.msra.mxu0 %v327
    %1216 = vmatprep.subr.mxu0 0.0
    %1217 = vmatpush1.msra.mxu0 %v328
    %1218 = vmatprep.subr.mxu0 0.0
    %1219 = vmatpush1.msra.mxu0 %v329
    %1220 = vmatprep.subr.mxu0 0.0
    %1221 = vmatpush1.msra.mxu0 %v330
    %1222 = vmatprep.subr.mxu0 0.0
    %1223 = vmatpush1.msra.mxu0 %v331
    %1224 = vmatprep.subr.mxu0 0.0
    %1225 = vmatpush1.msra.mxu0 %v332
    %1226 = vmatprep.subr.mxu0 0.0
    %1227 = vmatpush1.msra.mxu0 %v333
    %1228 = vmatprep.subr.mxu0 0.0
    %1229 = vmatpush1.msra.mxu0 %v334
    %1230 = vmatprep.subr.mxu0 0.0
    %1231 = vmatpush1.msra.mxu0 %v335
    %1232 = vmatprep.subr.mxu0 0.0
    %1233 = vmatpush1.msra.mxu0 %v336
    %1234 = vmatprep.subr.mxu0 0.0
    %1235 = vmatpush1.msra.mxu0 %v337
    %1236 = vmatprep.subr.mxu0 0.0
    %1237 = vmatpush1.msra.mxu0 %v338
    %1238 = vmatprep.subr.mxu0 0.0
    %1239 = vmatpush1.msra.mxu0 %v339
    %1240 = vmatprep.subr.mxu0 0.0
    %1241 = vmatpush1.msra.mxu0 %v340
    %1242 = vmatprep.subr.mxu0 0.0
    %1243 = vmatpush1.msra.mxu0 %v341
    %1244 = vmatprep.subr.mxu0 0.0
    %1245 = vmatpush1.msra.mxu0 %v342
    %1246 = vmatprep.subr.mxu0 0.0
    %1247 = vmatpush1.msra.mxu0 %v343
    %1248 = vmatprep.subr.mxu0 0.0
    %1249 = vmatpush1.msra.mxu0 %v344
    %1250 = vmatprep.subr.mxu0 0.0
    %1251 = vmatpush1.msra.mxu0 %v345
    %1252 = vmatprep.subr.mxu0 0.0
    %1253 = vmatpush1.msra.mxu0 %v346
    %1254 = vmatprep.subr.mxu0 0.0
    %1255 = vmatpush1.msra.mxu0 %v347
    %1256 = vmatprep.subr.mxu0 0.0
    %1257 = vmatpush1.msra.mxu0 %v348
    %1258 = vmatprep.subr.mxu0 0.0
    %1259 = vmatpush1.msra.mxu0 %v349
    %1260 = vmatprep.subr.mxu0 0.0
    %1261 = vmatpush1.msra.mxu0 %v350
    %1262 = vmatprep.subr.mxu0 0.0
    %1263 = vmatpush1.msra.mxu0 %v351
    %1264 = vmatprep.subr.mxu0 0.0
    %1265 = vmatpush1.msra.mxu0 %v352
    %1266 = vmatprep.subr.mxu0 0.0
    %1267 = vmatpush1.msra.mxu0 %v353
    %1268 = vmatprep.subr.mxu0 0.0
    %1269 = vmatpush1.msra.mxu0 %v354
    %1270 = vmatprep.subr.mxu0 0.0
    %1271 = vmatpush1.msra.mxu0 %v355
    %1272 = vmatprep.mubr.f32.mxu0 %v526
    %1273 = vmatmul.mubr.f32.gmra.mrb[0].mxu0 %v524
    %v1274 = vpop.f32.mrb[0].mxu0
    %v1275 = vadd.f32 %v1205, %v1274
    %v1276 = vpop.f32.mrb[0].mxu0
    %1277 = vdwg.mxu0
    %1278 = vmatprep.subr.mxu0 0.0
    %1279 = vmatpush1.msra.mxu0 %v356
    %1280 = vmatprep.subr.mxu0 0.0
    %1281 = vmatpush1.msra.mxu0 %v357
    %1282 = vmatprep.subr.mxu0 0.0
    %1283 = vmatpush1.msra.mxu0 %v358
    %1284 = vmatprep.subr.mxu0 0.0
    %1285 = vmatpush1.msra.mxu0 %v359
    %1286 = vmatprep.subr.mxu0 0.0
    %1287 = vmatpush1.msra.mxu0 %v360
    %1288 = vmatprep.subr.mxu0 0.0
    %1289 = vmatpush1.msra.mxu0 %v361
    %1290 = vmatprep.subr.mxu0 0.0
    %1291 = vmatpush1.msra.mxu0 %v362
    %1292 = vmatprep.subr.mxu0 0.0
    %1293 = vmatpush1.msra.mxu0 %v363
    %1294 = vmatprep.subr.mxu0 0.0
    %1295 = vmatpush1.msra.mxu0 %v364
    %1296 = vmatprep.subr.mxu0 0.0
    %1297 = vmatpush1.msra.mxu0 %v365
    %1298 = vmatprep.subr.mxu0 0.0
    %1299 = vmatpush1.msra.mxu0 %v366
    %1300 = vmatprep.subr.mxu0 0.0
    %1301 = vmatpush1.msra.mxu0 %v367
    %1302 = vmatprep.subr.mxu0 0.0
    %1303 = vmatpush1.msra.mxu0 %v368
    %1304 = vmatprep.subr.mxu0 0.0
    %1305 = vmatpush1.msra.mxu0 %v369
    %1306 = vmatprep.subr.mxu0 0.0
    %1307 = vmatpush1.msra.mxu0 %v370
    %1308 = vmatprep.subr.mxu0 0.0
    %1309 = vmatpush1.msra.mxu0 %v371
    %1310 = vmatprep.subr.mxu0 0.0
    %1311 = vmatpush1.msra.mxu0 %v372
    %1312 = vmatprep.subr.mxu0 0.0
    %1313 = vmatpush1.msra.mxu0 %v373
    %1314 = vmatprep.subr.mxu0 0.0
    %1315 = vmatpush1.msra.mxu0 %v374
    %1316 = vmatprep.subr.mxu0 0.0
    %1317 = vmatpush1.msra.mxu0 %v375
    %1318 = vmatprep.subr.mxu0 0.0
    %1319 = vmatpush1.msra.mxu0 %v376
    %1320 = vmatprep.subr.mxu0 0.0
    %1321 = vmatpush1.msra.mxu0 %v377
    %1322 = vmatprep.subr.mxu0 0.0
    %1323 = vmatpush1.msra.mxu0 %v378
    %1324 = vmatprep.subr.mxu0 0.0
    %1325 = vmatpush1.msra.mxu0 %v379
    %1326 = vmatprep.subr.mxu0 0.0
    %1327 = vmatpush1.msra.mxu0 %v380
    %1328 = vmatprep.subr.mxu0 0.0
    %1329 = vmatpush1.msra.mxu0 %v381
    %1330 = vmatprep.subr.mxu0 0.0
    %1331 = vmatpush1.msra.mxu0 %v382
    %1332 = vmatprep.subr.mxu0 0.0
    %1333 = vmatpush1.msra.mxu0 %v383
    %1334 = vmatprep.subr.mxu0 0.0
    %1335 = vmatpush1.msra.mxu0 %v384
    %1336 = vmatprep.subr.mxu0 0.0
    %1337 = vmatpush1.msra.mxu0 %v385
    %1338 = vmatprep.subr.mxu0 0.0
    %1339 = vmatpush1.msra.mxu0 %v386
    %1340 = vmatprep.subr.mxu0 0.0
    %1341 = vmatpush1.msra.mxu0 %v387
    %1342 = vmatprep.mubr.f32.mxu0 %v542
    %1343 = vmatmul.mubr.f32.gmra.mrb[0].mxu0 %v534
    %v1344 = vpop.f32.mrb[0].mxu0
    %v1345 = vadd.f32 %v1275, %v1344
    %v1346 = vpop.f32.mrb[0].mxu0
    %1347 = vdwg.mxu0
    %1348 = vmatprep.subr.mxu0 0.0
    %1349 = vmatpush1.msra.mxu0 %v388
    %1350 = vmatprep.subr.mxu0 0.0
    %1351 = vmatpush1.msra.mxu0 %v389
    %1352 = vmatprep.subr.mxu0 0.0
    %1353 = vmatpush1.msra.mxu0 %v390
    %1354 = vmatprep.subr.mxu0 0.0
    %1355 = vmatpush1.msra.mxu0 %v391
    %1356 = vmatprep.subr.mxu0 0.0
    %1357 = vmatpush1.msra.mxu0 %v392
    %1358 = vmatprep.subr.mxu0 0.0
    %1359 = vmatpush1.msra.mxu0 %v393
    %1360 = vmatprep.subr.mxu0 0.0
    %1361 = vmatpush1.msra.mxu0 %v394
    %1362 = vmatprep.subr.mxu0 0.0
    %1363 = vmatpush1.msra.mxu0 %v395
    %1364 = vmatprep.subr.mxu0 0.0
    %1365 = vmatpush1.msra.mxu0 %v396
    %1366 = vmatprep.subr.mxu0 0.0
    %1367 = vmatpush1.msra.mxu0 %v397
    %1368 = vmatprep.subr.mxu0 0.0
    %1369 = vmatpush1.msra.mxu0 %v398
    %1370 = vmatprep.subr.mxu0 0.0
    %1371 = vmatpush1.msra.mxu0 %v399
    %1372 = vmatprep.subr.mxu0 0.0
    %1373 = vmatpush1.msra.mxu0 %v400
    %1374 = vmatprep.subr.mxu0 0.0
    %1375 = vmatpush1.msra.mxu0 %v401
    %1376 = vmatprep.subr.mxu0 0.0
    %1377 = vmatpush1.msra.mxu0 %v402
    %1378 = vmatprep.subr.mxu0 0.0
    %1379 = vmatpush1.msra.mxu0 %v403
    %1380 = vmatprep.subr.mxu0 0.0
    %1381 = vmatpush1.msra.mxu0 %v404
    %1382 = vmatprep.subr.mxu0 0.0
    %1383 = vmatpush1.msra.mxu0 %v405
    %1384 = vmatprep.subr.mxu0 0.0
    %1385 = vmatpush1.msra.mxu0 %v406
    %1386 = vmatprep.subr.mxu0 0.0
    %1387 = vmatpush1.msra.mxu0 %v407
    %1388 = vmatprep.subr.mxu0 0.0
    %1389 = vmatpush1.msra.mxu0 %v408
    %1390 = vmatprep.subr.mxu0 0.0
    %1391 = vmatpush1.msra.mxu0 %v409
    %1392 = vmatprep.subr.mxu0 0.0
    %1393 = vmatpush1.msra.mxu0 %v410
    %1394 = vmatprep.subr.mxu0 0.0
    %1395 = vmatpush1.msra.mxu0 %v411
    %1396 = vmatprep.subr.mxu0 0.0
    %1397 = vmatpush1.msra.mxu0 %v412
    %1398 = vmatprep.subr.mxu0 0.0
    %1399 = vmatpush1.msra.mxu0 %v413
    %1400 = vmatprep.subr.mxu0 0.0
    %1401 = vmatpush1.msra.mxu0 %v414
    %1402 = vmatprep.subr.mxu0 0.0
    %1403 = vmatpush1.msra.mxu0 %v415
    %1404 = vmatprep.subr.mxu0 0.0
    %1405 = vmatpush1.msra.mxu0 %v416
    %1406 = vmatprep.subr.mxu0 0.0
    %1407 = vmatpush1.msra.mxu0 %v417
    %1408 = vmatprep.subr.mxu0 0.0
    %1409 = vmatpush1.msra.mxu0 %v418
    %1410 = vmatprep.subr.mxu0 0.0
    %1411 = vmatpush1.msra.mxu0 %v419
    %1412 = vmatprep.mubr.f32.mxu0 %v543
    %1413 = vmatmul.mubr.f32.gmra.mrb[0].mxu0 %v541
    %v1414 = vpop.f32.mrb[0].mxu0
    %v1415 = vadd.f32 %v1345, %v1414
    %v1416 = vpop.f32.mrb[0].mxu0
    %1417 = vdwg.mxu0
    %1418 = vmatprep.subr.mxu0 0.0
    %1419 = vmatpush1.msra.mxu0 %v420
    %1420 = vmatprep.subr.mxu0 0.0
    %1421 = vmatpush1.msra.mxu0 %v421
    %1422 = vmatprep.subr.mxu0 0.0
    %1423 = vmatpush1.msra.mxu0 %v422
    %1424 = vmatprep.subr.mxu0 0.0
    %1425 = vmatpush1.msra.mxu0 %v423
    %1426 = vmatprep.subr.mxu0 0.0
    %1427 = vmatpush1.msra.mxu0 %v424
    %1428 = vmatprep.subr.mxu0 0.0
    %1429 = vmatpush1.msra.mxu0 %v425
    %1430 = vmatprep.subr.mxu0 0.0
    %1431 = vmatpush1.msra.mxu0 %v426
    %1432 = vmatprep.subr.mxu0 0.0
    %1433 = vmatpush1.msra.mxu0 %v427
    %1434 = vmatprep.subr.mxu0 0.0
    %1435 = vmatpush1.msra.mxu0 0.0
    %1436 = vmatprep.subr.mxu0 0.0
    %1437 = vmatpush1.msra.mxu0 0.0
    %1438 = vmatprep.subr.mxu0 0.0
    %1439 = vmatpush1.msra.mxu0 0.0
    %1440 = vmatprep.subr.mxu0 0.0
    %1441 = vmatpush1.msra.mxu0 0.0
    %1442 = vmatprep.subr.mxu0 0.0
    %1443 = vmatpush1.msra.mxu0 0.0
    %1444 = vmatprep.subr.mxu0 0.0
    %1445 = vmatpush1.msra.mxu0 0.0
    %1446 = vmatprep.subr.mxu0 0.0
    %1447 = vmatpush1.msra.mxu0 0.0
    %1448 = vmatprep.subr.mxu0 0.0
    %1449 = vmatpush1.msra.mxu0 0.0
    %1450 = vmatprep.subr.mxu0 0.0
    %1451 = vmatpush1.msra.mxu0 0.0
    %1452 = vmatprep.subr.mxu0 0.0
    %1453 = vmatpush1.msra.mxu0 0.0
    %1454 = vmatprep.subr.mxu0 0.0
    %1455 = vmatpush1.msra.mxu0 0.0
    %1456 = vmatprep.subr.mxu0 0.0
    %1457 = vmatpush1.msra.mxu0 0.0
    %1458 = vmatprep.subr.mxu0 0.0
    %1459 = vmatpush1.msra.mxu0 0.0
    %1460 = vmatprep.subr.mxu0 0.0
    %1461 = vmatpush1.msra.mxu0 0.0
    %1462 = vmatprep.subr.mxu0 0.0
    %1463 = vmatpush1.msra.mxu0 0.0
    %1464 = vmatprep.subr.mxu0 0.0
    %1465 = vmatpush1.msra.mxu0 0.0
    %1466 = vmatprep.subr.mxu0 0.0
    %1467 = vmatpush1.msra.mxu0 0.0
    %1468 = vmatprep.subr.mxu0 0.0
    %1469 = vmatpush1.msra.mxu0 0.0
    %1470 = vmatprep.subr.mxu0 0.0
    %1471 = vmatpush1.msra.mxu0 0.0
    %1472 = vmatprep.subr.mxu0 0.0
    %1473 = vmatpush1.msra.mxu0 0.0
    %1474 = vmatprep.subr.mxu0 0.0
    %1475 = vmatpush1.msra.mxu0 0.0
    %1476 = vmatprep.subr.mxu0 0.0
    %1477 = vmatpush1.msra.mxu0 0.0
    %1478 = vmatprep.subr.mxu0 0.0
    %1479 = vmatpush1.msra.mxu0 0.0
    %1480 = vmatprep.subr.mxu0 0.0
    %1481 = vmatpush1.msra.mxu0 0.0
    %1482 = vmatprep.mubr.f32.mxu0 0.0
    %1483 = vmatmul.mubr.f32.gmra.mrb[0].mxu0 %v576
    %v1484 = vpop.f32.mrb[0].mxu0
    %v1485 = vadd.f32 %v1415, %v1484
    %v1486 = vpop.f32.mrb[0].mxu0
    %1487 = vdwg.mxu0
    %v1488 = vld [vmem:[%s3] sm:$0x3]
    %v1489 = vmul.f32 %v1485, 0.5
    %v1490 = vmul.f32 %v1489, 1.442695
    %v1491 = vpow.pop %v1490
    %1493 = vrot.lane.b32.xlu0 %v1491, 126
    %v1494 = vpop.permute.xlu0 %1493
    %v1496 = vmul.f32 %v1488, %v1494
    %v1497 = vadd.f32 %v1485, %v1496
    %vm1498 = vcmask 9216
    %1499 = vst.msk [vmem:[#allocation2] sm:$0x3] %vm1498, %v1485
    %1501 = vrot.lane.b32.xlu0 %v1485, 126
    %v1502 = vpop.permute.xlu0 %1501
    %1504 = vst.msk [vmem:[#allocation4] sm:$0x3] %vm1498, %v1502
    %1505 = vst.msk [vmem:[#allocation6] sm:$0x3] %vm1498, %v1497
    %v1506 = vld [vmem:[%s4] sm:$0xff]
    %v1507 = vld [vmem:[%s4 + $0x8] sm:$0xff]
    %v1508 = vld [vmem:[%s4 + $0x10] sm:$0xff]
    %v1509 = vld [vmem:[%s4 + $0x18] sm:$0xff]
    %v1510 = vld [vmem:[%s4 + $0x20] sm:$0xff]
    %v1511 = vld [vmem:[%s4 + $0x28] sm:$0xff]
    %v1512 = vld [vmem:[%s4 + $0x30] sm:$0x3]
    %v1513 = vld [vmem:[%s5] sm:$0xff]
    %v1514 = vld [vmem:[%s5 + $0x8] sm:$0xff]
    %v1515 = vld [vmem:[%s5 + $0x10] sm:$0xff]
    %v1516 = vld [vmem:[%s5 + $0x18] sm:$0x1]
    %v1521 = vlaneseq
    %v1522 = vshrl.u32 %v1521, 7
    %v1523 = vsub.s32 0, %v1522
    %v1524 = vrot.slane %v1513, %v1523
    %v1525 = vlaneseq
    %v1526 = vshrl.u32 %v1525, 7
    %v1527 = vsub.s32 1, %v1526
    %v1528 = vrot.slane %v1513, %v1527
    %v1529 = vlaneseq
    %v1530 = vshrl.u32 %v1529, 7
    %v1531 = vsub.s32 2, %v1530
    %v1532 = vrot.slane %v1513, %v1531
    %v1533 = vlaneseq
    %v1534 = vshrl.u32 %v1533, 7
    %v1535 = vsub.s32 3, %v1534
    %v1536 = vrot.slane %v1513, %v1535
    %v1537 = vlaneseq
    %v1538 = vshrl.u32 %v1537, 7
    %v1539 = vsub.s32 4, %v1538
    %v1540 = vrot.slane %v1513, %v1539
    %v1541 = vlaneseq
    %v1542 = vshrl.u32 %v1541, 7
    %v1543 = vsub.s32 5, %v1542
    %v1544 = vrot.slane %v1513, %v1543
    %v1545 = vlaneseq
    %v1546 = vshrl.u32 %v1545, 7
    %v1547 = vsub.s32 6, %v1546
    %v1548 = vrot.slane %v1513, %v1547
    %v1549 = vlaneseq
    %v1550 = vshrl.u32 %v1549, 7
    %v1551 = vsub.s32 7, %v1550
    %v1552 = vrot.slane %v1513, %v1551
    %v1553 = vlaneseq
    %v1554 = vshrl.u32 %v1553, 7
    %v1555 = vsub.s32 0, %v1554
    %v1556 = vrot.slane %v1514, %v1555
    %v1557 = vlaneseq
    %v1558 = vshrl.u32 %v1557, 7
    %v1559 = vsub.s32 1, %v1558
    %v1560 = vrot.slane %v1514, %v1559
    %v1561 = vlaneseq
    %v1562 = vshrl.u32 %v1561, 7
    %v1563 = vsub.s32 2, %v1562
    %v1564 = vrot.slane %v1514, %v1563
    %v1565 = vlaneseq
    %v1566 = vshrl.u32 %v1565, 7
    %v1567 = vsub.s32 3, %v1566
    %v1568 = vrot.slane %v1514, %v1567
    %v1569 = vlaneseq
    %v1570 = vshrl.u32 %v1569, 7
    %v1571 = vsub.s32 4, %v1570
    %v1572 = vrot.slane %v1514, %v1571
    %v1573 = vlaneseq
    %v1574 = vshrl.u32 %v1573, 7
    %v1575 = vsub.s32 5, %v1574
    %v1576 = vrot.slane %v1514, %v1575
    %v1577 = vlaneseq
    %v1578 = vshrl.u32 %v1577, 7
    %v1579 = vsub.s32 6, %v1578
    %v1580 = vrot.slane %v1514, %v1579
    %v1581 = vlaneseq
    %v1582 = vshrl.u32 %v1581, 7
    %v1583 = vsub.s32 7, %v1582
    %v1584 = vrot.slane %v1514, %v1583
    %v1585 = vlaneseq
    %v1586 = vshrl.u32 %v1585, 7
    %v1587 = vsub.s32 0, %v1586
    %v1588 = vrot.slane %v1515, %v1587
    %v1589 = vlaneseq
    %v1590 = vshrl.u32 %v1589, 7
    %v1591 = vsub.s32 1, %v1590
    %v1592 = vrot.slane %v1515, %v1591
    %v1593 = vlaneseq
    %v1594 = vshrl.u32 %v1593, 7
    %v1595 = vsub.s32 2, %v1594
    %v1596 = vrot.slane %v1515, %v1595
    %v1597 = vlaneseq
    %v1598 = vshrl.u32 %v1597, 7
    %v1599 = vsub.s32 3, %v1598
    %v1600 = vrot.slane %v1515, %v1599
    %v1601 = vlaneseq
    %v1602 = vshrl.u32 %v1601, 7
    %v1603 = vsub.s32 4, %v1602
    %v1604 = vrot.slane %v1515, %v1603
    %v1605 = vlaneseq
    %v1606 = vshrl.u32 %v1605, 7
    %v1607 = vsub.s32 5, %v1606
    %v1608 = vrot.slane %v1515, %v1607
    %v1609 = vlaneseq
    %v1610 = vshrl.u32 %v1609, 7
    %v1611 = vsub.s32 6, %v1610
    %v1612 = vrot.slane %v1515, %v1611
    %v1613 = vlaneseq
    %v1614 = vshrl.u32 %v1613, 7
    %v1615 = vsub.s32 7, %v1614
    %v1616 = vrot.slane %v1515, %v1615
    %v1617 = vlaneseq
    %v1618 = vshrl.u32 %v1617, 7
    %v1619 = vsub.s32 0, %v1618
    %v1620 = vrot.slane %v1516, %v1619
    %v1653 = vcombine.high %v1506, %v1506
    %v1655 = vunpack.c.l.s4 1983009808
    %v1656 = vunpack.c.0.s8 %v1655
    %v1657 = vlaneseq
    %v1658 = vshrl.u32 %v1657, 7
    %v1659 = vsub.s32 %v1656, %v1658
    %v1660 = vrot.slane %v1506, %v1659
    %v1662 = vunpack.c.l.s4 1983009808
    %v1663 = vunpack.c.0.s8 %v1662
    %v1664 = vlaneseq
    %v1665 = vshrl.u32 %v1664, 7
    %v1666 = vsub.s32 %v1663, %v1665
    %v1667 = vrot.slane %v1653, %v1666
    %v1668 = vcombine.high %v1660, %v1660
    %v1669 = vcombine.high %v1667, %v1667
    %v1670 = vcombine.high %v1507, %v1507
    %v1672 = vunpack.c.l.s4 1983009808
    %v1673 = vunpack.c.0.s8 %v1672
    %v1674 = vlaneseq
    %v1675 = vshrl.u32 %v1674, 7
    %v1676 = vsub.s32 %v1673, %v1675
    %v1677 = vrot.slane %v1507, %v1676
    %v1679 = vunpack.c.l.s4 1983009808
    %v1680 = vunpack.c.0.s8 %v1679
    %v1681 = vlaneseq
    %v1682 = vshrl.u32 %v1681, 7
    %v1683 = vsub.s32 %v1680, %v1682
    %v1684 = vrot.slane %v1670, %v1683
    %v1685 = vcombine.high %v1677, %v1677
    %v1686 = vcombine.high %v1684, %v1684
    %v1687 = vcombine.high %v1508, %v1508
    %v1689 = vunpack.c.l.s4 1983009808
    %v1690 = vunpack.c.0.s8 %v1689
    %v1691 = vlaneseq
    %v1692 = vshrl.u32 %v1691, 7
    %v1693 = vsub.s32 %v1690, %v1692
    %v1694 = vrot.slane %v1508, %v1693
    %v1696 = vunpack.c.l.s4 1983009808
    %v1697 = vunpack.c.0.s8 %v1696
    %v1698 = vlaneseq
    %v1699 = vshrl.u32 %v1698, 7
    %v1700 = vsub.s32 %v1697, %v1699
    %v1701 = vrot.slane %v1687, %v1700
    %v1702 = vcombine.high %v1694, %v1694
    %v1703 = vcombine.high %v1701, %v1701
    %v1704 = vcombine.high %v1509, %v1509
    %v1706 = vunpack.c.l.s4 1983009808
    %v1707 = vunpack.c.0.s8 %v1706
    %v1708 = vlaneseq
    %v1709 = vshrl.u32 %v1708, 7
    %v1710 = vsub.s32 %v1707, %v1709
    %v1711 = vrot.slane %v1509, %v1710
    %v1713 = vunpack.c.l.s4 1983009808
    %v1714 = vunpack.c.0.s8 %v1713
    %v1715 = vlaneseq
    %v1716 = vshrl.u32 %v1715, 7
    %v1717 = vsub.s32 %v1714, %v1716
    %v1718 = vrot.slane %v1704, %v1717
    %v1719 = vcombine.high %v1711, %v1711
    %v1720 = vcombine.high %v1718, %v1718
    %v1721 = vcombine.high %v1510, %v1510
    %v1723 = vunpack.c.l.s4 1983009808
    %v1724 = vunpack.c.0.s8 %v1723
    %v1725 = vlaneseq
    %v1726 = vshrl.u32 %v1725, 7
    %v1727 = vsub.s32 %v1724, %v1726
    %v1728 = vrot.slane %v1510, %v1727
    %v1730 = vunpack.c.l.s4 1983009808
    %v1731 = vunpack.c.0.s8 %v1730
    %v1732 = vlaneseq
    %v1733 = vshrl.u32 %v1732, 7
    %v1734 = vsub.s32 %v1731, %v1733
    %v1735 = vrot.slane %v1721, %v1734
    %v1736 = vcombine.high %v1728, %v1728
    %v1737 = vcombine.high %v1735, %v1735
    %v1738 = vcombine.high %v1511, %v1511
    %v1740 = vunpack.c.l.s4 1983009808
    %v1741 = vunpack.c.0.s8 %v1740
    %v1742 = vlaneseq
    %v1743 = vshrl.u32 %v1742, 7
    %v1744 = vsub.s32 %v1741, %v1743
    %v1745 = vrot.slane %v1511, %v1744
    %v1747 = vunpack.c.l.s4 1983009808
    %v1748 = vunpack.c.0.s8 %v1747
    %v1749 = vlaneseq
    %v1750 = vshrl.u32 %v1749, 7
    %v1751 = vsub.s32 %v1748, %v1750
    %v1752 = vrot.slane %v1738, %v1751
    %v1753 = vcombine.high %v1745, %v1745
    %v1754 = vcombine.high %v1752, %v1752
    %v1756 = vunpack.c.l.s4 1983009808
    %v1757 = vunpack.c.0.s8 %v1756
    %v1758 = vlaneseq
    %v1759 = vshrl.u32 %v1758, 7
    %v1760 = vsub.s32 %v1757, %v1759
    %v1761 = vrot.slane %v1512, %v1760
    %vm1762 = vcmask 15360
    %v1764 = vsel %vm1762, %v1497, 0
    %vm1766 = vcmask 1041408
    %v1767 = vsel %vm1766, %v1660, 0
    %v1769 = vsel %vm1766, %v1668, 0
    %v1771 = vsel %vm1766, %v1667, 0
    %v1773 = vsel %vm1766, %v1669, 0
    %v1775 = vsel %vm1766, %v1677, 0
    %v1777 = vsel %vm1766, %v1685, 0
    %v1779 = vsel %vm1766, %v1684, 0
    %v1781 = vsel %vm1766, %v1686, 0
    %v1783 = vsel %vm1766, %v1694, 0
    %v1785 = vsel %vm1766, %v1702, 0
    %v1787 = vsel %vm1766, %v1701, 0
    %v1789 = vsel %vm1766, %v1703, 0
    %v1791 = vsel %vm1766, %v1711, 0
    %v1793 = vsel %vm1766, %v1719, 0
    %v1795 = vsel %vm1766, %v1718, 0
    %v1797 = vsel %vm1766, %v1720, 0
    %v1799 = vsel %vm1766, %v1728, 0
    %v1801 = vsel %vm1766, %v1736, 0
    %v1803 = vsel %vm1766, %v1735, 0
    %v1805 = vsel %vm1766, %v1737, 0
    %v1807 = vsel %vm1766, %v1745, 0
    %v1809 = vsel %vm1766, %v1753, 0
    %v1811 = vsel %vm1766, %v1752, 0
    %v1813 = vsel %vm1766, %v1754, 0
    %v1815 = vsel %vm1766, %v1761, 0
    %1817 = vmatprep.subr.mxu0 %v1769
    %1818 = vmatpush1.msra.mxu0 %v1767
    %1819 = vmatprep.subr.mxu0 0.0
    %1820 = vmatpush1.msra.mxu0 0.0
    %1821 = vmatprep.subr.mxu0 0.0
    %1822 = vmatpush1.msra.mxu0 0.0
    %1823 = vmatprep.subr.mxu0 0.0
    %1824 = vmatpush1.msra.mxu0 0.0
    %1825 = vmatprep.subr.mxu0 0.0
    %1826 = vmatpush1.msra.mxu0 0.0
    %1827 = vmatprep.subr.mxu0 0.0
    %1828 = vmatpush1.msra.mxu0 0.0
    %1829 = vmatprep.subr.mxu0 0.0
    %1830 = vmatpush1.msra.mxu0 0.0
    %1831 = vmatprep.subr.mxu0 0.0
    %1832 = vmatpush1.msra.mxu0 0.0
    %1833 = vmatprep.subr.mxu0 0.0
    %1834 = vmatpush1.msra.mxu0 0.0
    %1835 = vmatprep.subr.mxu0 0.0
    %1836 = vmatpush1.msra.mxu0 0.0
    %1837 = vmatprep.subr.mxu0 0.0
    %1838 = vmatpush1.msra.mxu0 0.0
    %1839 = vmatprep.subr.mxu0 0.0
    %1840 = vmatpush1.msra.mxu0 0.0
    %1841 = vmatprep.subr.mxu0 0.0
    %1842 = vmatpush1.msra.mxu0 0.0
    %1843 = vmatprep.subr.mxu0 0.0
    %1844 = vmatpush1.msra.mxu0 0.0
    %1845 = vmatprep.subr.mxu0 0.0
    %1846 = vmatpush1.msra.mxu0 0.0
    %1847 = vmatprep.subr.mxu0 0.0
    %1848 = vmatpush1.msra.mxu0 0.0
    %1849 = vmatprep.subr.mxu0 0.0
    %1850 = vmatpush1.msra.mxu0 0.0
    %1851 = vmatprep.subr.mxu0 0.0
    %1852 = vmatpush1.msra.mxu0 0.0
    %1853 = vmatprep.subr.mxu0 0.0
    %1854 = vmatpush1.msra.mxu0 0.0
    %1855 = vmatprep.subr.mxu0 0.0
    %1856 = vmatpush1.msra.mxu0 0.0
    %1857 = vmatprep.subr.mxu0 0.0
    %1858 = vmatpush1.msra.mxu0 0.0
    %1859 = vmatprep.subr.mxu0 0.0
    %1860 = vmatpush1.msra.mxu0 0.0
    %1861 = vmatprep.subr.mxu0 0.0
    %1862 = vmatpush1.msra.mxu0 0.0
    %1863 = vmatprep.subr.mxu0 0.0
    %1864 = vmatpush1.msra.mxu0 0.0
    %1865 = vmatprep.subr.mxu0 0.0
    %1866 = vmatpush1.msra.mxu0 0.0
    %1867 = vmatprep.subr.mxu0 0.0
    %1868 = vmatpush1.msra.mxu0 0.0
    %1869 = vmatprep.subr.mxu0 0.0
    %1870 = vmatpush1.msra.mxu0 0.0
    %1871 = vmatprep.subr.mxu0 0.0
    %1872 = vmatpush1.msra.mxu0 0.0
    %1873 = vmatprep.subr.mxu0 0.0
    %1874 = vmatpush1.msra.mxu0 0.0
    %1875 = vmatprep.subr.mxu0 0.0
    %1876 = vmatpush1.msra.mxu0 0.0
    %1877 = vmatprep.subr.mxu0 0.0
    %1878 = vmatpush1.msra.mxu0 0.0
    %1879 = vmatprep.subr.mxu0 0.0
    %1880 = vmatpush1.msra.mxu0 0.0
    %1881 = vmatprep.mubr.f32.mxu0 0.0
    %1882 = vmatmul.mubr.f32.gmra.mrb[0].mxu0 %v1764
    %v1883 = vpop.f32.mrb[0].mxu0
    %v1884 = vadd.f32 %v1524, %v1883
    %v1885 = vpop.f32.mrb[0].mxu0
    %v1886 = vadd.f32 %v1528, %v1885
    %1887 = vdwg.mxu0
    %1888 = vmatprep.subr.mxu0 %v1773
    %1889 = vmatpush1.msra.mxu0 %v1771
    %1890 = vmatprep.subr.mxu0 0.0
    %1891 = vmatpush1.msra.mxu0 0.0
    %1892 = vmatprep.subr.mxu0 0.0
    %1893 = vmatpush1.msra.mxu0 0.0
    %1894 = vmatprep.subr.mxu0 0.0
    %1895 = vmatpush1.msra.mxu0 0.0
    %1896 = vmatprep.subr.mxu0 0.0
    %1897 = vmatpush1.msra.mxu0 0.0
    %1898 = vmatprep.subr.mxu0 0.0
    %1899 = vmatpush1.msra.mxu0 0.0
    %1900 = vmatprep.subr.mxu0 0.0
    %1901 = vmatpush1.msra.mxu0 0.0
    %1902 = vmatprep.subr.mxu0 0.0
    %1903 = vmatpush1.msra.mxu0 0.0
    %1904 = vmatprep.subr.mxu0 0.0
    %1905 = vmatpush1.msra.mxu0 0.0
    %1906 = vmatprep.subr.mxu0 0.0
    %1907 = vmatpush1.msra.mxu0 0.0
    %1908 = vmatprep.subr.mxu0 0.0
    %1909 = vmatpush1.msra.mxu0 0.0
    %1910 = vmatprep.subr.mxu0 0.0
    %1911 = vmatpush1.msra.mxu0 0.0
    %1912 = vmatprep.subr.mxu0 0.0
    %1913 = vmatpush1.msra.mxu0 0.0
    %1914 = vmatprep.subr.mxu0 0.0
    %1915 = vmatpush1.msra.mxu0 0.0
    %1916 = vmatprep.subr.mxu0 0.0
    %1917 = vmatpush1.msra.mxu0 0.0
    %1918 = vmatprep.subr.mxu0 0.0
    %1919 = vmatpush1.msra.mxu0 0.0
    %1920 = vmatprep.subr.mxu0 0.0
    %1921 = vmatpush1.msra.mxu0 0.0
    %1922 = vmatprep.subr.mxu0 0.0
    %1923 = vmatpush1.msra.mxu0 0.0
    %1924 = vmatprep.subr.mxu0 0.0
    %1925 = vmatpush1.msra.mxu0 0.0
    %1926 = vmatprep.subr.mxu0 0.0
    %1927 = vmatpush1.msra.mxu0 0.0
    %1928 = vmatprep.subr.mxu0 0.0
    %1929 = vmatpush1.msra.mxu0 0.0
    %1930 = vmatprep.subr.mxu0 0.0
    %1931 = vmatpush1.msra.mxu0 0.0
    %1932 = vmatprep.subr.mxu0 0.0
    %1933 = vmatpush1.msra.mxu0 0.0
    %1934 = vmatprep.subr.mxu0 0.0
    %1935 = vmatpush1.msra.mxu0 0.0
    %1936 = vmatprep.subr.mxu0 0.0
    %1937 = vmatpush1.msra.mxu0 0.0
    %1938 = vmatprep.subr.mxu0 0.0
    %1939 = vmatpush1.msra.mxu0 0.0
    %1940 = vmatprep.subr.mxu0 0.0
    %1941 = vmatpush1.msra.mxu0 0.0
    %1942 = vmatprep.subr.mxu0 0.0
    %1943 = vmatpush1.msra.mxu0 0.0
    %1944 = vmatprep.subr.mxu0 0.0
    %1945 = vmatpush1.msra.mxu0 0.0
    %1946 = vmatprep.subr.mxu0 0.0
    %1947 = vmatpush1.msra.mxu0 0.0
    %1948 = vmatprep.subr.mxu0 0.0
    %1949 = vmatpush1.msra.mxu0 0.0
    %1950 = vmatprep.subr.mxu0 0.0
    %1951 = vmatpush1.msra.mxu0 0.0
    %1952 = vmatprep.mubr.f32.mxu0 0.0
    %1953 = vmatmul.mubr.f32.gmra.mrb[0].mxu0 %v1764
    %v1954 = vpop.f32.mrb[0].mxu0
    %v1955 = vadd.f32 %v1532, %v1954
    %v1956 = vpop.f32.mrb[0].mxu0
    %v1957 = vadd.f32 %v1536, %v1956
    %1958 = vdwg.mxu0
    %1959 = vmatprep.subr.mxu0 %v1777
    %1960 = vmatpush1.msra.mxu0 %v1775
    %1961 = vmatprep.subr.mxu0 0.0
    %1962 = vmatpush1.msra.mxu0 0.0
    %1963 = vmatprep.subr.mxu0 0.0
    %1964 = vmatpush1.msra.mxu0 0.0
    %1965 = vmatprep.subr.mxu0 0.0
    %1966 = vmatpush1.msra.mxu0 0.0
    %1967 = vmatprep.subr.mxu0 0.0
    %1968 = vmatpush1.msra.mxu0 0.0
    %1969 = vmatprep.subr.mxu0 0.0
    %1970 = vmatpush1.msra.mxu0 0.0
    %1971 = vmatprep.subr.mxu0 0.0
    %1972 = vmatpush1.msra.mxu0 0.0
    %1973 = vmatprep.subr.mxu0 0.0
    %1974 = vmatpush1.msra.mxu0 0.0
    %1975 = vmatprep.subr.mxu0 0.0
    %1976 = vmatpush1.msra.mxu0 0.0
    %1977 = vmatprep.subr.mxu0 0.0
    %1978 = vmatpush1.msra.mxu0 0.0
    %1979 = vmatprep.subr.mxu0 0.0
    %1980 = vmatpush1.msra.mxu0 0.0
    %1981 = vmatprep.subr.mxu0 0.0
    %1982 = vmatpush1.msra.mxu0 0.0
    %1983 = vmatprep.subr.mxu0 0.0
    %1984 = vmatpush1.msra.mxu0 0.0
    %1985 = vmatprep.subr.mxu0 0.0
    %1986 = vmatpush1.msra.mxu0 0.0
    %1987 = vmatprep.subr.mxu0 0.0
    %1988 = vmatpush1.msra.mxu0 0.0
    %1989 = vmatprep.subr.mxu0 0.0
    %1990 = vmatpush1.msra.mxu0 0.0
    %1991 = vmatprep.subr.mxu0 0.0
    %1992 = vmatpush1.msra.mxu0 0.0
    %1993 = vmatprep.subr.mxu0 0.0
    %1994 = vmatpush1.msra.mxu0 0.0
    %1995 = vmatprep.subr.mxu0 0.0
    %1996 = vmatpush1.msra.mxu0 0.0
    %1997 = vmatprep.subr.mxu0 0.0
    %1998 = vmatpush1.msra.mxu0 0.0
    %1999 = vmatprep.subr.mxu0 0.0
    %2000 = vmatpush1.msra.mxu0 0.0
    %2001 = vmatprep.subr.mxu0 0.0
    %2002 = vmatpush1.msra.mxu0 0.0
    %2003 = vmatprep.subr.mxu0 0.0
    %2004 = vmatpush1.msra.mxu0 0.0
    %2005 = vmatprep.subr.mxu0 0.0
    %2006 = vmatpush1.msra.mxu0 0.0
    %2007 = vmatprep.subr.mxu0 0.0
    %2008 = vmatpush1.msra.mxu0 0.0
    %2009 = vmatprep.subr.mxu0 0.0
    %2010 = vmatpush1.msra.mxu0 0.0
    %2011 = vmatprep.subr.mxu0 0.0
    %2012 = vmatpush1.msra.mxu0 0.0
    %2013 = vmatprep.subr.mxu0 0.0
    %2014 = vmatpush1.msra.mxu0 0.0
    %2015 = vmatprep.subr.mxu0 0.0
    %2016 = vmatpush1.msra.mxu0 0.0
    %2017 = vmatprep.subr.mxu0 0.0
    %2018 = vmatpush1.msra.mxu0 0.0
    %2019 = vmatprep.subr.mxu0 0.0
    %2020 = vmatpush1.msra.mxu0 0.0
    %2021 = vmatprep.subr.mxu0 0.0
    %2022 = vmatpush1.msra.mxu0 0.0
    %2023 = vmatprep.mubr.f32.mxu0 0.0
    %2024 = vmatmul.mubr.f32.gmra.mrb[0].mxu0 %v1764
    %v2025 = vpop.f32.mrb[0].mxu0
    %v2026 = vadd.f32 %v1540, %v2025
    %v2027 = vpop.f32.mrb[0].mxu0
    %v2028 = vadd.f32 %v1544, %v2027
    %2029 = vdwg.mxu0
    %2030 = vmatprep.subr.mxu0 %v1781
    %2031 = vmatpush1.msra.mxu0 %v1779
    %2032 = vmatprep.subr.mxu0 0.0
    %2033 = vmatpush1.msra.mxu0 0.0
    %2034 = vmatprep.subr.mxu0 0.0
    %2035 = vmatpush1.msra.mxu0 0.0
    %2036 = vmatprep.subr.mxu0 0.0
    %2037 = vmatpush1.msra.mxu0 0.0
    %2038 = vmatprep.subr.mxu0 0.0
    %2039 = vmatpush1.msra.mxu0 0.0
    %2040 = vmatprep.subr.mxu0 0.0
    %2041 = vmatpush1.msra.mxu0 0.0
    %2042 = vmatprep.subr.mxu0 0.0
    %2043 = vmatpush1.msra.mxu0 0.0
    %2044 = vmatprep.subr.mxu0 0.0
    %2045 = vmatpush1.msra.mxu0 0.0
    %2046 = vmatprep.subr.mxu0 0.0
    %2047 = vmatpush1.msra.mxu0 0.0
    %2048 = vmatprep.subr.mxu0 0.0
    %2049 = vmatpush1.msra.mxu0 0.0
    %2050 = vmatprep.subr.mxu0 0.0
    %2051 = vmatpush1.msra.mxu0 0.0
    %2052 = vmatprep.subr.mxu0 0.0
    %2053 = vmatpush1.msra.mxu0 0.0
    %2054 = vmatprep.subr.mxu0 0.0
    %2055 = vmatpush1.msra.mxu0 0.0
    %2056 = vmatprep.subr.mxu0 0.0
    %2057 = vmatpush1.msra.mxu0 0.0
    %2058 = vmatprep.subr.mxu0 0.0
    %2059 = vmatpush1.msra.mxu0 0.0
    %2060 = vmatprep.subr.mxu0 0.0
    %2061 = vmatpush1.msra.mxu0 0.0
    %2062 = vmatprep.subr.mxu0 0.0
    %2063 = vmatpush1.msra.mxu0 0.0
    %2064 = vmatprep.subr.mxu0 0.0
    %2065 = vmatpush1.msra.mxu0 0.0
    %2066 = vmatprep.subr.mxu0 0.0
    %2067 = vmatpush1.msra.mxu0 0.0
    %2068 = vmatprep.subr.mxu0 0.0
    %2069 = vmatpush1.msra.mxu0 0.0
    %2070 = vmatprep.subr.mxu0 0.0
    %2071 = vmatpush1.msra.mxu0 0.0
    %2072 = vmatprep.subr.mxu0 0.0
    %2073 = vmatpush1.msra.mxu0 0.0
    %2074 = vmatprep.subr.mxu0 0.0
    %2075 = vmatpush1.msra.mxu0 0.0
    %2076 = vmatprep.subr.mxu0 0.0
    %2077 = vmatpush1.msra.mxu0 0.0
    %2078 = vmatprep.subr.mxu0 0.0
    %2079 = vmatpush1.msra.mxu0 0.0
    %2080 = vmatprep.subr.mxu0 0.0
    %2081 = vmatpush1.msra.mxu0 0.0
    %2082 = vmatprep.subr.mxu0 0.0
    %2083 = vmatpush1.msra.mxu0 0.0
    %2084 = vmatprep.subr.mxu0 0.0
    %2085 = vmatpush1.msra.mxu0 0.0
    %2086 = vmatprep.subr.mxu0 0.0
    %2087 = vmatpush1.msra.mxu0 0.0
    %2088 = vmatprep.subr.mxu0 0.0
    %2089 = vmatpush1.msra.mxu0 0.0
    %2090 = vmatprep.subr.mxu0 0.0
    %2091 = vmatpush1.msra.mxu0 0.0
    %2092 = vmatprep.subr.mxu0 0.0
    %2093 = vmatpush1.msra.mxu0 0.0
    %2094 = vmatprep.mubr.f32.mxu0 0.0
    %2095 = vmatmul.mubr.f32.gmra.mrb[0].mxu0 %v1764
    %v2096 = vpop.f32.mrb[0].mxu0
    %v2097 = vadd.f32 %v1548, %v2096
    %v2098 = vpop.f32.mrb[0].mxu0
    %v2099 = vadd.f32 %v1552, %v2098
    %2100 = vdwg.mxu0
    %2101 = vmatprep.subr.mxu0 %v1785
    %2102 = vmatpush1.msra.mxu0 %v1783
    %2103 = vmatprep.subr.mxu0 0.0
    %2104 = vmatpush1.msra.mxu0 0.0
    %2105 = vmatprep.subr.mxu0 0.0
    %2106 = vmatpush1.msra.mxu0 0.0
    %2107 = vmatprep.subr.mxu0 0.0
    %2108 = vmatpush1.msra.mxu0 0.0
    %2109 = vmatprep.subr.mxu0 0.0
    %2110 = vmatpush1.msra.mxu0 0.0
    %2111 = vmatprep.subr.mxu0 0.0
    %2112 = vmatpush1.msra.mxu0 0.0
    %2113 = vmatprep.subr.mxu0 0.0
    %2114 = vmatpush1.msra.mxu0 0.0
    %2115 = vmatprep.subr.mxu0 0.0
    %2116 = vmatpush1.msra.mxu0 0.0
    %2117 = vmatprep.subr.mxu0 0.0
    %2118 = vmatpush1.msra.mxu0 0.0
    %2119 = vmatprep.subr.mxu0 0.0
    %2120 = vmatpush1.msra.mxu0 0.0
    %2121 = vmatprep.subr.mxu0 0.0
    %2122 = vmatpush1.msra.mxu0 0.0
    %2123 = vmatprep.subr.mxu0 0.0
    %2124 = vmatpush1.msra.mxu0 0.0
    %2125 = vmatprep.subr.mxu0 0.0
    %2126 = vmatpush1.msra.mxu0 0.0
    %2127 = vmatprep.subr.mxu0 0.0
    %2128 = vmatpush1.msra.mxu0 0.0
    %2129 = vmatprep.subr.mxu0 0.0
    %2130 = vmatpush1.msra.mxu0 0.0
    %2131 = vmatprep.subr.mxu0 0.0
    %2132 = vmatpush1.msra.mxu0 0.0
    %2133 = vmatprep.subr.mxu0 0.0
    %2134 = vmatpush1.msra.mxu0 0.0
    %2135 = vmatprep.subr.mxu0 0.0
    %2136 = vmatpush1.msra.mxu0 0.0
    %2137 = vmatprep.subr.mxu0 0.0
    %2138 = vmatpush1.msra.mxu0 0.0
    %2139 = vmatprep.subr.mxu0 0.0
    %2140 = vmatpush1.msra.mxu0 0.0
    %2141 = vmatprep.subr.mxu0 0.0
    %2142 = vmatpush1.msra.mxu0 0.0
    %2143 = vmatprep.subr.mxu0 0.0
    %2144 = vmatpush1.msra.mxu0 0.0
    %2145 = vmatprep.subr.mxu0 0.0
    %2146 = vmatpush1.msra.mxu0 0.0
    %2147 = vmatprep.subr.mxu0 0.0
    %2148 = vmatpush1.msra.mxu0 0.0
    %2149 = vmatprep.subr.mxu0 0.0
    %2150 = vmatpush1.msra.mxu0 0.0
    %2151 = vmatprep.subr.mxu0 0.0
    %2152 = vmatpush1.msra.mxu0 0.0
    %2153 = vmatprep.subr.mxu0 0.0
    %2154 = vmatpush1.msra.mxu0 0.0
    %2155 = vmatprep.subr.mxu0 0.0
    %2156 = vmatpush1.msra.mxu0 0.0
    %2157 = vmatprep.subr.mxu0 0.0
    %2158 = vmatpush1.msra.mxu0 0.0
    %2159 = vmatprep.subr.mxu0 0.0
    %2160 = vmatpush1.msra.mxu0 0.0
    %2161 = vmatprep.subr.mxu0 0.0
    %2162 = vmatpush1.msra.mxu0 0.0
    %2163 = vmatprep.subr.mxu0 0.0
    %2164 = vmatpush1.msra.mxu0 0.0
    %2165 = vmatprep.mubr.f32.mxu0 0.0
    %2166 = vmatmul.mubr.f32.gmra.mrb[0].mxu0 %v1764
    %v2167 = vpop.f32.mrb[0].mxu0
    %v2168 = vadd.f32 %v1556, %v2167
    %v2169 = vpop.f32.mrb[0].mxu0
    %v2170 = vadd.f32 %v1560, %v2169
    %2171 = vdwg.mxu0
    %2172 = vmatprep.subr.mxu0 %v1789
    %2173 = vmatpush1.msra.mxu0 %v1787
    %2174 = vmatprep.subr.mxu0 0.0
    %2175 = vmatpush1.msra.mxu0 0.0
    %2176 = vmatprep.subr.mxu0 0.0
    %2177 = vmatpush1.msra.mxu0 0.0
    %2178 = vmatprep.subr.mxu0 0.0
    %2179 = vmatpush1.msra.mxu0 0.0
    %2180 = vmatprep.subr.mxu0 0.0
    %2181 = vmatpush1.msra.mxu0 0.0
    %2182 = vmatprep.subr.mxu0 0.0
    %2183 = vmatpush1.msra.mxu0 0.0
    %2184 = vmatprep.subr.mxu0 0.0
    %2185 = vmatpush1.msra.mxu0 0.0
    %2186 = vmatprep.subr.mxu0 0.0
    %2187 = vmatpush1.msra.mxu0 0.0
    %2188 = vmatprep.subr.mxu0 0.0
    %2189 = vmatpush1.msra.mxu0 0.0
    %2190 = vmatprep.subr.mxu0 0.0
    %2191 = vmatpush1.msra.mxu0 0.0
    %2192 = vmatprep.subr.mxu0 0.0
    %2193 = vmatpush1.msra.mxu0 0.0
    %2194 = vmatprep.subr.mxu0 0.0
    %2195 = vmatpush1.msra.mxu0 0.0
    %2196 = vmatprep.subr.mxu0 0.0
    %2197 = vmatpush1.msra.mxu0 0.0
    %2198 = vmatprep.subr.mxu0 0.0
    %2199 = vmatpush1.msra.mxu0 0.0
    %2200 = vmatprep.subr.mxu0 0.0
    %2201 = vmatpush1.msra.mxu0 0.0
    %2202 = vmatprep.subr.mxu0 0.0
    %2203 = vmatpush1.msra.mxu0 0.0
    %2204 = vmatprep.subr.mxu0 0.0
    %2205 = vmatpush1.msra.mxu0 0.0
    %2206 = vmatprep.subr.mxu0 0.0
    %2207 = vmatpush1.msra.mxu0 0.0
    %2208 = vmatprep.subr.mxu0 0.0
    %2209 = vmatpush1.msra.mxu0 0.0
    %2210 = vmatprep.subr.mxu0 0.0
    %2211 = vmatpush1.msra.mxu0 0.0
    %2212 = vmatprep.subr.mxu0 0.0
    %2213 = vmatpush1.msra.mxu0 0.0
    %2214 = vmatprep.subr.mxu0 0.0
    %2215 = vmatpush1.msra.mxu0 0.0
    %2216 = vmatprep.subr.mxu0 0.0
    %2217 = vmatpush1.msra.mxu0 0.0
    %2218 = vmatprep.subr.mxu0 0.0
    %2219 = vmatpush1.msra.mxu0 0.0
    %2220 = vmatprep.subr.mxu0 0.0
    %2221 = vmatpush1.msra.mxu0 0.0
    %2222 = vmatprep.subr.mxu0 0.0
    %2223 = vmatpush1.msra.mxu0 0.0
    %2224 = vmatprep.subr.mxu0 0.0
    %2225 = vmatpush1.msra.mxu0 0.0
    %2226 = vmatprep.subr.mxu0 0.0
    %2227 = vmatpush1.msra.mxu0 0.0
    %2228 = vmatprep.subr.mxu0 0.0
    %2229 = vmatpush1.msra.mxu0 0.0
    %2230 = vmatprep.subr.mxu0 0.0
    %2231 = vmatpush1.msra.mxu0 0.0
    %2232 = vmatprep.subr.mxu0 0.0
    %2233 = vmatpush1.msra.mxu0 0.0
    %2234 = vmatprep.subr.mxu0 0.0
    %2235 = vmatpush1.msra.mxu0 0.0
    %2236 = vmatprep.mubr.f32.mxu0 0.0
    %2237 = vmatmul.mubr.f32.gmra.mrb[0].mxu0 %v1764
    %v2238 = vpop.f32.mrb[0].mxu0
    %v2239 = vadd.f32 %v1564, %v2238
    %v2240 = vpop.f32.mrb[0].mxu0
    %v2241 = vadd.f32 %v1568, %v2240
    %2242 = vdwg.mxu0
    %2243 = vmatprep.subr.mxu0 %v1793
    %2244 = vmatpush1.msra.mxu0 %v1791
    %2245 = vmatprep.subr.mxu0 0.0
    %2246 = vmatpush1.msra.mxu0 0.0
    %2247 = vmatprep.subr.mxu0 0.0
    %2248 = vmatpush1.msra.mxu0 0.0
    %2249 = vmatprep.subr.mxu0 0.0
    %2250 = vmatpush1.msra.mxu0 0.0
    %2251 = vmatprep.subr.mxu0 0.0
    %2252 = vmatpush1.msra.mxu0 0.0
    %2253 = vmatprep.subr.mxu0 0.0
    %2254 = vmatpush1.msra.mxu0 0.0
    %2255 = vmatprep.subr.mxu0 0.0
    %2256 = vmatpush1.msra.mxu0 0.0
    %2257 = vmatprep.subr.mxu0 0.0
    %2258 = vmatpush1.msra.mxu0 0.0
    %2259 = vmatprep.subr.mxu0 0.0
    %2260 = vmatpush1.msra.mxu0 0.0
    %2261 = vmatprep.subr.mxu0 0.0
    %2262 = vmatpush1.msra.mxu0 0.0
    %2263 = vmatprep.subr.mxu0 0.0
    %2264 = vmatpush1.msra.mxu0 0.0
    %2265 = vmatprep.subr.mxu0 0.0
    %2266 = vmatpush1.msra.mxu0 0.0
    %2267 = vmatprep.subr.mxu0 0.0
    %2268 = vmatpush1.msra.mxu0 0.0
    %2269 = vmatprep.subr.mxu0 0.0
    %2270 = vmatpush1.msra.mxu0 0.0
    %2271 = vmatprep.subr.mxu0 0.0
    %2272 = vmatpush1.msra.mxu0 0.0
    %2273 = vmatprep.subr.mxu0 0.0
    %2274 = vmatpush1.msra.mxu0 0.0
    %2275 = vmatprep.subr.mxu0 0.0
    %2276 = vmatpush1.msra.mxu0 0.0
    %2277 = vmatprep.subr.mxu0 0.0
    %2278 = vmatpush1.msra.mxu0 0.0
    %2279 = vmatprep.subr.mxu0 0.0
    %2280 = vmatpush1.msra.mxu0 0.0
    %2281 = vmatprep.subr.mxu0 0.0
    %2282 = vmatpush1.msra.mxu0 0.0
    %2283 = vmatprep.subr.mxu0 0.0
    %2284 = vmatpush1.msra.mxu0 0.0
    %2285 = vmatprep.subr.mxu0 0.0
    %2286 = vmatpush1.msra.mxu0 0.0
    %2287 = vmatprep.subr.mxu0 0.0
    %2288 = vmatpush1.msra.mxu0 0.0
    %2289 = vmatprep.subr.mxu0 0.0
    %2290 = vmatpush1.msra.mxu0 0.0
    %2291 = vmatprep.subr.mxu0 0.0
    %2292 = vmatpush1.msra.mxu0 0.0
    %2293 = vmatprep.subr.mxu0 0.0
    %2294 = vmatpush1.msra.mxu0 0.0
    %2295 = vmatprep.subr.mxu0 0.0
    %2296 = vmatpush1.msra.mxu0 0.0
    %2297 = vmatprep.subr.mxu0 0.0
    %2298 = vmatpush1.msra.mxu0 0.0
    %2299 = vmatprep.subr.mxu0 0.0
    %2300 = vmatpush1.msra.mxu0 0.0
    %2301 = vmatprep.subr.mxu0 0.0
    %2302 = vmatpush1.msra.mxu0 0.0
    %2303 = vmatprep.subr.mxu0 0.0
    %2304 = vmatpush1.msra.mxu0 0.0
    %2305 = vmatprep.subr.mxu0 0.0
    %2306 = vmatpush1.msra.mxu0 0.0
    %2307 = vmatprep.mubr.f32.mxu0 0.0
    %2308 = vmatmul.mubr.f32.gmra.mrb[0].mxu0 %v1764
    %v2309 = vpop.f32.mrb[0].mxu0
    %v2310 = vadd.f32 %v1572, %v2309
    %v2311 = vpop.f32.mrb[0].mxu0
    %v2312 = vadd.f32 %v1576, %v2311
    %2313 = vdwg.mxu0
    %2314 = vmatprep.subr.mxu0 %v1797
    %2315 = vmatpush1.msra.mxu0 %v1795
    %2316 = vmatprep.subr.mxu0 0.0
    %2317 = vmatpush1.msra.mxu0 0.0
    %2318 = vmatprep.subr.mxu0 0.0
    %2319 = vmatpush1.msra.mxu0 0.0
    %2320 = vmatprep.subr.mxu0 0.0
    %2321 = vmatpush1.msra.mxu0 0.0
    %2322 = vmatprep.subr.mxu0 0.0
    %2323 = vmatpush1.msra.mxu0 0.0
    %2324 = vmatprep.subr.mxu0 0.0
    %2325 = vmatpush1.msra.mxu0 0.0
    %2326 = vmatprep.subr.mxu0 0.0
    %2327 = vmatpush1.msra.mxu0 0.0
    %2328 = vmatprep.subr.mxu0 0.0
    %2329 = vmatpush1.msra.mxu0 0.0
    %2330 = vmatprep.subr.mxu0 0.0
    %2331 = vmatpush1.msra.mxu0 0.0
    %2332 = vmatprep.subr.mxu0 0.0
    %2333 = vmatpush1.msra.mxu0 0.0
    %2334 = vmatprep.subr.mxu0 0.0
    %2335 = vmatpush1.msra.mxu0 0.0
    %2336 = vmatprep.subr.mxu0 0.0
    %2337 = vmatpush1.msra.mxu0 0.0
    %2338 = vmatprep.subr.mxu0 0.0
    %2339 = vmatpush1.msra.mxu0 0.0
    %2340 = vmatprep.subr.mxu0 0.0
    %2341 = vmatpush1.msra.mxu0 0.0
    %2342 = vmatprep.subr.mxu0 0.0
    %2343 = vmatpush1.msra.mxu0 0.0
    %2344 = vmatprep.subr.mxu0 0.0
    %2345 = vmatpush1.msra.mxu0 0.0
    %2346 = vmatprep.subr.mxu0 0.0
    %2347 = vmatpush1.msra.mxu0 0.0
    %2348 = vmatprep.subr.mxu0 0.0
    %2349 = vmatpush1.msra.mxu0 0.0
    %2350 = vmatprep.subr.mxu0 0.0
    %2351 = vmatpush1.msra.mxu0 0.0
    %2352 = vmatprep.subr.mxu0 0.0
    %2353 = vmatpush1.msra.mxu0 0.0
    %2354 = vmatprep.subr.mxu0 0.0
    %2355 = vmatpush1.msra.mxu0 0.0
    %2356 = vmatprep.subr.mxu0 0.0
    %2357 = vmatpush1.msra.mxu0 0.0
    %2358 = vmatprep.subr.mxu0 0.0
    %2359 = vmatpush1.msra.mxu0 0.0
    %2360 = vmatprep.subr.mxu0 0.0
    %2361 = vmatpush1.msra.mxu0 0.0
    %2362 = vmatprep.subr.mxu0 0.0
    %2363 = vmatpush1.msra.mxu0 0.0
    %2364 = vmatprep.subr.mxu0 0.0
    %2365 = vmatpush1.msra.mxu0 0.0
    %2366 = vmatprep.subr.mxu0 0.0
    %2367 = vmatpush1.msra.mxu0 0.0
    %2368 = vmatprep.subr.mxu0 0.0
    %2369 = vmatpush1.msra.mxu0 0.0
    %2370 = vmatprep.subr.mxu0 0.0
    %2371 = vmatpush1.msra.mxu0 0.0
    %2372 = vmatprep.subr.mxu0 0.0
    %2373 = vmatpush1.msra.mxu0 0.0
    %2374 = vmatprep.subr.mxu0 0.0
    %2375 = vmatpush1.msra.mxu0 0.0
    %2376 = vmatprep.subr.mxu0 0.0
    %2377 = vmatpush1.msra.mxu0 0.0
    %2378 = vmatprep.mubr.f32.mxu0 0.0
    %2379 = vmatmul.mubr.f32.gmra.mrb[0].mxu0 %v1764
    %v2380 = vpop.f32.mrb[0].mxu0
    %v2381 = vadd.f32 %v1580, %v2380
    %v2382 = vpop.f32.mrb[0].mxu0
    %v2383 = vadd.f32 %v1584, %v2382
    %2384 = vdwg.mxu0
    %2385 = vmatprep.subr.mxu0 %v1801
    %2386 = vmatpush1.msra.mxu0 %v1799
    %2387 = vmatprep.subr.mxu0 0.0
    %2388 = vmatpush1.msra.mxu0 0.0
    %2389 = vmatprep.subr.mxu0 0.0
    %2390 = vmatpush1.msra.mxu0 0.0
    %2391 = vmatprep.subr.mxu0 0.0
    %2392 = vmatpush1.msra.mxu0 0.0
    %2393 = vmatprep.subr.mxu0 0.0
    %2394 = vmatpush1.msra.mxu0 0.0
    %2395 = vmatprep.subr.mxu0 0.0
    %2396 = vmatpush1.msra.mxu0 0.0
    %2397 = vmatprep.subr.mxu0 0.0
    %2398 = vmatpush1.msra.mxu0 0.0
    %2399 = vmatprep.subr.mxu0 0.0
    %2400 = vmatpush1.msra.mxu0 0.0
    %2401 = vmatprep.subr.mxu0 0.0
    %2402 = vmatpush1.msra.mxu0 0.0
    %2403 = vmatprep.subr.mxu0 0.0
    %2404 = vmatpush1.msra.mxu0 0.0
    %2405 = vmatprep.subr.mxu0 0.0
    %2406 = vmatpush1.msra.mxu0 0.0
    %2407 = vmatprep.subr.mxu0 0.0
    %2408 = vmatpush1.msra.mxu0 0.0
    %2409 = vmatprep.subr.mxu0 0.0
    %2410 = vmatpush1.msra.mxu0 0.0
    %2411 = vmatprep.subr.mxu0 0.0
    %2412 = vmatpush1.msra.mxu0 0.0
    %2413 = vmatprep.subr.mxu0 0.0
    %2414 = vmatpush1.msra.mxu0 0.0
    %2415 = vmatprep.subr.mxu0 0.0
    %2416 = vmatpush1.msra.mxu0 0.0
    %2417 = vmatprep.subr.mxu0 0.0
    %2418 = vmatpush1.msra.mxu0 0.0
    %2419 = vmatprep.subr.mxu0 0.0
    %2420 = vmatpush1.msra.mxu0 0.0
    %2421 = vmatprep.subr.mxu0 0.0
    %2422 = vmatpush1.msra.mxu0 0.0
    %2423 = vmatprep.subr.mxu0 0.0
    %2424 = vmatpush1.msra.mxu0 0.0
    %2425 = vmatprep.subr.mxu0 0.0
    %2426 = vmatpush1.msra.mxu0 0.0
    %2427 = vmatprep.subr.mxu0 0.0
    %2428 = vmatpush1.msra.mxu0 0.0
    %2429 = vmatprep.subr.mxu0 0.0
    %2430 = vmatpush1.msra.mxu0 0.0
    %2431 = vmatprep.subr.mxu0 0.0
    %2432 = vmatpush1.msra.mxu0 0.0
    %2433 = vmatprep.subr.mxu0 0.0
    %2434 = vmatpush1.msra.mxu0 0.0
    %2435 = vmatprep.subr.mxu0 0.0
    %2436 = vmatpush1.msra.mxu0 0.0
    %2437 = vmatprep.subr.mxu0 0.0
    %2438 = vmatpush1.msra.mxu0 0.0
    %2439 = vmatprep.subr.mxu0 0.0
    %2440 = vmatpush1.msra.mxu0 0.0
    %2441 = vmatprep.subr.mxu0 0.0
    %2442 = vmatpush1.msra.mxu0 0.0
    %2443 = vmatprep.subr.mxu0 0.0
    %2444 = vmatpush1.msra.mxu0 0.0
    %2445 = vmatprep.subr.mxu0 0.0
    %2446 = vmatpush1.msra.mxu0 0.0
    %2447 = vmatprep.subr.mxu0 0.0
    %2448 = vmatpush1.msra.mxu0 0.0
    %2449 = vmatprep.mubr.f32.mxu0 0.0
    %2450 = vmatmul.mubr.f32.gmra.mrb[0].mxu0 %v1764
    %v2451 = vpop.f32.mrb[0].mxu0
    %v2452 = vadd.f32 %v1588, %v2451
    %v2453 = vpop.f32.mrb[0].mxu0
    %v2454 = vadd.f32 %v1592, %v2453
    %2455 = vdwg.mxu0
    %2456 = vmatprep.subr.mxu0 %v1805
    %2457 = vmatpush1.msra.mxu0 %v1803
    %2458 = vmatprep.subr.mxu0 0.0
    %2459 = vmatpush1.msra.mxu0 0.0
    %2460 = vmatprep.subr.mxu0 0.0
    %2461 = vmatpush1.msra.mxu0 0.0
    %2462 = vmatprep.subr.mxu0 0.0
    %2463 = vmatpush1.msra.mxu0 0.0
    %2464 = vmatprep.subr.mxu0 0.0
    %2465 = vmatpush1.msra.mxu0 0.0
    %2466 = vmatprep.subr.mxu0 0.0
    %2467 = vmatpush1.msra.mxu0 0.0
    %2468 = vmatprep.subr.mxu0 0.0
    %2469 = vmatpush1.msra.mxu0 0.0
    %2470 = vmatprep.subr.mxu0 0.0
    %2471 = vmatpush1.msra.mxu0 0.0
    %2472 = vmatprep.subr.mxu0 0.0
    %2473 = vmatpush1.msra.mxu0 0.0
    %2474 = vmatprep.subr.mxu0 0.0
    %2475 = vmatpush1.msra.mxu0 0.0
    %2476 = vmatprep.subr.mxu0 0.0
    %2477 = vmatpush1.msra.mxu0 0.0
    %2478 = vmatprep.subr.mxu0 0.0
    %2479 = vmatpush1.msra.mxu0 0.0
    %2480 = vmatprep.subr.mxu0 0.0
    %2481 = vmatpush1.msra.mxu0 0.0
    %2482 = vmatprep.subr.mxu0 0.0
    %2483 = vmatpush1.msra.mxu0 0.0
    %2484 = vmatprep.subr.mxu0 0.0
    %2485 = vmatpush1.msra.mxu0 0.0
    %2486 = vmatprep.subr.mxu0 0.0
    %2487 = vmatpush1.msra.mxu0 0.0
    %2488 = vmatprep.subr.mxu0 0.0
    %2489 = vmatpush1.msra.mxu0 0.0
    %2490 = vmatprep.subr.mxu0 0.0
    %2491 = vmatpush1.msra.mxu0 0.0
    %2492 = vmatprep.subr.mxu0 0.0
    %2493 = vmatpush1.msra.mxu0 0.0
    %2494 = vmatprep.subr.mxu0 0.0
    %2495 = vmatpush1.msra.mxu0 0.0
    %2496 = vmatprep.subr.mxu0 0.0
    %2497 = vmatpush1.msra.mxu0 0.0
    %2498 = vmatprep.subr.mxu0 0.0
    %2499 = vmatpush1.msra.mxu0 0.0
    %2500 = vmatprep.subr.mxu0 0.0
    %2501 = vmatpush1.msra.mxu0 0.0
    %2502 = vmatprep.subr.mxu0 0.0
    %2503 = vmatpush1.msra.mxu0 0.0
    %2504 = vmatprep.subr.mxu0 0.0
    %2505 = vmatpush1.msra.mxu0 0.0
    %2506 = vmatprep.subr.mxu0 0.0
    %2507 = vmatpush1.msra.mxu0 0.0
    %2508 = vmatprep.subr.mxu0 0.0
    %2509 = vmatpush1.msra.mxu0 0.0
    %2510 = vmatprep.subr.mxu0 0.0
    %2511 = vmatpush1.msra.mxu0 0.0
    %2512 = vmatprep.subr.mxu0 0.0
    %2513 = vmatpush1.msra.mxu0 0.0
    %2514 = vmatprep.subr.mxu0 0.0
    %2515 = vmatpush1.msra.mxu0 0.0
    %2516 = vmatprep.subr.mxu0 0.0
    %2517 = vmatpush1.msra.mxu0 0.0
    %2518 = vmatprep.subr.mxu0 0.0
    %2519 = vmatpush1.msra.mxu0 0.0
    %2520 = vmatprep.mubr.f32.mxu0 0.0
    %2521 = vmatmul.mubr.f32.gmra.mrb[0].mxu0 %v1764
    %v2522 = vpop.f32.mrb[0].mxu0
    %v2523 = vadd.f32 %v1596, %v2522
    %v2524 = vpop.f32.mrb[0].mxu0
    %v2525 = vadd.f32 %v1600, %v2524
    %2526 = vdwg.mxu0
    %2527 = vmatprep.subr.mxu0 %v1809
    %2528 = vmatpush1.msra.mxu0 %v1807
    %2529 = vmatprep.subr.mxu0 0.0
    %2530 = vmatpush1.msra.mxu0 0.0
    %2531 = vmatprep.subr.mxu0 0.0
    %2532 = vmatpush1.msra.mxu0 0.0
    %2533 = vmatprep.subr.mxu0 0.0
    %2534 = vmatpush1.msra.mxu0 0.0
    %2535 = vmatprep.subr.mxu0 0.0
    %2536 = vmatpush1.msra.mxu0 0.0
    %2537 = vmatprep.subr.mxu0 0.0
    %2538 = vmatpush1.msra.mxu0 0.0
    %2539 = vmatprep.subr.mxu0 0.0
    %2540 = vmatpush1.msra.mxu0 0.0
    %2541 = vmatprep.subr.mxu0 0.0
    %2542 = vmatpush1.msra.mxu0 0.0
    %2543 = vmatprep.subr.mxu0 0.0
    %2544 = vmatpush1.msra.mxu0 0.0
    %2545 = vmatprep.subr.mxu0 0.0
    %2546 = vmatpush1.msra.mxu0 0.0
    %2547 = vmatprep.subr.mxu0 0.0
    %2548 = vmatpush1.msra.mxu0 0.0
    %2549 = vmatprep.subr.mxu0 0.0
    %2550 = vmatpush1.msra.mxu0 0.0
    %2551 = vmatprep.subr.mxu0 0.0
    %2552 = vmatpush1.msra.mxu0 0.0
    %2553 = vmatprep.subr.mxu0 0.0
    %2554 = vmatpush1.msra.mxu0 0.0
    %2555 = vmatprep.subr.mxu0 0.0
    %2556 = vmatpush1.msra.mxu0 0.0
    %2557 = vmatprep.subr.mxu0 0.0
    %2558 = vmatpush1.msra.mxu0 0.0
    %2559 = vmatprep.subr.mxu0 0.0
    %2560 = vmatpush1.msra.mxu0 0.0
    %2561 = vmatprep.subr.mxu0 0.0
    %2562 = vmatpush1.msra.mxu0 0.0
    %2563 = vmatprep.subr.mxu0 0.0
    %2564 = vmatpush1.msra.mxu0 0.0
    %2565 = vmatprep.subr.mxu0 0.0
    %2566 = vmatpush1.msra.mxu0 0.0
    %2567 = vmatprep.subr.mxu0 0.0
    %2568 = vmatpush1.msra.mxu0 0.0
    %2569 = vmatprep.subr.mxu0 0.0
    %2570 = vmatpush1.msra.mxu0 0.0
    %2571 = vmatprep.subr.mxu0 0.0
    %2572 = vmatpush1.msra.mxu0 0.0
    %2573 = vmatprep.subr.mxu0 0.0
    %2574 = vmatpush1.msra.mxu0 0.0
    %2575 = vmatprep.subr.mxu0 0.0
    %2576 = vmatpush1.msra.mxu0 0.0
    %2577 = vmatprep.subr.mxu0 0.0
    %2578 = vmatpush1.msra.mxu0 0.0
    %2579 = vmatprep.subr.mxu0 0.0
    %2580 = vmatpush1.msra.mxu0 0.0
    %2581 = vmatprep.subr.mxu0 0.0
    %2582 = vmatpush1.msra.mxu0 0.0
    %2583 = vmatprep.subr.mxu0 0.0
    %2584 = vmatpush1.msra.mxu0 0.0
    %2585 = vmatprep.subr.mxu0 0.0
    %2586 = vmatpush1.msra.mxu0 0.0
    %2587 = vmatprep.subr.mxu0 0.0
    %2588 = vmatpush1.msra.mxu0 0.0
    %2589 = vmatprep.subr.mxu0 0.0
    %2590 = vmatpush1.msra.mxu0 0.0
    %2591 = vmatprep.mubr.f32.mxu0 0.0
    %2592 = vmatmul.mubr.f32.gmra.mrb[0].mxu0 %v1764
    %v2593 = vpop.f32.mrb[0].mxu0
    %v2594 = vadd.f32 %v1604, %v2593
    %v2595 = vpop.f32.mrb[0].mxu0
    %v2596 = vadd.f32 %v1608, %v2595
    %2597 = vdwg.mxu0
    %2598 = vmatprep.subr.mxu0 %v1813
    %2599 = vmatpush1.msra.mxu0 %v1811
    %2600 = vmatprep.subr.mxu0 0.0
    %2601 = vmatpush1.msra.mxu0 0.0
    %2602 = vmatprep.subr.mxu0 0.0
    %2603 = vmatpush1.msra.mxu0 0.0
    %2604 = vmatprep.subr.mxu0 0.0
    %2605 = vmatpush1.msra.mxu0 0.0
    %2606 = vmatprep.subr.mxu0 0.0
    %2607 = vmatpush1.msra.mxu0 0.0
    %2608 = vmatprep.subr.mxu0 0.0
    %2609 = vmatpush1.msra.mxu0 0.0
    %2610 = vmatprep.subr.mxu0 0.0
    %2611 = vmatpush1.msra.mxu0 0.0
    %2612 = vmatprep.subr.mxu0 0.0
    %2613 = vmatpush1.msra.mxu0 0.0
    %2614 = vmatprep.subr.mxu0 0.0
    %2615 = vmatpush1.msra.mxu0 0.0
    %2616 = vmatprep.subr.mxu0 0.0
    %2617 = vmatpush1.msra.mxu0 0.0
    %2618 = vmatprep.subr.mxu0 0.0
    %2619 = vmatpush1.msra.mxu0 0.0
    %2620 = vmatprep.subr.mxu0 0.0
    %2621 = vmatpush1.msra.mxu0 0.0
    %2622 = vmatprep.subr.mxu0 0.0
    %2623 = vmatpush1.msra.mxu0 0.0
    %2624 = vmatprep.subr.mxu0 0.0
    %2625 = vmatpush1.msra.mxu0 0.0
    %2626 = vmatprep.subr.mxu0 0.0
    %2627 = vmatpush1.msra.mxu0 0.0
    %2628 = vmatprep.subr.mxu0 0.0
    %2629 = vmatpush1.msra.mxu0 0.0
    %2630 = vmatprep.subr.mxu0 0.0
    %2631 = vmatpush1.msra.mxu0 0.0
    %2632 = vmatprep.subr.mxu0 0.0
    %2633 = vmatpush1.msra.mxu0 0.0
    %2634 = vmatprep.subr.mxu0 0.0
    %2635 = vmatpush1.msra.mxu0 0.0
    %2636 = vmatprep.subr.mxu0 0.0
    %2637 = vmatpush1.msra.mxu0 0.0
    %2638 = vmatprep.subr.mxu0 0.0
    %2639 = vmatpush1.msra.mxu0 0.0
    %2640 = vmatprep.subr.mxu0 0.0
    %2641 = vmatpush1.msra.mxu0 0.0
    %2642 = vmatprep.subr.mxu0 0.0
    %2643 = vmatpush1.msra.mxu0 0.0
    %2644 = vmatprep.subr.mxu0 0.0
    %2645 = vmatpush1.msra.mxu0 0.0
    %2646 = vmatprep.subr.mxu0 0.0
    %2647 = vmatpush1.msra.mxu0 0.0
    %2648 = vmatprep.subr.mxu0 0.0
    %2649 = vmatpush1.msra.mxu0 0.0
    %2650 = vmatprep.subr.mxu0 0.0
    %2651 = vmatpush1.msra.mxu0 0.0
    %2652 = vmatprep.subr.mxu0 0.0
    %2653 = vmatpush1.msra.mxu0 0.0
    %2654 = vmatprep.subr.mxu0 0.0
    %2655 = vmatpush1.msra.mxu0 0.0
    %2656 = vmatprep.subr.mxu0 0.0
    %2657 = vmatpush1.msra.mxu0 0.0
    %2658 = vmatprep.subr.mxu0 0.0
    %2659 = vmatpush1.msra.mxu0 0.0
    %2660 = vmatprep.subr.mxu0 0.0
    %2661 = vmatpush1.msra.mxu0 0.0
    %2662 = vmatprep.mubr.f32.mxu0 0.0
    %2663 = vmatmul.mubr.f32.gmra.mrb[0].mxu0 %v1764
    %v2664 = vpop.f32.mrb[0].mxu0
    %v2665 = vadd.f32 %v1612, %v2664
    %v2666 = vpop.f32.mrb[0].mxu0
    %v2667 = vadd.f32 %v1616, %v2666
    %2668 = vdwg.mxu0
    %2669 = vmatprep.subr.mxu0 0.0
    %2670 = vmatpush1.msra.mxu0 %v1815
    %2671 = vmatprep.subr.mxu0 0.0
    %2672 = vmatpush1.msra.mxu0 0.0
    %2673 = vmatprep.subr.mxu0 0.0
    %2674 = vmatpush1.msra.mxu0 0.0
    %2675 = vmatprep.subr.mxu0 0.0
    %2676 = vmatpush1.msra.mxu0 0.0
    %2677 = vmatprep.subr.mxu0 0.0
    %2678 = vmatpush1.msra.mxu0 0.0
    %2679 = vmatprep.subr.mxu0 0.0
    %2680 = vmatpush1.msra.mxu0 0.0
    %2681 = vmatprep.subr.mxu0 0.0
    %2682 = vmatpush1.msra.mxu0 0.0
    %2683 = vmatprep.subr.mxu0 0.0
    %2684 = vmatpush1.msra.mxu0 0.0
    %2685 = vmatprep.subr.mxu0 0.0
    %2686 = vmatpush1.msra.mxu0 0.0
    %2687 = vmatprep.subr.mxu0 0.0
    %2688 = vmatpush1.msra.mxu0 0.0
    %2689 = vmatprep.subr.mxu0 0.0
    %2690 = vmatpush1.msra.mxu0 0.0
    %2691 = vmatprep.subr.mxu0 0.0
    %2692 = vmatpush1.msra.mxu0 0.0
    %2693 = vmatprep.subr.mxu0 0.0
    %2694 = vmatpush1.msra.mxu0 0.0
    %2695 = vmatprep.subr.mxu0 0.0
    %2696 = vmatpush1.msra.mxu0 0.0
    %2697 = vmatprep.subr.mxu0 0.0
    %2698 = vmatpush1.msra.mxu0 0.0
    %2699 = vmatprep.subr.mxu0 0.0
    %2700 = vmatpush1.msra.mxu0 0.0
    %2701 = vmatprep.subr.mxu0 0.0
    %2702 = vmatpush1.msra.mxu0 0.0
    %2703 = vmatprep.subr.mxu0 0.0
    %2704 = vmatpush1.msra.mxu0 0.0
    %2705 = vmatprep.subr.mxu0 0.0
    %2706 = vmatpush1.msra.mxu0 0.0
    %2707 = vmatprep.subr.mxu0 0.0
    %2708 = vmatpush1.msra.mxu0 0.0
    %2709 = vmatprep.subr.mxu0 0.0
    %2710 = vmatpush1.msra.mxu0 0.0
    %2711 = vmatprep.subr.mxu0 0.0
    %2712 = vmatpush1.msra.mxu0 0.0
    %2713 = vmatprep.subr.mxu0 0.0
    %2714 = vmatpush1.msra.mxu0 0.0
    %2715 = vmatprep.subr.mxu0 0.0
    %2716 = vmatpush1.msra.mxu0 0.0
    %2717 = vmatprep.subr.mxu0 0.0
    %2718 = vmatpush1.msra.mxu0 0.0
    %2719 = vmatprep.subr.mxu0 0.0
    %2720 = vmatpush1.msra.mxu0 0.0
    %2721 = vmatprep.subr.mxu0 0.0
    %2722 = vmatpush1.msra.mxu0 0.0
    %2723 = vmatprep.subr.mxu0 0.0
    %2724 = vmatpush1.msra.mxu0 0.0
    %2725 = vmatprep.subr.mxu0 0.0
    %2726 = vmatpush1.msra.mxu0 0.0
    %2727 = vmatprep.subr.mxu0 0.0
    %2728 = vmatpush1.msra.mxu0 0.0
    %2729 = vmatprep.subr.mxu0 0.0
    %2730 = vmatpush1.msra.mxu0 0.0
    %2731 = vmatprep.subr.mxu0 0.0
    %2732 = vmatpush1.msra.mxu0 0.0
    %2733 = vmatprep.mubr.f32.mxu0 0.0
    %2734 = vmatmul.mubr.f32.gmra.mrb[0].mxu0 %v1764
    %v2735 = vpop.f32.mrb[0].mxu0
    %v2736 = vadd.f32 %v1620, %v2735
    %v2737 = vpop.f32.mrb[0].mxu0
    %2738 = vdwg.mxu0
    %v2764 = vcombine.low %v1884, %v1886
    %v2765 = vcombine.low %v1955, %v1957
    %v2767 = vunpack.c.l.s4 1983009808
    %v2768 = vunpack.c.0.s8 %v2767
    %v2769 = vlaneseq
    %v2770 = vshrl.u32 %v2769, 7
    %v2771 = vsub.s32 %v2768, %v2770
    %v2772 = vrot.slane %v2764, %v2771
    %v2774 = vunpack.c.l.s4 1983009808
    %v2775 = vunpack.c.0.s8 %v2774
    %v2776 = vlaneseq
    %v2777 = vshrl.u32 %v2776, 7
    %v2778 = vsub.s32 %v2775, %v2777
    %v2779 = vrot.slane %v2765, %v2778
    %v2780 = vcombine.low %v2772, %v2779
    %v2781 = vcombine.low %v2026, %v2028
    %v2782 = vcombine.low %v2097, %v2099
    %v2784 = vunpack.c.l.s4 1983009808
    %v2785 = vunpack.c.0.s8 %v2784
    %v2786 = vlaneseq
    %v2787 = vshrl.u32 %v2786, 7
    %v2788 = vsub.s32 %v2785, %v2787
    %v2789 = vrot.slane %v2781, %v2788
    %v2791 = vunpack.c.l.s4 1983009808
    %v2792 = vunpack.c.0.s8 %v2791
    %v2793 = vlaneseq
    %v2794 = vshrl.u32 %v2793, 7
    %v2795 = vsub.s32 %v2792, %v2794
    %v2796 = vrot.slane %v2782, %v2795
    %v2797 = vcombine.low %v2789, %v2796
    %v2798 = vcombine.low %v2168, %v2170
    %v2799 = vcombine.low %v2239, %v2241
    %v2801 = vunpack.c.l.s4 1983009808
    %v2802 = vunpack.c.0.s8 %v2801
    %v2803 = vlaneseq
    %v2804 = vshrl.u32 %v2803, 7
    %v2805 = vsub.s32 %v2802, %v2804
    %v2806 = vrot.slane %v2798, %v2805
    %v2808 = vunpack.c.l.s4 1983009808
    %v2809 = vunpack.c.0.s8 %v2808
    %v2810 = vlaneseq
    %v2811 = vshrl.u32 %v2810, 7
    %v2812 = vsub.s32 %v2809, %v2811
    %v2813 = vrot.slane %v2799, %v2812
    %v2814 = vcombine.low %v2806, %v2813
    %v2815 = vcombine.low %v2310, %v2312
    %v2816 = vcombine.low %v2381, %v2383
    %v2818 = vunpack.c.l.s4 1983009808
    %v2819 = vunpack.c.0.s8 %v2818
    %v2820 = vlaneseq
    %v2821 = vshrl.u32 %v2820, 7
    %v2822 = vsub.s32 %v2819, %v2821
    %v2823 = vrot.slane %v2815, %v2822
    %v2825 = vunpack.c.l.s4 1983009808
    %v2826 = vunpack.c.0.s8 %v2825
    %v2827 = vlaneseq
    %v2828 = vshrl.u32 %v2827, 7
    %v2829 = vsub.s32 %v2826, %v2828
    %v2830 = vrot.slane %v2816, %v2829
    %v2831 = vcombine.low %v2823, %v2830
    %v2832 = vcombine.low %v2452, %v2454
    %v2833 = vcombine.low %v2523, %v2525
    %v2835 = vunpack.c.l.s4 1983009808
    %v2836 = vunpack.c.0.s8 %v2835
    %v2837 = vlaneseq
    %v2838 = vshrl.u32 %v2837, 7
    %v2839 = vsub.s32 %v2836, %v2838
    %v2840 = vrot.slane %v2832, %v2839
    %v2842 = vunpack.c.l.s4 1983009808
    %v2843 = vunpack.c.0.s8 %v2842
    %v2844 = vlaneseq
    %v2845 = vshrl.u32 %v2844, 7
    %v2846 = vsub.s32 %v2843, %v2845
    %v2847 = vrot.slane %v2833, %v2846
    %v2848 = vcombine.low %v2840, %v2847
    %v2849 = vcombine.low %v2594, %v2596
    %v2850 = vcombine.low %v2665, %v2667
    %v2852 = vunpack.c.l.s4 1983009808
    %v2853 = vunpack.c.0.s8 %v2852
    %v2854 = vlaneseq
    %v2855 = vshrl.u32 %v2854, 7
    %v2856 = vsub.s32 %v2853, %v2855
    %v2857 = vrot.slane %v2849, %v2856
    %v2859 = vunpack.c.l.s4 1983009808
    %v2860 = vunpack.c.0.s8 %v2859
    %v2861 = vlaneseq
    %v2862 = vshrl.u32 %v2861, 7
    %v2863 = vsub.s32 %v2860, %v2862
    %v2864 = vrot.slane %v2850, %v2863
    %v2865 = vcombine.low %v2857, %v2864
    %v2867 = vunpack.c.l.s4 1983009808
    %v2868 = vunpack.c.0.s8 %v2867
    %v2869 = vlaneseq
    %v2870 = vshrl.u32 %v2869, 7
    %v2871 = vsub.s32 %v2868, %v2870
    %v2872 = vrot.slane %v2736, %v2871
    %2880 = vst [vmem:[%s9] sm:$0xff] %v2780
    %2881 = vst [vmem:[%s9 + $0x8] sm:$0xff] %v2797
    %2882 = vst [vmem:[%s9 + $0x10] sm:$0xff] %v2814
    %2883 = vst [vmem:[%s9 + $0x18] sm:$0xff] %v2831
    %2884 = vst [vmem:[%s9 + $0x20] sm:$0xff] %v2848
    %2885 = vst [vmem:[%s9 + $0x28] sm:$0xff] %v2865
    %vm2886 = vcmask 517120
    %2887 = vst.msk [vmem:[%s9 + $0x30] sm:$0x3] %vm2886, %v2872
    // Predicated region
    $region26: #{vae_forward.13} parent=1 // pred_check
      _
    $region27: #{vae_forward.13} parent=1 // pred_check_branch
      %2889 = sbr.rel (0) target = $region29
    $region28: #{vae_forward.13} parent=1 // pred_region
      %s2891 = ssub.s32 32, 32
      %2892 = vsyncadd [#allocation3], %s2891
      %s2894 = sshll.u32 [#allocation2], 4
      %s2895 = int_to_ptr.vmem [resolvable:$true] %s2894
      %2897 = dma.vmem_to_hbm [thread:$0]  %s2895, 32, %s6, [#allocation3]
    $region29: #{vae_forward.13} parent=1 // pred_fallthru
      _
    // Predicated region
    $region30: #{vae_forward.13} parent=1 // pred_check
      _
    $region31: #{vae_forward.13} parent=1 // pred_check_branch
      %2899 = sbr.rel (0) target = $region33
    $region32: #{vae_forward.13} parent=1 // pred_region
      %s2901 = ssub.s32 32, 32
      %2902 = vsyncadd [#allocation5], %s2901
      %s2904 = sshll.u32 [#allocation4], 4
      %s2905 = int_to_ptr.vmem [resolvable:$true] %s2904
      %2907 = dma.vmem_to_hbm [thread:$0]  %s2905, 32, %s7, [#allocation5]
    $region33: #{vae_forward.13} parent=1 // pred_fallthru
      _
    // Predicated region
    $region34: #{vae_forward.13} parent=1 // pred_check
      _
    $region35: #{vae_forward.13} parent=1 // pred_check_branch
      %2909 = sbr.rel (0) target = $region37
    $region36: #{vae_forward.13} parent=1 // pred_region
      %s2911 = ssub.s32 32, 32
      %2912 = vsyncadd [#allocation5], %s2911
      %s2914 = sshll.u32 [#allocation6], 4
      %s2915 = int_to_ptr.vmem [resolvable:$true] %s2914
      %2917 = dma.vmem_to_hbm [thread:$0]  %s2915, 32, %s8, [#allocation5]
    $region37: #{vae_forward.13} parent=1 // pred_fallthru
      _
    // Predicated region
    $region38: #{vae_forward.13} parent=1 // pred_check
      _
    $region39: #{vae_forward.13} parent=1 // pred_check_branch
      %2919 = sbr.rel (0) target = $region41
    $region40: #{vae_forward.13} parent=1 // pred_region
      _
    $region41: #{vae_forward.13} parent=1 // pred_fallthru
      _
    // Predicated region
    $region42: #{vae_forward.13} parent=1 // pred_check
      _
    $region43: #{vae_forward.13} parent=1 // pred_check_branch
      %2921 = sbr.rel (0) target = $region45
    $region44: #{vae_forward.13} parent=1 // pred_region
      %2922 = dma.done [#allocation3], 32
    $region45: #{vae_forward.13} parent=1 // pred_fallthru
      _
    // Predicated region
    $region46: #{vae_forward.13} parent=1 // pred_check
      _
    $region47: #{vae_forward.13} parent=1 // pred_check_branch
      %2924 = sbr.rel (0) target = $region49
    $region48: #{vae_forward.13} parent=1 // pred_region
      %2925 = dma.done [#allocation5], 32
    $region49: #{vae_forward.13} parent=1 // pred_fallthru
      _
    // Predicated region
    $region50: #{vae_forward.13} parent=1 // pred_check
      _
    $region51: #{vae_forward.13} parent=1 // pred_check_branch
      %2927 = sbr.rel (0) target = $region53
    $region52: #{vae_forward.13} parent=1 // pred_region
      %2928 = dma.done [#allocation5], 32
    $region53: #{vae_forward.13} parent=1 // pred_fallthru
      _
    // Predicated region
    $region54: #{vae_forward.13} parent=1 // pred_check
      _
    $region55: #{vae_forward.13} parent=1 // pred_check_branch
      %2930 = sbr.rel (0) target = $region57
    $region56: #{vae_forward.13} parent=1 // pred_region
      _
    $region57: #{vae_forward.13} parent=1 // pred_fallthru
      _
    %2931 = vsyncpa [#allocation3], 1
    %2932 = vsyncpa [#allocation5], 1

// kernel: vae_forward.15
$region0: #{vae_forward.15}
  #allocation0 [shape = 'u32[]', space=smem, size = 0x4, offset = 0x4, fixed_abs, tag = 'smem constant byte address 0x4 - core index']
  #allocation1 [shape = 'u32[144,128]{1,0:T(1,128)}', space=vmem, size = 0x12000, scoped, tag = 'internal scratch']
  %s0 = inlined_call_operand.vmem [shape: bf16[352,576], index: 0, kind: input, shape index: {}]
  %s1 = inlined_call_operand.vmem [shape: bf16[576,64], index: 1, kind: input, shape index: {}]
  %s2 = inlined_call_operand.vmem [shape: f32[1,64], index: 2, kind: input, shape index: {}]
  %s3 = inlined_call_operand.vmem [shape: f32[352,64], index: 3, kind: output, shape index: {}]
  %s4 = sld [smem:[#allocation0]]
  $region22: #{vae_forward.15} parent=0
    _
  %s6 = ssub.s32 1, %s4
  %s7 = scalar_select 0, %s6, %s4
  // Predicated region
  $region2: #{vae_forward.15} parent=0 // pred_check
    _
  $region3: #{vae_forward.15} parent=0 // pred_check_branch
    %9 = sbr.rel (0) target = $region5
  $region4: #{vae_forward.15} parent=0 // pred_region
    _
  $region5: #{vae_forward.15} parent=0 // pred_fallthru
    _
  // Predicated region
  $region6: #{vae_forward.15} parent=0 // pred_check
    _
  $region7: #{vae_forward.15} parent=0 // pred_check_branch
    %11 = sbr.rel (0) target = $region9
  $region8: #{vae_forward.15} parent=0 // pred_region
    _
  $region9: #{vae_forward.15} parent=0 // pred_fallthru
    _
  // Predicated region
  $region10: #{vae_forward.15} parent=0 // pred_check
    _
  $region11: #{vae_forward.15} parent=0 // pred_check_branch
    %13 = sbr.rel (0) target = $region13
  $region12: #{vae_forward.15} parent=0 // pred_region
    _
  $region13: #{vae_forward.15} parent=0 // pred_fallthru
    _
  %v15 = vld [vmem:[%s0] sm:$0xff]
  %v16 = vld [vmem:[%s0 + $0x8] sm:$0xff]
  %v17 = vld [vmem:[%s0 + $0x10] sm:$0xf]
  %v18 = vld [vmem:[%s0 + $0x14] sm:$0xff]
  %v19 = vld [vmem:[%s0 + $0x1c] sm:$0xff]
  %v20 = vld [vmem:[%s0 + $0x24] sm:$0xf]
  %v21 = vld [vmem:[%s0 + $0x28] sm:$0xff]
  %v22 = vld [vmem:[%s0 + $0x30] sm:$0xff]
  %v23 = vld [vmem:[%s0 + $0x38] sm:$0xf]
  %v24 = vld [vmem:[%s0 + $0x3c] sm:$0xff]
  %v25 = vld [vmem:[%s0 + $0x44] sm:$0xff]
  %v26 = vld [vmem:[%s0 + $0x4c] sm:$0xf]
  %v27 = vld [vmem:[%s0 + $0x50] sm:$0xff]
  %v28 = vld [vmem:[%s0 + $0x58] sm:$0xff]
  %v29 = vld [vmem:[%s0 + $0x60] sm:$0xf]
  %v30 = vld [vmem:[%s0 + $0x64] sm:$0xff]
  %v31 = vld [vmem:[%s0 + $0x6c] sm:$0xff]
  %v32 = vld [vmem:[%s0 + $0x74] sm:$0xf]
  %v33 = vld [vmem:[%s0 + $0x78] sm:$0xff]
  %v34 = vld [vmem:[%s0 + $0x80] sm:$0xff]
  %v35 = vld [vmem:[%s0 + $0x88] sm:$0xf]
  %v36 = vld [vmem:[%s0 + $0x8c] sm:$0xff]
  %v37 = vld [vmem:[%s0 + $0x94] sm:$0xff]
  %v38 = vld [vmem:[%s0 + $0x9c] sm:$0xf]
  %v39 = vld [vmem:[%s0 + $0xa0] sm:$0xff]
  %v40 = vld [vmem:[%s0 + $0xa8] sm:$0xff]
  %v41 = vld [vmem:[%s0 + $0xb0] sm:$0xf]
  %v42 = vld [vmem:[%s0 + $0xb4] sm:$0xff]
  %v43 = vld [vmem:[%s0 + $0xbc] sm:$0xff]
  %v44 = vld [vmem:[%s0 + $0xc4] sm:$0xf]
  %v45 = vld [vmem:[%s0 + $0xc8] sm:$0xff]
  %v46 = vld [vmem:[%s0 + $0xd0] sm:$0xff]
  %v47 = vld [vmem:[%s0 + $0xd8] sm:$0xf]
  %v48 = vld [vmem:[%s0 + $0xdc] sm:$0xff]
  %v49 = vld [vmem:[%s0 + $0xe4] sm:$0xff]
  %v50 = vld [vmem:[%s0 + $0xec] sm:$0xf]
  %v51 = vld [vmem:[%s0 + $0xf0] sm:$0xff]
  %v52 = vld [vmem:[%s0 + $0xf8] sm:$0xff]
  %v53 = vld [vmem:[%s0 + $0x100] sm:$0xf]
  %v54 = vld [vmem:[%s0 + $0x104] sm:$0xff]
  %v55 = vld [vmem:[%s0 + $0x10c] sm:$0xff]
  %v56 = vld [vmem:[%s0 + $0x114] sm:$0xf]
  %v57 = vld [vmem:[%s0 + $0x118] sm:$0xff]
  %v58 = vld [vmem:[%s0 + $0x120] sm:$0xff]
  %v59 = vld [vmem:[%s0 + $0x128] sm:$0xf]
  %v60 = vld [vmem:[%s0 + $0x12c] sm:$0xff]
  %v61 = vld [vmem:[%s0 + $0x134] sm:$0xff]
  %v62 = vld [vmem:[%s0 + $0x13c] sm:$0xf]
  %v63 = vld [vmem:[%s0 + $0x140] sm:$0xff]
  %v64 = vld [vmem:[%s0 + $0x148] sm:$0xff]
  %v65 = vld [vmem:[%s0 + $0x150] sm:$0xf]
  %v66 = vld [vmem:[%s0 + $0x154] sm:$0xff]
  %v67 = vld [vmem:[%s0 + $0x15c] sm:$0xff]
  %v68 = vld [vmem:[%s0 + $0x164] sm:$0xf]
  %v69 = vld [vmem:[%s0 + $0x168] sm:$0xff]
  %v70 = vld [vmem:[%s0 + $0x170] sm:$0xff]
  %v71 = vld [vmem:[%s0 + $0x178] sm:$0xf]
  %v72 = vld [vmem:[%s0 + $0x17c] sm:$0xff]
  %v73 = vld [vmem:[%s0 + $0x184] sm:$0xff]
  %v74 = vld [vmem:[%s0 + $0x18c] sm:$0xf]
  %v75 = vld [vmem:[%s0 + $0x190] sm:$0xff]
  %v76 = vld [vmem:[%s0 + $0x198] sm:$0xff]
  %v77 = vld [vmem:[%s0 + $0x1a0] sm:$0xf]
  %v78 = vld [vmem:[%s0 + $0x1a4] sm:$0xff]
  %v79 = vld [vmem:[%s0 + $0x1ac] sm:$0xff]
  %v80 = vld [vmem:[%s0 + $0x1b4] sm:$0xf]
  %v81 = vld [vmem:[%s0 + $0x1b8] sm:$0xff]
  %v82 = vld [vmem:[%s0 + $0x1c0] sm:$0xff]
  %v83 = vld [vmem:[%s0 + $0x1c8] sm:$0xf]
  %v84 = vld [vmem:[%s0 + $0x1cc] sm:$0xff]
  %v85 = vld [vmem:[%s0 + $0x1d4] sm:$0xff]
  %v86 = vld [vmem:[%s0 + $0x1dc] sm:$0xf]
  %v87 = vld [vmem:[%s0 + $0x1e0] sm:$0xff]
  %v88 = vld [vmem:[%s0 + $0x1e8] sm:$0xff]
  %v89 = vld [vmem:[%s0 + $0x1f0] sm:$0xf]
  %v90 = vld [vmem:[%s0 + $0x1f4] sm:$0xff]
  %v91 = vld [vmem:[%s0 + $0x1fc] sm:$0xff]
  %v92 = vld [vmem:[%s0 + $0x204] sm:$0xf]
  %v93 = vld [vmem:[%s0 + $0x208] sm:$0xff]
  %v94 = vld [vmem:[%s0 + $0x210] sm:$0xff]
  %v95 = vld [vmem:[%s0 + $0x218] sm:$0xf]
  %v96 = vld [vmem:[%s0 + $0x21c] sm:$0xff]
  %v97 = vld [vmem:[%s0 + $0x224] sm:$0xff]
  %v98 = vld [vmem:[%s0 + $0x22c] sm:$0xf]
  %v99 = vld [vmem:[%s0 + $0x230] sm:$0xff]
  %v100 = vld [vmem:[%s0 + $0x238] sm:$0xff]
  %v101 = vld [vmem:[%s0 + $0x240] sm:$0xf]
  %v102 = vld [vmem:[%s0 + $0x244] sm:$0xff]
  %v103 = vld [vmem:[%s0 + $0x24c] sm:$0xff]
  %v104 = vld [vmem:[%s0 + $0x254] sm:$0xf]
  %v105 = vld [vmem:[%s0 + $0x258] sm:$0xff]
  %v106 = vld [vmem:[%s0 + $0x260] sm:$0xff]
  %v107 = vld [vmem:[%s0 + $0x268] sm:$0xf]
  %v108 = vld [vmem:[%s0 + $0x26c] sm:$0xff]
  %v109 = vld [vmem:[%s0 + $0x274] sm:$0xff]
  %v110 = vld [vmem:[%s0 + $0x27c] sm:$0xf]
  %v111 = vld [vmem:[%s0 + $0x280] sm:$0xff]
  %v112 = vld [vmem:[%s0 + $0x288] sm:$0xff]
  %v113 = vld [vmem:[%s0 + $0x290] sm:$0xf]
  %v114 = vld [vmem:[%s0 + $0x294] sm:$0xff]
  %v115 = vld [vmem:[%s0 + $0x29c] sm:$0xff]
  %v116 = vld [vmem:[%s0 + $0x2a4] sm:$0xf]
  %v117 = vld [vmem:[%s0 + $0x2a8] sm:$0xff]
  %v118 = vld [vmem:[%s0 + $0x2b0] sm:$0xff]
  %v119 = vld [vmem:[%s0 + $0x2b8] sm:$0xf]
  %v120 = vld [vmem:[%s0 + $0x2bc] sm:$0xff]
  %v121 = vld [vmem:[%s0 + $0x2c4] sm:$0xff]
  %v122 = vld [vmem:[%s0 + $0x2cc] sm:$0xf]
  %v123 = vld [vmem:[%s0 + $0x2d0] sm:$0xff]
  %v124 = vld [vmem:[%s0 + $0x2d8] sm:$0xff]
  %v125 = vld [vmem:[%s0 + $0x2e0] sm:$0xf]
  %v126 = vld [vmem:[%s0 + $0x2e4] sm:$0xff]
  %v127 = vld [vmem:[%s0 + $0x2ec] sm:$0xff]
  %v128 = vld [vmem:[%s0 + $0x2f4] sm:$0xf]
  %v129 = vld [vmem:[%s0 + $0x2f8] sm:$0xff]
  %v130 = vld [vmem:[%s0 + $0x300] sm:$0xff]
  %v131 = vld [vmem:[%s0 + $0x308] sm:$0xf]
  %v132 = vld [vmem:[%s0 + $0x30c] sm:$0xff]
  %v133 = vld [vmem:[%s0 + $0x314] sm:$0xff]
  %v134 = vld [vmem:[%s0 + $0x31c] sm:$0xf]
  %v135 = vld [vmem:[%s0 + $0x320] sm:$0xff]
  %v136 = vld [vmem:[%s0 + $0x328] sm:$0xff]
  %v137 = vld [vmem:[%s0 + $0x330] sm:$0xf]
  %v138 = vld [vmem:[%s0 + $0x334] sm:$0xff]
  %v139 = vld [vmem:[%s0 + $0x33c] sm:$0xff]
  %v140 = vld [vmem:[%s0 + $0x344] sm:$0xf]
  %v141 = vld [vmem:[%s0 + $0x348] sm:$0xff]
  %v142 = vld [vmem:[%s0 + $0x350] sm:$0xff]
  %v143 = vld [vmem:[%s0 + $0x358] sm:$0xf]
  %v144 = vld [vmem:[%s0 + $0x35c] sm:$0xff]
  %v145 = vld [vmem:[%s0 + $0x364] sm:$0xff]
  %v146 = vld [vmem:[%s0 + $0x36c] sm:$0xf]
  %v147 = vld [vmem:[%s1] sm:$0xf]
  %v148 = vld [vmem:[%s1 + $0x4] sm:$0xf]
  %v149 = vld [vmem:[%s1 + $0x8] sm:$0xf]
  %v150 = vld [vmem:[%s1 + $0xc] sm:$0xf]
  %v151 = vld [vmem:[%s1 + $0x10] sm:$0xf]
  %v152 = vld [vmem:[%s1 + $0x14] sm:$0xf]
  %v153 = vld [vmem:[%s1 + $0x18] sm:$0xf]
  %v154 = vld [vmem:[%s1 + $0x1c] sm:$0xf]
  %v155 = vld [vmem:[%s1 + $0x20] sm:$0xf]
  %v156 = vld [vmem:[%s1 + $0x24] sm:$0xf]
  %v157 = vld [vmem:[%s1 + $0x28] sm:$0xf]
  %v158 = vld [vmem:[%s1 + $0x2c] sm:$0xf]
  %v159 = vld [vmem:[%s1 + $0x30] sm:$0xf]
  %v160 = vld [vmem:[%s1 + $0x34] sm:$0xf]
  %v161 = vld [vmem:[%s1 + $0x38] sm:$0xf]
  %v162 = vld [vmem:[%s1 + $0x3c] sm:$0xf]
  %v163 = vld [vmem:[%s1 + $0x40] sm:$0xf]
  %v164 = vld [vmem:[%s1 + $0x44] sm:$0xf]
  %v165 = vld [vmem:[%s1 + $0x48] sm:$0xf]
  %v166 = vld [vmem:[%s1 + $0x4c] sm:$0xf]
  %v167 = vld [vmem:[%s1 + $0x50] sm:$0xf]
  %v168 = vld [vmem:[%s1 + $0x54] sm:$0xf]
  %v169 = vld [vmem:[%s1 + $0x58] sm:$0xf]
  %v170 = vld [vmem:[%s1 + $0x5c] sm:$0xf]
  %v171 = vld [vmem:[%s1 + $0x60] sm:$0xf]
  %v172 = vld [vmem:[%s1 + $0x64] sm:$0xf]
  %v173 = vld [vmem:[%s1 + $0x68] sm:$0xf]
  %v174 = vld [vmem:[%s1 + $0x6c] sm:$0xf]
  %v175 = vld [vmem:[%s1 + $0x70] sm:$0xf]
  %v176 = vld [vmem:[%s1 + $0x74] sm:$0xf]
  %v177 = vld [vmem:[%s1 + $0x78] sm:$0xf]
  %v178 = vld [vmem:[%s1 + $0x7c] sm:$0xf]
  %v179 = vld [vmem:[%s1 + $0x80] sm:$0xf]
  %v180 = vld [vmem:[%s1 + $0x84] sm:$0xf]
  %v181 = vld [vmem:[%s1 + $0x88] sm:$0xf]
  %v182 = vld [vmem:[%s1 + $0x8c] sm:$0xf]
  %v183 = vld [vmem:[%s1 + $0x90] sm:$0xf]
  %v184 = vld [vmem:[%s1 + $0x94] sm:$0xf]
  %v185 = vld [vmem:[%s1 + $0x98] sm:$0xf]
  %v186 = vld [vmem:[%s1 + $0x9c] sm:$0xf]
  %v187 = vld [vmem:[%s1 + $0xa0] sm:$0xf]
  %v188 = vld [vmem:[%s1 + $0xa4] sm:$0xf]
  %v189 = vld [vmem:[%s1 + $0xa8] sm:$0xf]
  %v190 = vld [vmem:[%s1 + $0xac] sm:$0xf]
  %v191 = vld [vmem:[%s1 + $0xb0] sm:$0xf]
  %v192 = vld [vmem:[%s1 + $0xb4] sm:$0xf]
  %v193 = vld [vmem:[%s1 + $0xb8] sm:$0xf]
  %v194 = vld [vmem:[%s1 + $0xbc] sm:$0xf]
  %v195 = vld [vmem:[%s1 + $0xc0] sm:$0xf]
  %v196 = vld [vmem:[%s1 + $0xc4] sm:$0xf]
  %v197 = vld [vmem:[%s1 + $0xc8] sm:$0xf]
  %v198 = vld [vmem:[%s1 + $0xcc] sm:$0xf]
  %v199 = vld [vmem:[%s1 + $0xd0] sm:$0xf]
  %v200 = vld [vmem:[%s1 + $0xd4] sm:$0xf]
  %v201 = vld [vmem:[%s1 + $0xd8] sm:$0xf]
  %v202 = vld [vmem:[%s1 + $0xdc] sm:$0xf]
  %v203 = vld [vmem:[%s1 + $0xe0] sm:$0xf]
  %v204 = vld [vmem:[%s1 + $0xe4] sm:$0xf]
  %v205 = vld [vmem:[%s1 + $0xe8] sm:$0xf]
  %v206 = vld [vmem:[%s1 + $0xec] sm:$0xf]
  %v207 = vld [vmem:[%s1 + $0xf0] sm:$0xf]
  %v208 = vld [vmem:[%s1 + $0xf4] sm:$0xf]
  %v209 = vld [vmem:[%s1 + $0xf8] sm:$0xf]
  %v210 = vld [vmem:[%s1 + $0xfc] sm:$0xf]
  %v211 = vld [vmem:[%s1 + $0x100] sm:$0xf]
  %v212 = vld [vmem:[%s1 + $0x104] sm:$0xf]
  %v213 = vld [vmem:[%s1 + $0x108] sm:$0xf]
  %v214 = vld [vmem:[%s1 + $0x10c] sm:$0xf]
  %v215 = vld [vmem:[%s1 + $0x110] sm:$0xf]
  %v216 = vld [vmem:[%s1 + $0x114] sm:$0xf]
  %v217 = vld [vmem:[%s1 + $0x118] sm:$0xf]
  %v218 = vld [vmem:[%s1 + $0x11c] sm:$0xf]
  %v219 = vld [vmem:[%s2] sm:$0x1]
  %v221 = vlaneseq
  %v222 = vshrl.u32 %v221, 7
  %v223 = vsub.s32 0, %v222
  %v224 = vrot.slane %v219, %v223
  %v358 = vunpack.c.l.b16 %v15
  %v359 = vunpack.c.h.b16 %v15
  %v360 = vunpack.c.l.b16 %v16
  %v361 = vunpack.c.h.b16 %v16
  %v362 = vunpack.c.l.b16 %v17
  %v363 = vunpack.c.l.b16 %v18
  %v364 = vunpack.c.h.b16 %v18
  %v365 = vunpack.c.l.b16 %v19
  %v366 = vunpack.c.h.b16 %v19
  %v367 = vunpack.c.l.b16 %v20
  %v368 = vunpack.c.l.b16 %v21
  %v369 = vunpack.c.h.b16 %v21
  %v370 = vunpack.c.l.b16 %v22
  %v371 = vunpack.c.h.b16 %v22
  %v372 = vunpack.c.l.b16 %v23
  %v373 = vunpack.c.l.b16 %v24
  %v374 = vunpack.c.h.b16 %v24
  %v375 = vunpack.c.l.b16 %v25
  %v376 = vunpack.c.h.b16 %v25
  %v377 = vunpack.c.l.b16 %v26
  %v378 = vunpack.c.l.b16 %v27
  %v379 = vunpack.c.h.b16 %v27
  %v380 = vunpack.c.l.b16 %v28
  %v381 = vunpack.c.h.b16 %v28
  %v382 = vunpack.c.l.b16 %v29
  %v383 = vunpack.c.l.b16 %v30
  %v384 = vunpack.c.h.b16 %v30
  %v385 = vunpack.c.l.b16 %v31
  %v386 = vunpack.c.h.b16 %v31
  %v387 = vunpack.c.l.b16 %v32
  %v388 = vunpack.c.l.b16 %v33
  %v389 = vunpack.c.h.b16 %v33
  %v390 = vunpack.c.l.b16 %v34
  %v391 = vunpack.c.h.b16 %v34
  %v392 = vunpack.c.l.b16 %v35
  %v393 = vunpack.c.l.b16 %v36
  %v394 = vunpack.c.h.b16 %v36
  %v395 = vunpack.c.l.b16 %v37
  %v396 = vunpack.c.h.b16 %v37
  %v397 = vunpack.c.l.b16 %v38
  %v398 = vunpack.c.l.b16 %v39
  %v399 = vunpack.c.h.b16 %v39
  %v400 = vunpack.c.l.b16 %v40
  %v401 = vunpack.c.h.b16 %v40
  %v402 = vunpack.c.l.b16 %v41
  %v403 = vunpack.c.l.b16 %v42
  %v404 = vunpack.c.h.b16 %v42
  %v405 = vunpack.c.l.b16 %v43
  %v406 = vunpack.c.h.b16 %v43
  %v407 = vunpack.c.l.b16 %v44
  %v408 = vunpack.c.l.b16 %v45
  %v409 = vunpack.c.h.b16 %v45
  %v410 = vunpack.c.l.b16 %v46
  %v411 = vunpack.c.h.b16 %v46
  %v412 = vunpack.c.l.b16 %v47
  %v413 = vunpack.c.l.b16 %v48
  %v414 = vunpack.c.h.b16 %v48
  %v415 = vunpack.c.l.b16 %v49
  %v416 = vunpack.c.h.b16 %v49
  %v417 = vunpack.c.l.b16 %v50
  %v418 = vunpack.c.l.b16 %v51
  %v419 = vunpack.c.h.b16 %v51
  %v420 = vunpack.c.l.b16 %v52
  %v421 = vunpack.c.h.b16 %v52
  %v422 = vunpack.c.l.b16 %v53
  %v423 = vunpack.c.l.b16 %v54
  %v424 = vunpack.c.h.b16 %v54
  %v425 = vunpack.c.l.b16 %v55
  %v426 = vunpack.c.h.b16 %v55
  %v427 = vunpack.c.l.b16 %v56
  %v428 = vunpack.c.l.b16 %v57
  %v429 = vunpack.c.h.b16 %v57
  %v430 = vunpack.c.l.b16 %v58
  %v431 = vunpack.c.h.b16 %v58
  %v432 = vunpack.c.l.b16 %v59
  %v433 = vunpack.c.l.b16 %v60
  %v434 = vunpack.c.h.b16 %v60
  %v435 = vunpack.c.l.b16 %v61
  %v436 = vunpack.c.h.b16 %v61
  %v437 = vunpack.c.l.b16 %v62
  %v438 = vunpack.c.l.b16 %v63
  %v439 = vunpack.c.h.b16 %v63
  %v440 = vunpack.c.l.b16 %v64
  %v441 = vunpack.c.h.b16 %v64
  %v442 = vunpack.c.l.b16 %v65
  %v443 = vunpack.c.l.b16 %v66
  %v444 = vunpack.c.h.b16 %v66
  %v445 = vunpack.c.l.b16 %v67
  %v446 = vunpack.c.h.b16 %v67
  %v447 = vunpack.c.l.b16 %v68
  %v448 = vunpack.c.l.b16 %v69
  %v449 = vunpack.c.h.b16 %v69
  %v450 = vunpack.c.l.b16 %v70
  %v451 = vunpack.c.h.b16 %v70
  %v452 = vunpack.c.l.b16 %v71
  %v453 = vunpack.c.l.b16 %v72
  %v454 = vunpack.c.h.b16 %v72
  %v455 = vunpack.c.l.b16 %v73
  %v456 = vunpack.c.h.b16 %v73
  %v457 = vunpack.c.l.b16 %v74
  %v458 = vunpack.c.l.b16 %v75
  %v459 = vunpack.c.h.b16 %v75
  %v460 = vunpack.c.l.b16 %v76
  %v461 = vunpack.c.h.b16 %v76
  %v462 = vunpack.c.l.b16 %v77
  %v463 = vunpack.c.l.b16 %v78
  %v464 = vunpack.c.h.b16 %v78
  %v465 = vunpack.c.l.b16 %v79
  %v466 = vunpack.c.h.b16 %v79
  %v467 = vunpack.c.l.b16 %v80
  %v468 = vunpack.c.l.b16 %v81
  %v469 = vunpack.c.h.b16 %v81
  %v470 = vunpack.c.l.b16 %v82
  %v471 = vunpack.c.h.b16 %v82
  %v472 = vunpack.c.l.b16 %v83
  %v473 = vunpack.c.l.b16 %v84
  %v474 = vunpack.c.h.b16 %v84
  %v475 = vunpack.c.l.b16 %v85
  %v476 = vunpack.c.h.b16 %v85
  %v477 = vunpack.c.l.b16 %v86
  %v478 = vunpack.c.l.b16 %v87
  %v479 = vunpack.c.h.b16 %v87
  %v480 = vunpack.c.l.b16 %v88
  %v481 = vunpack.c.h.b16 %v88
  %v482 = vunpack.c.l.b16 %v89
  %v483 = vunpack.c.l.b16 %v90
  %v484 = vunpack.c.h.b16 %v90
  %v485 = vunpack.c.l.b16 %v91
  %v486 = vunpack.c.h.b16 %v91
  %v487 = vunpack.c.l.b16 %v92
  %v488 = vunpack.c.l.b16 %v93
  %v489 = vunpack.c.h.b16 %v93
  %v490 = vunpack.c.l.b16 %v94
  %v491 = vunpack.c.h.b16 %v94
  %v492 = vunpack.c.l.b16 %v95
  %v493 = vunpack.c.l.b16 %v96
  %v494 = vunpack.c.h.b16 %v96
  %v495 = vunpack.c.l.b16 %v97
  %v496 = vunpack.c.h.b16 %v97
  %v497 = vunpack.c.l.b16 %v98
  %v498 = vunpack.c.l.b16 %v99
  %v499 = vunpack.c.h.b16 %v99
  %v500 = vunpack.c.l.b16 %v100
  %v501 = vunpack.c.h.b16 %v100
  %v502 = vunpack.c.l.b16 %v101
  %v503 = vunpack.c.l.b16 %v102
  %v504 = vunpack.c.h.b16 %v102
  %v505 = vunpack.c.l.b16 %v103
  %v506 = vunpack.c.h.b16 %v103
  %v507 = vunpack.c.l.b16 %v104
  %v508 = vunpack.c.l.b16 %v105
  %v509 = vunpack.c.h.b16 %v105
  %v510 = vunpack.c.l.b16 %v106
  %v511 = vunpack.c.h.b16 %v106
  %v512 = vunpack.c.l.b16 %v107
  %v513 = vunpack.c.l.b16 %v108
  %v514 = vunpack.c.h.b16 %v108
  %v515 = vunpack.c.l.b16 %v109
  %v516 = vunpack.c.h.b16 %v109
  %v517 = vunpack.c.l.b16 %v110
  %v518 = vunpack.c.l.b16 %v111
  %v519 = vunpack.c.h.b16 %v111
  %v520 = vunpack.c.l.b16 %v112
  %v521 = vunpack.c.h.b16 %v112
  %v522 = vunpack.c.l.b16 %v113
  %v523 = vunpack.c.l.b16 %v114
  %v524 = vunpack.c.h.b16 %v114
  %v525 = vunpack.c.l.b16 %v115
  %v526 = vunpack.c.h.b16 %v115
  %v527 = vunpack.c.l.b16 %v116
  %v528 = vunpack.c.l.b16 %v117
  %v529 = vunpack.c.h.b16 %v117
  %v530 = vunpack.c.l.b16 %v118
  %v531 = vunpack.c.h.b16 %v118
  %v532 = vunpack.c.l.b16 %v119
  %v533 = vunpack.c.l.b16 %v120
  %v534 = vunpack.c.h.b16 %v120
  %v535 = vunpack.c.l.b16 %v121
  %v536 = vunpack.c.h.b16 %v121
  %v537 = vunpack.c.l.b16 %v122
  %v538 = vunpack.c.l.b16 %v123
  %v539 = vunpack.c.h.b16 %v123
  %v540 = vunpack.c.l.b16 %v124
  %v541 = vunpack.c.h.b16 %v124
  %v542 = vunpack.c.l.b16 %v125
  %v543 = vunpack.c.l.b16 %v126
  %v544 = vunpack.c.h.b16 %v126
  %v545 = vunpack.c.l.b16 %v127
  %v546 = vunpack.c.h.b16 %v127
  %v547 = vunpack.c.l.b16 %v128
  %v548 = vunpack.c.l.b16 %v129
  %v549 = vunpack.c.h.b16 %v129
  %v550 = vunpack.c.l.b16 %v130
  %v551 = vunpack.c.h.b16 %v130
  %v552 = vunpack.c.l.b16 %v131
  %v553 = vunpack.c.l.b16 %v132
  %v554 = vunpack.c.h.b16 %v132
  %v555 = vunpack.c.l.b16 %v133
  %v556 = vunpack.c.h.b16 %v133
  %v557 = vunpack.c.l.b16 %v134
  %v558 = vunpack.c.l.b16 %v135
  %v559 = vunpack.c.h.b16 %v135
  %v560 = vunpack.c.l.b16 %v136
  %v561 = vunpack.c.h.b16 %v136
  %v562 = vunpack.c.l.b16 %v137
  %v563 = vunpack.c.l.b16 %v138
  %v564 = vunpack.c.h.b16 %v138
  %v565 = vunpack.c.l.b16 %v139
  %v566 = vunpack.c.h.b16 %v139
  %v567 = vunpack.c.l.b16 %v140
  %v568 = vunpack.c.l.b16 %v141
  %v569 = vunpack.c.h.b16 %v141
  %v570 = vunpack.c.l.b16 %v142
  %v571 = vunpack.c.h.b16 %v142
  %v572 = vunpack.c.l.b16 %v143
  %v573 = vunpack.c.l.b16 %v144
  %v574 = vunpack.c.h.b16 %v144
  %v575 = vunpack.c.l.b16 %v145
  %v576 = vunpack.c.h.b16 %v145
  %v577 = vunpack.c.l.b16 %v146
  %v578 = vpack.c.b16 %v363, %v358
  %v579 = vpack.c.b16 %v364, %v359
  %v580 = vpack.c.b16 %v365, %v360
  %v581 = vpack.c.b16 %v366, %v361
  %v582 = vpack.c.b16 %v367, %v362
  %v583 = vpack.c.b16 %v373, %v368
  %v584 = vpack.c.b16 %v374, %v369
  %v585 = vpack.c.b16 %v375, %v370
  %v586 = vpack.c.b16 %v376, %v371
  %v587 = vpack.c.b16 %v377, %v372
  %v588 = vpack.c.b16 %v383, %v378
  %v589 = vpack.c.b16 %v384, %v379
  %v590 = vpack.c.b16 %v385, %v380
  %v591 = vpack.c.b16 %v386, %v381
  %v592 = vpack.c.b16 %v387, %v382
  %v593 = vpack.c.b16 %v393, %v388
  %v594 = vpack.c.b16 %v394, %v389
  %v595 = vpack.c.b16 %v395, %v390
  %v596 = vpack.c.b16 %v396, %v391
  %v597 = vpack.c.b16 %v397, %v392
  %v598 = vpack.c.b16 %v403, %v398
  %v599 = vpack.c.b16 %v404, %v399
  %v600 = vpack.c.b16 %v405, %v400
  %v601 = vpack.c.b16 %v406, %v401
  %v602 = vpack.c.b16 %v407, %v402
  %v603 = vpack.c.b16 %v413, %v408
  %v604 = vpack.c.b16 %v414, %v409
  %v605 = vpack.c.b16 %v415, %v410
  %v606 = vpack.c.b16 %v416, %v411
  %v607 = vpack.c.b16 %v417, %v412
  %v608 = vpack.c.b16 %v423, %v418
  %v609 = vpack.c.b16 %v424, %v419
  %v610 = vpack.c.b16 %v425, %v420
  %v611 = vpack.c.b16 %v426, %v421
  %v612 = vpack.c.b16 %v427, %v422
  %v613 = vpack.c.b16 %v433, %v428
  %v614 = vpack.c.b16 %v434, %v429
  %v615 = vpack.c.b16 %v435, %v430
  %v616 = vpack.c.b16 %v436, %v431
  %v617 = vpack.c.b16 %v437, %v432
  %v618 = vpack.c.b16 %v443, %v438
  %v619 = vpack.c.b16 %v444, %v439
  %v620 = vpack.c.b16 %v445, %v440
  %v621 = vpack.c.b16 %v446, %v441
  %v622 = vpack.c.b16 %v447, %v442
  %v623 = vpack.c.b16 %v453, %v448
  %v624 = vpack.c.b16 %v454, %v449
  %v625 = vpack.c.b16 %v455, %v450
  %v626 = vpack.c.b16 %v456, %v451
  %v627 = vpack.c.b16 %v457, %v452
  %v628 = vpack.c.b16 %v463, %v458
  %v629 = vpack.c.b16 %v464, %v459
  %v630 = vpack.c.b16 %v465, %v460
  %v631 = vpack.c.b16 %v466, %v461
  %v632 = vpack.c.b16 %v467, %v462
  %v633 = vpack.c.b16 %v473, %v468
  %v634 = vpack.c.b16 %v474, %v469
  %v635 = vpack.c.b16 %v475, %v470
  %v636 = vpack.c.b16 %v476, %v471
  %v637 = vpack.c.b16 %v477, %v472
  %v638 = vpack.c.b16 %v483, %v478
  %v639 = vpack.c.b16 %v484, %v479
  %v640 = vpack.c.b16 %v485, %v480
  %v641 = vpack.c.b16 %v486, %v481
  %v642 = vpack.c.b16 %v487, %v482
  %v643 = vpack.c.b16 %v493, %v488
  %v644 = vpack.c.b16 %v494, %v489
  %v645 = vpack.c.b16 %v495, %v490
  %v646 = vpack.c.b16 %v496, %v491
  %v647 = vpack.c.b16 %v497, %v492
  %v648 = vpack.c.b16 %v503, %v498
  %v649 = vpack.c.b16 %v504, %v499
  %v650 = vpack.c.b16 %v505, %v500
  %v651 = vpack.c.b16 %v506, %v501
  %v652 = vpack.c.b16 %v507, %v502
  %v653 = vpack.c.b16 %v513, %v508
  %v654 = vpack.c.b16 %v514, %v509
  %v655 = vpack.c.b16 %v515, %v510
  %v656 = vpack.c.b16 %v516, %v511
  %v657 = vpack.c.b16 %v517, %v512
  %v658 = vpack.c.b16 %v523, %v518
  %v659 = vpack.c.b16 %v524, %v519
  %v660 = vpack.c.b16 %v525, %v520
  %v661 = vpack.c.b16 %v526, %v521
  %v662 = vpack.c.b16 %v527, %v522
  %v663 = vpack.c.b16 %v533, %v528
  %v664 = vpack.c.b16 %v534, %v529
  %v665 = vpack.c.b16 %v535, %v530
  %v666 = vpack.c.b16 %v536, %v531
  %v667 = vpack.c.b16 %v537, %v532
  %v668 = vpack.c.b16 %v543, %v538
  %v669 = vpack.c.b16 %v544, %v539
  %v670 = vpack.c.b16 %v545, %v540
  %v671 = vpack.c.b16 %v546, %v541
  %v672 = vpack.c.b16 %v547, %v542
  %v673 = vpack.c.b16 %v553, %v548
  %v674 = vpack.c.b16 %v554, %v549
  %v675 = vpack.c.b16 %v555, %v550
  %v676 = vpack.c.b16 %v556, %v551
  %v677 = vpack.c.b16 %v557, %v552
  %v678 = vpack.c.b16 %v563, %v558
  %v679 = vpack.c.b16 %v564, %v559
  %v680 = vpack.c.b16 %v565, %v560
  %v681 = vpack.c.b16 %v566, %v561
  %v682 = vpack.c.b16 %v567, %v562
  %v683 = vpack.c.b16 %v573, %v568
  %v684 = vpack.c.b16 %v574, %v569
  %v685 = vpack.c.b16 %v575, %v570
  %v686 = vpack.c.b16 %v576, %v571
  %v687 = vpack.c.b16 %v577, %v572
  %v848 = vunpack.c.l.b16 %v147
  %v849 = vunpack.c.l.b16 %v148
  %v850 = vunpack.c.l.b16 %v149
  %v851 = vunpack.c.l.b16 %v150
  %v852 = vunpack.c.l.b16 %v151
  %v853 = vunpack.c.l.b16 %v152
  %v854 = vunpack.c.l.b16 %v153
  %v855 = vunpack.c.l.b16 %v154
  %v856 = vunpack.c.l.b16 %v155
  %v857 = vunpack.c.l.b16 %v156
  %v858 = vunpack.c.l.b16 %v157
  %v859 = vunpack.c.l.b16 %v158
  %v860 = vunpack.c.l.b16 %v159
  %v861 = vunpack.c.l.b16 %v160
  %v862 = vunpack.c.l.b16 %v161
  %v863 = vunpack.c.l.b16 %v162
  %v864 = vunpack.c.l.b16 %v163
  %v865 = vunpack.c.l.b16 %v164
  %v866 = vunpack.c.l.b16 %v165
  %v867 = vunpack.c.l.b16 %v166
  %v868 = vunpack.c.l.b16 %v167
  %v869 = vunpack.c.l.b16 %v168
  %v870 = vunpack.c.l.b16 %v169
  %v871 = vunpack.c.l.b16 %v170
  %v872 = vunpack.c.l.b16 %v171
  %v873 = vunpack.c.l.b16 %v172
  %v874 = vunpack.c.l.b16 %v173
  %v875 = vunpack.c.l.b16 %v174
  %v876 = vunpack.c.l.b16 %v175
  %v877 = vunpack.c.l.b16 %v176
  %v878 = vunpack.c.l.b16 %v177
  %v879 = vunpack.c.l.b16 %v178
  %v880 = vunpack.c.l.b16 %v179
  %v881 = vunpack.c.l.b16 %v180
  %v882 = vunpack.c.l.b16 %v181
  %v883 = vunpack.c.l.b16 %v182
  %v884 = vunpack.c.l.b16 %v183
  %v885 = vunpack.c.l.b16 %v184
  %v886 = vunpack.c.l.b16 %v185
  %v887 = vunpack.c.l.b16 %v186
  %v888 = vunpack.c.l.b16 %v187
  %v889 = vunpack.c.l.b16 %v188
  %v890 = vunpack.c.l.b16 %v189
  %v891 = vunpack.c.l.b16 %v190
  %v892 = vunpack.c.l.b16 %v191
  %v893 = vunpack.c.l.b16 %v192
  %v894 = vunpack.c.l.b16 %v193
  %v895 = vunpack.c.l.b16 %v194
  %v896 = vunpack.c.l.b16 %v195
  %v897 = vunpack.c.l.b16 %v196
  %v898 = vunpack.c.l.b16 %v197
  %v899 = vunpack.c.l.b16 %v198
  %v900 = vunpack.c.l.b16 %v199
  %v901 = vunpack.c.l.b16 %v200
  %v902 = vunpack.c.l.b16 %v201
  %v903 = vunpack.c.l.b16 %v202
  %v904 = vunpack.c.l.b16 %v203
  %v905 = vunpack.c.l.b16 %v204
  %v906 = vunpack.c.l.b16 %v205
  %v907 = vunpack.c.l.b16 %v206
  %v908 = vunpack.c.l.b16 %v207
  %v909 = vunpack.c.l.b16 %v208
  %v910 = vunpack.c.l.b16 %v209
  %v911 = vunpack.c.l.b16 %v210
  %v912 = vunpack.c.l.b16 %v211
  %v913 = vunpack.c.l.b16 %v212
  %v914 = vunpack.c.l.b16 %v213
  %v915 = vunpack.c.l.b16 %v214
  %v916 = vunpack.c.l.b16 %v215
  %v917 = vunpack.c.l.b16 %v216
  %v918 = vunpack.c.l.b16 %v217
  %v919 = vunpack.c.l.b16 %v218
  %v920 = vpack.c.b16 %v849, %v848
  %v921 = vpack.c.b16 %v851, %v850
  %v922 = vpack.c.b16 %v853, %v852
  %v923 = vpack.c.b16 %v855, %v854
  %v924 = vpack.c.b16 %v857, %v856
  %v925 = vpack.c.b16 %v859, %v858
  %v926 = vpack.c.b16 %v861, %v860
  %v927 = vpack.c.b16 %v863, %v862
  %v928 = vpack.c.b16 %v865, %v864
  %v929 = vpack.c.b16 %v867, %v866
  %v930 = vpack.c.b16 %v869, %v868
  %v931 = vpack.c.b16 %v871, %v870
  %v932 = vpack.c.b16 %v873, %v872
  %v933 = vpack.c.b16 %v875, %v874
  %v934 = vpack.c.b16 %v877, %v876
  %v935 = vpack.c.b16 %v879, %v878
  %v936 = vpack.c.b16 %v881, %v880
  %v937 = vpack.c.b16 %v883, %v882
  %v938 = vpack.c.b16 %v885, %v884
  %v939 = vpack.c.b16 %v887, %v886
  %v940 = vpack.c.b16 %v889, %v888
  %v941 = vpack.c.b16 %v891, %v890
  %v942 = vpack.c.b16 %v893, %v892
  %v943 = vpack.c.b16 %v895, %v894
  %v944 = vpack.c.b16 %v897, %v896
  %v945 = vpack.c.b16 %v899, %v898
  %v946 = vpack.c.b16 %v901, %v900
  %v947 = vpack.c.b16 %v903, %v902
  %v948 = vpack.c.b16 %v905, %v904
  %v949 = vpack.c.b16 %v907, %v906
  %v950 = vpack.c.b16 %v909, %v908
  %v951 = vpack.c.b16 %v911, %v910
  %v952 = vpack.c.b16 %v913, %v912
  %v953 = vpack.c.b16 %v915, %v914
  %v954 = vpack.c.b16 %v917, %v916
  %v955 = vpack.c.b16 %v919, %v918
  %vm992 = vcmask 523264
  %v994 = vsel %vm992, %v582, 0
  %v997 = vsel %vm992, %v587, 0
  %v1000 = vsel %vm992, %v592, 0
  %v1003 = vsel %vm992, %v597, 0
  %v1006 = vsel %vm992, %v602, 0
  %v1009 = vsel %vm992, %v607, 0
  %v1012 = vsel %vm992, %v612, 0
  %v1015 = vsel %vm992, %v617, 0
  %v1018 = vsel %vm992, %v622, 0
  %v1021 = vsel %vm992, %v627, 0
  %v1024 = vsel %vm992, %v632, 0
  %v1027 = vsel %vm992, %v637, 0
  %v1030 = vsel %vm992, %v642, 0
  %v1033 = vsel %vm992, %v647, 0
  %v1036 = vsel %vm992, %v652, 0
  %v1039 = vsel %vm992, %v657, 0
  %v1042 = vsel %vm992, %v662, 0
  %v1045 = vsel %vm992, %v667, 0
  %v1048 = vsel %vm992, %v672, 0
  %v1051 = vsel %vm992, %v677, 0
  %v1054 = vsel %vm992, %v682, 0
  %v1057 = vsel %vm992, %v687, 0
  %1059 = vmatprep.subr.bf16.mxu0 0
  %1060 = vmatpush1.bf16.msra.mxu0 %v920
  %1061 = vmatprep.subr.bf16.mxu0 0
  %1062 = vmatpush1.bf16.msra.mxu0 %v921
  %1063 = vmatprep.subr.bf16.mxu0 0
  %1064 = vmatpush1.bf16.msra.mxu0 %v922
  %1065 = vmatprep.subr.bf16.mxu0 0
  %1066 = vmatpush1.bf16.msra.mxu0 %v923
  %1067 = vmatprep.subr.bf16.mxu0 0
  %1068 = vmatpush1.bf16.msra.mxu0 %v924
  %1069 = vmatprep.subr.bf16.mxu0 0
  %1070 = vmatpush1.bf16.msra.mxu0 %v925
  %1071 = vmatprep.subr.bf16.mxu0 0
  %1072 = vmatpush1.bf16.msra.mxu0 %v926
  %1073 = vmatprep.subr.bf16.mxu0 0
  %1074 = vmatpush1.bf16.msra.mxu0 %v927
  %1075 = vmatprep.subr.bf16.mxu0 0
  %1076 = vmatpush1.bf16.msra.mxu0 %v928
  %1077 = vmatprep.subr.bf16.mxu0 0
  %1078 = vmatpush1.bf16.msra.mxu0 %v929
  %1079 = vmatprep.subr.bf16.mxu0 0
  %1080 = vmatpush1.bf16.msra.mxu0 %v930
  %1081 = vmatprep.subr.bf16.mxu0 0
  %1082 = vmatpush1.bf16.msra.mxu0 %v931
  %1083 = vmatprep.subr.bf16.mxu0 0
  %1084 = vmatpush1.bf16.msra.mxu0 %v932
  %1085 = vmatprep.subr.bf16.mxu0 0
  %1086 = vmatpush1.bf16.msra.mxu0 %v933
  %1087 = vmatprep.subr.bf16.mxu0 0
  %1088 = vmatpush1.bf16.msra.mxu0 %v934
  %1089 = vmatprep.subr.bf16.mxu0 0
  %1090 = vmatpush1.bf16.msra.mxu0 %v935
  %1091 = vmatprep.mubr.bf16.mxu0 %v579
  %1092 = vmatmul.mubr.bf16.gmra.mrb[0].mxu0 %v578
  %v1093 = vpop.f32.mrb[0].mxu0
  %v1094 = vadd.f32 %v224, %v1093
  %v1095 = vpop.f32.mrb[0].mxu0
  %v1096 = vpop.f32.mrb[0].mxu0
  %v1097 = vadd.f32 %v224, %v1096
  %v1098 = vpop.f32.mrb[0].mxu0
  %1099 = vmatprep.mubr.bf16.mxu0 %v584
  %1100 = vmatmul.mubr.bf16.gmra.mrb[0].mxu0 %v583
  %v1101 = vpop.f32.mrb[0].mxu0
  %v1102 = vadd.f32 %v224, %v1101
  %v1103 = vpop.f32.mrb[0].mxu0
  %v1104 = vpop.f32.mrb[0].mxu0
  %v1105 = vadd.f32 %v224, %v1104
  %v1106 = vpop.f32.mrb[0].mxu0
  %1107 = vmatprep.mubr.bf16.mxu0 %v589
  %1108 = vmatmul.mubr.bf16.gmra.mrb[0].mxu0 %v588
  %v1109 = vpop.f32.mrb[0].mxu0
  %v1110 = vadd.f32 %v224, %v1109
  %v1111 = vpop.f32.mrb[0].mxu0
  %v1112 = vpop.f32.mrb[0].mxu0
  %v1113 = vadd.f32 %v224, %v1112
  %v1114 = vpop.f32.mrb[0].mxu0
  %1115 = vmatprep.mubr.bf16.mxu0 %v594
  %1116 = vmatmul.mubr.bf16.gmra.mrb[0].mxu0 %v593
  %v1117 = vpop.f32.mrb[0].mxu0
  %v1118 = vadd.f32 %v224, %v1117
  %v1119 = vpop.f32.mrb[0].mxu0
  %v1120 = vpop.f32.mrb[0].mxu0
  %v1121 = vadd.f32 %v224, %v1120
  %v1122 = vpop.f32.mrb[0].mxu0
  %1123 = vmatprep.mubr.bf16.mxu0 %v599
  %1124 = vmatmul.mubr.bf16.gmra.mrb[0].mxu0 %v598
  %v1125 = vpop.f32.mrb[0].mxu0
  %v1126 = vadd.f32 %v224, %v1125
  %v1127 = vpop.f32.mrb[0].mxu0
  %v1128 = vpop.f32.mrb[0].mxu0
  %v1129 = vadd.f32 %v224, %v1128
  %v1130 = vpop.f32.mrb[0].mxu0
  %1131 = vmatprep.mubr.bf16.mxu0 %v604
  %1132 = vmatmul.mubr.bf16.gmra.mrb[0].mxu0 %v603
  %v1133 = vpop.f32.mrb[0].mxu0
  %v1134 = vadd.f32 %v224, %v1133
  %v1135 = vpop.f32.mrb[0].mxu0
  %v1136 = vpop.f32.mrb[0].mxu0
  %v1137 = vadd.f32 %v224, %v1136
  %v1138 = vpop.f32.mrb[0].mxu0
  %1139 = vmatprep.mubr.bf16.mxu0 %v609
  %1140 = vmatmul.mubr.bf16.gmra.mrb[0].mxu0 %v608
  %v1141 = vpop.f32.mrb[0].mxu0
  %v1142 = vadd.f32 %v224, %v1141
  %v1143 = vpop.f32.mrb[0].mxu0
  %v1144 = vpop.f32.mrb[0].mxu0
  %v1145 = vadd.f32 %v224, %v1144
  %v1146 = vpop.f32.mrb[0].mxu0
  %1147 = vmatprep.mubr.bf16.mxu0 %v614
  %1148 = vmatmul.mubr.bf16.gmra.mrb[0].mxu0 %v613
  %v1149 = vpop.f32.mrb[0].mxu0
  %v1150 = vadd.f32 %v224, %v1149
  %v1151 = vpop.f32.mrb[0].mxu0
  %v1152 = vpop.f32.mrb[0].mxu0
  %v1153 = vadd.f32 %v224, %v1152
  %v1154 = vpop.f32.mrb[0].mxu0
  %1155 = vmatprep.mubr.bf16.mxu0 %v619
  %1156 = vmatmul.mubr.bf16.gmra.mrb[0].mxu0 %v618
  %v1157 = vpop.f32.mrb[0].mxu0
  %v1158 = vadd.f32 %v224, %v1157
  %v1159 = vpop.f32.mrb[0].mxu0
  %v1160 = vpop.f32.mrb[0].mxu0
  %v1161 = vadd.f32 %v224, %v1160
  %v1162 = vpop.f32.mrb[0].mxu0
  %1163 = vmatprep.mubr.bf16.mxu0 %v624
  %1164 = vmatmul.mubr.bf16.gmra.mrb[0].mxu0 %v623
  %v1165 = vpop.f32.mrb[0].mxu0
  %v1166 = vadd.f32 %v224, %v1165
  %v1167 = vpop.f32.mrb[0].mxu0
  %v1168 = vpop.f32.mrb[0].mxu0
  %v1169 = vadd.f32 %v224, %v1168
  %v1170 = vpop.f32.mrb[0].mxu0
  %1171 = vmatprep.mubr.bf16.mxu0 %v629
  %1172 = vmatmul.mubr.bf16.gmra.mrb[0].mxu0 %v628
  %v1173 = vpop.f32.mrb[0].mxu0
  %v1174 = vadd.f32 %v224, %v1173
  %v1175 = vpop.f32.mrb[0].mxu0
  %v1176 = vpop.f32.mrb[0].mxu0
  %v1177 = vadd.f32 %v224, %v1176
  %v1178 = vpop.f32.mrb[0].mxu0
  %1179 = vmatprep.mubr.bf16.mxu0 %v634
  %1180 = vmatmul.mubr.bf16.gmra.mrb[0].mxu0 %v633
  %v1181 = vpop.f32.mrb[0].mxu0
  %v1182 = vadd.f32 %v224, %v1181
  %v1183 = vpop.f32.mrb[0].mxu0
  %v1184 = vpop.f32.mrb[0].mxu0
  %v1185 = vadd.f32 %v224, %v1184
  %v1186 = vpop.f32.mrb[0].mxu0
  %1187 = vmatprep.mubr.bf16.mxu0 %v639
  %1188 = vmatmul.mubr.bf16.gmra.mrb[0].mxu0 %v638
  %v1189 = vpop.f32.mrb[0].mxu0
  %v1190 = vadd.f32 %v224, %v1189
  %v1191 = vpop.f32.mrb[0].mxu0
  %v1192 = vpop.f32.mrb[0].mxu0
  %v1193 = vadd.f32 %v224, %v1192
  %v1194 = vpop.f32.mrb[0].mxu0
  %1195 = vmatprep.mubr.bf16.mxu0 %v644
  %1196 = vmatmul.mubr.bf16.gmra.mrb[0].mxu0 %v643
  %v1197 = vpop.f32.mrb[0].mxu0
  %v1198 = vadd.f32 %v224, %v1197
  %v1199 = vpop.f32.mrb[0].mxu0
  %v1200 = vpop.f32.mrb[0].mxu0
  %v1201 = vadd.f32 %v224, %v1200
  %v1202 = vpop.f32.mrb[0].mxu0
  %1203 = vmatprep.mubr.bf16.mxu0 %v649
  %1204 = vmatmul.mubr.bf16.gmra.mrb[0].mxu0 %v648
  %v1205 = vpop.f32.mrb[0].mxu0
  %v1206 = vadd.f32 %v224, %v1205
  %v1207 = vpop.f32.mrb[0].mxu0
  %v1208 = vpop.f32.mrb[0].mxu0
  %v1209 = vadd.f32 %v224, %v1208
  %v1210 = vpop.f32.mrb[0].mxu0
  %1211 = vmatprep.mubr.bf16.mxu0 %v654
  %1212 = vmatmul.mubr.bf16.gmra.mrb[0].mxu0 %v653
  %v1213 = vpop.f32.mrb[0].mxu0
  %v1214 = vadd.f32 %v224, %v1213
  %v1215 = vpop.f32.mrb[0].mxu0
  %v1216 = vpop.f32.mrb[0].mxu0
  %v1217 = vadd.f32 %v224, %v1216
  %v1218 = vpop.f32.mrb[0].mxu0
  %1219 = vmatprep.mubr.bf16.mxu0 %v659
  %1220 = vmatmul.mubr.bf16.gmra.mrb[0].mxu0 %v658
  %v1221 = vpop.f32.mrb[0].mxu0
  %v1222 = vadd.f32 %v224, %v1221
  %v1223 = vpop.f32.mrb[0].mxu0
  %v1224 = vpop.f32.mrb[0].mxu0
  %v1225 = vadd.f32 %v224, %v1224
  %v1226 = vpop.f32.mrb[0].mxu0
  %1227 = vmatprep.mubr.bf16.mxu0 %v664
  %1228 = vmatmul.mubr.bf16.gmra.mrb[0].mxu0 %v663
  %v1229 = vpop.f32.mrb[0].mxu0
  %v1230 = vadd.f32 %v224, %v1229
  %v1231 = vpop.f32.mrb[0].mxu0
  %v1232 = vpop.f32.mrb[0].mxu0
  %v1233 = vadd.f32 %v224, %v1232
  %v1234 = vpop.f32.mrb[0].mxu0
  %1235 = vmatprep.mubr.bf16.mxu0 %v669
  %1236 = vmatmul.mubr.bf16.gmra.mrb[0].mxu0 %v668
  %v1237 = vpop.f32.mrb[0].mxu0
  %v1238 = vadd.f32 %v224, %v1237
  %v1239 = vpop.f32.mrb[0].mxu0
  %v1240 = vpop.f32.mrb[0].mxu0
  %v1241 = vadd.f32 %v224, %v1240
  %v1242 = vpop.f32.mrb[0].mxu0
  %1243 = vmatprep.mubr.bf16.mxu0 %v674
  %1244 = vmatmul.mubr.bf16.gmra.mrb[0].mxu0 %v673
  %v1245 = vpop.f32.mrb[0].mxu0
  %v1246 = vadd.f32 %v224, %v1245
  %v1247 = vpop.f32.mrb[0].mxu0
  %v1248 = vpop.f32.mrb[0].mxu0
  %v1249 = vadd.f32 %v224, %v1248
  %v1250 = vpop.f32.mrb[0].mxu0
  %1251 = vmatprep.mubr.bf16.mxu0 %v679
  %1252 = vmatmul.mubr.bf16.gmra.mrb[0].mxu0 %v678
  %v1253 = vpop.f32.mrb[0].mxu0
  %v1254 = vadd.f32 %v224, %v1253
  %v1255 = vpop.f32.mrb[0].mxu0
  %v1256 = vpop.f32.mrb[0].mxu0
  %v1257 = vadd.f32 %v224, %v1256
  %v1258 = vpop.f32.mrb[0].mxu0
  %1259 = vmatprep.mubr.bf16.mxu0 %v684
  %1260 = vmatmul.mubr.bf16.gmra.mrb[0].mxu0 %v683
  %v1261 = vpop.f32.mrb[0].mxu0
  %v1262 = vadd.f32 %v224, %v1261
  %v1263 = vpop.f32.mrb[0].mxu0
  %v1264 = vpop.f32.mrb[0].mxu0
  %v1265 = vadd.f32 %v224, %v1264
  %v1266 = vpop.f32.mrb[0].mxu0
  %1267 = vdwg.mxu0
  %1268 = vmatprep.subr.bf16.mxu0 0
  %1269 = vmatpush1.bf16.msra.mxu0 %v936
  %1270 = vmatprep.subr.bf16.mxu0 0
  %1271 = vmatpush1.bf16.msra.mxu0 %v937
  %1272 = vmatprep.subr.bf16.mxu0 0
  %1273 = vmatpush1.bf16.msra.mxu0 %v938
  %1274 = vmatprep.subr.bf16.mxu0 0
  %1275 = vmatpush1.bf16.msra.mxu0 %v939
  %1276 = vmatprep.subr.bf16.mxu0 0
  %1277 = vmatpush1.bf16.msra.mxu0 %v940
  %1278 = vmatprep.subr.bf16.mxu0 0
  %1279 = vmatpush1.bf16.msra.mxu0 %v941
  %1280 = vmatprep.subr.bf16.mxu0 0
  %1281 = vmatpush1.bf16.msra.mxu0 %v942
  %1282 = vmatprep.subr.bf16.mxu0 0
  %1283 = vmatpush1.bf16.msra.mxu0 %v943
  %1284 = vmatprep.subr.bf16.mxu0 0
  %1285 = vmatpush1.bf16.msra.mxu0 %v944
  %1286 = vmatprep.subr.bf16.mxu0 0
  %1287 = vmatpush1.bf16.msra.mxu0 %v945
  %1288 = vmatprep.subr.bf16.mxu0 0
  %1289 = vmatpush1.bf16.msra.mxu0 %v946
  %1290 = vmatprep.subr.bf16.mxu0 0
  %1291 = vmatpush1.bf16.msra.mxu0 %v947
  %1292 = vmatprep.subr.bf16.mxu0 0
  %1293 = vmatpush1.bf16.msra.mxu0 %v948
  %1294 = vmatprep.subr.bf16.mxu0 0
  %1295 = vmatpush1.bf16.msra.mxu0 %v949
  %1296 = vmatprep.subr.bf16.mxu0 0
  %1297 = vmatpush1.bf16.msra.mxu0 %v950
  %1298 = vmatprep.subr.bf16.mxu0 0
  %1299 = vmatpush1.bf16.msra.mxu0 %v951
  %1300 = vmatprep.mubr.bf16.mxu0 %v581
  %1301 = vmatmul.mubr.bf16.gmra.mrb[0].mxu0 %v580
  %v1302 = vpop.f32.mrb[0].mxu0
  %v1303 = vadd.f32 %v1094, %v1302
  %v1304 = vpop.f32.mrb[0].mxu0
  %v1305 = vpop.f32.mrb[0].mxu0
  %v1306 = vadd.f32 %v1097, %v1305
  %v1307 = vpop.f32.mrb[0].mxu0
  %1308 = vmatprep.mubr.bf16.mxu0 %v586
  %1309 = vmatmul.mubr.bf16.gmra.mrb[0].mxu0 %v585
  %v1310 = vpop.f32.mrb[0].mxu0
  %v1311 = vadd.f32 %v1102, %v1310
  %v1312 = vpop.f32.mrb[0].mxu0
  %v1313 = vpop.f32.mrb[0].mxu0
  %v1314 = vadd.f32 %v1105, %v1313
  %v1315 = vpop.f32.mrb[0].mxu0
  %1316 = vmatprep.mubr.bf16.mxu0 %v591
  %1317 = vmatmul.mubr.bf16.gmra.mrb[0].mxu0 %v590
  %v1318 = vpop.f32.mrb[0].mxu0
  %v1319 = vadd.f32 %v1110, %v1318
  %v1320 = vpop.f32.mrb[0].mxu0
  %v1321 = vpop.f32.mrb[0].mxu0
  %v1322 = vadd.f32 %v1113, %v1321
  %v1323 = vpop.f32.mrb[0].mxu0
  %1324 = vmatprep.mubr.bf16.mxu0 %v596
  %1325 = vmatmul.mubr.bf16.gmra.mrb[0].mxu0 %v595
  %v1326 = vpop.f32.mrb[0].mxu0
  %v1327 = vadd.f32 %v1118, %v1326
  %v1328 = vpop.f32.mrb[0].mxu0
  %v1329 = vpop.f32.mrb[0].mxu0
  %v1330 = vadd.f32 %v1121, %v1329
  %v1331 = vpop.f32.mrb[0].mxu0
  %1332 = vmatprep.mubr.bf16.mxu0 %v601
  %1333 = vmatmul.mubr.bf16.gmra.mrb[0].mxu0 %v600
  %v1334 = vpop.f32.mrb[0].mxu0
  %v1335 = vadd.f32 %v1126, %v1334
  %v1336 = vpop.f32.mrb[0].mxu0
  %v1337 = vpop.f32.mrb[0].mxu0
  %v1338 = vadd.f32 %v1129, %v1337
  %v1339 = vpop.f32.mrb[0].mxu0
  %1340 = vmatprep.mubr.bf16.mxu0 %v606
  %1341 = vmatmul.mubr.bf16.gmra.mrb[0].mxu0 %v605
  %v1342 = vpop.f32.mrb[0].mxu0
  %v1343 = vadd.f32 %v1134, %v1342
  %v1344 = vpop.f32.mrb[0].mxu0
  %v1345 = vpop.f32.mrb[0].mxu0
  %v1346 = vadd.f32 %v1137, %v1345
  %v1347 = vpop.f32.mrb[0].mxu0
  %1348 = vmatprep.mubr.bf16.mxu0 %v611
  %1349 = vmatmul.mubr.bf16.gmra.mrb[0].mxu0 %v610
  %v1350 = vpop.f32.mrb[0].mxu0
  %v1351 = vadd.f32 %v1142, %v1350
  %v1352 = vpop.f32.mrb[0].mxu0
  %v1353 = vpop.f32.mrb[0].mxu0
  %v1354 = vadd.f32 %v1145, %v1353
  %v1355 = vpop.f32.mrb[0].mxu0
  %1356 = vmatprep.mubr.bf16.mxu0 %v616
  %1357 = vmatmul.mubr.bf16.gmra.mrb[0].mxu0 %v615
  %v1358 = vpop.f32.mrb[0].mxu0
  %v1359 = vadd.f32 %v1150, %v1358
  %v1360 = vpop.f32.mrb[0].mxu0
  %v1361 = vpop.f32.mrb[0].mxu0
  %v1362 = vadd.f32 %v1153, %v1361
  %v1363 = vpop.f32.mrb[0].mxu0
  %1364 = vmatprep.mubr.bf16.mxu0 %v621
  %1365 = vmatmul.mubr.bf16.gmra.mrb[0].mxu0 %v620
  %v1366 = vpop.f32.mrb[0].mxu0
  %v1367 = vadd.f32 %v1158, %v1366
  %v1368 = vpop.f32.mrb[0].mxu0
  %v1369 = vpop.f32.mrb[0].mxu0
  %v1370 = vadd.f32 %v1161, %v1369
  %v1371 = vpop.f32.mrb[0].mxu0
  %1372 = vmatprep.mubr.bf16.mxu0 %v626
  %1373 = vmatmul.mubr.bf16.gmra.mrb[0].mxu0 %v625
  %v1374 = vpop.f32.mrb[0].mxu0
  %v1375 = vadd.f32 %v1166, %v1374
  %v1376 = vpop.f32.mrb[0].mxu0
  %v1377 = vpop.f32.mrb[0].mxu0
  %v1378 = vadd.f32 %v1169, %v1377
  %v1379 = vpop.f32.mrb[0].mxu0
  %1380 = vmatprep.mubr.bf16.mxu0 %v631
  %1381 = vmatmul.mubr.bf16.gmra.mrb[0].mxu0 %v630
  %v1382 = vpop.f32.mrb[0].mxu0
  %v1383 = vadd.f32 %v1174, %v1382
  %v1384 = vpop.f32.mrb[0].mxu0
  %v1385 = vpop.f32.mrb[0].mxu0
  %v1386 = vadd.f32 %v1177, %v1385
  %v1387 = vpop.f32.mrb[0].mxu0
  %1388 = vmatprep.mubr.bf16.mxu0 %v636
  %1389 = vmatmul.mubr.bf16.gmra.mrb[0].mxu0 %v635
  %v1390 = vpop.f32.mrb[0].mxu0
  %v1391 = vadd.f32 %v1182, %v1390
  %v1392 = vpop.f32.mrb[0].mxu0
  %v1393 = vpop.f32.mrb[0].mxu0
  %v1394 = vadd.f32 %v1185, %v1393
  %v1395 = vpop.f32.mrb[0].mxu0
  %1396 = vmatprep.mubr.bf16.mxu0 %v641
  %1397 = vmatmul.mubr.bf16.gmra.mrb[0].mxu0 %v640
  %v1398 = vpop.f32.mrb[0].mxu0
  %v1399 = vadd.f32 %v1190, %v1398
  %v1400 = vpop.f32.mrb[0].mxu0
  %v1401 = vpop.f32.mrb[0].mxu0
  %v1402 = vadd.f32 %v1193, %v1401
  %v1403 = vpop.f32.mrb[0].mxu0
  %1404 = vmatprep.mubr.bf16.mxu0 %v646
  %1405 = vmatmul.mubr.bf16.gmra.mrb[0].mxu0 %v645
  %v1406 = vpop.f32.mrb[0].mxu0
  %v1407 = vadd.f32 %v1198, %v1406
  %v1408 = vpop.f32.mrb[0].mxu0
  %v1409 = vpop.f32.mrb[0].mxu0
  %v1410 = vadd.f32 %v1201, %v1409
  %v1411 = vpop.f32.mrb[0].mxu0
  %1412 = vmatprep.mubr.bf16.mxu0 %v651
  %1413 = vmatmul.mubr.bf16.gmra.mrb[0].mxu0 %v650
  %v1414 = vpop.f32.mrb[0].mxu0
  %v1415 = vadd.f32 %v1206, %v1414
  %v1416 = vpop.f32.mrb[0].mxu0
  %v1417 = vpop.f32.mrb[0].mxu0
  %v1418 = vadd.f32 %v1209, %v1417
  %v1419 = vpop.f32.mrb[0].mxu0
  %1420 = vmatprep.mubr.bf16.mxu0 %v656
  %1421 = vmatmul.mubr.bf16.gmra.mrb[0].mxu0 %v655
  %v1422 = vpop.f32.mrb[0].mxu0
  %v1423 = vadd.f32 %v1214, %v1422
  %v1424 = vpop.f32.mrb[0].mxu0
  %v1425 = vpop.f32.mrb[0].mxu0
  %v1426 = vadd.f32 %v1217, %v1425
  %v1427 = vpop.f32.mrb[0].mxu0
  %1428 = vmatprep.mubr.bf16.mxu0 %v661
  %1429 = vmatmul.mubr.bf16.gmra.mrb[0].mxu0 %v660
  %v1430 = vpop.f32.mrb[0].mxu0
  %v1431 = vadd.f32 %v1222, %v1430
  %v1432 = vpop.f32.mrb[0].mxu0
  %v1433 = vpop.f32.mrb[0].mxu0
  %v1434 = vadd.f32 %v1225, %v1433
  %v1435 = vpop.f32.mrb[0].mxu0
  %1436 = vmatprep.mubr.bf16.mxu0 %v666
  %1437 = vmatmul.mubr.bf16.gmra.mrb[0].mxu0 %v665
  %v1438 = vpop.f32.mrb[0].mxu0
  %v1439 = vadd.f32 %v1230, %v1438
  %v1440 = vpop.f32.mrb[0].mxu0
  %v1441 = vpop.f32.mrb[0].mxu0
  %v1442 = vadd.f32 %v1233, %v1441
  %v1443 = vpop.f32.mrb[0].mxu0
  %1444 = vmatprep.mubr.bf16.mxu0 %v671
  %1445 = vmatmul.mubr.bf16.gmra.mrb[0].mxu0 %v670
  %v1446 = vpop.f32.mrb[0].mxu0
  %v1447 = vadd.f32 %v1238, %v1446
  %v1448 = vpop.f32.mrb[0].mxu0
  %v1449 = vpop.f32.mrb[0].mxu0
  %v1450 = vadd.f32 %v1241, %v1449
  %v1451 = vpop.f32.mrb[0].mxu0
  %1452 = vmatprep.mubr.bf16.mxu0 %v676
  %1453 = vmatmul.mubr.bf16.gmra.mrb[0].mxu0 %v675
  %v1454 = vpop.f32.mrb[0].mxu0
  %v1455 = vadd.f32 %v1246, %v1454
  %v1456 = vpop.f32.mrb[0].mxu0
  %v1457 = vpop.f32.mrb[0].mxu0
  %v1458 = vadd.f32 %v1249, %v1457
  %v1459 = vpop.f32.mrb[0].mxu0
  %1460 = vmatprep.mubr.bf16.mxu0 %v681
  %1461 = vmatmul.mubr.bf16.gmra.mrb[0].mxu0 %v680
  %v1462 = vpop.f32.mrb[0].mxu0
  %v1463 = vadd.f32 %v1254, %v1462
  %v1464 = vpop.f32.mrb[0].mxu0
  %v1465 = vpop.f32.mrb[0].mxu0
  %v1466 = vadd.f32 %v1257, %v1465
  %v1467 = vpop.f32.mrb[0].mxu0
  %1468 = vmatprep.mubr.bf16.mxu0 %v686
  %1469 = vmatmul.mubr.bf16.gmra.mrb[0].mxu0 %v685
  %v1470 = vpop.f32.mrb[0].mxu0
  %v1471 = vadd.f32 %v1262, %v1470
  %v1472 = vpop.f32.mrb[0].mxu0
  %v1473 = vpop.f32.mrb[0].mxu0
  %v1474 = vadd.f32 %v1265, %v1473
  %v1475 = vpop.f32.mrb[0].mxu0
  %1476 = vdwg.mxu0
  %1477 = vmatprep.subr.bf16.mxu0 0
  %1478 = vmatpush1.bf16.msra.mxu0 %v952
  %1479 = vmatprep.subr.bf16.mxu0 0
  %1480 = vmatpush1.bf16.msra.mxu0 %v953
  %1481 = vmatprep.subr.bf16.mxu0 0
  %1482 = vmatpush1.bf16.msra.mxu0 %v954
  %1483 = vmatprep.subr.bf16.mxu0 0
  %1484 = vmatpush1.bf16.msra.mxu0 %v955
  %1485 = vmatprep.subr.bf16.mxu0 0
  %1486 = vmatpush1.bf16.msra.mxu0 0
  %1487 = vmatprep.subr.bf16.mxu0 0
  %1488 = vmatpush1.bf16.msra.mxu0 0
  %1489 = vmatprep.subr.bf16.mxu0 0
  %1490 = vmatpush1.bf16.msra.mxu0 0
  %1491 = vmatprep.subr.bf16.mxu0 0
  %1492 = vmatpush1.bf16.msra.mxu0 0
  %1493 = vmatprep.subr.bf16.mxu0 0
  %1494 = vmatpush1.bf16.msra.mxu0 0
  %1495 = vmatprep.subr.bf16.mxu0 0
  %1496 = vmatpush1.bf16.msra.mxu0 0
  %1497 = vmatprep.subr.bf16.mxu0 0
  %1498 = vmatpush1.bf16.msra.mxu0 0
  %1499 = vmatprep.subr.bf16.mxu0 0
  %1500 = vmatpush1.bf16.msra.mxu0 0
  %1501 = vmatprep.subr.bf16.mxu0 0
  %1502 = vmatpush1.bf16.msra.mxu0 0
  %1503 = vmatprep.subr.bf16.mxu0 0
  %1504 = vmatpush1.bf16.msra.mxu0 0
  %1505 = vmatprep.subr.bf16.mxu0 0
  %1506 = vmatpush1.bf16.msra.mxu0 0
  %1507 = vmatprep.subr.bf16.mxu0 0
  %1508 = vmatpush1.bf16.msra.mxu0 0
  %1509 = vmatprep.mubr.bf16.mxu0 0
  %1510 = vmatmul.mubr.bf16.gmra.mrb[0].mxu0 %v994
  %v1511 = vpop.f32.mrb[0].mxu0
  %v1512 = vadd.f32 %v1303, %v1511
  %v1513 = vpop.f32.mrb[0].mxu0
  %v1514 = vpop.f32.mrb[0].mxu0
  %v1515 = vadd.f32 %v1306, %v1514
  %v1516 = vpop.f32.mrb[0].mxu0
  %1517 = vmatprep.mubr.bf16.mxu0 0
  %1518 = vmatmul.mubr.bf16.gmra.mrb[0].mxu0 %v997
  %v1519 = vpop.f32.mrb[0].mxu0
  %v1520 = vadd.f32 %v1311, %v1519
  %v1521 = vpop.f32.mrb[0].mxu0
  %v1522 = vpop.f32.mrb[0].mxu0
  %v1523 = vadd.f32 %v1314, %v1522
  %v1524 = vpop.f32.mrb[0].mxu0
  %1525 = vmatprep.mubr.bf16.mxu0 0
  %1526 = vmatmul.mubr.bf16.gmra.mrb[0].mxu0 %v1000
  %v1527 = vpop.f32.mrb[0].mxu0
  %v1528 = vadd.f32 %v1319, %v1527
  %v1529 = vpop.f32.mrb[0].mxu0
  %v1530 = vpop.f32.mrb[0].mxu0
  %v1531 = vadd.f32 %v1322, %v1530
  %v1532 = vpop.f32.mrb[0].mxu0
  %1533 = vmatprep.mubr.bf16.mxu0 0
  %1534 = vmatmul.mubr.bf16.gmra.mrb[0].mxu0 %v1003
  %v1535 = vpop.f32.mrb[0].mxu0
  %v1536 = vadd.f32 %v1327, %v1535
  %v1537 = vpop.f32.mrb[0].mxu0
  %v1538 = vpop.f32.mrb[0].mxu0
  %v1539 = vadd.f32 %v1330, %v1538
  %v1540 = vpop.f32.mrb[0].mxu0
  %1541 = vmatprep.mubr.bf16.mxu0 0
  %1542 = vmatmul.mubr.bf16.gmra.mrb[0].mxu0 %v1006
  %v1543 = vpop.f32.mrb[0].mxu0
  %v1544 = vadd.f32 %v1335, %v1543
  %v1545 = vpop.f32.mrb[0].mxu0
  %v1546 = vpop.f32.mrb[0].mxu0
  %v1547 = vadd.f32 %v1338, %v1546
  %v1548 = vpop.f32.mrb[0].mxu0
  %1549 = vmatprep.mubr.bf16.mxu0 0
  %1550 = vmatmul.mubr.bf16.gmra.mrb[0].mxu0 %v1009
  %v1551 = vpop.f32.mrb[0].mxu0
  %v1552 = vadd.f32 %v1343, %v1551
  %v1553 = vpop.f32.mrb[0].mxu0
  %v1554 = vpop.f32.mrb[0].mxu0
  %v1555 = vadd.f32 %v1346, %v1554
  %v1556 = vpop.f32.mrb[0].mxu0
  %1557 = vmatprep.mubr.bf16.mxu0 0
  %1558 = vmatmul.mubr.bf16.gmra.mrb[0].mxu0 %v1012
  %v1559 = vpop.f32.mrb[0].mxu0
  %v1560 = vadd.f32 %v1351, %v1559
  %v1561 = vpop.f32.mrb[0].mxu0
  %v1562 = vpop.f32.mrb[0].mxu0
  %v1563 = vadd.f32 %v1354, %v1562
  %v1564 = vpop.f32.mrb[0].mxu0
  %1565 = vmatprep.mubr.bf16.mxu0 0
  %1566 = vmatmul.mubr.bf16.gmra.mrb[0].mxu0 %v1015
  %v1567 = vpop.f32.mrb[0].mxu0
  %v1568 = vadd.f32 %v1359, %v1567
  %v1569 = vpop.f32.mrb[0].mxu0
  %v1570 = vpop.f32.mrb[0].mxu0
  %v1571 = vadd.f32 %v1362, %v1570
  %v1572 = vpop.f32.mrb[0].mxu0
  %1573 = vmatprep.mubr.bf16.mxu0 0
  %1574 = vmatmul.mubr.bf16.gmra.mrb[0].mxu0 %v1018
  %v1575 = vpop.f32.mrb[0].mxu0
  %v1576 = vadd.f32 %v1367, %v1575
  %v1577 = vpop.f32.mrb[0].mxu0
  %v1578 = vpop.f32.mrb[0].mxu0
  %v1579 = vadd.f32 %v1370, %v1578
  %v1580 = vpop.f32.mrb[0].mxu0
  %1581 = vmatprep.mubr.bf16.mxu0 0
  %1582 = vmatmul.mubr.bf16.gmra.mrb[0].mxu0 %v1021
  %v1583 = vpop.f32.mrb[0].mxu0
  %v1584 = vadd.f32 %v1375, %v1583
  %v1585 = vpop.f32.mrb[0].mxu0
  %v1586 = vpop.f32.mrb[0].mxu0
  %v1587 = vadd.f32 %v1378, %v1586
  %v1588 = vpop.f32.mrb[0].mxu0
  %1589 = vmatprep.mubr.bf16.mxu0 0
  %1590 = vmatmul.mubr.bf16.gmra.mrb[0].mxu0 %v1024
  %v1591 = vpop.f32.mrb[0].mxu0
  %v1592 = vadd.f32 %v1383, %v1591
  %v1593 = vpop.f32.mrb[0].mxu0
  %v1594 = vpop.f32.mrb[0].mxu0
  %v1595 = vadd.f32 %v1386, %v1594
  %v1596 = vpop.f32.mrb[0].mxu0
  %1597 = vmatprep.mubr.bf16.mxu0 0
  %1598 = vmatmul.mubr.bf16.gmra.mrb[0].mxu0 %v1027
  %v1599 = vpop.f32.mrb[0].mxu0
  %v1600 = vadd.f32 %v1391, %v1599
  %v1601 = vpop.f32.mrb[0].mxu0
  %v1602 = vpop.f32.mrb[0].mxu0
  %v1603 = vadd.f32 %v1394, %v1602
  %v1604 = vpop.f32.mrb[0].mxu0
  %1605 = vmatprep.mubr.bf16.mxu0 0
  %1606 = vmatmul.mubr.bf16.gmra.mrb[0].mxu0 %v1030
  %v1607 = vpop.f32.mrb[0].mxu0
  %v1608 = vadd.f32 %v1399, %v1607
  %v1609 = vpop.f32.mrb[0].mxu0
  %v1610 = vpop.f32.mrb[0].mxu0
  %v1611 = vadd.f32 %v1402, %v1610
  %v1612 = vpop.f32.mrb[0].mxu0
  %1613 = vmatprep.mubr.bf16.mxu0 0
  %1614 = vmatmul.mubr.bf16.gmra.mrb[0].mxu0 %v1033
  %v1615 = vpop.f32.mrb[0].mxu0
  %v1616 = vadd.f32 %v1407, %v1615
  %v1617 = vpop.f32.mrb[0].mxu0
  %v1618 = vpop.f32.mrb[0].mxu0
  %v1619 = vadd.f32 %v1410, %v1618
  %v1620 = vpop.f32.mrb[0].mxu0
  %1621 = vmatprep.mubr.bf16.mxu0 0
  %1622 = vmatmul.mubr.bf16.gmra.mrb[0].mxu0 %v1036
  %v1623 = vpop.f32.mrb[0].mxu0
  %v1624 = vadd.f32 %v1415, %v1623
  %v1625 = vpop.f32.mrb[0].mxu0
  %v1626 = vpop.f32.mrb[0].mxu0
  %v1627 = vadd.f32 %v1418, %v1626
  %v1628 = vpop.f32.mrb[0].mxu0
  %1629 = vmatprep.mubr.bf16.mxu0 0
  %1630 = vmatmul.mubr.bf16.gmra.mrb[0].mxu0 %v1039
  %v1631 = vpop.f32.mrb[0].mxu0
  %v1632 = vadd.f32 %v1423, %v1631
  %v1633 = vpop.f32.mrb[0].mxu0
  %v1634 = vpop.f32.mrb[0].mxu0
  %v1635 = vadd.f32 %v1426, %v1634
  %v1636 = vpop.f32.mrb[0].mxu0
  %1637 = vmatprep.mubr.bf16.mxu0 0
  %1638 = vmatmul.mubr.bf16.gmra.mrb[0].mxu0 %v1042
  %v1639 = vpop.f32.mrb[0].mxu0
  %v1640 = vadd.f32 %v1431, %v1639
  %v1641 = vpop.f32.mrb[0].mxu0
  %v1642 = vpop.f32.mrb[0].mxu0
  %v1643 = vadd.f32 %v1434, %v1642
  %v1644 = vpop.f32.mrb[0].mxu0
  %1645 = vmatprep.mubr.bf16.mxu0 0
  %1646 = vmatmul.mubr.bf16.gmra.mrb[0].mxu0 %v1045
  %v1647 = vpop.f32.mrb[0].mxu0
  %v1648 = vadd.f32 %v1439, %v1647
  %v1649 = vpop.f32.mrb[0].mxu0
  %v1650 = vpop.f32.mrb[0].mxu0
  %v1651 = vadd.f32 %v1442, %v1650
  %v1652 = vpop.f32.mrb[0].mxu0
  %1653 = vmatprep.mubr.bf16.mxu0 0
  %1654 = vmatmul.mubr.bf16.gmra.mrb[0].mxu0 %v1048
  %v1655 = vpop.f32.mrb[0].mxu0
  %v1656 = vadd.f32 %v1447, %v1655
  %v1657 = vpop.f32.mrb[0].mxu0
  %v1658 = vpop.f32.mrb[0].mxu0
  %v1659 = vadd.f32 %v1450, %v1658
  %v1660 = vpop.f32.mrb[0].mxu0
  %1661 = vmatprep.mubr.bf16.mxu0 0
  %1662 = vmatmul.mubr.bf16.gmra.mrb[0].mxu0 %v1051
  %v1663 = vpop.f32.mrb[0].mxu0
  %v1664 = vadd.f32 %v1455, %v1663
  %v1665 = vpop.f32.mrb[0].mxu0
  %v1666 = vpop.f32.mrb[0].mxu0
  %v1667 = vadd.f32 %v1458, %v1666
  %v1668 = vpop.f32.mrb[0].mxu0
  %1669 = vmatprep.mubr.bf16.mxu0 0
  %1670 = vmatmul.mubr.bf16.gmra.mrb[0].mxu0 %v1054
  %v1671 = vpop.f32.mrb[0].mxu0
  %v1672 = vadd.f32 %v1463, %v1671
  %v1673 = vpop.f32.mrb[0].mxu0
  %v1674 = vpop.f32.mrb[0].mxu0
  %v1675 = vadd.f32 %v1466, %v1674
  %v1676 = vpop.f32.mrb[0].mxu0
  %1677 = vmatprep.mubr.bf16.mxu0 0
  %1678 = vmatmul.mubr.bf16.gmra.mrb[0].mxu0 %v1057
  %v1679 = vpop.f32.mrb[0].mxu0
  %v1680 = vadd.f32 %v1471, %v1679
  %v1681 = vpop.f32.mrb[0].mxu0
  %v1682 = vpop.f32.mrb[0].mxu0
  %v1683 = vadd.f32 %v1474, %v1682
  %v1684 = vpop.f32.mrb[0].mxu0
  %1685 = vdwg.mxu0
  %vm1686 = vcmp.gt.f32.partialorder %v1512, 0.0
  %vm1687 = vcmp.gt.f32.partialorder %v1515, 0.0
  %vm1688 = vcmp.gt.f32.partialorder %v1520, 0.0
  %vm1689 = vcmp.gt.f32.partialorder %v1523, 0.0
  %vm1690 = vcmp.gt.f32.partialorder %v1528, 0.0
  %vm1691 = vcmp.gt.f32.partialorder %v1531, 0.0
  %vm1692 = vcmp.gt.f32.partialorder %v1536, 0.0
  %vm1693 = vcmp.gt.f32.partialorder %v1539, 0.0
  %vm1694 = vcmp.gt.f32.partialorder %v1544, 0.0
  %vm1695 = vcmp.gt.f32.partialorder %v1547, 0.0
  %vm1696 = vcmp.gt.f32.partialorder %v1552, 0.0
  %vm1697 = vcmp.gt.f32.partialorder %v1555, 0.0
  %vm1698 = vcmp.gt.f32.partialorder %v1560, 0.0
  %vm1699 = vcmp.gt.f32.partialorder %v1563, 0.0
  %vm1700 = vcmp.gt.f32.partialorder %v1568, 0.0
  %vm1701 = vcmp.gt.f32.partialorder %v1571, 0.0
  %vm1702 = vcmp.gt.f32.partialorder %v1576, 0.0
  %vm1703 = vcmp.gt.f32.partialorder %v1579, 0.0
  %vm1704 = vcmp.gt.f32.partialorder %v1584, 0.0
  %vm1705 = vcmp.gt.f32.partialorder %v1587, 0.0
  %vm1706 = vcmp.gt.f32.partialorder %v1592, 0.0
  %vm1707 = vcmp.gt.f32.partialorder %v1595, 0.0
  %vm1708 = vcmp.gt.f32.partialorder %v1600, 0.0
  %vm1709 = vcmp.gt.f32.partialorder %v1603, 0.0
  %vm1710 = vcmp.gt.f32.partialorder %v1608, 0.0
  %vm1711 = vcmp.gt.f32.partialorder %v1611, 0.0
  %vm1712 = vcmp.gt.f32.partialorder %v1616, 0.0
  %vm1713 = vcmp.gt.f32.partialorder %v1619, 0.0
  %vm1714 = vcmp.gt.f32.partialorder %v1624, 0.0
  %vm1715 = vcmp.gt.f32.partialorder %v1627, 0.0
  %vm1716 = vcmp.gt.f32.partialorder %v1632, 0.0
  %vm1717 = vcmp.gt.f32.partialorder %v1635, 0.0
  %vm1718 = vcmp.gt.f32.partialorder %v1640, 0.0
  %vm1719 = vcmp.gt.f32.partialorder %v1643, 0.0
  %vm1720 = vcmp.gt.f32.partialorder %v1648, 0.0
  %vm1721 = vcmp.gt.f32.partialorder %v1651, 0.0
  %vm1722 = vcmp.gt.f32.partialorder %v1656, 0.0
  %vm1723 = vcmp.gt.f32.partialorder %v1659, 0.0
  %vm1724 = vcmp.gt.f32.partialorder %v1664, 0.0
  %vm1725 = vcmp.gt.f32.partialorder %v1667, 0.0
  %vm1726 = vcmp.gt.f32.partialorder %v1672, 0.0
  %vm1727 = vcmp.gt.f32.partialorder %v1675, 0.0
  %vm1728 = vcmp.gt.f32.partialorder %v1680, 0.0
  %vm1729 = vcmp.gt.f32.partialorder %v1683, 0.0
  %v1730 = vmul.f32 %v1512, 0.01
  %v1731 = vmul.f32 %v1515, 0.01
  %v1732 = vmul.f32 %v1520, 0.01
  %v1733 = vmul.f32 %v1523, 0.01
  %v1734 = vmul.f32 %v1528, 0.01
  %v1735 = vmul.f32 %v1531, 0.01
  %v1736 = vmul.f32 %v1536, 0.01
  %v1737 = vmul.f32 %v1539, 0.01
  %v1738 = vmul.f32 %v1544, 0.01
  %v1739 = vmul.f32 %v1547, 0.01
  %v1740 = vmul.f32 %v1552, 0.01
  %v1741 = vmul.f32 %v1555, 0.01
  %v1742 = vmul.f32 %v1560, 0.01
  %v1743 = vmul.f32 %v1563, 0.01
  %v1744 = vmul.f32 %v1568, 0.01
  %v1745 = vmul.f32 %v1571, 0.01
  %v1746 = vmul.f32 %v1576, 0.01
  %v1747 = vmul.f32 %v1579, 0.01
  %v1748 = vmul.f32 %v1584, 0.01
  %v1749 = vmul.f32 %v1587, 0.01
  %v1750 = vmul.f32 %v1592, 0.01
  %v1751 = vmul.f32 %v1595, 0.01
  %v1752 = vmul.f32 %v1600, 0.01
  %v1753 = vmul.f32 %v1603, 0.01
  %v1754 = vmul.f32 %v1608, 0.01
  %v1755 = vmul.f32 %v1611, 0.01
  %v1756 = vmul.f32 %v1616, 0.01
  %v1757 = vmul.f32 %v1619, 0.01
  %v1758 = vmul.f32 %v1624, 0.01
  %v1759 = vmul.f32 %v1627, 0.01
  %v1760 = vmul.f32 %v1632, 0.01
  %v1761 = vmul.f32 %v1635, 0.01
  %v1762 = vmul.f32 %v1640, 0.01
  %v1763 = vmul.f32 %v1643, 0.01
  %v1764 = vmul.f32 %v1648, 0.01
  %v1765 = vmul.f32 %v1651, 0.01
  %v1766 = vmul.f32 %v1656, 0.01
  %v1767 = vmul.f32 %v1659, 0.01
  %v1768 = vmul.f32 %v1664, 0.01
  %v1769 = vmul.f32 %v1667, 0.01
  %v1770 = vmul.f32 %v1672, 0.01
  %v1771 = vmul.f32 %v1675, 0.01
  %v1772 = vmul.f32 %v1680, 0.01
  %v1773 = vmul.f32 %v1683, 0.01
  %v1774 = vsel %vm1686, %v1512, %v1730
  %v1775 = vsel %vm1687, %v1515, %v1731
  %v1776 = vsel %vm1688, %v1520, %v1732
  %v1777 = vsel %vm1689, %v1523, %v1733
  %v1778 = vsel %vm1690, %v1528, %v1734
  %v1779 = vsel %vm1691, %v1531, %v1735
  %v1780 = vsel %vm1692, %v1536, %v1736
  %v1781 = vsel %vm1693, %v1539, %v1737
  %v1782 = vsel %vm1694, %v1544, %v1738
  %v1783 = vsel %vm1695, %v1547, %v1739
  %v1784 = vsel %vm1696, %v1552, %v1740
  %v1785 = vsel %vm1697, %v1555, %v1741
  %v1786 = vsel %vm1698, %v1560, %v1742
  %v1787 = vsel %vm1699, %v1563, %v1743
  %v1788 = vsel %vm1700, %v1568, %v1744
  %v1789 = vsel %vm1701, %v1571, %v1745
  %v1790 = vsel %vm1702, %v1576, %v1746
  %v1791 = vsel %vm1703, %v1579, %v1747
  %v1792 = vsel %vm1704, %v1584, %v1748
  %v1793 = vsel %vm1705, %v1587, %v1749
  %v1794 = vsel %vm1706, %v1592, %v1750
  %v1795 = vsel %vm1707, %v1595, %v1751
  %v1796 = vsel %vm1708, %v1600, %v1752
  %v1797 = vsel %vm1709, %v1603, %v1753
  %v1798 = vsel %vm1710, %v1608, %v1754
  %v1799 = vsel %vm1711, %v1611, %v1755
  %v1800 = vsel %vm1712, %v1616, %v1756
  %v1801 = vsel %vm1713, %v1619, %v1757
  %v1802 = vsel %vm1714, %v1624, %v1758
  %v1803 = vsel %vm1715, %v1627, %v1759
  %v1804 = vsel %vm1716, %v1632, %v1760
  %v1805 = vsel %vm1717, %v1635, %v1761
  %v1806 = vsel %vm1718, %v1640, %v1762
  %v1807 = vsel %vm1719, %v1643, %v1763
  %v1808 = vsel %vm1720, %v1648, %v1764
  %v1809 = vsel %vm1721, %v1651, %v1765
  %v1810 = vsel %vm1722, %v1656, %v1766
  %v1811 = vsel %vm1723, %v1659, %v1767
  %v1812 = vsel %vm1724, %v1664, %v1768
  %v1813 = vsel %vm1725, %v1667, %v1769
  %v1814 = vsel %vm1726, %v1672, %v1770
  %v1815 = vsel %vm1727, %v1675, %v1771
  %v1816 = vsel %vm1728, %v1680, %v1772
  %v1817 = vsel %vm1729, %v1683, %v1773
  %1818 = vst.msk [vmem:[%s3] sm:$0xff] %vm992, %v1774
  %1819 = vst.msk [vmem:[%s3 + $0x8] sm:$0xff] %vm992, %v1775
  %1820 = vst.msk [vmem:[%s3 + $0x10] sm:$0xff] %vm992, %v1776
  %1821 = vst.msk [vmem:[%s3 + $0x18] sm:$0xff] %vm992, %v1777
  %1822 = vst.msk [vmem:[%s3 + $0x20] sm:$0xff] %vm992, %v1778
  %1823 = vst.msk [vmem:[%s3 + $0x28] sm:$0xff] %vm992, %v1779
  %1824 = vst.msk [vmem:[%s3 + $0x30] sm:$0xff] %vm992, %v1780
  %1825 = vst.msk [vmem:[%s3 + $0x38] sm:$0xff] %vm992, %v1781
  %1826 = vst.msk [vmem:[%s3 + $0x40] sm:$0xff] %vm992, %v1782
  %1827 = vst.msk [vmem:[%s3 + $0x48] sm:$0xff] %vm992, %v1783
  %1828 = vst.msk [vmem:[%s3 + $0x50] sm:$0xff] %vm992, %v1784
  %1829 = vst.msk [vmem:[%s3 + $0x58] sm:$0xff] %vm992, %v1785
  %1830 = vst.msk [vmem:[%s3 + $0x60] sm:$0xff] %vm992, %v1786
  %1831 = vst.msk [vmem:[%s3 + $0x68] sm:$0xff] %vm992, %v1787
  %1832 = vst.msk [vmem:[%s3 + $0x70] sm:$0xff] %vm992, %v1788
  %1833 = vst.msk [vmem:[%s3 + $0x78] sm:$0xff] %vm992, %v1789
  %1834 = vst.msk [vmem:[%s3 + $0x80] sm:$0xff] %vm992, %v1790
  %1835 = vst.msk [vmem:[%s3 + $0x88] sm:$0xff] %vm992, %v1791
  %1836 = vst.msk [vmem:[%s3 + $0x90] sm:$0xff] %vm992, %v1792
  %1837 = vst.msk [vmem:[%s3 + $0x98] sm:$0xff] %vm992, %v1793
  %1838 = vst.msk [vmem:[%s3 + $0xa0] sm:$0xff] %vm992, %v1794
  %1839 = vst.msk [vmem:[%s3 + $0xa8] sm:$0xff] %vm992, %v1795
  %1840 = vst.msk [vmem:[%s3 + $0xb0] sm:$0xff] %vm992, %v1796
  %1841 = vst.msk [vmem:[%s3 + $0xb8] sm:$0xff] %vm992, %v1797
  %1842 = vst.msk [vmem:[%s3 + $0xc0] sm:$0xff] %vm992, %v1798
  %1843 = vst.msk [vmem:[%s3 + $0xc8] sm:$0xff] %vm992, %v1799
  %1844 = vst.msk [vmem:[%s3 + $0xd0] sm:$0xff] %vm992, %v1800
  %1845 = vst.msk [vmem:[%s3 + $0xd8] sm:$0xff] %vm992, %v1801
  %1846 = vst.msk [vmem:[%s3 + $0xe0] sm:$0xff] %vm992, %v1802
  %1847 = vst.msk [vmem:[%s3 + $0xe8] sm:$0xff] %vm992, %v1803
  %1848 = vst.msk [vmem:[%s3 + $0xf0] sm:$0xff] %vm992, %v1804
  %1849 = vst.msk [vmem:[%s3 + $0xf8] sm:$0xff] %vm992, %v1805
  %1850 = vst.msk [vmem:[%s3 + $0x100] sm:$0xff] %vm992, %v1806
  %1851 = vst.msk [vmem:[%s3 + $0x108] sm:$0xff] %vm992, %v1807
  %1852 = vst.msk [vmem:[%s3 + $0x110] sm:$0xff] %vm992, %v1808
  %1853 = vst.msk [vmem:[%s3 + $0x118] sm:$0xff] %vm992, %v1809
  %1854 = vst.msk [vmem:[%s3 + $0x120] sm:$0xff] %vm992, %v1810
  %1855 = vst.msk [vmem:[%s3 + $0x128] sm:$0xff] %vm992, %v1811
  %1856 = vst.msk [vmem:[%s3 + $0x130] sm:$0xff] %vm992, %v1812
  %1857 = vst.msk [vmem:[%s3 + $0x138] sm:$0xff] %vm992, %v1813
  %1858 = vst.msk [vmem:[%s3 + $0x140] sm:$0xff] %vm992, %v1814
  %1859 = vst.msk [vmem:[%s3 + $0x148] sm:$0xff] %vm992, %v1815
  %1860 = vst.msk [vmem:[%s3 + $0x150] sm:$0xff] %vm992, %v1816
  %1861 = vst.msk [vmem:[%s3 + $0x158] sm:$0xff] %vm992, %v1817
  // Predicated region
  $region14: #{vae_forward.15} parent=0 // pred_check
    _
  $region15: #{vae_forward.15} parent=0 // pred_check_branch
    %1863 = sbr.rel (0) target = $region17
  $region16: #{vae_forward.15} parent=0 // pred_region
    _
  $region17: #{vae_forward.15} parent=0 // pred_fallthru
    _
  // Predicated region
  $region18: #{vae_forward.15} parent=0 // pred_check
    _
  $region19: #{vae_forward.15} parent=0 // pred_check_branch
    %1865 = sbr.rel (0) target = $region21
  $region20: #{vae_forward.15} parent=0 // pred_region
    _
  $region21: #{vae_forward.15} parent=0 // pred_fallthru
    _

// kernel: vae_forward.16
$region0: #{vae_forward.16}
  #allocation0 [shape = 'u32[]', space=smem, size = 0x4, offset = 0x4, fixed_abs, tag = 'smem constant byte address 0x4 - core index']
  #allocation1 [shape = 'u32[144,128]{1,0:T(1,128)}', space=vmem, size = 0x12000, scoped, tag = 'internal scratch']
  %s0 = inlined_call_operand.vmem [shape: bf16[1488,576], index: 0, kind: input, shape index: {}]
  %s1 = inlined_call_operand.vmem [shape: bf16[576,32], index: 1, kind: input, shape index: {}]
  %s2 = inlined_call_operand.vmem [shape: f32[1,32], index: 2, kind: input, shape index: {}]
  %s3 = inlined_call_operand.vmem [shape: f32[1488,32], index: 3, kind: output, shape index: {}]
  %s4 = sld [smem:[#allocation0]]
  $region45: #{vae_forward.16} parent=0
    _
  %s6 = ssub.s32 1, %s4
  %s7 = scalar_select 0, %s6, %s4
  loop: start=0, step=1, limit=5
  $region2: #{vae_forward.16} parent=0 // loop_pre_header
    _
  $region3: #{vae_forward.16} parent=0 // loop_header
    %s9 = sphi 0, %s13
    %p10 = scmp.ge.s32.totalorder %s9, 5
    %s19 = sphi 0, %s21
    %s22 = sphi 0, %s19
    %s23 = sphi 0, %s22
    %s39 = sphi 0, %s23
    %s43 = sphi 0, %s43
    %s45 = sphi 0, %s43
    %s46 = sphi 0, %s45
    %s60 = sphi 0, %s46
    %s64 = sphi 0, %s64
    %s66 = sphi 0, %s64
    %s67 = sphi 0, %s66
    %s81 = sphi 0, %s67
    %s87 = sphi 0, %s89
    %s90 = sphi 0, %s87
    %s91 = sphi 0, %s90
    %s107 = sphi 0, %s91
  $region4: #{vae_forward.16} parent=0 // loop_header_branch
    %12 = sbr.rel (%p10) target = $region8
  $region5: #{vae_forward.16} parent=0 // loop_body
    %s14 = ssub.s32 %s9, 1
    %s15 = ssub.s32 %s9, 2
    %s16 = sadd.s32 %s9, 1
    %s17 = ssub.s32 %s9, %s16
    %p18 = scmp.eq.s32.totalorder %s17, 0
    %s20 = sadd.s32 %s19, 1
    %s21 = scalar_select %p18, %s19, %s20
    %p24 = pneg %p18
    %p25 = scmp.eq.s32.totalorder %s9, 2
    %p26 = por %p24, %p25
    %p27 = scmp.ne.s32.totalorder %s19, %s22
    %p28 = scmp.eq.s32.totalorder %s9, 0
    %p29 = por %p27, %p28
    %p30 = scmp.ne.s32.totalorder %s19, %s22
    %p31 = scmp.eq.s32.totalorder %s14, 2
    %p32 = por %p30, %p31
    %p33 = scmp.ne.s32.totalorder %s22, %s23
    %p34 = scmp.eq.s32.totalorder %s14, 0
    %p35 = por %p33, %p34
    %p36 = scmp.ne.s32.totalorder %s22, %s23
    %p37 = scmp.eq.s32.totalorder %s15, 2
    %p38 = por %p36, %p37
    %p40 = scmp.ne.s32.totalorder %s23, %s39
    %p41 = scmp.eq.s32.totalorder %s15, 0
    %p42 = por %p40, %p41
    %s44 = sadd.s32 %s43, 1
    %p47 = scmp.eq.s32.totalorder %s9, 2
    %p48 = scmp.ne.s32.totalorder %s43, %s45
    %p49 = scmp.eq.s32.totalorder %s9, 0
    %p50 = por %p48, %p49
    %p51 = scmp.ne.s32.totalorder %s43, %s45
    %p52 = scmp.eq.s32.totalorder %s14, 2
    %p53 = por %p51, %p52
    %p54 = scmp.ne.s32.totalorder %s45, %s46
    %p55 = scmp.eq.s32.totalorder %s14, 0
    %p56 = por %p54, %p55
    %p57 = scmp.ne.s32.totalorder %s45, %s46
    %p58 = scmp.eq.s32.totalorder %s15, 2
    %p59 = por %p57, %p58
    %p61 = scmp.ne.s32.totalorder %s46, %s60
    %p62 = scmp.eq.s32.totalorder %s15, 0
    %p63 = por %p61, %p62
    %s65 = sadd.s32 %s64, 1
    %p68 = scmp.eq.s32.totalorder %s9, 2
    %p69 = scmp.ne.s32.totalorder %s64, %s66
    %p70 = scmp.eq.s32.totalorder %s9, 0
    %p71 = por %p69, %p70
    %p72 = scmp.ne.s32.totalorder %s64, %s66
    %p73 = scmp.eq.s32.totalorder %s14, 2
    %p74 = por %p72, %p73
    %p75 = scmp.ne.s32.totalorder %s66, %s67
    %p76 = scmp.eq.s32.totalorder %s14, 0
    %p77 = por %p75, %p76
    %p78 = scmp.ne.s32.totalorder %s66, %s67
    %p79 = scmp.eq.s32.totalorder %s15, 2
    %p80 = por %p78, %p79
    %p82 = scmp.ne.s32.totalorder %s67, %s81
    %p83 = scmp.eq.s32.totalorder %s15, 0
    %p84 = por %p82, %p83
    %s85 = ssub.s32 %s9, %s16
    %p86 = scmp.eq.s32.totalorder %s85, 0
    %s88 = sadd.s32 %s87, 1
    %s89 = scalar_select %p86, %s87, %s88
    %p92 = pneg %p86
    %p93 = scmp.eq.s32.totalorder %s9, 2
    %p94 = por %p92, %p93
    %p95 = scmp.ne.s32.totalorder %s87, %s90
    %p96 = scmp.eq.s32.totalorder %s9, 0
    %p97 = por %p95, %p96
    %p98 = scmp.ne.s32.totalorder %s87, %s90
    %p99 = scmp.eq.s32.totalorder %s14, 2
    %p100 = por %p98, %p99
    %p101 = scmp.ne.s32.totalorder %s90, %s91
    %p102 = scmp.eq.s32.totalorder %s14, 0
    %p103 = por %p101, %p102
    %p104 = scmp.ne.s32.totalorder %s90, %s91
    %p105 = scmp.eq.s32.totalorder %s15, 2
    %p106 = por %p104, %p105
    %p108 = scmp.ne.s32.totalorder %s91, %s107
    %p109 = scmp.eq.s32.totalorder %s15, 0
    %p110 = por %p108, %p109
    %p111 = scmp.le.s32.totalorder 1, %s9
    %p112 = scmp.lt.s32.totalorder %s9, 4
    %p113 = pnand %p111, %p112
    %p114 = pneg %p113
    // Predicated region
    $region9: #{vae_forward.16} parent=5 // pred_check
      _
    $region10: #{vae_forward.16} parent=5 // pred_check_branch
      %116 = sbr.rel (%p113) target = $region12
    $region11: #{vae_forward.16} parent=5 // pred_region
      %s117 = ssub.s32 %s9, 1
      // Predicated region
      $region13: #{vae_forward.16} parent=11 // pred_check
        %p118 = pneg %p56
      $region14: #{vae_forward.16} parent=11 // pred_check_branch
        %120 = sbr.rel (%p118) target = $region16
      $region15: #{vae_forward.16} parent=11 // pred_region
        _
      $region16: #{vae_forward.16} parent=11 // pred_fallthru
        _
      // Predicated region
      $region17: #{vae_forward.16} parent=11 // pred_check
        %p121 = pneg %p77
      $region18: #{vae_forward.16} parent=11 // pred_check_branch
        %123 = sbr.rel (%p121) target = $region20
      $region19: #{vae_forward.16} parent=11 // pred_region
        _
      $region20: #{vae_forward.16} parent=11 // pred_fallthru
        _
    $region12: #{vae_forward.16} parent=5 // pred_fallthru
      _
    %p124 = scmp.lt.s32.totalorder %s9, 3
    // Predicated region
    $region21: #{vae_forward.16} parent=5 // pred_check
      %p125 = pneg %p124
    $region22: #{vae_forward.16} parent=5 // pred_check_branch
      %127 = sbr.rel (%p125) target = $region24
    $region23: #{vae_forward.16} parent=5 // pred_region
      // Predicated region
      $region25: #{vae_forward.16} parent=23 // pred_check
        %p128 = pneg %p29
      $region26: #{vae_forward.16} parent=23 // pred_check_branch
        %130 = sbr.rel (%p128) target = $region28
      $region27: #{vae_forward.16} parent=23 // pred_region
        %s131 = smul.u32 62, %s9
        %p132 = scmp.lt.s32.totalorder %s131, 185
        %s133 = scalar_select %p132, %s131, 185
        %s134 = smul.addr %s133, 5
        %s135 = smul.addr %s134, 4
        %s136 = scalar_lea.vmem %s0, %s135
        %s137 = smul.u32 62, %s9
      $region28: #{vae_forward.16} parent=23 // pred_fallthru
        _
    $region24: #{vae_forward.16} parent=5 // pred_fallthru
      _
    %p138 = scmp.le.s32.totalorder 1, %s9
    %p139 = scmp.lt.s32.totalorder %s9, 4
    %p140 = pnand %p138, %p139
    %p141 = pneg %p140
    // Predicated region
    $region29: #{vae_forward.16} parent=5 // pred_check
      _
    $region30: #{vae_forward.16} parent=5 // pred_check_branch
      %143 = sbr.rel (%p140) target = $region32
    $region31: #{vae_forward.16} parent=5 // pred_region
      %s144 = ssub.s32 %s9, 1
      %s145 = smul.u32 62, %s14
      %p146 = scmp.lt.s32.totalorder %s145, 185
      %s147 = scalar_select %p146, %s145, 185
      %s148 = smul.addr %s147, 5
      %s149 = smul.addr %s148, 4
      %s150 = scalar_lea.vmem %s0, %s149
      %p151 = pneg %p35
      %p152 = pneg %p32
      %p153 = pneg %p56
      %p154 = pneg %p53
      %p155 = pneg %p77
      %p156 = pneg %p74
      %p157 = pneg %p103
      %p158 = pneg %p100
      %s159 = smul.u32 62, %s14
      %p160 = scmp.lt.s32.totalorder %s159, 185
      %s161 = scalar_select %p160, %s159, 185
      %s162 = smul.addr %s161, 8
      %s163 = scalar_lea.vmem %s3, %s162
      %s164 = smul.u32 62, %s14
      %p165 = scmp.lt.s32.totalorder %s164, 185
      %s166 = scalar_select %p165, %s164, 185
      %s167 = smul.addr %s166, 5
      %s168 = smul.addr %s167, 4
      %s169 = scalar_lea.vmem %s0, %s168
      %s170 = smul.u32 62, %s14
      %s171 = smul.u32 62, %s14
      %p172 = scmp.lt.s32.totalorder %s171, 185
      %s173 = scalar_select %p172, %s171, 185
      %s174 = smul.addr %s173, 8
      %s175 = scalar_lea.vmem %s3, %s174
      %s176 = smul.u32 62, %s14
      %v178 = vld [vmem:[%s169] sm:$0xff]
      %v179 = vld [vmem:[%s169 + $0x8] sm:$0xff]
      %v180 = vld [vmem:[%s169 + $0x10] sm:$0xf]
      %v181 = vld [vmem:[%s169 + $0x14] sm:$0xff]
      %v182 = vld [vmem:[%s169 + $0x1c] sm:$0xff]
      %v183 = vld [vmem:[%s169 + $0x24] sm:$0xf]
      %v184 = vld [vmem:[%s169 + $0x28] sm:$0xff]
      %v185 = vld [vmem:[%s169 + $0x30] sm:$0xff]
      %v186 = vld [vmem:[%s169 + $0x38] sm:$0xf]
      %v187 = vld [vmem:[%s169 + $0x3c] sm:$0xff]
      %v188 = vld [vmem:[%s169 + $0x44] sm:$0xff]
      %v189 = vld [vmem:[%s169 + $0x4c] sm:$0xf]
      %v190 = vld [vmem:[%s169 + $0x50] sm:$0xff]
      %v191 = vld [vmem:[%s169 + $0x58] sm:$0xff]
      %v192 = vld [vmem:[%s169 + $0x60] sm:$0xf]
      %v193 = vld [vmem:[%s169 + $0x64] sm:$0xff]
      %v194 = vld [vmem:[%s169 + $0x6c] sm:$0xff]
      %v195 = vld [vmem:[%s169 + $0x74] sm:$0xf]
      %v196 = vld [vmem:[%s169 + $0x78] sm:$0xff]
      %v197 = vld [vmem:[%s169 + $0x80] sm:$0xff]
      %v198 = vld [vmem:[%s169 + $0x88] sm:$0xf]
      %v199 = vld [vmem:[%s169 + $0x8c] sm:$0xff]
      %v200 = vld [vmem:[%s169 + $0x94] sm:$0xff]
      %v201 = vld [vmem:[%s169 + $0x9c] sm:$0xf]
      %v202 = vld [vmem:[%s169 + $0xa0] sm:$0xff]
      %v203 = vld [vmem:[%s169 + $0xa8] sm:$0xff]
      %v204 = vld [vmem:[%s169 + $0xb0] sm:$0xf]
      %v205 = vld [vmem:[%s169 + $0xb4] sm:$0xff]
      %v206 = vld [vmem:[%s169 + $0xbc] sm:$0xff]
      %v207 = vld [vmem:[%s169 + $0xc4] sm:$0xf]
      %v208 = vld [vmem:[%s169 + $0xc8] sm:$0xff]
      %v209 = vld [vmem:[%s169 + $0xd0] sm:$0xff]
      %v210 = vld [vmem:[%s169 + $0xd8] sm:$0xf]
      %v211 = vld [vmem:[%s169 + $0xdc] sm:$0xff]
      %v212 = vld [vmem:[%s169 + $0xe4] sm:$0xff]
      %v213 = vld [vmem:[%s169 + $0xec] sm:$0xf]
      %v214 = vld [vmem:[%s169 + $0xf0] sm:$0xff]
      %v215 = vld [vmem:[%s169 + $0xf8] sm:$0xff]
      %v216 = vld [vmem:[%s169 + $0x100] sm:$0xf]
      %v217 = vld [vmem:[%s169 + $0x104] sm:$0xff]
      %v218 = vld [vmem:[%s169 + $0x10c] sm:$0xff]
      %v219 = vld [vmem:[%s169 + $0x114] sm:$0xf]
      %v220 = vld [vmem:[%s169 + $0x118] sm:$0xff]
      %v221 = vld [vmem:[%s169 + $0x120] sm:$0xff]
      %v222 = vld [vmem:[%s169 + $0x128] sm:$0xf]
      %v223 = vld [vmem:[%s169 + $0x12c] sm:$0xff]
      %v224 = vld [vmem:[%s169 + $0x134] sm:$0xff]
      %v225 = vld [vmem:[%s169 + $0x13c] sm:$0xf]
      %v226 = vld [vmem:[%s169 + $0x140] sm:$0xff]
      %v227 = vld [vmem:[%s169 + $0x148] sm:$0xff]
      %v228 = vld [vmem:[%s169 + $0x150] sm:$0xf]
      %v229 = vld [vmem:[%s169 + $0x154] sm:$0xff]
      %v230 = vld [vmem:[%s169 + $0x15c] sm:$0xff]
      %v231 = vld [vmem:[%s169 + $0x164] sm:$0xf]
      %v232 = vld [vmem:[%s169 + $0x168] sm:$0xff]
      %v233 = vld [vmem:[%s169 + $0x170] sm:$0xff]
      %v234 = vld [vmem:[%s169 + $0x178] sm:$0xf]
      %v235 = vld [vmem:[%s169 + $0x17c] sm:$0xff]
      %v236 = vld [vmem:[%s169 + $0x184] sm:$0xff]
      %v237 = vld [vmem:[%s169 + $0x18c] sm:$0xf]
      %v238 = vld [vmem:[%s169 + $0x190] sm:$0xff]
      %v239 = vld [vmem:[%s169 + $0x198] sm:$0xff]
      %v240 = vld [vmem:[%s169 + $0x1a0] sm:$0xf]
      %v241 = vld [vmem:[%s169 + $0x1a4] sm:$0xff]
      %v242 = vld [vmem:[%s169 + $0x1ac] sm:$0xff]
      %v243 = vld [vmem:[%s169 + $0x1b4] sm:$0xf]
      %v244 = vld [vmem:[%s169 + $0x1b8] sm:$0xff]
      %v245 = vld [vmem:[%s169 + $0x1c0] sm:$0xff]
      %v246 = vld [vmem:[%s169 + $0x1c8] sm:$0xf]
      %v247 = vld [vmem:[%s169 + $0x1cc] sm:$0xff]
      %v248 = vld [vmem:[%s169 + $0x1d4] sm:$0xff]
      %v249 = vld [vmem:[%s169 + $0x1dc] sm:$0xf]
      %v250 = vld [vmem:[%s169 + $0x1e0] sm:$0xff]
      %v251 = vld [vmem:[%s169 + $0x1e8] sm:$0xff]
      %v252 = vld [vmem:[%s169 + $0x1f0] sm:$0xf]
      %v253 = vld [vmem:[%s169 + $0x1f4] sm:$0xff]
      %v254 = vld [vmem:[%s169 + $0x1fc] sm:$0xff]
      %v255 = vld [vmem:[%s169 + $0x204] sm:$0xf]
      %v256 = vld [vmem:[%s169 + $0x208] sm:$0xff]
      %v257 = vld [vmem:[%s169 + $0x210] sm:$0xff]
      %v258 = vld [vmem:[%s169 + $0x218] sm:$0xf]
      %v259 = vld [vmem:[%s169 + $0x21c] sm:$0xff]
      %v260 = vld [vmem:[%s169 + $0x224] sm:$0xff]
      %v261 = vld [vmem:[%s169 + $0x22c] sm:$0xf]
      %v262 = vld [vmem:[%s169 + $0x230] sm:$0xff]
      %v263 = vld [vmem:[%s169 + $0x238] sm:$0xff]
      %v264 = vld [vmem:[%s169 + $0x240] sm:$0xf]
      %v265 = vld [vmem:[%s169 + $0x244] sm:$0xff]
      %v266 = vld [vmem:[%s169 + $0x24c] sm:$0xff]
      %v267 = vld [vmem:[%s169 + $0x254] sm:$0xf]
      %v268 = vld [vmem:[%s169 + $0x258] sm:$0xff]
      %v269 = vld [vmem:[%s169 + $0x260] sm:$0xff]
      %v270 = vld [vmem:[%s169 + $0x268] sm:$0xf]
      %v271 = vld [vmem:[%s169 + $0x26c] sm:$0xff]
      %v272 = vld [vmem:[%s169 + $0x274] sm:$0xff]
      %v273 = vld [vmem:[%s169 + $0x27c] sm:$0xf]
      %v274 = vld [vmem:[%s169 + $0x280] sm:$0xff]
      %v275 = vld [vmem:[%s169 + $0x288] sm:$0xff]
      %v276 = vld [vmem:[%s169 + $0x290] sm:$0xf]
      %v277 = vld [vmem:[%s169 + $0x294] sm:$0xff]
      %v278 = vld [vmem:[%s169 + $0x29c] sm:$0xff]
      %v279 = vld [vmem:[%s169 + $0x2a4] sm:$0xf]
      %v280 = vld [vmem:[%s169 + $0x2a8] sm:$0xff]
      %v281 = vld [vmem:[%s169 + $0x2b0] sm:$0xff]
      %v282 = vld [vmem:[%s169 + $0x2b8] sm:$0xf]
      %v283 = vld [vmem:[%s169 + $0x2bc] sm:$0xff]
      %v284 = vld [vmem:[%s169 + $0x2c4] sm:$0xff]
      %v285 = vld [vmem:[%s169 + $0x2cc] sm:$0xf]
      %v286 = vld [vmem:[%s169 + $0x2d0] sm:$0xff]
      %v287 = vld [vmem:[%s169 + $0x2d8] sm:$0xff]
      %v288 = vld [vmem:[%s169 + $0x2e0] sm:$0xf]
      %v289 = vld [vmem:[%s169 + $0x2e4] sm:$0xff]
      %v290 = vld [vmem:[%s169 + $0x2ec] sm:$0xff]
      %v291 = vld [vmem:[%s169 + $0x2f4] sm:$0xf]
      %v292 = vld [vmem:[%s169 + $0x2f8] sm:$0xff]
      %v293 = vld [vmem:[%s169 + $0x300] sm:$0xff]
      %v294 = vld [vmem:[%s169 + $0x308] sm:$0xf]
      %v295 = vld [vmem:[%s169 + $0x30c] sm:$0xff]
      %v296 = vld [vmem:[%s169 + $0x314] sm:$0xff]
      %v297 = vld [vmem:[%s169 + $0x31c] sm:$0xf]
      %v298 = vld [vmem:[%s169 + $0x320] sm:$0xff]
      %v299 = vld [vmem:[%s169 + $0x328] sm:$0xff]
      %v300 = vld [vmem:[%s169 + $0x330] sm:$0xf]
      %v301 = vld [vmem:[%s169 + $0x334] sm:$0xff]
      %v302 = vld [vmem:[%s169 + $0x33c] sm:$0xff]
      %v303 = vld [vmem:[%s169 + $0x344] sm:$0xf]
      %v304 = vld [vmem:[%s169 + $0x348] sm:$0xff]
      %v305 = vld [vmem:[%s169 + $0x350] sm:$0xff]
      %v306 = vld [vmem:[%s169 + $0x358] sm:$0xf]
      %v307 = vld [vmem:[%s169 + $0x35c] sm:$0xff]
      %v308 = vld [vmem:[%s169 + $0x364] sm:$0xff]
      %v309 = vld [vmem:[%s169 + $0x36c] sm:$0xf]
      %v310 = vld [vmem:[%s169 + $0x370] sm:$0xff]
      %v311 = vld [vmem:[%s169 + $0x378] sm:$0xff]
      %v312 = vld [vmem:[%s169 + $0x380] sm:$0xf]
      %v313 = vld [vmem:[%s169 + $0x384] sm:$0xff]
      %v314 = vld [vmem:[%s169 + $0x38c] sm:$0xff]
      %v315 = vld [vmem:[%s169 + $0x394] sm:$0xf]
      %v316 = vld [vmem:[%s169 + $0x398] sm:$0xff]
      %v317 = vld [vmem:[%s169 + $0x3a0] sm:$0xff]
      %v318 = vld [vmem:[%s169 + $0x3a8] sm:$0xf]
      %v319 = vld [vmem:[%s169 + $0x3ac] sm:$0xff]
      %v320 = vld [vmem:[%s169 + $0x3b4] sm:$0xff]
      %v321 = vld [vmem:[%s169 + $0x3bc] sm:$0xf]
      %v322 = vld [vmem:[%s169 + $0x3c0] sm:$0xff]
      %v323 = vld [vmem:[%s169 + $0x3c8] sm:$0xff]
      %v324 = vld [vmem:[%s169 + $0x3d0] sm:$0xf]
      %v325 = vld [vmem:[%s169 + $0x3d4] sm:$0xff]
      %v326 = vld [vmem:[%s169 + $0x3dc] sm:$0xff]
      %v327 = vld [vmem:[%s169 + $0x3e4] sm:$0xf]
      %v328 = vld [vmem:[%s169 + $0x3e8] sm:$0xff]
      %v329 = vld [vmem:[%s169 + $0x3f0] sm:$0xff]
      %v330 = vld [vmem:[%s169 + $0x3f8] sm:$0xf]
      %v331 = vld [vmem:[%s169 + $0x3fc] sm:$0xff]
      %v332 = vld [vmem:[%s169 + $0x404] sm:$0xff]
      %v333 = vld [vmem:[%s169 + $0x40c] sm:$0xf]
      %v334 = vld [vmem:[%s169 + $0x410] sm:$0xff]
      %v335 = vld [vmem:[%s169 + $0x418] sm:$0xff]
      %v336 = vld [vmem:[%s169 + $0x420] sm:$0xf]
      %v337 = vld [vmem:[%s169 + $0x424] sm:$0xff]
      %v338 = vld [vmem:[%s169 + $0x42c] sm:$0xff]
      %v339 = vld [vmem:[%s169 + $0x434] sm:$0xf]
      %v340 = vld [vmem:[%s169 + $0x438] sm:$0xff]
      %v341 = vld [vmem:[%s169 + $0x440] sm:$0xff]
      %v342 = vld [vmem:[%s169 + $0x448] sm:$0xf]
      %v343 = vld [vmem:[%s169 + $0x44c] sm:$0xff]
      %v344 = vld [vmem:[%s169 + $0x454] sm:$0xff]
      %v345 = vld [vmem:[%s169 + $0x45c] sm:$0xf]
      %v346 = vld [vmem:[%s169 + $0x460] sm:$0xff]
      %v347 = vld [vmem:[%s169 + $0x468] sm:$0xff]
      %v348 = vld [vmem:[%s169 + $0x470] sm:$0xf]
      %v349 = vld [vmem:[%s169 + $0x474] sm:$0xff]
      %v350 = vld [vmem:[%s169 + $0x47c] sm:$0xff]
      %v351 = vld [vmem:[%s169 + $0x484] sm:$0xf]
      %v352 = vld [vmem:[%s169 + $0x488] sm:$0xff]
      %v353 = vld [vmem:[%s169 + $0x490] sm:$0xff]
      %v354 = vld [vmem:[%s169 + $0x498] sm:$0xf]
      %v355 = vld [vmem:[%s169 + $0x49c] sm:$0xff]
      %v356 = vld [vmem:[%s169 + $0x4a4] sm:$0xff]
      %v357 = vld [vmem:[%s169 + $0x4ac] sm:$0xf]
      %v358 = vld [vmem:[%s169 + $0x4b0] sm:$0xff]
      %v359 = vld [vmem:[%s169 + $0x4b8] sm:$0xff]
      %v360 = vld [vmem:[%s169 + $0x4c0] sm:$0xf]
      %v361 = vld [vmem:[%s169 + $0x4c4] sm:$0xff]
      %v362 = vld [vmem:[%s169 + $0x4cc] sm:$0xff]
      %v363 = vld [vmem:[%s169 + $0x4d4] sm:$0xf]
      %v364 = vld [vmem:[%s1] sm:$0xf]
      %v365 = vld [vmem:[%s1 + $0x4] sm:$0xf]
      %v366 = vld [vmem:[%s1 + $0x8] sm:$0xf]
      %v367 = vld [vmem:[%s1 + $0xc] sm:$0xf]
      %v368 = vld [vmem:[%s1 + $0x10] sm:$0xf]
      %v369 = vld [vmem:[%s1 + $0x14] sm:$0xf]
      %v370 = vld [vmem:[%s1 + $0x18] sm:$0xf]
      %v371 = vld [vmem:[%s1 + $0x1c] sm:$0xf]
      %v372 = vld [vmem:[%s1 + $0x20] sm:$0xf]
      %v373 = vld [vmem:[%s1 + $0x24] sm:$0xf]
      %v374 = vld [vmem:[%s1 + $0x28] sm:$0xf]
      %v375 = vld [vmem:[%s1 + $0x2c] sm:$0xf]
      %v376 = vld [vmem:[%s1 + $0x30] sm:$0xf]
      %v377 = vld [vmem:[%s1 + $0x34] sm:$0xf]
      %v378 = vld [vmem:[%s1 + $0x38] sm:$0xf]
      %v379 = vld [vmem:[%s1 + $0x3c] sm:$0xf]
      %v380 = vld [vmem:[%s1 + $0x40] sm:$0xf]
      %v381 = vld [vmem:[%s1 + $0x44] sm:$0xf]
      %v382 = vld [vmem:[%s1 + $0x48] sm:$0xf]
      %v383 = vld [vmem:[%s1 + $0x4c] sm:$0xf]
      %v384 = vld [vmem:[%s1 + $0x50] sm:$0xf]
      %v385 = vld [vmem:[%s1 + $0x54] sm:$0xf]
      %v386 = vld [vmem:[%s1 + $0x58] sm:$0xf]
      %v387 = vld [vmem:[%s1 + $0x5c] sm:$0xf]
      %v388 = vld [vmem:[%s1 + $0x60] sm:$0xf]
      %v389 = vld [vmem:[%s1 + $0x64] sm:$0xf]
      %v390 = vld [vmem:[%s1 + $0x68] sm:$0xf]
      %v391 = vld [vmem:[%s1 + $0x6c] sm:$0xf]
      %v392 = vld [vmem:[%s1 + $0x70] sm:$0xf]
      %v393 = vld [vmem:[%s1 + $0x74] sm:$0xf]
      %v394 = vld [vmem:[%s1 + $0x78] sm:$0xf]
      %v395 = vld [vmem:[%s1 + $0x7c] sm:$0xf]
      %v396 = vld [vmem:[%s1 + $0x80] sm:$0xf]
      %v397 = vld [vmem:[%s1 + $0x84] sm:$0xf]
      %v398 = vld [vmem:[%s1 + $0x88] sm:$0xf]
      %v399 = vld [vmem:[%s1 + $0x8c] sm:$0xf]
      %v400 = vld [vmem:[%s1 + $0x90] sm:$0xf]
      %v401 = vld [vmem:[%s1 + $0x94] sm:$0xf]
      %v402 = vld [vmem:[%s1 + $0x98] sm:$0xf]
      %v403 = vld [vmem:[%s1 + $0x9c] sm:$0xf]
      %v404 = vld [vmem:[%s1 + $0xa0] sm:$0xf]
      %v405 = vld [vmem:[%s1 + $0xa4] sm:$0xf]
      %v406 = vld [vmem:[%s1 + $0xa8] sm:$0xf]
      %v407 = vld [vmem:[%s1 + $0xac] sm:$0xf]
      %v408 = vld [vmem:[%s1 + $0xb0] sm:$0xf]
      %v409 = vld [vmem:[%s1 + $0xb4] sm:$0xf]
      %v410 = vld [vmem:[%s1 + $0xb8] sm:$0xf]
      %v411 = vld [vmem:[%s1 + $0xbc] sm:$0xf]
      %v412 = vld [vmem:[%s1 + $0xc0] sm:$0xf]
      %v413 = vld [vmem:[%s1 + $0xc4] sm:$0xf]
      %v414 = vld [vmem:[%s1 + $0xc8] sm:$0xf]
      %v415 = vld [vmem:[%s1 + $0xcc] sm:$0xf]
      %v416 = vld [vmem:[%s1 + $0xd0] sm:$0xf]
      %v417 = vld [vmem:[%s1 + $0xd4] sm:$0xf]
      %v418 = vld [vmem:[%s1 + $0xd8] sm:$0xf]
      %v419 = vld [vmem:[%s1 + $0xdc] sm:$0xf]
      %v420 = vld [vmem:[%s1 + $0xe0] sm:$0xf]
      %v421 = vld [vmem:[%s1 + $0xe4] sm:$0xf]
      %v422 = vld [vmem:[%s1 + $0xe8] sm:$0xf]
      %v423 = vld [vmem:[%s1 + $0xec] sm:$0xf]
      %v424 = vld [vmem:[%s1 + $0xf0] sm:$0xf]
      %v425 = vld [vmem:[%s1 + $0xf4] sm:$0xf]
      %v426 = vld [vmem:[%s1 + $0xf8] sm:$0xf]
      %v427 = vld [vmem:[%s1 + $0xfc] sm:$0xf]
      %v428 = vld [vmem:[%s1 + $0x100] sm:$0xf]
      %v429 = vld [vmem:[%s1 + $0x104] sm:$0xf]
      %v430 = vld [vmem:[%s1 + $0x108] sm:$0xf]
      %v431 = vld [vmem:[%s1 + $0x10c] sm:$0xf]
      %v432 = vld [vmem:[%s1 + $0x110] sm:$0xf]
      %v433 = vld [vmem:[%s1 + $0x114] sm:$0xf]
      %v434 = vld [vmem:[%s1 + $0x118] sm:$0xf]
      %v435 = vld [vmem:[%s1 + $0x11c] sm:$0xf]
      %v436 = vld [vmem:[%s2] sm:$0x1]
      %v438 = vlaneseq
      %v439 = vshrl.u32 %v438, 7
      %v440 = vsub.s32 0, %v439
      %v441 = vrot.slane %v436, %v440
      %v629 = vunpack.c.l.b16 %v178
      %v630 = vunpack.c.h.b16 %v178
      %v631 = vunpack.c.l.b16 %v179
      %v632 = vunpack.c.h.b16 %v179
      %v633 = vunpack.c.l.b16 %v180
      %v634 = vunpack.c.l.b16 %v181
      %v635 = vunpack.c.h.b16 %v181
      %v636 = vunpack.c.l.b16 %v182
      %v637 = vunpack.c.h.b16 %v182
      %v638 = vunpack.c.l.b16 %v183
      %v639 = vunpack.c.l.b16 %v184
      %v640 = vunpack.c.h.b16 %v184
      %v641 = vunpack.c.l.b16 %v185
      %v642 = vunpack.c.h.b16 %v185
      %v643 = vunpack.c.l.b16 %v186
      %v644 = vunpack.c.l.b16 %v187
      %v645 = vunpack.c.h.b16 %v187
      %v646 = vunpack.c.l.b16 %v188
      %v647 = vunpack.c.h.b16 %v188
      %v648 = vunpack.c.l.b16 %v189
      %v649 = vunpack.c.l.b16 %v190
      %v650 = vunpack.c.h.b16 %v190
      %v651 = vunpack.c.l.b16 %v191
      %v652 = vunpack.c.h.b16 %v191
      %v653 = vunpack.c.l.b16 %v192
      %v654 = vunpack.c.l.b16 %v193
      %v655 = vunpack.c.h.b16 %v193
      %v656 = vunpack.c.l.b16 %v194
      %v657 = vunpack.c.h.b16 %v194
      %v658 = vunpack.c.l.b16 %v195
      %v659 = vunpack.c.l.b16 %v196
      %v660 = vunpack.c.h.b16 %v196
      %v661 = vunpack.c.l.b16 %v197
      %v662 = vunpack.c.h.b16 %v197
      %v663 = vunpack.c.l.b16 %v198
      %v664 = vunpack.c.l.b16 %v199
      %v665 = vunpack.c.h.b16 %v199
      %v666 = vunpack.c.l.b16 %v200
      %v667 = vunpack.c.h.b16 %v200
      %v668 = vunpack.c.l.b16 %v201
      %v669 = vunpack.c.l.b16 %v202
      %v670 = vunpack.c.h.b16 %v202
      %v671 = vunpack.c.l.b16 %v203
      %v672 = vunpack.c.h.b16 %v203
      %v673 = vunpack.c.l.b16 %v204
      %v674 = vunpack.c.l.b16 %v205
      %v675 = vunpack.c.h.b16 %v205
      %v676 = vunpack.c.l.b16 %v206
      %v677 = vunpack.c.h.b16 %v206
      %v678 = vunpack.c.l.b16 %v207
      %v679 = vunpack.c.l.b16 %v208
      %v680 = vunpack.c.h.b16 %v208
      %v681 = vunpack.c.l.b16 %v209
      %v682 = vunpack.c.h.b16 %v209
      %v683 = vunpack.c.l.b16 %v210
      %v684 = vunpack.c.l.b16 %v211
      %v685 = vunpack.c.h.b16 %v211
      %v686 = vunpack.c.l.b16 %v212
      %v687 = vunpack.c.h.b16 %v212
      %v688 = vunpack.c.l.b16 %v213
      %v689 = vunpack.c.l.b16 %v214
      %v690 = vunpack.c.h.b16 %v214
      %v691 = vunpack.c.l.b16 %v215
      %v692 = vunpack.c.h.b16 %v215
      %v693 = vunpack.c.l.b16 %v216
      %v694 = vunpack.c.l.b16 %v217
      %v695 = vunpack.c.h.b16 %v217
      %v696 = vunpack.c.l.b16 %v218
      %v697 = vunpack.c.h.b16 %v218
      %v698 = vunpack.c.l.b16 %v219
      %v699 = vunpack.c.l.b16 %v220
      %v700 = vunpack.c.h.b16 %v220
      %v701 = vunpack.c.l.b16 %v221
      %v702 = vunpack.c.h.b16 %v221
      %v703 = vunpack.c.l.b16 %v222
      %v704 = vunpack.c.l.b16 %v223
      %v705 = vunpack.c.h.b16 %v223
      %v706 = vunpack.c.l.b16 %v224
      %v707 = vunpack.c.h.b16 %v224
      %v708 = vunpack.c.l.b16 %v225
      %v709 = vunpack.c.l.b16 %v226
      %v710 = vunpack.c.h.b16 %v226
      %v711 = vunpack.c.l.b16 %v227
      %v712 = vunpack.c.h.b16 %v227
      %v713 = vunpack.c.l.b16 %v228
      %v714 = vunpack.c.l.b16 %v229
      %v715 = vunpack.c.h.b16 %v229
      %v716 = vunpack.c.l.b16 %v230
      %v717 = vunpack.c.h.b16 %v230
      %v718 = vunpack.c.l.b16 %v231
      %v719 = vunpack.c.l.b16 %v232
      %v720 = vunpack.c.h.b16 %v232
      %v721 = vunpack.c.l.b16 %v233
      %v722 = vunpack.c.h.b16 %v233
      %v723 = vunpack.c.l.b16 %v234
      %v724 = vunpack.c.l.b16 %v235
      %v725 = vunpack.c.h.b16 %v235
      %v726 = vunpack.c.l.b16 %v236
      %v727 = vunpack.c.h.b16 %v236
      %v728 = vunpack.c.l.b16 %v237
      %v729 = vunpack.c.l.b16 %v238
      %v730 = vunpack.c.h.b16 %v238
      %v731 = vunpack.c.l.b16 %v239
      %v732 = vunpack.c.h.b16 %v239
      %v733 = vunpack.c.l.b16 %v240
      %v734 = vunpack.c.l.b16 %v241
      %v735 = vunpack.c.h.b16 %v241
      %v736 = vunpack.c.l.b16 %v242
      %v737 = vunpack.c.h.b16 %v242
      %v738 = vunpack.c.l.b16 %v243
      %v739 = vunpack.c.l.b16 %v244
      %v740 = vunpack.c.h.b16 %v244
      %v741 = vunpack.c.l.b16 %v245
      %v742 = vunpack.c.h.b16 %v245
      %v743 = vunpack.c.l.b16 %v246
      %v744 = vunpack.c.l.b16 %v247
      %v745 = vunpack.c.h.b16 %v247
      %v746 = vunpack.c.l.b16 %v248
      %v747 = vunpack.c.h.b16 %v248
      %v748 = vunpack.c.l.b16 %v249
      %v749 = vunpack.c.l.b16 %v250
      %v750 = vunpack.c.h.b16 %v250
      %v751 = vunpack.c.l.b16 %v251
      %v752 = vunpack.c.h.b16 %v251
      %v753 = vunpack.c.l.b16 %v252
      %v754 = vunpack.c.l.b16 %v253
      %v755 = vunpack.c.h.b16 %v253
      %v756 = vunpack.c.l.b16 %v254
      %v757 = vunpack.c.h.b16 %v254
      %v758 = vunpack.c.l.b16 %v255
      %v759 = vunpack.c.l.b16 %v256
      %v760 = vunpack.c.h.b16 %v256
      %v761 = vunpack.c.l.b16 %v257
      %v762 = vunpack.c.h.b16 %v257
      %v763 = vunpack.c.l.b16 %v258
      %v764 = vunpack.c.l.b16 %v259
      %v765 = vunpack.c.h.b16 %v259
      %v766 = vunpack.c.l.b16 %v260
      %v767 = vunpack.c.h.b16 %v260
      %v768 = vunpack.c.l.b16 %v261
      %v769 = vunpack.c.l.b16 %v262
      %v770 = vunpack.c.h.b16 %v262
      %v771 = vunpack.c.l.b16 %v263
      %v772 = vunpack.c.h.b16 %v263
      %v773 = vunpack.c.l.b16 %v264
      %v774 = vunpack.c.l.b16 %v265
      %v775 = vunpack.c.h.b16 %v265
      %v776 = vunpack.c.l.b16 %v266
      %v777 = vunpack.c.h.b16 %v266
      %v778 = vunpack.c.l.b16 %v267
      %v779 = vunpack.c.l.b16 %v268
      %v780 = vunpack.c.h.b16 %v268
      %v781 = vunpack.c.l.b16 %v269
      %v782 = vunpack.c.h.b16 %v269
      %v783 = vunpack.c.l.b16 %v270
      %v784 = vunpack.c.l.b16 %v271
      %v785 = vunpack.c.h.b16 %v271
      %v786 = vunpack.c.l.b16 %v272
      %v787 = vunpack.c.h.b16 %v272
      %v788 = vunpack.c.l.b16 %v273
      %v789 = vunpack.c.l.b16 %v274
      %v790 = vunpack.c.h.b16 %v274
      %v791 = vunpack.c.l.b16 %v275
      %v792 = vunpack.c.h.b16 %v275
      %v793 = vunpack.c.l.b16 %v276
      %v794 = vunpack.c.l.b16 %v277
      %v795 = vunpack.c.h.b16 %v277
      %v796 = vunpack.c.l.b16 %v278
      %v797 = vunpack.c.h.b16 %v278
      %v798 = vunpack.c.l.b16 %v279
      %v799 = vunpack.c.l.b16 %v280
      %v800 = vunpack.c.h.b16 %v280
      %v801 = vunpack.c.l.b16 %v281
      %v802 = vunpack.c.h.b16 %v281
      %v803 = vunpack.c.l.b16 %v282
      %v804 = vunpack.c.l.b16 %v283
      %v805 = vunpack.c.h.b16 %v283
      %v806 = vunpack.c.l.b16 %v284
      %v807 = vunpack.c.h.b16 %v284
      %v808 = vunpack.c.l.b16 %v285
      %v809 = vunpack.c.l.b16 %v286
      %v810 = vunpack.c.h.b16 %v286
      %v811 = vunpack.c.l.b16 %v287
      %v812 = vunpack.c.h.b16 %v287
      %v813 = vunpack.c.l.b16 %v288
      %v814 = vunpack.c.l.b16 %v289
      %v815 = vunpack.c.h.b16 %v289
      %v816 = vunpack.c.l.b16 %v290
      %v817 = vunpack.c.h.b16 %v290
      %v818 = vunpack.c.l.b16 %v291
      %v819 = vunpack.c.l.b16 %v292
      %v820 = vunpack.c.h.b16 %v292
      %v821 = vunpack.c.l.b16 %v293
      %v822 = vunpack.c.h.b16 %v293
      %v823 = vunpack.c.l.b16 %v294
      %v824 = vunpack.c.l.b16 %v295
      %v825 = vunpack.c.h.b16 %v295
      %v826 = vunpack.c.l.b16 %v296
      %v827 = vunpack.c.h.b16 %v296
      %v828 = vunpack.c.l.b16 %v297
      %v829 = vunpack.c.l.b16 %v298
      %v830 = vunpack.c.h.b16 %v298
      %v831 = vunpack.c.l.b16 %v299
      %v832 = vunpack.c.h.b16 %v299
      %v833 = vunpack.c.l.b16 %v300
      %v834 = vunpack.c.l.b16 %v301
      %v835 = vunpack.c.h.b16 %v301
      %v836 = vunpack.c.l.b16 %v302
      %v837 = vunpack.c.h.b16 %v302
      %v838 = vunpack.c.l.b16 %v303
      %v839 = vunpack.c.l.b16 %v304
      %v840 = vunpack.c.h.b16 %v304
      %v841 = vunpack.c.l.b16 %v305
      %v842 = vunpack.c.h.b16 %v305
      %v843 = vunpack.c.l.b16 %v306
      %v844 = vunpack.c.l.b16 %v307
      %v845 = vunpack.c.h.b16 %v307
      %v846 = vunpack.c.l.b16 %v308
      %v847 = vunpack.c.h.b16 %v308
      %v848 = vunpack.c.l.b16 %v309
      %v849 = vunpack.c.l.b16 %v310
      %v850 = vunpack.c.h.b16 %v310
      %v851 = vunpack.c.l.b16 %v311
      %v852 = vunpack.c.h.b16 %v311
      %v853 = vunpack.c.l.b16 %v312
      %v854 = vunpack.c.l.b16 %v313
      %v855 = vunpack.c.h.b16 %v313
      %v856 = vunpack.c.l.b16 %v314
      %v857 = vunpack.c.h.b16 %v314
      %v858 = vunpack.c.l.b16 %v315
      %v859 = vunpack.c.l.b16 %v316
      %v860 = vunpack.c.h.b16 %v316
      %v861 = vunpack.c.l.b16 %v317
      %v862 = vunpack.c.h.b16 %v317
      %v863 = vunpack.c.l.b16 %v318
      %v864 = vunpack.c.l.b16 %v319
      %v865 = vunpack.c.h.b16 %v319
      %v866 = vunpack.c.l.b16 %v320
      %v867 = vunpack.c.h.b16 %v320
      %v868 = vunpack.c.l.b16 %v321
      %v869 = vunpack.c.l.b16 %v322
      %v870 = vunpack.c.h.b16 %v322
      %v871 = vunpack.c.l.b16 %v323
      %v872 = vunpack.c.h.b16 %v323
      %v873 = vunpack.c.l.b16 %v324
      %v874 = vunpack.c.l.b16 %v325
      %v875 = vunpack.c.h.b16 %v325
      %v876 = vunpack.c.l.b16 %v326
      %v877 = vunpack.c.h.b16 %v326
      %v878 = vunpack.c.l.b16 %v327
      %v879 = vunpack.c.l.b16 %v328
      %v880 = vunpack.c.h.b16 %v328
      %v881 = vunpack.c.l.b16 %v329
      %v882 = vunpack.c.h.b16 %v329
      %v883 = vunpack.c.l.b16 %v330
      %v884 = vunpack.c.l.b16 %v331
      %v885 = vunpack.c.h.b16 %v331
      %v886 = vunpack.c.l.b16 %v332
      %v887 = vunpack.c.h.b16 %v332
      %v888 = vunpack.c.l.b16 %v333
      %v889 = vunpack.c.l.b16 %v334
      %v890 = vunpack.c.h.b16 %v334
      %v891 = vunpack.c.l.b16 %v335
      %v892 = vunpack.c.h.b16 %v335
      %v893 = vunpack.c.l.b16 %v336
      %v894 = vunpack.c.l.b16 %v337
      %v895 = vunpack.c.h.b16 %v337
      %v896 = vunpack.c.l.b16 %v338
      %v897 = vunpack.c.h.b16 %v338
      %v898 = vunpack.c.l.b16 %v339
      %v899 = vunpack.c.l.b16 %v340
      %v900 = vunpack.c.h.b16 %v340
      %v901 = vunpack.c.l.b16 %v341
      %v902 = vunpack.c.h.b16 %v341
      %v903 = vunpack.c.l.b16 %v342
      %v904 = vunpack.c.l.b16 %v343
      %v905 = vunpack.c.h.b16 %v343
      %v906 = vunpack.c.l.b16 %v344
      %v907 = vunpack.c.h.b16 %v344
      %v908 = vunpack.c.l.b16 %v345
      %v909 = vunpack.c.l.b16 %v346
      %v910 = vunpack.c.h.b16 %v346
      %v911 = vunpack.c.l.b16 %v347
      %v912 = vunpack.c.h.b16 %v347
      %v913 = vunpack.c.l.b16 %v348
      %v914 = vunpack.c.l.b16 %v349
      %v915 = vunpack.c.h.b16 %v349
      %v916 = vunpack.c.l.b16 %v350
      %v917 = vunpack.c.h.b16 %v350
      %v918 = vunpack.c.l.b16 %v351
      %v919 = vunpack.c.l.b16 %v352
      %v920 = vunpack.c.h.b16 %v352
      %v921 = vunpack.c.l.b16 %v353
      %v922 = vunpack.c.h.b16 %v353
      %v923 = vunpack.c.l.b16 %v354
      %v924 = vunpack.c.l.b16 %v355
      %v925 = vunpack.c.h.b16 %v355
      %v926 = vunpack.c.l.b16 %v356
      %v927 = vunpack.c.h.b16 %v356
      %v928 = vunpack.c.l.b16 %v357
      %v929 = vunpack.c.l.b16 %v358
      %v930 = vunpack.c.h.b16 %v358
      %v931 = vunpack.c.l.b16 %v359
      %v932 = vunpack.c.h.b16 %v359
      %v933 = vunpack.c.l.b16 %v360
      %v934 = vunpack.c.l.b16 %v361
      %v935 = vunpack.c.h.b16 %v361
      %v936 = vunpack.c.l.b16 %v362
      %v937 = vunpack.c.h.b16 %v362
      %v938 = vunpack.c.l.b16 %v363
      %v939 = vpack.c.b16 %v634, %v629
      %v940 = vpack.c.b16 %v635, %v630
      %v941 = vpack.c.b16 %v636, %v631
      %v942 = vpack.c.b16 %v637, %v632
      %v943 = vpack.c.b16 %v638, %v633
      %v944 = vpack.c.b16 %v644, %v639
      %v945 = vpack.c.b16 %v645, %v640
      %v946 = vpack.c.b16 %v646, %v641
      %v947 = vpack.c.b16 %v647, %v642
      %v948 = vpack.c.b16 %v648, %v643
      %v949 = vpack.c.b16 %v654, %v649
      %v950 = vpack.c.b16 %v655, %v650
      %v951 = vpack.c.b16 %v656, %v651
      %v952 = vpack.c.b16 %v657, %v652
      %v953 = vpack.c.b16 %v658, %v653
      %v954 = vpack.c.b16 %v664, %v659
      %v955 = vpack.c.b16 %v665, %v660
      %v956 = vpack.c.b16 %v666, %v661
      %v957 = vpack.c.b16 %v667, %v662
      %v958 = vpack.c.b16 %v668, %v663
      %v959 = vpack.c.b16 %v674, %v669
      %v960 = vpack.c.b16 %v675, %v670
      %v961 = vpack.c.b16 %v676, %v671
      %v962 = vpack.c.b16 %v677, %v672
      %v963 = vpack.c.b16 %v678, %v673
      %v964 = vpack.c.b16 %v684, %v679
      %v965 = vpack.c.b16 %v685, %v680
      %v966 = vpack.c.b16 %v686, %v681
      %v967 = vpack.c.b16 %v687, %v682
      %v968 = vpack.c.b16 %v688, %v683
      %v969 = vpack.c.b16 %v694, %v689
      %v970 = vpack.c.b16 %v695, %v690
      %v971 = vpack.c.b16 %v696, %v691
      %v972 = vpack.c.b16 %v697, %v692
      %v973 = vpack.c.b16 %v698, %v693
      %v974 = vpack.c.b16 %v704, %v699
      %v975 = vpack.c.b16 %v705, %v700
      %v976 = vpack.c.b16 %v706, %v701
      %v977 = vpack.c.b16 %v707, %v702
      %v978 = vpack.c.b16 %v708, %v703
      %v979 = vpack.c.b16 %v714, %v709
      %v980 = vpack.c.b16 %v715, %v710
      %v981 = vpack.c.b16 %v716, %v711
      %v982 = vpack.c.b16 %v717, %v712
      %v983 = vpack.c.b16 %v718, %v713
      %v984 = vpack.c.b16 %v724, %v719
      %v985 = vpack.c.b16 %v725, %v720
      %v986 = vpack.c.b16 %v726, %v721
      %v987 = vpack.c.b16 %v727, %v722
      %v988 = vpack.c.b16 %v728, %v723
      %v989 = vpack.c.b16 %v734, %v729
      %v990 = vpack.c.b16 %v735, %v730
      %v991 = vpack.c.b16 %v736, %v731
      %v992 = vpack.c.b16 %v737, %v732
      %v993 = vpack.c.b16 %v738, %v733
      %v994 = vpack.c.b16 %v744, %v739
      %v995 = vpack.c.b16 %v745, %v740
      %v996 = vpack.c.b16 %v746, %v741
      %v997 = vpack.c.b16 %v747, %v742
      %v998 = vpack.c.b16 %v748, %v743
      %v999 = vpack.c.b16 %v754, %v749
      %v1000 = vpack.c.b16 %v755, %v750
      %v1001 = vpack.c.b16 %v756, %v751
      %v1002 = vpack.c.b16 %v757, %v752
      %v1003 = vpack.c.b16 %v758, %v753
      %v1004 = vpack.c.b16 %v764, %v759
      %v1005 = vpack.c.b16 %v765, %v760
      %v1006 = vpack.c.b16 %v766, %v761
      %v1007 = vpack.c.b16 %v767, %v762
      %v1008 = vpack.c.b16 %v768, %v763
      %v1009 = vpack.c.b16 %v774, %v769
      %v1010 = vpack.c.b16 %v775, %v770
      %v1011 = vpack.c.b16 %v776, %v771
      %v1012 = vpack.c.b16 %v777, %v772
      %v1013 = vpack.c.b16 %v778, %v773
      %v1014 = vpack.c.b16 %v784, %v779
      %v1015 = vpack.c.b16 %v785, %v780
      %v1016 = vpack.c.b16 %v786, %v781
      %v1017 = vpack.c.b16 %v787, %v782
      %v1018 = vpack.c.b16 %v788, %v783
      %v1019 = vpack.c.b16 %v794, %v789
      %v1020 = vpack.c.b16 %v795, %v790
      %v1021 = vpack.c.b16 %v796, %v791
      %v1022 = vpack.c.b16 %v797, %v792
      %v1023 = vpack.c.b16 %v798, %v793
      %v1024 = vpack.c.b16 %v804, %v799
      %v1025 = vpack.c.b16 %v805, %v800
      %v1026 = vpack.c.b16 %v806, %v801
      %v1027 = vpack.c.b16 %v807, %v802
      %v1028 = vpack.c.b16 %v808, %v803
      %v1029 = vpack.c.b16 %v814, %v809
      %v1030 = vpack.c.b16 %v815, %v810
      %v1031 = vpack.c.b16 %v816, %v811
      %v1032 = vpack.c.b16 %v817, %v812
      %v1033 = vpack.c.b16 %v818, %v813
      %v1034 = vpack.c.b16 %v824, %v819
      %v1035 = vpack.c.b16 %v825, %v820
      %v1036 = vpack.c.b16 %v826, %v821
      %v1037 = vpack.c.b16 %v827, %v822
      %v1038 = vpack.c.b16 %v828, %v823
      %v1039 = vpack.c.b16 %v834, %v829
      %v1040 = vpack.c.b16 %v835, %v830
      %v1041 = vpack.c.b16 %v836, %v831
      %v1042 = vpack.c.b16 %v837, %v832
      %v1043 = vpack.c.b16 %v838, %v833
      %v1044 = vpack.c.b16 %v844, %v839
      %v1045 = vpack.c.b16 %v845, %v840
      %v1046 = vpack.c.b16 %v846, %v841
      %v1047 = vpack.c.b16 %v847, %v842
      %v1048 = vpack.c.b16 %v848, %v843
      %v1049 = vpack.c.b16 %v854, %v849
      %v1050 = vpack.c.b16 %v855, %v850
      %v1051 = vpack.c.b16 %v856, %v851
      %v1052 = vpack.c.b16 %v857, %v852
      %v1053 = vpack.c.b16 %v858, %v853
      %v1054 = vpack.c.b16 %v864, %v859
      %v1055 = vpack.c.b16 %v865, %v860
      %v1056 = vpack.c.b16 %v866, %v861
      %v1057 = vpack.c.b16 %v867, %v862
      %v1058 = vpack.c.b16 %v868, %v863
      %v1059 = vpack.c.b16 %v874, %v869
      %v1060 = vpack.c.b16 %v875, %v870
      %v1061 = vpack.c.b16 %v876, %v871
      %v1062 = vpack.c.b16 %v877, %v872
      %v1063 = vpack.c.b16 %v878, %v873
      %v1064 = vpack.c.b16 %v884, %v879
      %v1065 = vpack.c.b16 %v885, %v880
      %v1066 = vpack.c.b16 %v886, %v881
      %v1067 = vpack.c.b16 %v887, %v882
      %v1068 = vpack.c.b16 %v888, %v883
      %v1069 = vpack.c.b16 %v894, %v889
      %v1070 = vpack.c.b16 %v895, %v890
      %v1071 = vpack.c.b16 %v896, %v891
      %v1072 = vpack.c.b16 %v897, %v892
      %v1073 = vpack.c.b16 %v898, %v893
      %v1074 = vpack.c.b16 %v904, %v899
      %v1075 = vpack.c.b16 %v905, %v900
      %v1076 = vpack.c.b16 %v906, %v901
      %v1077 = vpack.c.b16 %v907, %v902
      %v1078 = vpack.c.b16 %v908, %v903
      %v1079 = vpack.c.b16 %v914, %v909
      %v1080 = vpack.c.b16 %v915, %v910
      %v1081 = vpack.c.b16 %v916, %v911
      %v1082 = vpack.c.b16 %v917, %v912
      %v1083 = vpack.c.b16 %v918, %v913
      %v1084 = vpack.c.b16 %v924, %v919
      %v1085 = vpack.c.b16 %v925, %v920
      %v1086 = vpack.c.b16 %v926, %v921
      %v1087 = vpack.c.b16 %v927, %v922
      %v1088 = vpack.c.b16 %v928, %v923
      %v1089 = vpack.c.b16 %v934, %v929
      %v1090 = vpack.c.b16 %v935, %v930
      %v1091 = vpack.c.b16 %v936, %v931
      %v1092 = vpack.c.b16 %v937, %v932
      %v1093 = vpack.c.b16 %v938, %v933
      %v1290 = vunpack.c.l.b16 %v364
      %v1291 = vunpack.c.l.b16 %v365
      %v1292 = vunpack.c.l.b16 %v366
      %v1293 = vunpack.c.l.b16 %v367
      %v1294 = vunpack.c.l.b16 %v368
      %v1295 = vunpack.c.l.b16 %v369
      %v1296 = vunpack.c.l.b16 %v370
      %v1297 = vunpack.c.l.b16 %v371
      %v1298 = vunpack.c.l.b16 %v372
      %v1299 = vunpack.c.l.b16 %v373
      %v1300 = vunpack.c.l.b16 %v374
      %v1301 = vunpack.c.l.b16 %v375
      %v1302 = vunpack.c.l.b16 %v376
      %v1303 = vunpack.c.l.b16 %v377
      %v1304 = vunpack.c.l.b16 %v378
      %v1305 = vunpack.c.l.b16 %v379
      %v1306 = vunpack.c.l.b16 %v380
      %v1307 = vunpack.c.l.b16 %v381
      %v1308 = vunpack.c.l.b16 %v382
      %v1309 = vunpack.c.l.b16 %v383
      %v1310 = vunpack.c.l.b16 %v384
      %v1311 = vunpack.c.l.b16 %v385
      %v1312 = vunpack.c.l.b16 %v386
      %v1313 = vunpack.c.l.b16 %v387
      %v1314 = vunpack.c.l.b16 %v388
      %v1315 = vunpack.c.l.b16 %v389
      %v1316 = vunpack.c.l.b16 %v390
      %v1317 = vunpack.c.l.b16 %v391
      %v1318 = vunpack.c.l.b16 %v392
      %v1319 = vunpack.c.l.b16 %v393
      %v1320 = vunpack.c.l.b16 %v394
      %v1321 = vunpack.c.l.b16 %v395
      %v1322 = vunpack.c.l.b16 %v396
      %v1323 = vunpack.c.l.b16 %v397
      %v1324 = vunpack.c.l.b16 %v398
      %v1325 = vunpack.c.l.b16 %v399
      %v1326 = vunpack.c.l.b16 %v400
      %v1327 = vunpack.c.l.b16 %v401
      %v1328 = vunpack.c.l.b16 %v402
      %v1329 = vunpack.c.l.b16 %v403
      %v1330 = vunpack.c.l.b16 %v404
      %v1331 = vunpack.c.l.b16 %v405
      %v1332 = vunpack.c.l.b16 %v406
      %v1333 = vunpack.c.l.b16 %v407
      %v1334 = vunpack.c.l.b16 %v408
      %v1335 = vunpack.c.l.b16 %v409
      %v1336 = vunpack.c.l.b16 %v410
      %v1337 = vunpack.c.l.b16 %v411
      %v1338 = vunpack.c.l.b16 %v412
      %v1339 = vunpack.c.l.b16 %v413
      %v1340 = vunpack.c.l.b16 %v414
      %v1341 = vunpack.c.l.b16 %v415
      %v1342 = vunpack.c.l.b16 %v416
      %v1343 = vunpack.c.l.b16 %v417
      %v1344 = vunpack.c.l.b16 %v418
      %v1345 = vunpack.c.l.b16 %v419
      %v1346 = vunpack.c.l.b16 %v420
      %v1347 = vunpack.c.l.b16 %v421
      %v1348 = vunpack.c.l.b16 %v422
      %v1349 = vunpack.c.l.b16 %v423
      %v1350 = vunpack.c.l.b16 %v424
      %v1351 = vunpack.c.l.b16 %v425
      %v1352 = vunpack.c.l.b16 %v426
      %v1353 = vunpack.c.l.b16 %v427
      %v1354 = vunpack.c.l.b16 %v428
      %v1355 = vunpack.c.l.b16 %v429
      %v1356 = vunpack.c.l.b16 %v430
      %v1357 = vunpack.c.l.b16 %v431
      %v1358 = vunpack.c.l.b16 %v432
      %v1359 = vunpack.c.l.b16 %v433
      %v1360 = vunpack.c.l.b16 %v434
      %v1361 = vunpack.c.l.b16 %v435
      %v1362 = vpack.c.b16 %v1291, %v1290
      %v1363 = vpack.c.b16 %v1293, %v1292
      %v1364 = vpack.c.b16 %v1295, %v1294
      %v1365 = vpack.c.b16 %v1297, %v1296
      %v1366 = vpack.c.b16 %v1299, %v1298
      %v1367 = vpack.c.b16 %v1301, %v1300
      %v1368 = vpack.c.b16 %v1303, %v1302
      %v1369 = vpack.c.b16 %v1305, %v1304
      %v1370 = vpack.c.b16 %v1307, %v1306
      %v1371 = vpack.c.b16 %v1309, %v1308
      %v1372 = vpack.c.b16 %v1311, %v1310
      %v1373 = vpack.c.b16 %v1313, %v1312
      %v1374 = vpack.c.b16 %v1315, %v1314
      %v1375 = vpack.c.b16 %v1317, %v1316
      %v1376 = vpack.c.b16 %v1319, %v1318
      %v1377 = vpack.c.b16 %v1321, %v1320
      %v1378 = vpack.c.b16 %v1323, %v1322
      %v1379 = vpack.c.b16 %v1325, %v1324
      %v1380 = vpack.c.b16 %v1327, %v1326
      %v1381 = vpack.c.b16 %v1329, %v1328
      %v1382 = vpack.c.b16 %v1331, %v1330
      %v1383 = vpack.c.b16 %v1333, %v1332
      %v1384 = vpack.c.b16 %v1335, %v1334
      %v1385 = vpack.c.b16 %v1337, %v1336
      %v1386 = vpack.c.b16 %v1339, %v1338
      %v1387 = vpack.c.b16 %v1341, %v1340
      %v1388 = vpack.c.b16 %v1343, %v1342
      %v1389 = vpack.c.b16 %v1345, %v1344
      %v1390 = vpack.c.b16 %v1347, %v1346
      %v1391 = vpack.c.b16 %v1349, %v1348
      %v1392 = vpack.c.b16 %v1351, %v1350
      %v1393 = vpack.c.b16 %v1353, %v1352
      %v1394 = vpack.c.b16 %v1355, %v1354
      %v1395 = vpack.c.b16 %v1357, %v1356
      %v1396 = vpack.c.b16 %v1359, %v1358
      %v1397 = vpack.c.b16 %v1361, %v1360
      %vm1434 = vcmask 523264
      %v1436 = vsel %vm1434, %v943, 0
      %v1439 = vsel %vm1434, %v948, 0
      %v1442 = vsel %vm1434, %v953, 0
      %v1445 = vsel %vm1434, %v958, 0
      %v1448 = vsel %vm1434, %v963, 0
      %v1451 = vsel %vm1434, %v968, 0
      %v1454 = vsel %vm1434, %v973, 0
      %v1457 = vsel %vm1434, %v978, 0
      %v1460 = vsel %vm1434, %v983, 0
      %v1463 = vsel %vm1434, %v988, 0
      %v1466 = vsel %vm1434, %v993, 0
      %v1469 = vsel %vm1434, %v998, 0
      %v1472 = vsel %vm1434, %v1003, 0
      %v1475 = vsel %vm1434, %v1008, 0
      %v1478 = vsel %vm1434, %v1013, 0
      %v1481 = vsel %vm1434, %v1018, 0
      %v1484 = vsel %vm1434, %v1023, 0
      %v1487 = vsel %vm1434, %v1028, 0
      %v1490 = vsel %vm1434, %v1033, 0
      %v1493 = vsel %vm1434, %v1038, 0
      %v1496 = vsel %vm1434, %v1043, 0
      %v1499 = vsel %vm1434, %v1048, 0
      %v1502 = vsel %vm1434, %v1053, 0
      %v1505 = vsel %vm1434, %v1058, 0
      %v1508 = vsel %vm1434, %v1063, 0
      %v1511 = vsel %vm1434, %v1068, 0
      %v1514 = vsel %vm1434, %v1073, 0
      %v1517 = vsel %vm1434, %v1078, 0
      %v1520 = vsel %vm1434, %v1083, 0
      %v1523 = vsel %vm1434, %v1088, 0
      %v1526 = vsel %vm1434, %v1093, 0
      %1528 = vmatprep.subr.bf16.mxu0 0
      %1529 = vmatpush1.bf16.msra.mxu0 %v1362
      %1530 = vmatprep.subr.bf16.mxu0 0
      %1531 = vmatpush1.bf16.msra.mxu0 %v1363
      %1532 = vmatprep.subr.bf16.mxu0 0
      %1533 = vmatpush1.bf16.msra.mxu0 %v1364
      %1534 = vmatprep.subr.bf16.mxu0 0
      %1535 = vmatpush1.bf16.msra.mxu0 %v1365
      %1536 = vmatprep.subr.bf16.mxu0 0
      %1537 = vmatpush1.bf16.msra.mxu0 %v1366
      %1538 = vmatprep.subr.bf16.mxu0 0
      %1539 = vmatpush1.bf16.msra.mxu0 %v1367
      %1540 = vmatprep.subr.bf16.mxu0 0
      %1541 = vmatpush1.bf16.msra.mxu0 %v1368
      %1542 = vmatprep.subr.bf16.mxu0 0
      %1543 = vmatpush1.bf16.msra.mxu0 %v1369
      %1544 = vmatprep.subr.bf16.mxu0 0
      %1545 = vmatpush1.bf16.msra.mxu0 %v1370
      %1546 = vmatprep.subr.bf16.mxu0 0
      %1547 = vmatpush1.bf16.msra.mxu0 %v1371
      %1548 = vmatprep.subr.bf16.mxu0 0
      %1549 = vmatpush1.bf16.msra.mxu0 %v1372
      %1550 = vmatprep.subr.bf16.mxu0 0
      %1551 = vmatpush1.bf16.msra.mxu0 %v1373
      %1552 = vmatprep.subr.bf16.mxu0 0
      %1553 = vmatpush1.bf16.msra.mxu0 %v1374
      %1554 = vmatprep.subr.bf16.mxu0 0
      %1555 = vmatpush1.bf16.msra.mxu0 %v1375
      %1556 = vmatprep.subr.bf16.mxu0 0
      %1557 = vmatpush1.bf16.msra.mxu0 %v1376
      %1558 = vmatprep.subr.bf16.mxu0 0
      %1559 = vmatpush1.bf16.msra.mxu0 %v1377
      %1560 = vmatprep.mubr.bf16.mxu0 %v940
      %1561 = vmatmul.mubr.bf16.gmra.mrb[0].mxu0 %v939
      %v1562 = vpop.f32.mrb[0].mxu0
      %v1563 = vadd.f32 %v441, %v1562
      %v1564 = vpop.f32.mrb[0].mxu0
      %v1565 = vpop.f32.mrb[0].mxu0
      %v1566 = vadd.f32 %v441, %v1565
      %v1567 = vpop.f32.mrb[0].mxu0
      %1568 = vmatprep.mubr.bf16.mxu0 %v945
      %1569 = vmatmul.mubr.bf16.gmra.mrb[0].mxu0 %v944
      %v1570 = vpop.f32.mrb[0].mxu0
      %v1571 = vadd.f32 %v441, %v1570
      %v1572 = vpop.f32.mrb[0].mxu0
      %v1573 = vpop.f32.mrb[0].mxu0
      %v1574 = vadd.f32 %v441, %v1573
      %v1575 = vpop.f32.mrb[0].mxu0
      %1576 = vmatprep.mubr.bf16.mxu0 %v950
      %1577 = vmatmul.mubr.bf16.gmra.mrb[0].mxu0 %v949
      %v1578 = vpop.f32.mrb[0].mxu0
      %v1579 = vadd.f32 %v441, %v1578
      %v1580 = vpop.f32.mrb[0].mxu0
      %v1581 = vpop.f32.mrb[0].mxu0
      %v1582 = vadd.f32 %v441, %v1581
      %v1583 = vpop.f32.mrb[0].mxu0
      %1584 = vmatprep.mubr.bf16.mxu0 %v955
      %1585 = vmatmul.mubr.bf16.gmra.mrb[0].mxu0 %v954
      %v1586 = vpop.f32.mrb[0].mxu0
      %v1587 = vadd.f32 %v441, %v1586
      %v1588 = vpop.f32.mrb[0].mxu0
      %v1589 = vpop.f32.mrb[0].mxu0
      %v1590 = vadd.f32 %v441, %v1589
      %v1591 = vpop.f32.mrb[0].mxu0
      %1592 = vmatprep.mubr.bf16.mxu0 %v960
      %1593 = vmatmul.mubr.bf16.gmra.mrb[0].mxu0 %v959
      %v1594 = vpop.f32.mrb[0].mxu0
      %v1595 = vadd.f32 %v441, %v1594
      %v1596 = vpop.f32.mrb[0].mxu0
      %v1597 = vpop.f32.mrb[0].mxu0
      %v1598 = vadd.f32 %v441, %v1597
      %v1599 = vpop.f32.mrb[0].mxu0
      %1600 = vmatprep.mubr.bf16.mxu0 %v965
      %1601 = vmatmul.mubr.bf16.gmra.mrb[0].mxu0 %v964
      %v1602 = vpop.f32.mrb[0].mxu0
      %v1603 = vadd.f32 %v441, %v1602
      %v1604 = vpop.f32.mrb[0].mxu0
      %v1605 = vpop.f32.mrb[0].mxu0
      %v1606 = vadd.f32 %v441, %v1605
      %v1607 = vpop.f32.mrb[0].mxu0
      %1608 = vmatprep.mubr.bf16.mxu0 %v970
      %1609 = vmatmul.mubr.bf16.gmra.mrb[0].mxu0 %v969
      %v1610 = vpop.f32.mrb[0].mxu0
      %v1611 = vadd.f32 %v441, %v1610
      %v1612 = vpop.f32.mrb[0].mxu0
      %v1613 = vpop.f32.mrb[0].mxu0
      %v1614 = vadd.f32 %v441, %v1613
      %v1615 = vpop.f32.mrb[0].mxu0
      %1616 = vmatprep.mubr.bf16.mxu0 %v975
      %1617 = vmatmul.mubr.bf16.gmra.mrb[0].mxu0 %v974
      %v1618 = vpop.f32.mrb[0].mxu0
      %v1619 = vadd.f32 %v441, %v1618
      %v1620 = vpop.f32.mrb[0].mxu0
      %v1621 = vpop.f32.mrb[0].mxu0
      %v1622 = vadd.f32 %v441, %v1621
      %v1623 = vpop.f32.mrb[0].mxu0
      %1624 = vmatprep.mubr.bf16.mxu0 %v980
      %1625 = vmatmul.mubr.bf16.gmra.mrb[0].mxu0 %v979
      %v1626 = vpop.f32.mrb[0].mxu0
      %v1627 = vadd.f32 %v441, %v1626
      %v1628 = vpop.f32.mrb[0].mxu0
      %v1629 = vpop.f32.mrb[0].mxu0
      %v1630 = vadd.f32 %v441, %v1629
      %v1631 = vpop.f32.mrb[0].mxu0
      %1632 = vmatprep.mubr.bf16.mxu0 %v985
      %1633 = vmatmul.mubr.bf16.gmra.mrb[0].mxu0 %v984
      %v1634 = vpop.f32.mrb[0].mxu0
      %v1635 = vadd.f32 %v441, %v1634
      %v1636 = vpop.f32.mrb[0].mxu0
      %v1637 = vpop.f32.mrb[0].mxu0
      %v1638 = vadd.f32 %v441, %v1637
      %v1639 = vpop.f32.mrb[0].mxu0
      %1640 = vmatprep.mubr.bf16.mxu0 %v990
      %1641 = vmatmul.mubr.bf16.gmra.mrb[0].mxu0 %v989
      %v1642 = vpop.f32.mrb[0].mxu0
      %v1643 = vadd.f32 %v441, %v1642
      %v1644 = vpop.f32.mrb[0].mxu0
      %v1645 = vpop.f32.mrb[0].mxu0
      %v1646 = vadd.f32 %v441, %v1645
      %v1647 = vpop.f32.mrb[0].mxu0
      %1648 = vmatprep.mubr.bf16.mxu0 %v995
      %1649 = vmatmul.mubr.bf16.gmra.mrb[0].mxu0 %v994
      %v1650 = vpop.f32.mrb[0].mxu0
      %v1651 = vadd.f32 %v441, %v1650
      %v1652 = vpop.f32.mrb[0].mxu0
      %v1653 = vpop.f32.mrb[0].mxu0
      %v1654 = vadd.f32 %v441, %v1653
      %v1655 = vpop.f32.mrb[0].mxu0
      %1656 = vmatprep.mubr.bf16.mxu0 %v1000
      %1657 = vmatmul.mubr.bf16.gmra.mrb[0].mxu0 %v999
      %v1658 = vpop.f32.mrb[0].mxu0
      %v1659 = vadd.f32 %v441, %v1658
      %v1660 = vpop.f32.mrb[0].mxu0
      %v1661 = vpop.f32.mrb[0].mxu0
      %v1662 = vadd.f32 %v441, %v1661
      %v1663 = vpop.f32.mrb[0].mxu0
      %1664 = vmatprep.mubr.bf16.mxu0 %v1005
      %1665 = vmatmul.mubr.bf16.gmra.mrb[0].mxu0 %v1004
      %v1666 = vpop.f32.mrb[0].mxu0
      %v1667 = vadd.f32 %v441, %v1666
      %v1668 = vpop.f32.mrb[0].mxu0
      %v1669 = vpop.f32.mrb[0].mxu0
      %v1670 = vadd.f32 %v441, %v1669
      %v1671 = vpop.f32.mrb[0].mxu0
      %1672 = vmatprep.mubr.bf16.mxu0 %v1010
      %1673 = vmatmul.mubr.bf16.gmra.mrb[0].mxu0 %v1009
      %v1674 = vpop.f32.mrb[0].mxu0
      %v1675 = vadd.f32 %v441, %v1674
      %v1676 = vpop.f32.mrb[0].mxu0
      %v1677 = vpop.f32.mrb[0].mxu0
      %v1678 = vadd.f32 %v441, %v1677
      %v1679 = vpop.f32.mrb[0].mxu0
      %1680 = vmatprep.mubr.bf16.mxu0 %v1015
      %1681 = vmatmul.mubr.bf16.gmra.mrb[0].mxu0 %v1014
      %v1682 = vpop.f32.mrb[0].mxu0
      %v1683 = vadd.f32 %v441, %v1682
      %v1684 = vpop.f32.mrb[0].mxu0
      %v1685 = vpop.f32.mrb[0].mxu0
      %v1686 = vadd.f32 %v441, %v1685
      %v1687 = vpop.f32.mrb[0].mxu0
      %1688 = vmatprep.mubr.bf16.mxu0 %v1020
      %1689 = vmatmul.mubr.bf16.gmra.mrb[0].mxu0 %v1019
      %v1690 = vpop.f32.mrb[0].mxu0
      %v1691 = vadd.f32 %v441, %v1690
      %v1692 = vpop.f32.mrb[0].mxu0
      %v1693 = vpop.f32.mrb[0].mxu0
      %v1694 = vadd.f32 %v441, %v1693
      %v1695 = vpop.f32.mrb[0].mxu0
      %1696 = vmatprep.mubr.bf16.mxu0 %v1025
      %1697 = vmatmul.mubr.bf16.gmra.mrb[0].mxu0 %v1024
      %v1698 = vpop.f32.mrb[0].mxu0
      %v1699 = vadd.f32 %v441, %v1698
      %v1700 = vpop.f32.mrb[0].mxu0
      %v1701 = vpop.f32.mrb[0].mxu0
      %v1702 = vadd.f32 %v441, %v1701
      %v1703 = vpop.f32.mrb[0].mxu0
      %1704 = vmatprep.mubr.bf16.mxu0 %v1030
      %1705 = vmatmul.mubr.bf16.gmra.mrb[0].mxu0 %v1029
      %v1706 = vpop.f32.mrb[0].mxu0
      %v1707 = vadd.f32 %v441, %v1706
      %v1708 = vpop.f32.mrb[0].mxu0
      %v1709 = vpop.f32.mrb[0].mxu0
      %v1710 = vadd.f32 %v441, %v1709
      %v1711 = vpop.f32.mrb[0].mxu0
      %1712 = vmatprep.mubr.bf16.mxu0 %v1035
      %1713 = vmatmul.mubr.bf16.gmra.mrb[0].mxu0 %v1034
      %v1714 = vpop.f32.mrb[0].mxu0
      %v1715 = vadd.f32 %v441, %v1714
      %v1716 = vpop.f32.mrb[0].mxu0
      %v1717 = vpop.f32.mrb[0].mxu0
      %v1718 = vadd.f32 %v441, %v1717
      %v1719 = vpop.f32.mrb[0].mxu0
      %1720 = vmatprep.mubr.bf16.mxu0 %v1040
      %1721 = vmatmul.mubr.bf16.gmra.mrb[0].mxu0 %v1039
      %v1722 = vpop.f32.mrb[0].mxu0
      %v1723 = vadd.f32 %v441, %v1722
      %v1724 = vpop.f32.mrb[0].mxu0
      %v1725 = vpop.f32.mrb[0].mxu0
      %v1726 = vadd.f32 %v441, %v1725
      %v1727 = vpop.f32.mrb[0].mxu0
      %1728 = vmatprep.mubr.bf16.mxu0 %v1045
      %1729 = vmatmul.mubr.bf16.gmra.mrb[0].mxu0 %v1044
      %v1730 = vpop.f32.mrb[0].mxu0
      %v1731 = vadd.f32 %v441, %v1730
      %v1732 = vpop.f32.mrb[0].mxu0
      %v1733 = vpop.f32.mrb[0].mxu0
      %v1734 = vadd.f32 %v441, %v1733
      %v1735 = vpop.f32.mrb[0].mxu0
      %1736 = vmatprep.mubr.bf16.mxu0 %v1050
      %1737 = vmatmul.mubr.bf16.gmra.mrb[0].mxu0 %v1049
      %v1738 = vpop.f32.mrb[0].mxu0
      %v1739 = vadd.f32 %v441, %v1738
      %v1740 = vpop.f32.mrb[0].mxu0
      %v1741 = vpop.f32.mrb[0].mxu0
      %v1742 = vadd.f32 %v441, %v1741
      %v1743 = vpop.f32.mrb[0].mxu0
      %1744 = vmatprep.mubr.bf16.mxu0 %v1055
      %1745 = vmatmul.mubr.bf16.gmra.mrb[0].mxu0 %v1054
      %v1746 = vpop.f32.mrb[0].mxu0
      %v1747 = vadd.f32 %v441, %v1746
      %v1748 = vpop.f32.mrb[0].mxu0
      %v1749 = vpop.f32.mrb[0].mxu0
      %v1750 = vadd.f32 %v441, %v1749
      %v1751 = vpop.f32.mrb[0].mxu0
      %1752 = vmatprep.mubr.bf16.mxu0 %v1060
      %1753 = vmatmul.mubr.bf16.gmra.mrb[0].mxu0 %v1059
      %v1754 = vpop.f32.mrb[0].mxu0
      %v1755 = vadd.f32 %v441, %v1754
      %v1756 = vpop.f32.mrb[0].mxu0
      %v1757 = vpop.f32.mrb[0].mxu0
      %v1758 = vadd.f32 %v441, %v1757
      %v1759 = vpop.f32.mrb[0].mxu0
      %1760 = vmatprep.mubr.bf16.mxu0 %v1065
      %1761 = vmatmul.mubr.bf16.gmra.mrb[0].mxu0 %v1064
      %v1762 = vpop.f32.mrb[0].mxu0
      %v1763 = vadd.f32 %v441, %v1762
      %v1764 = vpop.f32.mrb[0].mxu0
      %v1765 = vpop.f32.mrb[0].mxu0
      %v1766 = vadd.f32 %v441, %v1765
      %v1767 = vpop.f32.mrb[0].mxu0
      %1768 = vmatprep.mubr.bf16.mxu0 %v1070
      %1769 = vmatmul.mubr.bf16.gmra.mrb[0].mxu0 %v1069
      %v1770 = vpop.f32.mrb[0].mxu0
      %v1771 = vadd.f32 %v441, %v1770
      %v1772 = vpop.f32.mrb[0].mxu0
      %v1773 = vpop.f32.mrb[0].mxu0
      %v1774 = vadd.f32 %v441, %v1773
      %v1775 = vpop.f32.mrb[0].mxu0
      %1776 = vmatprep.mubr.bf16.mxu0 %v1075
      %1777 = vmatmul.mubr.bf16.gmra.mrb[0].mxu0 %v1074
      %v1778 = vpop.f32.mrb[0].mxu0
      %v1779 = vadd.f32 %v441, %v1778
      %v1780 = vpop.f32.mrb[0].mxu0
      %v1781 = vpop.f32.mrb[0].mxu0
      %v1782 = vadd.f32 %v441, %v1781
      %v1783 = vpop.f32.mrb[0].mxu0
      %1784 = vmatprep.mubr.bf16.mxu0 %v1080
      %1785 = vmatmul.mubr.bf16.gmra.mrb[0].mxu0 %v1079
      %v1786 = vpop.f32.mrb[0].mxu0
      %v1787 = vadd.f32 %v441, %v1786
      %v1788 = vpop.f32.mrb[0].mxu0
      %v1789 = vpop.f32.mrb[0].mxu0
      %v1790 = vadd.f32 %v441, %v1789
      %v1791 = vpop.f32.mrb[0].mxu0
      %1792 = vmatprep.mubr.bf16.mxu0 %v1085
      %1793 = vmatmul.mubr.bf16.gmra.mrb[0].mxu0 %v1084
      %v1794 = vpop.f32.mrb[0].mxu0
      %v1795 = vadd.f32 %v441, %v1794
      %v1796 = vpop.f32.mrb[0].mxu0
      %v1797 = vpop.f32.mrb[0].mxu0
      %v1798 = vadd.f32 %v441, %v1797
      %v1799 = vpop.f32.mrb[0].mxu0
      %1800 = vmatprep.mubr.bf16.mxu0 %v1090
      %1801 = vmatmul.mubr.bf16.gmra.mrb[0].mxu0 %v1089
      %v1802 = vpop.f32.mrb[0].mxu0
      %v1803 = vadd.f32 %v441, %v1802
      %v1804 = vpop.f32.mrb[0].mxu0
      %v1805 = vpop.f32.mrb[0].mxu0
      %v1806 = vadd.f32 %v441, %v1805
      %v1807 = vpop.f32.mrb[0].mxu0
      %1808 = vdwg.mxu0
      %1809 = vmatprep.subr.bf16.mxu0 0
      %1810 = vmatpush1.bf16.msra.mxu0 %v1378
      %1811 = vmatprep.subr.bf16.mxu0 0
      %1812 = vmatpush1.bf16.msra.mxu0 %v1379
      %1813 = vmatprep.subr.bf16.mxu0 0
      %1814 = vmatpush1.bf16.msra.mxu0 %v1380
      %1815 = vmatprep.subr.bf16.mxu0 0
      %1816 = vmatpush1.bf16.msra.mxu0 %v1381
      %1817 = vmatprep.subr.bf16.mxu0 0
      %1818 = vmatpush1.bf16.msra.mxu0 %v1382
      %1819 = vmatprep.subr.bf16.mxu0 0
      %1820 = vmatpush1.bf16.msra.mxu0 %v1383
      %1821 = vmatprep.subr.bf16.mxu0 0
      %1822 = vmatpush1.bf16.msra.mxu0 %v1384
      %1823 = vmatprep.subr.bf16.mxu0 0
      %1824 = vmatpush1.bf16.msra.mxu0 %v1385
      %1825 = vmatprep.subr.bf16.mxu0 0
      %1826 = vmatpush1.bf16.msra.mxu0 %v1386
      %1827 = vmatprep.subr.bf16.mxu0 0
      %1828 = vmatpush1.bf16.msra.mxu0 %v1387
      %1829 = vmatprep.subr.bf16.mxu0 0
      %1830 = vmatpush1.bf16.msra.mxu0 %v1388
      %1831 = vmatprep.subr.bf16.mxu0 0
      %1832 = vmatpush1.bf16.msra.mxu0 %v1389
      %1833 = vmatprep.subr.bf16.mxu0 0
      %1834 = vmatpush1.bf16.msra.mxu0 %v1390
      %1835 = vmatprep.subr.bf16.mxu0 0
      %1836 = vmatpush1.bf16.msra.mxu0 %v1391
      %1837 = vmatprep.subr.bf16.mxu0 0
      %1838 = vmatpush1.bf16.msra.mxu0 %v1392
      %1839 = vmatprep.subr.bf16.mxu0 0
      %1840 = vmatpush1.bf16.msra.mxu0 %v1393
      %1841 = vmatprep.mubr.bf16.mxu0 %v942
      %1842 = vmatmul.mubr.bf16.gmra.mrb[0].mxu0 %v941
      %v1843 = vpop.f32.mrb[0].mxu0
      %v1844 = vadd.f32 %v1563, %v1843
      %v1845 = vpop.f32.mrb[0].mxu0
      %v1846 = vpop.f32.mrb[0].mxu0
      %v1847 = vadd.f32 %v1566, %v1846
      %v1848 = vpop.f32.mrb[0].mxu0
      %1849 = vmatprep.mubr.bf16.mxu0 %v947
      %1850 = vmatmul.mubr.bf16.gmra.mrb[0].mxu0 %v946
      %v1851 = vpop.f32.mrb[0].mxu0
      %v1852 = vadd.f32 %v1571, %v1851
      %v1853 = vpop.f32.mrb[0].mxu0
      %v1854 = vpop.f32.mrb[0].mxu0
      %v1855 = vadd.f32 %v1574, %v1854
      %v1856 = vpop.f32.mrb[0].mxu0
      %1857 = vmatprep.mubr.bf16.mxu0 %v952
      %1858 = vmatmul.mubr.bf16.gmra.mrb[0].mxu0 %v951
      %v1859 = vpop.f32.mrb[0].mxu0
      %v1860 = vadd.f32 %v1579, %v1859
      %v1861 = vpop.f32.mrb[0].mxu0
      %v1862 = vpop.f32.mrb[0].mxu0
      %v1863 = vadd.f32 %v1582, %v1862
      %v1864 = vpop.f32.mrb[0].mxu0
      %1865 = vmatprep.mubr.bf16.mxu0 %v957
      %1866 = vmatmul.mubr.bf16.gmra.mrb[0].mxu0 %v956
      %v1867 = vpop.f32.mrb[0].mxu0
      %v1868 = vadd.f32 %v1587, %v1867
      %v1869 = vpop.f32.mrb[0].mxu0
      %v1870 = vpop.f32.mrb[0].mxu0
      %v1871 = vadd.f32 %v1590, %v1870
      %v1872 = vpop.f32.mrb[0].mxu0
      %1873 = vmatprep.mubr.bf16.mxu0 %v962
      %1874 = vmatmul.mubr.bf16.gmra.mrb[0].mxu0 %v961
      %v1875 = vpop.f32.mrb[0].mxu0
      %v1876 = vadd.f32 %v1595, %v1875
      %v1877 = vpop.f32.mrb[0].mxu0
      %v1878 = vpop.f32.mrb[0].mxu0
      %v1879 = vadd.f32 %v1598, %v1878
      %v1880 = vpop.f32.mrb[0].mxu0
      %1881 = vmatprep.mubr.bf16.mxu0 %v967
      %1882 = vmatmul.mubr.bf16.gmra.mrb[0].mxu0 %v966
      %v1883 = vpop.f32.mrb[0].mxu0
      %v1884 = vadd.f32 %v1603, %v1883
      %v1885 = vpop.f32.mrb[0].mxu0
      %v1886 = vpop.f32.mrb[0].mxu0
      %v1887 = vadd.f32 %v1606, %v1886
      %v1888 = vpop.f32.mrb[0].mxu0
      %1889 = vmatprep.mubr.bf16.mxu0 %v972
      %1890 = vmatmul.mubr.bf16.gmra.mrb[0].mxu0 %v971
      %v1891 = vpop.f32.mrb[0].mxu0
      %v1892 = vadd.f32 %v1611, %v1891
      %v1893 = vpop.f32.mrb[0].mxu0
      %v1894 = vpop.f32.mrb[0].mxu0
      %v1895 = vadd.f32 %v1614, %v1894
      %v1896 = vpop.f32.mrb[0].mxu0
      %1897 = vmatprep.mubr.bf16.mxu0 %v977
      %1898 = vmatmul.mubr.bf16.gmra.mrb[0].mxu0 %v976
      %v1899 = vpop.f32.mrb[0].mxu0
      %v1900 = vadd.f32 %v1619, %v1899
      %v1901 = vpop.f32.mrb[0].mxu0
      %v1902 = vpop.f32.mrb[0].mxu0
      %v1903 = vadd.f32 %v1622, %v1902
      %v1904 = vpop.f32.mrb[0].mxu0
      %1905 = vmatprep.mubr.bf16.mxu0 %v982
      %1906 = vmatmul.mubr.bf16.gmra.mrb[0].mxu0 %v981
      %v1907 = vpop.f32.mrb[0].mxu0
      %v1908 = vadd.f32 %v1627, %v1907
      %v1909 = vpop.f32.mrb[0].mxu0
      %v1910 = vpop.f32.mrb[0].mxu0
      %v1911 = vadd.f32 %v1630, %v1910
      %v1912 = vpop.f32.mrb[0].mxu0
      %1913 = vmatprep.mubr.bf16.mxu0 %v987
      %1914 = vmatmul.mubr.bf16.gmra.mrb[0].mxu0 %v986
      %v1915 = vpop.f32.mrb[0].mxu0
      %v1916 = vadd.f32 %v1635, %v1915
      %v1917 = vpop.f32.mrb[0].mxu0
      %v1918 = vpop.f32.mrb[0].mxu0
      %v1919 = vadd.f32 %v1638, %v1918
      %v1920 = vpop.f32.mrb[0].mxu0
      %1921 = vmatprep.mubr.bf16.mxu0 %v992
      %1922 = vmatmul.mubr.bf16.gmra.mrb[0].mxu0 %v991
      %v1923 = vpop.f32.mrb[0].mxu0
      %v1924 = vadd.f32 %v1643, %v1923
      %v1925 = vpop.f32.mrb[0].mxu0
      %v1926 = vpop.f32.mrb[0].mxu0
      %v1927 = vadd.f32 %v1646, %v1926
      %v1928 = vpop.f32.mrb[0].mxu0
      %1929 = vmatprep.mubr.bf16.mxu0 %v997
      %1930 = vmatmul.mubr.bf16.gmra.mrb[0].mxu0 %v996
      %v1931 = vpop.f32.mrb[0].mxu0
      %v1932 = vadd.f32 %v1651, %v1931
      %v1933 = vpop.f32.mrb[0].mxu0
      %v1934 = vpop.f32.mrb[0].mxu0
      %v1935 = vadd.f32 %v1654, %v1934
      %v1936 = vpop.f32.mrb[0].mxu0
      %1937 = vmatprep.mubr.bf16.mxu0 %v1002
      %1938 = vmatmul.mubr.bf16.gmra.mrb[0].mxu0 %v1001
      %v1939 = vpop.f32.mrb[0].mxu0
      %v1940 = vadd.f32 %v1659, %v1939
      %v1941 = vpop.f32.mrb[0].mxu0
      %v1942 = vpop.f32.mrb[0].mxu0
      %v1943 = vadd.f32 %v1662, %v1942
      %v1944 = vpop.f32.mrb[0].mxu0
      %1945 = vmatprep.mubr.bf16.mxu0 %v1007
      %1946 = vmatmul.mubr.bf16.gmra.mrb[0].mxu0 %v1006
      %v1947 = vpop.f32.mrb[0].mxu0
      %v1948 = vadd.f32 %v1667, %v1947
      %v1949 = vpop.f32.mrb[0].mxu0
      %v1950 = vpop.f32.mrb[0].mxu0
      %v1951 = vadd.f32 %v1670, %v1950
      %v1952 = vpop.f32.mrb[0].mxu0
      %1953 = vmatprep.mubr.bf16.mxu0 %v1012
      %1954 = vmatmul.mubr.bf16.gmra.mrb[0].mxu0 %v1011
      %v1955 = vpop.f32.mrb[0].mxu0
      %v1956 = vadd.f32 %v1675, %v1955
      %v1957 = vpop.f32.mrb[0].mxu0
      %v1958 = vpop.f32.mrb[0].mxu0
      %v1959 = vadd.f32 %v1678, %v1958
      %v1960 = vpop.f32.mrb[0].mxu0
      %1961 = vmatprep.mubr.bf16.mxu0 %v1017
      %1962 = vmatmul.mubr.bf16.gmra.mrb[0].mxu0 %v1016
      %v1963 = vpop.f32.mrb[0].mxu0
      %v1964 = vadd.f32 %v1683, %v1963
      %v1965 = vpop.f32.mrb[0].mxu0
      %v1966 = vpop.f32.mrb[0].mxu0
      %v1967 = vadd.f32 %v1686, %v1966
      %v1968 = vpop.f32.mrb[0].mxu0
      %1969 = vmatprep.mubr.bf16.mxu0 %v1022
      %1970 = vmatmul.mubr.bf16.gmra.mrb[0].mxu0 %v1021
      %v1971 = vpop.f32.mrb[0].mxu0
      %v1972 = vadd.f32 %v1691, %v1971
      %v1973 = vpop.f32.mrb[0].mxu0
      %v1974 = vpop.f32.mrb[0].mxu0
      %v1975 = vadd.f32 %v1694, %v1974
      %v1976 = vpop.f32.mrb[0].mxu0
      %1977 = vmatprep.mubr.bf16.mxu0 %v1027
      %1978 = vmatmul.mubr.bf16.gmra.mrb[0].mxu0 %v1026
      %v1979 = vpop.f32.mrb[0].mxu0
      %v1980 = vadd.f32 %v1699, %v1979
      %v1981 = vpop.f32.mrb[0].mxu0
      %v1982 = vpop.f32.mrb[0].mxu0
      %v1983 = vadd.f32 %v1702, %v1982
      %v1984 = vpop.f32.mrb[0].mxu0
      %1985 = vmatprep.mubr.bf16.mxu0 %v1032
      %1986 = vmatmul.mubr.bf16.gmra.mrb[0].mxu0 %v1031
      %v1987 = vpop.f32.mrb[0].mxu0
      %v1988 = vadd.f32 %v1707, %v1987
      %v1989 = vpop.f32.mrb[0].mxu0
      %v1990 = vpop.f32.mrb[0].mxu0
      %v1991 = vadd.f32 %v1710, %v1990
      %v1992 = vpop.f32.mrb[0].mxu0
      %1993 = vmatprep.mubr.bf16.mxu0 %v1037
      %1994 = vmatmul.mubr.bf16.gmra.mrb[0].mxu0 %v1036
      %v1995 = vpop.f32.mrb[0].mxu0
      %v1996 = vadd.f32 %v1715, %v1995
      %v1997 = vpop.f32.mrb[0].mxu0
      %v1998 = vpop.f32.mrb[0].mxu0
      %v1999 = vadd.f32 %v1718, %v1998
      %v2000 = vpop.f32.mrb[0].mxu0
      %2001 = vmatprep.mubr.bf16.mxu0 %v1042
      %2002 = vmatmul.mubr.bf16.gmra.mrb[0].mxu0 %v1041
      %v2003 = vpop.f32.mrb[0].mxu0
      %v2004 = vadd.f32 %v1723, %v2003
      %v2005 = vpop.f32.mrb[0].mxu0
      %v2006 = vpop.f32.mrb[0].mxu0
      %v2007 = vadd.f32 %v1726, %v2006
      %v2008 = vpop.f32.mrb[0].mxu0
      %2009 = vmatprep.mubr.bf16.mxu0 %v1047
      %2010 = vmatmul.mubr.bf16.gmra.mrb[0].mxu0 %v1046
      %v2011 = vpop.f32.mrb[0].mxu0
      %v2012 = vadd.f32 %v1731, %v2011
      %v2013 = vpop.f32.mrb[0].mxu0
      %v2014 = vpop.f32.mrb[0].mxu0
      %v2015 = vadd.f32 %v1734, %v2014
      %v2016 = vpop.f32.mrb[0].mxu0
      %2017 = vmatprep.mubr.bf16.mxu0 %v1052
      %2018 = vmatmul.mubr.bf16.gmra.mrb[0].mxu0 %v1051
      %v2019 = vpop.f32.mrb[0].mxu0
      %v2020 = vadd.f32 %v1739, %v2019
      %v2021 = vpop.f32.mrb[0].mxu0
      %v2022 = vpop.f32.mrb[0].mxu0
      %v2023 = vadd.f32 %v1742, %v2022
      %v2024 = vpop.f32.mrb[0].mxu0
      %2025 = vmatprep.mubr.bf16.mxu0 %v1057
      %2026 = vmatmul.mubr.bf16.gmra.mrb[0].mxu0 %v1056
      %v2027 = vpop.f32.mrb[0].mxu0
      %v2028 = vadd.f32 %v1747, %v2027
      %v2029 = vpop.f32.mrb[0].mxu0
      %v2030 = vpop.f32.mrb[0].mxu0
      %v2031 = vadd.f32 %v1750, %v2030
      %v2032 = vpop.f32.mrb[0].mxu0
      %2033 = vmatprep.mubr.bf16.mxu0 %v1062
      %2034 = vmatmul.mubr.bf16.gmra.mrb[0].mxu0 %v1061
      %v2035 = vpop.f32.mrb[0].mxu0
      %v2036 = vadd.f32 %v1755, %v2035
      %v2037 = vpop.f32.mrb[0].mxu0
      %v2038 = vpop.f32.mrb[0].mxu0
      %v2039 = vadd.f32 %v1758, %v2038
      %v2040 = vpop.f32.mrb[0].mxu0
      %2041 = vmatprep.mubr.bf16.mxu0 %v1067
      %2042 = vmatmul.mubr.bf16.gmra.mrb[0].mxu0 %v1066
      %v2043 = vpop.f32.mrb[0].mxu0
      %v2044 = vadd.f32 %v1763, %v2043
      %v2045 = vpop.f32.mrb[0].mxu0
      %v2046 = vpop.f32.mrb[0].mxu0
      %v2047 = vadd.f32 %v1766, %v2046
      %v2048 = vpop.f32.mrb[0].mxu0
      %2049 = vmatprep.mubr.bf16.mxu0 %v1072
      %2050 = vmatmul.mubr.bf16.gmra.mrb[0].mxu0 %v1071
      %v2051 = vpop.f32.mrb[0].mxu0
      %v2052 = vadd.f32 %v1771, %v2051
      %v2053 = vpop.f32.mrb[0].mxu0
      %v2054 = vpop.f32.mrb[0].mxu0
      %v2055 = vadd.f32 %v1774, %v2054
      %v2056 = vpop.f32.mrb[0].mxu0
      %2057 = vmatprep.mubr.bf16.mxu0 %v1077
      %2058 = vmatmul.mubr.bf16.gmra.mrb[0].mxu0 %v1076
      %v2059 = vpop.f32.mrb[0].mxu0
      %v2060 = vadd.f32 %v1779, %v2059
      %v2061 = vpop.f32.mrb[0].mxu0
      %v2062 = vpop.f32.mrb[0].mxu0
      %v2063 = vadd.f32 %v1782, %v2062
      %v2064 = vpop.f32.mrb[0].mxu0
      %2065 = vmatprep.mubr.bf16.mxu0 %v1082
      %2066 = vmatmul.mubr.bf16.gmra.mrb[0].mxu0 %v1081
      %v2067 = vpop.f32.mrb[0].mxu0
      %v2068 = vadd.f32 %v1787, %v2067
      %v2069 = vpop.f32.mrb[0].mxu0
      %v2070 = vpop.f32.mrb[0].mxu0
      %v2071 = vadd.f32 %v1790, %v2070
      %v2072 = vpop.f32.mrb[0].mxu0
      %2073 = vmatprep.mubr.bf16.mxu0 %v1087
      %2074 = vmatmul.mubr.bf16.gmra.mrb[0].mxu0 %v1086
      %v2075 = vpop.f32.mrb[0].mxu0
      %v2076 = vadd.f32 %v1795, %v2075
      %v2077 = vpop.f32.mrb[0].mxu0
      %v2078 = vpop.f32.mrb[0].mxu0
      %v2079 = vadd.f32 %v1798, %v2078
      %v2080 = vpop.f32.mrb[0].mxu0
      %2081 = vmatprep.mubr.bf16.mxu0 %v1092
      %2082 = vmatmul.mubr.bf16.gmra.mrb[0].mxu0 %v1091
      %v2083 = vpop.f32.mrb[0].mxu0
      %v2084 = vadd.f32 %v1803, %v2083
      %v2085 = vpop.f32.mrb[0].mxu0
      %v2086 = vpop.f32.mrb[0].mxu0
      %v2087 = vadd.f32 %v1806, %v2086
      %v2088 = vpop.f32.mrb[0].mxu0
      %2089 = vdwg.mxu0
      %2090 = vmatprep.subr.bf16.mxu0 0
      %2091 = vmatpush1.bf16.msra.mxu0 %v1394
      %2092 = vmatprep.subr.bf16.mxu0 0
      %2093 = vmatpush1.bf16.msra.mxu0 %v1395
      %2094 = vmatprep.subr.bf16.mxu0 0
      %2095 = vmatpush1.bf16.msra.mxu0 %v1396
      %2096 = vmatprep.subr.bf16.mxu0 0
      %2097 = vmatpush1.bf16.msra.mxu0 %v1397
      %2098 = vmatprep.subr.bf16.mxu0 0
      %2099 = vmatpush1.bf16.msra.mxu0 0
      %2100 = vmatprep.subr.bf16.mxu0 0
      %2101 = vmatpush1.bf16.msra.mxu0 0
      %2102 = vmatprep.subr.bf16.mxu0 0
      %2103 = vmatpush1.bf16.msra.mxu0 0
      %2104 = vmatprep.subr.bf16.mxu0 0
      %2105 = vmatpush1.bf16.msra.mxu0 0
      %2106 = vmatprep.subr.bf16.mxu0 0
      %2107 = vmatpush1.bf16.msra.mxu0 0
      %2108 = vmatprep.subr.bf16.mxu0 0
      %2109 = vmatpush1.bf16.msra.mxu0 0
      %2110 = vmatprep.subr.bf16.mxu0 0
      %2111 = vmatpush1.bf16.msra.mxu0 0
      %2112 = vmatprep.subr.bf16.mxu0 0
      %2113 = vmatpush1.bf16.msra.mxu0 0
      %2114 = vmatprep.subr.bf16.mxu0 0
      %2115 = vmatpush1.bf16.msra.mxu0 0
      %2116 = vmatprep.subr.bf16.mxu0 0
      %2117 = vmatpush1.bf16.msra.mxu0 0
      %2118 = vmatprep.subr.bf16.mxu0 0
      %2119 = vmatpush1.bf16.msra.mxu0 0
      %2120 = vmatprep.subr.bf16.mxu0 0
      %2121 = vmatpush1.bf16.msra.mxu0 0
      %2122 = vmatprep.mubr.bf16.mxu0 0
      %2123 = vmatmul.mubr.bf16.gmra.mrb[0].mxu0 %v1436
      %v2124 = vpop.f32.mrb[0].mxu0
      %v2125 = vadd.f32 %v1844, %v2124
      %v2126 = vpop.f32.mrb[0].mxu0
      %v2127 = vpop.f32.mrb[0].mxu0
      %v2128 = vadd.f32 %v1847, %v2127
      %v2129 = vpop.f32.mrb[0].mxu0
      %2130 = vmatprep.mubr.bf16.mxu0 0
      %2131 = vmatmul.mubr.bf16.gmra.mrb[0].mxu0 %v1439
      %v2132 = vpop.f32.mrb[0].mxu0
      %v2133 = vadd.f32 %v1852, %v2132
      %v2134 = vpop.f32.mrb[0].mxu0
      %v2135 = vpop.f32.mrb[0].mxu0
      %v2136 = vadd.f32 %v1855, %v2135
      %v2137 = vpop.f32.mrb[0].mxu0
      %2138 = vmatprep.mubr.bf16.mxu0 0
      %2139 = vmatmul.mubr.bf16.gmra.mrb[0].mxu0 %v1442
      %v2140 = vpop.f32.mrb[0].mxu0
      %v2141 = vadd.f32 %v1860, %v2140
      %v2142 = vpop.f32.mrb[0].mxu0
      %v2143 = vpop.f32.mrb[0].mxu0
      %v2144 = vadd.f32 %v1863, %v2143
      %v2145 = vpop.f32.mrb[0].mxu0
      %2146 = vmatprep.mubr.bf16.mxu0 0
      %2147 = vmatmul.mubr.bf16.gmra.mrb[0].mxu0 %v1445
      %v2148 = vpop.f32.mrb[0].mxu0
      %v2149 = vadd.f32 %v1868, %v2148
      %v2150 = vpop.f32.mrb[0].mxu0
      %v2151 = vpop.f32.mrb[0].mxu0
      %v2152 = vadd.f32 %v1871, %v2151
      %v2153 = vpop.f32.mrb[0].mxu0
      %2154 = vmatprep.mubr.bf16.mxu0 0
      %2155 = vmatmul.mubr.bf16.gmra.mrb[0].mxu0 %v1448
      %v2156 = vpop.f32.mrb[0].mxu0
      %v2157 = vadd.f32 %v1876, %v2156
      %v2158 = vpop.f32.mrb[0].mxu0
      %v2159 = vpop.f32.mrb[0].mxu0
      %v2160 = vadd.f32 %v1879, %v2159
      %v2161 = vpop.f32.mrb[0].mxu0
      %2162 = vmatprep.mubr.bf16.mxu0 0
      %2163 = vmatmul.mubr.bf16.gmra.mrb[0].mxu0 %v1451
      %v2164 = vpop.f32.mrb[0].mxu0
      %v2165 = vadd.f32 %v1884, %v2164
      %v2166 = vpop.f32.mrb[0].mxu0
      %v2167 = vpop.f32.mrb[0].mxu0
      %v2168 = vadd.f32 %v1887, %v2167
      %v2169 = vpop.f32.mrb[0].mxu0
      %2170 = vmatprep.mubr.bf16.mxu0 0
      %2171 = vmatmul.mubr.bf16.gmra.mrb[0].mxu0 %v1454
      %v2172 = vpop.f32.mrb[0].mxu0
      %v2173 = vadd.f32 %v1892, %v2172
      %v2174 = vpop.f32.mrb[0].mxu0
      %v2175 = vpop.f32.mrb[0].mxu0
      %v2176 = vadd.f32 %v1895, %v2175
      %v2177 = vpop.f32.mrb[0].mxu0
      %2178 = vmatprep.mubr.bf16.mxu0 0
      %2179 = vmatmul.mubr.bf16.gmra.mrb[0].mxu0 %v1457
      %v2180 = vpop.f32.mrb[0].mxu0
      %v2181 = vadd.f32 %v1900, %v2180
      %v2182 = vpop.f32.mrb[0].mxu0
      %v2183 = vpop.f32.mrb[0].mxu0
      %v2184 = vadd.f32 %v1903, %v2183
      %v2185 = vpop.f32.mrb[0].mxu0
      %2186 = vmatprep.mubr.bf16.mxu0 0
      %2187 = vmatmul.mubr.bf16.gmra.mrb[0].mxu0 %v1460
      %v2188 = vpop.f32.mrb[0].mxu0
      %v2189 = vadd.f32 %v1908, %v2188
      %v2190 = vpop.f32.mrb[0].mxu0
      %v2191 = vpop.f32.mrb[0].mxu0
      %v2192 = vadd.f32 %v1911, %v2191
      %v2193 = vpop.f32.mrb[0].mxu0
      %2194 = vmatprep.mubr.bf16.mxu0 0
      %2195 = vmatmul.mubr.bf16.gmra.mrb[0].mxu0 %v1463
      %v2196 = vpop.f32.mrb[0].mxu0
      %v2197 = vadd.f32 %v1916, %v2196
      %v2198 = vpop.f32.mrb[0].mxu0
      %v2199 = vpop.f32.mrb[0].mxu0
      %v2200 = vadd.f32 %v1919, %v2199
      %v2201 = vpop.f32.mrb[0].mxu0
      %2202 = vmatprep.mubr.bf16.mxu0 0
      %2203 = vmatmul.mubr.bf16.gmra.mrb[0].mxu0 %v1466
      %v2204 = vpop.f32.mrb[0].mxu0
      %v2205 = vadd.f32 %v1924, %v2204
      %v2206 = vpop.f32.mrb[0].mxu0
      %v2207 = vpop.f32.mrb[0].mxu0
      %v2208 = vadd.f32 %v1927, %v2207
      %v2209 = vpop.f32.mrb[0].mxu0
      %2210 = vmatprep.mubr.bf16.mxu0 0
      %2211 = vmatmul.mubr.bf16.gmra.mrb[0].mxu0 %v1469
      %v2212 = vpop.f32.mrb[0].mxu0
      %v2213 = vadd.f32 %v1932, %v2212
      %v2214 = vpop.f32.mrb[0].mxu0
      %v2215 = vpop.f32.mrb[0].mxu0
      %v2216 = vadd.f32 %v1935, %v2215
      %v2217 = vpop.f32.mrb[0].mxu0
      %2218 = vmatprep.mubr.bf16.mxu0 0
      %2219 = vmatmul.mubr.bf16.gmra.mrb[0].mxu0 %v1472
      %v2220 = vpop.f32.mrb[0].mxu0
      %v2221 = vadd.f32 %v1940, %v2220
      %v2222 = vpop.f32.mrb[0].mxu0
      %v2223 = vpop.f32.mrb[0].mxu0
      %v2224 = vadd.f32 %v1943, %v2223
      %v2225 = vpop.f32.mrb[0].mxu0
      %2226 = vmatprep.mubr.bf16.mxu0 0
      %2227 = vmatmul.mubr.bf16.gmra.mrb[0].mxu0 %v1475
      %v2228 = vpop.f32.mrb[0].mxu0
      %v2229 = vadd.f32 %v1948, %v2228
      %v2230 = vpop.f32.mrb[0].mxu0
      %v2231 = vpop.f32.mrb[0].mxu0
      %v2232 = vadd.f32 %v1951, %v2231
      %v2233 = vpop.f32.mrb[0].mxu0
      %2234 = vmatprep.mubr.bf16.mxu0 0
      %2235 = vmatmul.mubr.bf16.gmra.mrb[0].mxu0 %v1478
      %v2236 = vpop.f32.mrb[0].mxu0
      %v2237 = vadd.f32 %v1956, %v2236
      %v2238 = vpop.f32.mrb[0].mxu0
      %v2239 = vpop.f32.mrb[0].mxu0
      %v2240 = vadd.f32 %v1959, %v2239
      %v2241 = vpop.f32.mrb[0].mxu0
      %2242 = vmatprep.mubr.bf16.mxu0 0
      %2243 = vmatmul.mubr.bf16.gmra.mrb[0].mxu0 %v1481
      %v2244 = vpop.f32.mrb[0].mxu0
      %v2245 = vadd.f32 %v1964, %v2244
      %v2246 = vpop.f32.mrb[0].mxu0
      %v2247 = vpop.f32.mrb[0].mxu0
      %v2248 = vadd.f32 %v1967, %v2247
      %v2249 = vpop.f32.mrb[0].mxu0
      %2250 = vmatprep.mubr.bf16.mxu0 0
      %2251 = vmatmul.mubr.bf16.gmra.mrb[0].mxu0 %v1484
      %v2252 = vpop.f32.mrb[0].mxu0
      %v2253 = vadd.f32 %v1972, %v2252
      %v2254 = vpop.f32.mrb[0].mxu0
      %v2255 = vpop.f32.mrb[0].mxu0
      %v2256 = vadd.f32 %v1975, %v2255
      %v2257 = vpop.f32.mrb[0].mxu0
      %2258 = vmatprep.mubr.bf16.mxu0 0
      %2259 = vmatmul.mubr.bf16.gmra.mrb[0].mxu0 %v1487
      %v2260 = vpop.f32.mrb[0].mxu0
      %v2261 = vadd.f32 %v1980, %v2260
      %v2262 = vpop.f32.mrb[0].mxu0
      %v2263 = vpop.f32.mrb[0].mxu0
      %v2264 = vadd.f32 %v1983, %v2263
      %v2265 = vpop.f32.mrb[0].mxu0
      %2266 = vmatprep.mubr.bf16.mxu0 0
      %2267 = vmatmul.mubr.bf16.gmra.mrb[0].mxu0 %v1490
      %v2268 = vpop.f32.mrb[0].mxu0
      %v2269 = vadd.f32 %v1988, %v2268
      %v2270 = vpop.f32.mrb[0].mxu0
      %v2271 = vpop.f32.mrb[0].mxu0
      %v2272 = vadd.f32 %v1991, %v2271
      %v2273 = vpop.f32.mrb[0].mxu0
      %2274 = vmatprep.mubr.bf16.mxu0 0
      %2275 = vmatmul.mubr.bf16.gmra.mrb[0].mxu0 %v1493
      %v2276 = vpop.f32.mrb[0].mxu0
      %v2277 = vadd.f32 %v1996, %v2276
      %v2278 = vpop.f32.mrb[0].mxu0
      %v2279 = vpop.f32.mrb[0].mxu0
      %v2280 = vadd.f32 %v1999, %v2279
      %v2281 = vpop.f32.mrb[0].mxu0
      %2282 = vmatprep.mubr.bf16.mxu0 0
      %2283 = vmatmul.mubr.bf16.gmra.mrb[0].mxu0 %v1496
      %v2284 = vpop.f32.mrb[0].mxu0
      %v2285 = vadd.f32 %v2004, %v2284
      %v2286 = vpop.f32.mrb[0].mxu0
      %v2287 = vpop.f32.mrb[0].mxu0
      %v2288 = vadd.f32 %v2007, %v2287
      %v2289 = vpop.f32.mrb[0].mxu0
      %2290 = vmatprep.mubr.bf16.mxu0 0
      %2291 = vmatmul.mubr.bf16.gmra.mrb[0].mxu0 %v1499
      %v2292 = vpop.f32.mrb[0].mxu0
      %v2293 = vadd.f32 %v2012, %v2292
      %v2294 = vpop.f32.mrb[0].mxu0
      %v2295 = vpop.f32.mrb[0].mxu0
      %v2296 = vadd.f32 %v2015, %v2295
      %v2297 = vpop.f32.mrb[0].mxu0
      %2298 = vmatprep.mubr.bf16.mxu0 0
      %2299 = vmatmul.mubr.bf16.gmra.mrb[0].mxu0 %v1502
      %v2300 = vpop.f32.mrb[0].mxu0
      %v2301 = vadd.f32 %v2020, %v2300
      %v2302 = vpop.f32.mrb[0].mxu0
      %v2303 = vpop.f32.mrb[0].mxu0
      %v2304 = vadd.f32 %v2023, %v2303
      %v2305 = vpop.f32.mrb[0].mxu0
      %2306 = vmatprep.mubr.bf16.mxu0 0
      %2307 = vmatmul.mubr.bf16.gmra.mrb[0].mxu0 %v1505
      %v2308 = vpop.f32.mrb[0].mxu0
      %v2309 = vadd.f32 %v2028, %v2308
      %v2310 = vpop.f32.mrb[0].mxu0
      %v2311 = vpop.f32.mrb[0].mxu0
      %v2312 = vadd.f32 %v2031, %v2311
      %v2313 = vpop.f32.mrb[0].mxu0
      %2314 = vmatprep.mubr.bf16.mxu0 0
      %2315 = vmatmul.mubr.bf16.gmra.mrb[0].mxu0 %v1508
      %v2316 = vpop.f32.mrb[0].mxu0
      %v2317 = vadd.f32 %v2036, %v2316
      %v2318 = vpop.f32.mrb[0].mxu0
      %v2319 = vpop.f32.mrb[0].mxu0
      %v2320 = vadd.f32 %v2039, %v2319
      %v2321 = vpop.f32.mrb[0].mxu0
      %2322 = vmatprep.mubr.bf16.mxu0 0
      %2323 = vmatmul.mubr.bf16.gmra.mrb[0].mxu0 %v1511
      %v2324 = vpop.f32.mrb[0].mxu0
      %v2325 = vadd.f32 %v2044, %v2324
      %v2326 = vpop.f32.mrb[0].mxu0
      %v2327 = vpop.f32.mrb[0].mxu0
      %v2328 = vadd.f32 %v2047, %v2327
      %v2329 = vpop.f32.mrb[0].mxu0
      %2330 = vmatprep.mubr.bf16.mxu0 0
      %2331 = vmatmul.mubr.bf16.gmra.mrb[0].mxu0 %v1514
      %v2332 = vpop.f32.mrb[0].mxu0
      %v2333 = vadd.f32 %v2052, %v2332
      %v2334 = vpop.f32.mrb[0].mxu0
      %v2335 = vpop.f32.mrb[0].mxu0
      %v2336 = vadd.f32 %v2055, %v2335
      %v2337 = vpop.f32.mrb[0].mxu0
      %2338 = vmatprep.mubr.bf16.mxu0 0
      %2339 = vmatmul.mubr.bf16.gmra.mrb[0].mxu0 %v1517
      %v2340 = vpop.f32.mrb[0].mxu0
      %v2341 = vadd.f32 %v2060, %v2340
      %v2342 = vpop.f32.mrb[0].mxu0
      %v2343 = vpop.f32.mrb[0].mxu0
      %v2344 = vadd.f32 %v2063, %v2343
      %v2345 = vpop.f32.mrb[0].mxu0
      %2346 = vmatprep.mubr.bf16.mxu0 0
      %2347 = vmatmul.mubr.bf16.gmra.mrb[0].mxu0 %v1520
      %v2348 = vpop.f32.mrb[0].mxu0
      %v2349 = vadd.f32 %v2068, %v2348
      %v2350 = vpop.f32.mrb[0].mxu0
      %v2351 = vpop.f32.mrb[0].mxu0
      %v2352 = vadd.f32 %v2071, %v2351
      %v2353 = vpop.f32.mrb[0].mxu0
      %2354 = vmatprep.mubr.bf16.mxu0 0
      %2355 = vmatmul.mubr.bf16.gmra.mrb[0].mxu0 %v1523
      %v2356 = vpop.f32.mrb[0].mxu0
      %v2357 = vadd.f32 %v2076, %v2356
      %v2358 = vpop.f32.mrb[0].mxu0
      %v2359 = vpop.f32.mrb[0].mxu0
      %v2360 = vadd.f32 %v2079, %v2359
      %v2361 = vpop.f32.mrb[0].mxu0
      %2362 = vmatprep.mubr.bf16.mxu0 0
      %2363 = vmatmul.mubr.bf16.gmra.mrb[0].mxu0 %v1526
      %v2364 = vpop.f32.mrb[0].mxu0
      %v2365 = vadd.f32 %v2084, %v2364
      %v2366 = vpop.f32.mrb[0].mxu0
      %v2367 = vpop.f32.mrb[0].mxu0
      %v2368 = vadd.f32 %v2087, %v2367
      %v2369 = vpop.f32.mrb[0].mxu0
      %2370 = vdwg.mxu0
      %vm2371 = vcmp.gt.f32.partialorder %v2125, 0.0
      %vm2372 = vcmp.gt.f32.partialorder %v2128, 0.0
      %vm2373 = vcmp.gt.f32.partialorder %v2133, 0.0
      %vm2374 = vcmp.gt.f32.partialorder %v2136, 0.0
      %vm2375 = vcmp.gt.f32.partialorder %v2141, 0.0
      %vm2376 = vcmp.gt.f32.partialorder %v2144, 0.0
      %vm2377 = vcmp.gt.f32.partialorder %v2149, 0.0
      %vm2378 = vcmp.gt.f32.partialorder %v2152, 0.0
      %vm2379 = vcmp.gt.f32.partialorder %v2157, 0.0
      %vm2380 = vcmp.gt.f32.partialorder %v2160, 0.0
      %vm2381 = vcmp.gt.f32.partialorder %v2165, 0.0
      %vm2382 = vcmp.gt.f32.partialorder %v2168, 0.0
      %vm2383 = vcmp.gt.f32.partialorder %v2173, 0.0
      %vm2384 = vcmp.gt.f32.partialorder %v2176, 0.0
      %vm2385 = vcmp.gt.f32.partialorder %v2181, 0.0
      %vm2386 = vcmp.gt.f32.partialorder %v2184, 0.0
      %vm2387 = vcmp.gt.f32.partialorder %v2189, 0.0
      %vm2388 = vcmp.gt.f32.partialorder %v2192, 0.0
      %vm2389 = vcmp.gt.f32.partialorder %v2197, 0.0
      %vm2390 = vcmp.gt.f32.partialorder %v2200, 0.0
      %vm2391 = vcmp.gt.f32.partialorder %v2205, 0.0
      %vm2392 = vcmp.gt.f32.partialorder %v2208, 0.0
      %vm2393 = vcmp.gt.f32.partialorder %v2213, 0.0
      %vm2394 = vcmp.gt.f32.partialorder %v2216, 0.0
      %vm2395 = vcmp.gt.f32.partialorder %v2221, 0.0
      %vm2396 = vcmp.gt.f32.partialorder %v2224, 0.0
      %vm2397 = vcmp.gt.f32.partialorder %v2229, 0.0
      %vm2398 = vcmp.gt.f32.partialorder %v2232, 0.0
      %vm2399 = vcmp.gt.f32.partialorder %v2237, 0.0
      %vm2400 = vcmp.gt.f32.partialorder %v2240, 0.0
      %vm2401 = vcmp.gt.f32.partialorder %v2245, 0.0
      %vm2402 = vcmp.gt.f32.partialorder %v2248, 0.0
      %vm2403 = vcmp.gt.f32.partialorder %v2253, 0.0
      %vm2404 = vcmp.gt.f32.partialorder %v2256, 0.0
      %vm2405 = vcmp.gt.f32.partialorder %v2261, 0.0
      %vm2406 = vcmp.gt.f32.partialorder %v2264, 0.0
      %vm2407 = vcmp.gt.f32.partialorder %v2269, 0.0
      %vm2408 = vcmp.gt.f32.partialorder %v2272, 0.0
      %vm2409 = vcmp.gt.f32.partialorder %v2277, 0.0
      %vm2410 = vcmp.gt.f32.partialorder %v2280, 0.0
      %vm2411 = vcmp.gt.f32.partialorder %v2285, 0.0
      %vm2412 = vcmp.gt.f32.partialorder %v2288, 0.0
      %vm2413 = vcmp.gt.f32.partialorder %v2293, 0.0
      %vm2414 = vcmp.gt.f32.partialorder %v2296, 0.0
      %vm2415 = vcmp.gt.f32.partialorder %v2301, 0.0
      %vm2416 = vcmp.gt.f32.partialorder %v2304, 0.0
      %vm2417 = vcmp.gt.f32.partialorder %v2309, 0.0
      %vm2418 = vcmp.gt.f32.partialorder %v2312, 0.0
      %vm2419 = vcmp.gt.f32.partialorder %v2317, 0.0
      %vm2420 = vcmp.gt.f32.partialorder %v2320, 0.0
      %vm2421 = vcmp.gt.f32.partialorder %v2325, 0.0
      %vm2422 = vcmp.gt.f32.partialorder %v2328, 0.0
      %vm2423 = vcmp.gt.f32.partialorder %v2333, 0.0
      %vm2424 = vcmp.gt.f32.partialorder %v2336, 0.0
      %vm2425 = vcmp.gt.f32.partialorder %v2341, 0.0
      %vm2426 = vcmp.gt.f32.partialorder %v2344, 0.0
      %vm2427 = vcmp.gt.f32.partialorder %v2349, 0.0
      %vm2428 = vcmp.gt.f32.partialorder %v2352, 0.0
      %vm2429 = vcmp.gt.f32.partialorder %v2357, 0.0
      %vm2430 = vcmp.gt.f32.partialorder %v2360, 0.0
      %vm2431 = vcmp.gt.f32.partialorder %v2365, 0.0
      %vm2432 = vcmp.gt.f32.partialorder %v2368, 0.0
      %v2433 = vmul.f32 %v2125, 0.01
      %v2434 = vmul.f32 %v2128, 0.01
      %v2435 = vmul.f32 %v2133, 0.01
      %v2436 = vmul.f32 %v2136, 0.01
      %v2437 = vmul.f32 %v2141, 0.01
      %v2438 = vmul.f32 %v2144, 0.01
      %v2439 = vmul.f32 %v2149, 0.01
      %v2440 = vmul.f32 %v2152, 0.01
      %v2441 = vmul.f32 %v2157, 0.01
      %v2442 = vmul.f32 %v2160, 0.01
      %v2443 = vmul.f32 %v2165, 0.01
      %v2444 = vmul.f32 %v2168, 0.01
      %v2445 = vmul.f32 %v2173, 0.01
      %v2446 = vmul.f32 %v2176, 0.01
      %v2447 = vmul.f32 %v2181, 0.01
      %v2448 = vmul.f32 %v2184, 0.01
      %v2449 = vmul.f32 %v2189, 0.01
      %v2450 = vmul.f32 %v2192, 0.01
      %v2451 = vmul.f32 %v2197, 0.01
      %v2452 = vmul.f32 %v2200, 0.01
      %v2453 = vmul.f32 %v2205, 0.01
      %v2454 = vmul.f32 %v2208, 0.01
      %v2455 = vmul.f32 %v2213, 0.01
      %v2456 = vmul.f32 %v2216, 0.01
      %v2457 = vmul.f32 %v2221, 0.01
      %v2458 = vmul.f32 %v2224, 0.01
      %v2459 = vmul.f32 %v2229, 0.01
      %v2460 = vmul.f32 %v2232, 0.01
      %v2461 = vmul.f32 %v2237, 0.01
      %v2462 = vmul.f32 %v2240, 0.01
      %v2463 = vmul.f32 %v2245, 0.01
      %v2464 = vmul.f32 %v2248, 0.01
      %v2465 = vmul.f32 %v2253, 0.01
      %v2466 = vmul.f32 %v2256, 0.01
      %v2467 = vmul.f32 %v2261, 0.01
      %v2468 = vmul.f32 %v2264, 0.01
      %v2469 = vmul.f32 %v2269, 0.01
      %v2470 = vmul.f32 %v2272, 0.01
      %v2471 = vmul.f32 %v2277, 0.01
      %v2472 = vmul.f32 %v2280, 0.01
      %v2473 = vmul.f32 %v2285, 0.01
      %v2474 = vmul.f32 %v2288, 0.01
      %v2475 = vmul.f32 %v2293, 0.01
      %v2476 = vmul.f32 %v2296, 0.01
      %v2477 = vmul.f32 %v2301, 0.01
      %v2478 = vmul.f32 %v2304, 0.01
      %v2479 = vmul.f32 %v2309, 0.01
      %v2480 = vmul.f32 %v2312, 0.01
      %v2481 = vmul.f32 %v2317, 0.01
      %v2482 = vmul.f32 %v2320, 0.01
      %v2483 = vmul.f32 %v2325, 0.01
      %v2484 = vmul.f32 %v2328, 0.01
      %v2485 = vmul.f32 %v2333, 0.01
      %v2486 = vmul.f32 %v2336, 0.01
      %v2487 = vmul.f32 %v2341, 0.01
      %v2488 = vmul.f32 %v2344, 0.01
      %v2489 = vmul.f32 %v2349, 0.01
      %v2490 = vmul.f32 %v2352, 0.01
      %v2491 = vmul.f32 %v2357, 0.01
      %v2492 = vmul.f32 %v2360, 0.01
      %v2493 = vmul.f32 %v2365, 0.01
      %v2494 = vmul.f32 %v2368, 0.01
      %v2495 = vsel %vm2371, %v2125, %v2433
      %v2496 = vsel %vm2372, %v2128, %v2434
      %v2497 = vsel %vm2373, %v2133, %v2435
      %v2498 = vsel %vm2374, %v2136, %v2436
      %v2499 = vsel %vm2375, %v2141, %v2437
      %v2500 = vsel %vm2376, %v2144, %v2438
      %v2501 = vsel %vm2377, %v2149, %v2439
      %v2502 = vsel %vm2378, %v2152, %v2440
      %v2503 = vsel %vm2379, %v2157, %v2441
      %v2504 = vsel %vm2380, %v2160, %v2442
      %v2505 = vsel %vm2381, %v2165, %v2443
      %v2506 = vsel %vm2382, %v2168, %v2444
      %v2507 = vsel %vm2383, %v2173, %v2445
      %v2508 = vsel %vm2384, %v2176, %v2446
      %v2509 = vsel %vm2385, %v2181, %v2447
      %v2510 = vsel %vm2386, %v2184, %v2448
      %v2511 = vsel %vm2387, %v2189, %v2449
      %v2512 = vsel %vm2388, %v2192, %v2450
      %v2513 = vsel %vm2389, %v2197, %v2451
      %v2514 = vsel %vm2390, %v2200, %v2452
      %v2515 = vsel %vm2391, %v2205, %v2453
      %v2516 = vsel %vm2392, %v2208, %v2454
      %v2517 = vsel %vm2393, %v2213, %v2455
      %v2518 = vsel %vm2394, %v2216, %v2456
      %v2519 = vsel %vm2395, %v2221, %v2457
      %v2520 = vsel %vm2396, %v2224, %v2458
      %v2521 = vsel %vm2397, %v2229, %v2459
      %v2522 = vsel %vm2398, %v2232, %v2460
      %v2523 = vsel %vm2399, %v2237, %v2461
      %v2524 = vsel %vm2400, %v2240, %v2462
      %v2525 = vsel %vm2401, %v2245, %v2463
      %v2526 = vsel %vm2402, %v2248, %v2464
      %v2527 = vsel %vm2403, %v2253, %v2465
      %v2528 = vsel %vm2404, %v2256, %v2466
      %v2529 = vsel %vm2405, %v2261, %v2467
      %v2530 = vsel %vm2406, %v2264, %v2468
      %v2531 = vsel %vm2407, %v2269, %v2469
      %v2532 = vsel %vm2408, %v2272, %v2470
      %v2533 = vsel %vm2409, %v2277, %v2471
      %v2534 = vsel %vm2410, %v2280, %v2472
      %v2535 = vsel %vm2411, %v2285, %v2473
      %v2536 = vsel %vm2412, %v2288, %v2474
      %v2537 = vsel %vm2413, %v2293, %v2475
      %v2538 = vsel %vm2414, %v2296, %v2476
      %v2539 = vsel %vm2415, %v2301, %v2477
      %v2540 = vsel %vm2416, %v2304, %v2478
      %v2541 = vsel %vm2417, %v2309, %v2479
      %v2542 = vsel %vm2418, %v2312, %v2480
      %v2543 = vsel %vm2419, %v2317, %v2481
      %v2544 = vsel %vm2420, %v2320, %v2482
      %v2545 = vsel %vm2421, %v2325, %v2483
      %v2546 = vsel %vm2422, %v2328, %v2484
      %v2547 = vsel %vm2423, %v2333, %v2485
      %v2548 = vsel %vm2424, %v2336, %v2486
      %v2549 = vsel %vm2425, %v2341, %v2487
      %v2550 = vsel %vm2426, %v2344, %v2488
      %v2551 = vsel %vm2427, %v2349, %v2489
      %v2552 = vsel %vm2428, %v2352, %v2490
      %v2553 = vsel %vm2429, %v2357, %v2491
      %v2554 = vsel %vm2430, %v2360, %v2492
      %v2555 = vsel %vm2431, %v2365, %v2493
      %v2556 = vsel %vm2432, %v2368, %v2494
      %vm2557 = vcmask 261120
      %2558 = vst.msk [vmem:[%s175] sm:$0xff] %vm2557, %v2495
      %2559 = vst.msk [vmem:[%s175 + $0x8] sm:$0xff] %vm2557, %v2496
      %2560 = vst.msk [vmem:[%s175 + $0x10] sm:$0xff] %vm2557, %v2497
      %2561 = vst.msk [vmem:[%s175 + $0x18] sm:$0xff] %vm2557, %v2498
      %2562 = vst.msk [vmem:[%s175 + $0x20] sm:$0xff] %vm2557, %v2499
      %2563 = vst.msk [vmem:[%s175 + $0x28] sm:$0xff] %vm2557, %v2500
      %2564 = vst.msk [vmem:[%s175 + $0x30] sm:$0xff] %vm2557, %v2501
      %2565 = vst.msk [vmem:[%s175 + $0x38] sm:$0xff] %vm2557, %v2502
      %2566 = vst.msk [vmem:[%s175 + $0x40] sm:$0xff] %vm2557, %v2503
      %2567 = vst.msk [vmem:[%s175 + $0x48] sm:$0xff] %vm2557, %v2504
      %2568 = vst.msk [vmem:[%s175 + $0x50] sm:$0xff] %vm2557, %v2505
      %2569 = vst.msk [vmem:[%s175 + $0x58] sm:$0xff] %vm2557, %v2506
      %2570 = vst.msk [vmem:[%s175 + $0x60] sm:$0xff] %vm2557, %v2507
      %2571 = vst.msk [vmem:[%s175 + $0x68] sm:$0xff] %vm2557, %v2508
      %2572 = vst.msk [vmem:[%s175 + $0x70] sm:$0xff] %vm2557, %v2509
      %2573 = vst.msk [vmem:[%s175 + $0x78] sm:$0xff] %vm2557, %v2510
      %2574 = vst.msk [vmem:[%s175 + $0x80] sm:$0xff] %vm2557, %v2511
      %2575 = vst.msk [vmem:[%s175 + $0x88] sm:$0xff] %vm2557, %v2512
      %2576 = vst.msk [vmem:[%s175 + $0x90] sm:$0xff] %vm2557, %v2513
      %2577 = vst.msk [vmem:[%s175 + $0x98] sm:$0xff] %vm2557, %v2514
      %2578 = vst.msk [vmem:[%s175 + $0xa0] sm:$0xff] %vm2557, %v2515
      %2579 = vst.msk [vmem:[%s175 + $0xa8] sm:$0xff] %vm2557, %v2516
      %2580 = vst.msk [vmem:[%s175 + $0xb0] sm:$0xff] %vm2557, %v2517
      %2581 = vst.msk [vmem:[%s175 + $0xb8] sm:$0xff] %vm2557, %v2518
      %2582 = vst.msk [vmem:[%s175 + $0xc0] sm:$0xff] %vm2557, %v2519
      %2583 = vst.msk [vmem:[%s175 + $0xc8] sm:$0xff] %vm2557, %v2520
      %2584 = vst.msk [vmem:[%s175 + $0xd0] sm:$0xff] %vm2557, %v2521
      %2585 = vst.msk [vmem:[%s175 + $0xd8] sm:$0xff] %vm2557, %v2522
      %2586 = vst.msk [vmem:[%s175 + $0xe0] sm:$0xff] %vm2557, %v2523
      %2587 = vst.msk [vmem:[%s175 + $0xe8] sm:$0xff] %vm2557, %v2524
      %2588 = vst.msk [vmem:[%s175 + $0xf0] sm:$0xff] %vm2557, %v2525
      %2589 = vst.msk [vmem:[%s175 + $0xf8] sm:$0xff] %vm2557, %v2526
      %2590 = vst.msk [vmem:[%s175 + $0x100] sm:$0xff] %vm2557, %v2527
      %2591 = vst.msk [vmem:[%s175 + $0x108] sm:$0xff] %vm2557, %v2528
      %2592 = vst.msk [vmem:[%s175 + $0x110] sm:$0xff] %vm2557, %v2529
      %2593 = vst.msk [vmem:[%s175 + $0x118] sm:$0xff] %vm2557, %v2530
      %2594 = vst.msk [vmem:[%s175 + $0x120] sm:$0xff] %vm2557, %v2531
      %2595 = vst.msk [vmem:[%s175 + $0x128] sm:$0xff] %vm2557, %v2532
      %2596 = vst.msk [vmem:[%s175 + $0x130] sm:$0xff] %vm2557, %v2533
      %2597 = vst.msk [vmem:[%s175 + $0x138] sm:$0xff] %vm2557, %v2534
      %2598 = vst.msk [vmem:[%s175 + $0x140] sm:$0xff] %vm2557, %v2535
      %2599 = vst.msk [vmem:[%s175 + $0x148] sm:$0xff] %vm2557, %v2536
      %2600 = vst.msk [vmem:[%s175 + $0x150] sm:$0xff] %vm2557, %v2537
      %2601 = vst.msk [vmem:[%s175 + $0x158] sm:$0xff] %vm2557, %v2538
      %2602 = vst.msk [vmem:[%s175 + $0x160] sm:$0xff] %vm2557, %v2539
      %2603 = vst.msk [vmem:[%s175 + $0x168] sm:$0xff] %vm2557, %v2540
      %2604 = vst.msk [vmem:[%s175 + $0x170] sm:$0xff] %vm2557, %v2541
      %2605 = vst.msk [vmem:[%s175 + $0x178] sm:$0xff] %vm2557, %v2542
      %2606 = vst.msk [vmem:[%s175 + $0x180] sm:$0xff] %vm2557, %v2543
      %2607 = vst.msk [vmem:[%s175 + $0x188] sm:$0xff] %vm2557, %v2544
      %2608 = vst.msk [vmem:[%s175 + $0x190] sm:$0xff] %vm2557, %v2545
      %2609 = vst.msk [vmem:[%s175 + $0x198] sm:$0xff] %vm2557, %v2546
      %2610 = vst.msk [vmem:[%s175 + $0x1a0] sm:$0xff] %vm2557, %v2547
      %2611 = vst.msk [vmem:[%s175 + $0x1a8] sm:$0xff] %vm2557, %v2548
      %2612 = vst.msk [vmem:[%s175 + $0x1b0] sm:$0xff] %vm2557, %v2549
      %2613 = vst.msk [vmem:[%s175 + $0x1b8] sm:$0xff] %vm2557, %v2550
      %2614 = vst.msk [vmem:[%s175 + $0x1c0] sm:$0xff] %vm2557, %v2551
      %2615 = vst.msk [vmem:[%s175 + $0x1c8] sm:$0xff] %vm2557, %v2552
      %2616 = vst.msk [vmem:[%s175 + $0x1d0] sm:$0xff] %vm2557, %v2553
      %2617 = vst.msk [vmem:[%s175 + $0x1d8] sm:$0xff] %vm2557, %v2554
      %2618 = vst.msk [vmem:[%s175 + $0x1e0] sm:$0xff] %vm2557, %v2555
      %2619 = vst.msk [vmem:[%s175 + $0x1e8] sm:$0xff] %vm2557, %v2556
      %s2620 = smul.u32 62, %s14
      %p2621 = scmp.lt.s32.totalorder %s2620, 185
      %s2622 = scalar_select %p2621, %s2620, 185
      %s2623 = smul.addr %s2622, 8
      %s2624 = scalar_lea.vmem %s3, %s2623
      // Predicated region
      $region33: #{vae_forward.16} parent=31 // pred_check
        %p2625 = pneg %p100
      $region34: #{vae_forward.16} parent=31 // pred_check_branch
        %2627 = sbr.rel (%p2625) target = $region36
      $region35: #{vae_forward.16} parent=31 // pred_region
        %s2628 = smul.u32 62, %s14
      $region36: #{vae_forward.16} parent=31 // pred_fallthru
        _
    $region32: #{vae_forward.16} parent=5 // pred_fallthru
      _
    %p2629 = scmp.le.s32.totalorder 2, %s9
    // Predicated region
    $region37: #{vae_forward.16} parent=5 // pred_check
      %p2630 = pneg %p2629
    $region38: #{vae_forward.16} parent=5 // pred_check_branch
      %2632 = sbr.rel (%p2630) target = $region40
    $region39: #{vae_forward.16} parent=5 // pred_region
      %s2633 = ssub.s32 %s9, 2
      // Predicated region
      $region41: #{vae_forward.16} parent=39 // pred_check
        %p2634 = pneg %p106
      $region42: #{vae_forward.16} parent=39 // pred_check_branch
        %2636 = sbr.rel (%p2634) target = $region44
      $region43: #{vae_forward.16} parent=39 // pred_region
        %s2637 = smul.u32 62, %s15
        %p2638 = scmp.lt.s32.totalorder %s2637, 185
        %s2639 = scalar_select %p2638, %s2637, 185
        %s2640 = smul.addr %s2639, 8
        %s2641 = scalar_lea.vmem %s3, %s2640
      $region44: #{vae_forward.16} parent=39 // pred_fallthru
        _
    $region40: #{vae_forward.16} parent=5 // pred_fallthru
      _
  $region6: #{vae_forward.16} parent=0 // loop_footer
    %s13 = sadd.s32 1, %s9
  $region7: #{vae_forward.16} parent=0 // loop_footer_branch
    %8 = sbr.rel target = $region3
  $region8: #{vae_forward.16} parent=0 // loop_exit
    _

// kernel: vae_forward.17
$region0: #{vae_forward.17}
  #allocation0 [shape = 'u32[]', space=smem, size = 0x4, offset = 0x4, fixed_abs, tag = 'smem constant byte address 0x4 - core index']
  #allocation1 [shape = 'u32[144,128]{1,0:T(1,128)}', space=vmem, size = 0x12000, scoped, tag = 'internal scratch']
  #allocation2 [shape = 'f32[1,1]{1,0:T(1,128)S(1)}', space=vmem, size = 0x200, scoped, tag = 'scoped memory for vae_forward.17']
  %s0 = inlined_call_operand.vmem [shape: bf16[1728,288], index: 0, kind: input, shape index: {}]
  %s1 = inlined_call_operand.vmem [shape: bf16[288,1], index: 1, kind: input, shape index: {}]
  %s2 = inlined_call_operand.<no memory space> [shape: f32[1,1], index: 2, kind: input, shape index: {}]
  %s3 = inlined_call_operand.vmem [shape: f32[1728,1], index: 3, kind: output, shape index: {}]
  %s4 = sld [smem:[#allocation0]]
  $region45: #{vae_forward.17} parent=0
    _
  %s6 = ssub.s32 1, %s4
  %s7 = scalar_select 0, %s6, %s4
  %v8 = vstv %s2
  %9 = vst [vmem:[#allocation2] sm:$0x1] %v8
  loop: start=0, step=1, limit=6
  $region2: #{vae_forward.17} parent=0 // loop_pre_header
    _
  $region3: #{vae_forward.17} parent=0 // loop_header
    %s11 = sphi 0, %s15
    %p12 = scmp.ge.s32.totalorder %s11, 6
    %s21 = sphi 0, %s23
    %s24 = sphi 0, %s21
    %s25 = sphi 0, %s24
    %s41 = sphi 0, %s25
    %s45 = sphi 0, %s45
    %s47 = sphi 0, %s45
    %s48 = sphi 0, %s47
    %s62 = sphi 0, %s48
    %s66 = sphi 0, %s66
    %s68 = sphi 0, %s66
    %s69 = sphi 0, %s68
    %s83 = sphi 0, %s69
    %s89 = sphi 0, %s91
    %s92 = sphi 0, %s89
    %s93 = sphi 0, %s92
    %s109 = sphi 0, %s93
  $region4: #{vae_forward.17} parent=0 // loop_header_branch
    %14 = sbr.rel (%p12) target = $region8
  $region5: #{vae_forward.17} parent=0 // loop_body
    %s16 = ssub.s32 %s11, 1
    %s17 = ssub.s32 %s11, 2
    %s18 = sadd.s32 %s11, 1
    %s19 = ssub.s32 %s11, %s18
    %p20 = scmp.eq.s32.totalorder %s19, 0
    %s22 = sadd.s32 %s21, 1
    %s23 = scalar_select %p20, %s21, %s22
    %p26 = pneg %p20
    %p27 = scmp.eq.s32.totalorder %s11, 3
    %p28 = por %p26, %p27
    %p29 = scmp.ne.s32.totalorder %s21, %s24
    %p30 = scmp.eq.s32.totalorder %s11, 0
    %p31 = por %p29, %p30
    %p32 = scmp.ne.s32.totalorder %s21, %s24
    %p33 = scmp.eq.s32.totalorder %s16, 3
    %p34 = por %p32, %p33
    %p35 = scmp.ne.s32.totalorder %s24, %s25
    %p36 = scmp.eq.s32.totalorder %s16, 0
    %p37 = por %p35, %p36
    %p38 = scmp.ne.s32.totalorder %s24, %s25
    %p39 = scmp.eq.s32.totalorder %s17, 3
    %p40 = por %p38, %p39
    %p42 = scmp.ne.s32.totalorder %s25, %s41
    %p43 = scmp.eq.s32.totalorder %s17, 0
    %p44 = por %p42, %p43
    %s46 = sadd.s32 %s45, 1
    %p49 = scmp.eq.s32.totalorder %s11, 3
    %p50 = scmp.ne.s32.totalorder %s45, %s47
    %p51 = scmp.eq.s32.totalorder %s11, 0
    %p52 = por %p50, %p51
    %p53 = scmp.ne.s32.totalorder %s45, %s47
    %p54 = scmp.eq.s32.totalorder %s16, 3
    %p55 = por %p53, %p54
    %p56 = scmp.ne.s32.totalorder %s47, %s48
    %p57 = scmp.eq.s32.totalorder %s16, 0
    %p58 = por %p56, %p57
    %p59 = scmp.ne.s32.totalorder %s47, %s48
    %p60 = scmp.eq.s32.totalorder %s17, 3
    %p61 = por %p59, %p60
    %p63 = scmp.ne.s32.totalorder %s48, %s62
    %p64 = scmp.eq.s32.totalorder %s17, 0
    %p65 = por %p63, %p64
    %s67 = sadd.s32 %s66, 1
    %p70 = scmp.eq.s32.totalorder %s11, 3
    %p71 = scmp.ne.s32.totalorder %s66, %s68
    %p72 = scmp.eq.s32.totalorder %s11, 0
    %p73 = por %p71, %p72
    %p74 = scmp.ne.s32.totalorder %s66, %s68
    %p75 = scmp.eq.s32.totalorder %s16, 3
    %p76 = por %p74, %p75
    %p77 = scmp.ne.s32.totalorder %s68, %s69
    %p78 = scmp.eq.s32.totalorder %s16, 0
    %p79 = por %p77, %p78
    %p80 = scmp.ne.s32.totalorder %s68, %s69
    %p81 = scmp.eq.s32.totalorder %s17, 3
    %p82 = por %p80, %p81
    %p84 = scmp.ne.s32.totalorder %s69, %s83
    %p85 = scmp.eq.s32.totalorder %s17, 0
    %p86 = por %p84, %p85
    %s87 = ssub.s32 %s11, %s18
    %p88 = scmp.eq.s32.totalorder %s87, 0
    %s90 = sadd.s32 %s89, 1
    %s91 = scalar_select %p88, %s89, %s90
    %p94 = pneg %p88
    %p95 = scmp.eq.s32.totalorder %s11, 3
    %p96 = por %p94, %p95
    %p97 = scmp.ne.s32.totalorder %s89, %s92
    %p98 = scmp.eq.s32.totalorder %s11, 0
    %p99 = por %p97, %p98
    %p100 = scmp.ne.s32.totalorder %s89, %s92
    %p101 = scmp.eq.s32.totalorder %s16, 3
    %p102 = por %p100, %p101
    %p103 = scmp.ne.s32.totalorder %s92, %s93
    %p104 = scmp.eq.s32.totalorder %s16, 0
    %p105 = por %p103, %p104
    %p106 = scmp.ne.s32.totalorder %s92, %s93
    %p107 = scmp.eq.s32.totalorder %s17, 3
    %p108 = por %p106, %p107
    %p110 = scmp.ne.s32.totalorder %s93, %s109
    %p111 = scmp.eq.s32.totalorder %s17, 0
    %p112 = por %p110, %p111
    %p113 = scmp.le.s32.totalorder 1, %s11
    %p114 = scmp.lt.s32.totalorder %s11, 5
    %p115 = pnand %p113, %p114
    %p116 = pneg %p115
    // Predicated region
    $region9: #{vae_forward.17} parent=5 // pred_check
      _
    $region10: #{vae_forward.17} parent=5 // pred_check_branch
      %118 = sbr.rel (%p115) target = $region12
    $region11: #{vae_forward.17} parent=5 // pred_region
      %s119 = ssub.s32 %s11, 1
      // Predicated region
      $region13: #{vae_forward.17} parent=11 // pred_check
        %p120 = pneg %p58
      $region14: #{vae_forward.17} parent=11 // pred_check_branch
        %122 = sbr.rel (%p120) target = $region16
      $region15: #{vae_forward.17} parent=11 // pred_region
        _
      $region16: #{vae_forward.17} parent=11 // pred_fallthru
        _
      // Predicated region
      $region17: #{vae_forward.17} parent=11 // pred_check
        %p123 = pneg %p79
      $region18: #{vae_forward.17} parent=11 // pred_check_branch
        %125 = sbr.rel (%p123) target = $region20
      $region19: #{vae_forward.17} parent=11 // pred_region
        _
      $region20: #{vae_forward.17} parent=11 // pred_fallthru
        _
    $region12: #{vae_forward.17} parent=5 // pred_fallthru
      _
    %p126 = scmp.lt.s32.totalorder %s11, 4
    // Predicated region
    $region21: #{vae_forward.17} parent=5 // pred_check
      %p127 = pneg %p126
    $region22: #{vae_forward.17} parent=5 // pred_check_branch
      %129 = sbr.rel (%p127) target = $region24
    $region23: #{vae_forward.17} parent=5 // pred_region
      // Predicated region
      $region25: #{vae_forward.17} parent=23 // pred_check
        %p130 = pneg %p31
      $region26: #{vae_forward.17} parent=23 // pred_check_branch
        %132 = sbr.rel (%p130) target = $region28
      $region27: #{vae_forward.17} parent=23 // pred_region
        %s133 = smul.u32 54, %s11
        %p134 = scmp.lt.s32.totalorder %s133, 215
        %s135 = scalar_select %p134, %s133, 215
        %s136 = smul.addr %s135, 3
        %s137 = smul.addr %s136, 4
        %s138 = scalar_lea.vmem %s0, %s137
        %s139 = smul.u32 54, %s11
      $region28: #{vae_forward.17} parent=23 // pred_fallthru
        _
    $region24: #{vae_forward.17} parent=5 // pred_fallthru
      _
    %p140 = scmp.le.s32.totalorder 1, %s11
    %p141 = scmp.lt.s32.totalorder %s11, 5
    %p142 = pnand %p140, %p141
    %p143 = pneg %p142
    // Predicated region
    $region29: #{vae_forward.17} parent=5 // pred_check
      _
    $region30: #{vae_forward.17} parent=5 // pred_check_branch
      %145 = sbr.rel (%p142) target = $region32
    $region31: #{vae_forward.17} parent=5 // pred_region
      %s146 = ssub.s32 %s11, 1
      %s147 = smul.u32 54, %s16
      %p148 = scmp.lt.s32.totalorder %s147, 215
      %s149 = scalar_select %p148, %s147, 215
      %s150 = smul.addr %s149, 3
      %s151 = smul.addr %s150, 4
      %s152 = scalar_lea.vmem %s0, %s151
      %p153 = pneg %p37
      %p154 = pneg %p34
      %p155 = pneg %p58
      %p156 = pneg %p55
      %p157 = pneg %p79
      %p158 = pneg %p76
      %p159 = pneg %p105
      %p160 = pneg %p102
      %s161 = smul.u32 54, %s16
      %p162 = scmp.lt.s32.totalorder %s161, 215
      %s163 = scalar_select %p162, %s161, 215
      %s164 = smul.addr %s163, 8
      %s165 = scalar_lea.vmem %s3, %s164
      %s166 = smul.u32 54, %s16
      %p167 = scmp.lt.s32.totalorder %s166, 215
      %s168 = scalar_select %p167, %s166, 215
      %s169 = smul.addr %s168, 3
      %s170 = smul.addr %s169, 4
      %s171 = scalar_lea.vmem %s0, %s170
      %s172 = smul.u32 54, %s16
      %s173 = smul.u32 54, %s16
      %p174 = scmp.lt.s32.totalorder %s173, 215
      %s175 = scalar_select %p174, %s173, 215
      %s176 = smul.addr %s175, 8
      %s177 = scalar_lea.vmem %s3, %s176
      %s178 = smul.u32 54, %s16
      %v180 = vld [vmem:[%s171] sm:$0xff]
      %v181 = vld [vmem:[%s171 + $0x8] sm:$0xf]
      %v182 = vld [vmem:[%s171 + $0xc] sm:$0xff]
      %v183 = vld [vmem:[%s171 + $0x14] sm:$0xf]
      %v184 = vld [vmem:[%s171 + $0x18] sm:$0xff]
      %v185 = vld [vmem:[%s171 + $0x20] sm:$0xf]
      %v186 = vld [vmem:[%s171 + $0x24] sm:$0xff]
      %v187 = vld [vmem:[%s171 + $0x2c] sm:$0xf]
      %v188 = vld [vmem:[%s171 + $0x30] sm:$0xff]
      %v189 = vld [vmem:[%s171 + $0x38] sm:$0xf]
      %v190 = vld [vmem:[%s171 + $0x3c] sm:$0xff]
      %v191 = vld [vmem:[%s171 + $0x44] sm:$0xf]
      %v192 = vld [vmem:[%s171 + $0x48] sm:$0xff]
      %v193 = vld [vmem:[%s171 + $0x50] sm:$0xf]
      %v194 = vld [vmem:[%s171 + $0x54] sm:$0xff]
      %v195 = vld [vmem:[%s171 + $0x5c] sm:$0xf]
      %v196 = vld [vmem:[%s171 + $0x60] sm:$0xff]
      %v197 = vld [vmem:[%s171 + $0x68] sm:$0xf]
      %v198 = vld [vmem:[%s171 + $0x6c] sm:$0xff]
      %v199 = vld [vmem:[%s171 + $0x74] sm:$0xf]
      %v200 = vld [vmem:[%s171 + $0x78] sm:$0xff]
      %v201 = vld [vmem:[%s171 + $0x80] sm:$0xf]
      %v202 = vld [vmem:[%s171 + $0x84] sm:$0xff]
      %v203 = vld [vmem:[%s171 + $0x8c] sm:$0xf]
      %v204 = vld [vmem:[%s171 + $0x90] sm:$0xff]
      %v205 = vld [vmem:[%s171 + $0x98] sm:$0xf]
      %v206 = vld [vmem:[%s171 + $0x9c] sm:$0xff]
      %v207 = vld [vmem:[%s171 + $0xa4] sm:$0xf]
      %v208 = vld [vmem:[%s171 + $0xa8] sm:$0xff]
      %v209 = vld [vmem:[%s171 + $0xb0] sm:$0xf]
      %v210 = vld [vmem:[%s171 + $0xb4] sm:$0xff]
      %v211 = vld [vmem:[%s171 + $0xbc] sm:$0xf]
      %v212 = vld [vmem:[%s171 + $0xc0] sm:$0xff]
      %v213 = vld [vmem:[%s171 + $0xc8] sm:$0xf]
      %v214 = vld [vmem:[%s171 + $0xcc] sm:$0xff]
      %v215 = vld [vmem:[%s171 + $0xd4] sm:$0xf]
      %v216 = vld [vmem:[%s171 + $0xd8] sm:$0xff]
      %v217 = vld [vmem:[%s171 + $0xe0] sm:$0xf]
      %v218 = vld [vmem:[%s171 + $0xe4] sm:$0xff]
      %v219 = vld [vmem:[%s171 + $0xec] sm:$0xf]
      %v220 = vld [vmem:[%s171 + $0xf0] sm:$0xff]
      %v221 = vld [vmem:[%s171 + $0xf8] sm:$0xf]
      %v222 = vld [vmem:[%s171 + $0xfc] sm:$0xff]
      %v223 = vld [vmem:[%s171 + $0x104] sm:$0xf]
      %v224 = vld [vmem:[%s171 + $0x108] sm:$0xff]
      %v225 = vld [vmem:[%s171 + $0x110] sm:$0xf]
      %v226 = vld [vmem:[%s171 + $0x114] sm:$0xff]
      %v227 = vld [vmem:[%s171 + $0x11c] sm:$0xf]
      %v228 = vld [vmem:[%s171 + $0x120] sm:$0xff]
      %v229 = vld [vmem:[%s171 + $0x128] sm:$0xf]
      %v230 = vld [vmem:[%s171 + $0x12c] sm:$0xff]
      %v231 = vld [vmem:[%s171 + $0x134] sm:$0xf]
      %v232 = vld [vmem:[%s171 + $0x138] sm:$0xff]
      %v233 = vld [vmem:[%s171 + $0x140] sm:$0xf]
      %v234 = vld [vmem:[%s171 + $0x144] sm:$0xff]
      %v235 = vld [vmem:[%s171 + $0x14c] sm:$0xf]
      %v236 = vld [vmem:[%s171 + $0x150] sm:$0xff]
      %v237 = vld [vmem:[%s171 + $0x158] sm:$0xf]
      %v238 = vld [vmem:[%s171 + $0x15c] sm:$0xff]
      %v239 = vld [vmem:[%s171 + $0x164] sm:$0xf]
      %v240 = vld [vmem:[%s171 + $0x168] sm:$0xff]
      %v241 = vld [vmem:[%s171 + $0x170] sm:$0xf]
      %v242 = vld [vmem:[%s171 + $0x174] sm:$0xff]
      %v243 = vld [vmem:[%s171 + $0x17c] sm:$0xf]
      %v244 = vld [vmem:[%s171 + $0x180] sm:$0xff]
      %v245 = vld [vmem:[%s171 + $0x188] sm:$0xf]
      %v246 = vld [vmem:[%s171 + $0x18c] sm:$0xff]
      %v247 = vld [vmem:[%s171 + $0x194] sm:$0xf]
      %v248 = vld [vmem:[%s171 + $0x198] sm:$0xff]
      %v249 = vld [vmem:[%s171 + $0x1a0] sm:$0xf]
      %v250 = vld [vmem:[%s171 + $0x1a4] sm:$0xff]
      %v251 = vld [vmem:[%s171 + $0x1ac] sm:$0xf]
      %v252 = vld [vmem:[%s171 + $0x1b0] sm:$0xff]
      %v253 = vld [vmem:[%s171 + $0x1b8] sm:$0xf]
      %v254 = vld [vmem:[%s171 + $0x1bc] sm:$0xff]
      %v255 = vld [vmem:[%s171 + $0x1c4] sm:$0xf]
      %v256 = vld [vmem:[%s171 + $0x1c8] sm:$0xff]
      %v257 = vld [vmem:[%s171 + $0x1d0] sm:$0xf]
      %v258 = vld [vmem:[%s171 + $0x1d4] sm:$0xff]
      %v259 = vld [vmem:[%s171 + $0x1dc] sm:$0xf]
      %v260 = vld [vmem:[%s171 + $0x1e0] sm:$0xff]
      %v261 = vld [vmem:[%s171 + $0x1e8] sm:$0xf]
      %v262 = vld [vmem:[%s171 + $0x1ec] sm:$0xff]
      %v263 = vld [vmem:[%s171 + $0x1f4] sm:$0xf]
      %v264 = vld [vmem:[%s171 + $0x1f8] sm:$0xff]
      %v265 = vld [vmem:[%s171 + $0x200] sm:$0xf]
      %v266 = vld [vmem:[%s171 + $0x204] sm:$0xff]
      %v267 = vld [vmem:[%s171 + $0x20c] sm:$0xf]
      %v268 = vld [vmem:[%s171 + $0x210] sm:$0xff]
      %v269 = vld [vmem:[%s171 + $0x218] sm:$0xf]
      %v270 = vld [vmem:[%s171 + $0x21c] sm:$0xff]
      %v271 = vld [vmem:[%s171 + $0x224] sm:$0xf]
      %v272 = vld [vmem:[%s171 + $0x228] sm:$0xff]
      %v273 = vld [vmem:[%s171 + $0x230] sm:$0xf]
      %v274 = vld [vmem:[%s171 + $0x234] sm:$0xff]
      %v275 = vld [vmem:[%s171 + $0x23c] sm:$0xf]
      %v276 = vld [vmem:[%s171 + $0x240] sm:$0xff]
      %v277 = vld [vmem:[%s171 + $0x248] sm:$0xf]
      %v278 = vld [vmem:[%s171 + $0x24c] sm:$0xff]
      %v279 = vld [vmem:[%s171 + $0x254] sm:$0xf]
      %v280 = vld [vmem:[%s171 + $0x258] sm:$0xff]
      %v281 = vld [vmem:[%s171 + $0x260] sm:$0xf]
      %v282 = vld [vmem:[%s171 + $0x264] sm:$0xff]
      %v283 = vld [vmem:[%s171 + $0x26c] sm:$0xf]
      %v284 = vld [vmem:[%s171 + $0x270] sm:$0xff]
      %v285 = vld [vmem:[%s171 + $0x278] sm:$0xf]
      %v286 = vld [vmem:[%s171 + $0x27c] sm:$0xff]
      %v287 = vld [vmem:[%s171 + $0x284] sm:$0xf]
      %v288 = vld [vmem:[%s1] sm:$0xf]
      %v289 = vld [vmem:[%s1 + $0x4] sm:$0xf]
      %v290 = vld [vmem:[%s1 + $0x8] sm:$0xf]
      %v291 = vld [vmem:[%s1 + $0xc] sm:$0xf]
      %v292 = vld [vmem:[%s1 + $0x10] sm:$0xf]
      %v293 = vld [vmem:[%s1 + $0x14] sm:$0xf]
      %v294 = vld [vmem:[%s1 + $0x18] sm:$0xf]
      %v295 = vld [vmem:[%s1 + $0x1c] sm:$0xf]
      %v296 = vld [vmem:[%s1 + $0x20] sm:$0xf]
      %v297 = vld [vmem:[%s1 + $0x24] sm:$0xf]
      %v298 = vld [vmem:[%s1 + $0x28] sm:$0xf]
      %v299 = vld [vmem:[%s1 + $0x2c] sm:$0xf]
      %v300 = vld [vmem:[%s1 + $0x30] sm:$0xf]
      %v301 = vld [vmem:[%s1 + $0x34] sm:$0xf]
      %v302 = vld [vmem:[%s1 + $0x38] sm:$0xf]
      %v303 = vld [vmem:[%s1 + $0x3c] sm:$0xf]
      %v304 = vld [vmem:[%s1 + $0x40] sm:$0xf]
      %v305 = vld [vmem:[%s1 + $0x44] sm:$0xf]
      %v306 = vld [vmem:[%s1 + $0x48] sm:$0xf]
      %v307 = vld [vmem:[%s1 + $0x4c] sm:$0xf]
      %v308 = vld [vmem:[%s1 + $0x50] sm:$0xf]
      %v309 = vld [vmem:[%s1 + $0x54] sm:$0xf]
      %v310 = vld [vmem:[%s1 + $0x58] sm:$0xf]
      %v311 = vld [vmem:[%s1 + $0x5c] sm:$0xf]
      %v312 = vld [vmem:[%s1 + $0x60] sm:$0xf]
      %v313 = vld [vmem:[%s1 + $0x64] sm:$0xf]
      %v314 = vld [vmem:[%s1 + $0x68] sm:$0xf]
      %v315 = vld [vmem:[%s1 + $0x6c] sm:$0xf]
      %v316 = vld [vmem:[%s1 + $0x70] sm:$0xf]
      %v317 = vld [vmem:[%s1 + $0x74] sm:$0xf]
      %v318 = vld [vmem:[%s1 + $0x78] sm:$0xf]
      %v319 = vld [vmem:[%s1 + $0x7c] sm:$0xf]
      %v320 = vld [vmem:[%s1 + $0x80] sm:$0xf]
      %v321 = vld [vmem:[%s1 + $0x84] sm:$0xf]
      %v322 = vld [vmem:[%s1 + $0x88] sm:$0xf]
      %v323 = vld [vmem:[%s1 + $0x8c] sm:$0xf]
      %v324 = vld [vmem:[#allocation2] sm:$0x1]
      %v326 = vlaneseq
      %v327 = vshrl.u32 %v326, 7
      %v328 = vsub.s32 0, %v327
      %v329 = vrot.slane %v324, %v328
      %v439 = vunpack.c.l.b16 %v180
      %v440 = vunpack.c.h.b16 %v180
      %v441 = vunpack.c.l.b16 %v181
      %v442 = vunpack.c.l.b16 %v182
      %v443 = vunpack.c.h.b16 %v182
      %v444 = vunpack.c.l.b16 %v183
      %v445 = vunpack.c.l.b16 %v184
      %v446 = vunpack.c.h.b16 %v184
      %v447 = vunpack.c.l.b16 %v185
      %v448 = vunpack.c.l.b16 %v186
      %v449 = vunpack.c.h.b16 %v186
      %v450 = vunpack.c.l.b16 %v187
      %v451 = vunpack.c.l.b16 %v188
      %v452 = vunpack.c.h.b16 %v188
      %v453 = vunpack.c.l.b16 %v189
      %v454 = vunpack.c.l.b16 %v190
      %v455 = vunpack.c.h.b16 %v190
      %v456 = vunpack.c.l.b16 %v191
      %v457 = vunpack.c.l.b16 %v192
      %v458 = vunpack.c.h.b16 %v192
      %v459 = vunpack.c.l.b16 %v193
      %v460 = vunpack.c.l.b16 %v194
      %v461 = vunpack.c.h.b16 %v194
      %v462 = vunpack.c.l.b16 %v195
      %v463 = vunpack.c.l.b16 %v196
      %v464 = vunpack.c.h.b16 %v196
      %v465 = vunpack.c.l.b16 %v197
      %v466 = vunpack.c.l.b16 %v198
      %v467 = vunpack.c.h.b16 %v198
      %v468 = vunpack.c.l.b16 %v199
      %v469 = vunpack.c.l.b16 %v200
      %v470 = vunpack.c.h.b16 %v200
      %v471 = vunpack.c.l.b16 %v201
      %v472 = vunpack.c.l.b16 %v202
      %v473 = vunpack.c.h.b16 %v202
      %v474 = vunpack.c.l.b16 %v203
      %v475 = vunpack.c.l.b16 %v204
      %v476 = vunpack.c.h.b16 %v204
      %v477 = vunpack.c.l.b16 %v205
      %v478 = vunpack.c.l.b16 %v206
      %v479 = vunpack.c.h.b16 %v206
      %v480 = vunpack.c.l.b16 %v207
      %v481 = vunpack.c.l.b16 %v208
      %v482 = vunpack.c.h.b16 %v208
      %v483 = vunpack.c.l.b16 %v209
      %v484 = vunpack.c.l.b16 %v210
      %v485 = vunpack.c.h.b16 %v210
      %v486 = vunpack.c.l.b16 %v211
      %v487 = vunpack.c.l.b16 %v212
      %v488 = vunpack.c.h.b16 %v212
      %v489 = vunpack.c.l.b16 %v213
      %v490 = vunpack.c.l.b16 %v214
      %v491 = vunpack.c.h.b16 %v214
      %v492 = vunpack.c.l.b16 %v215
      %v493 = vunpack.c.l.b16 %v216
      %v494 = vunpack.c.h.b16 %v216
      %v495 = vunpack.c.l.b16 %v217
      %v496 = vunpack.c.l.b16 %v218
      %v497 = vunpack.c.h.b16 %v218
      %v498 = vunpack.c.l.b16 %v219
      %v499 = vunpack.c.l.b16 %v220
      %v500 = vunpack.c.h.b16 %v220
      %v501 = vunpack.c.l.b16 %v221
      %v502 = vunpack.c.l.b16 %v222
      %v503 = vunpack.c.h.b16 %v222
      %v504 = vunpack.c.l.b16 %v223
      %v505 = vunpack.c.l.b16 %v224
      %v506 = vunpack.c.h.b16 %v224
      %v507 = vunpack.c.l.b16 %v225
      %v508 = vunpack.c.l.b16 %v226
      %v509 = vunpack.c.h.b16 %v226
      %v510 = vunpack.c.l.b16 %v227
      %v511 = vunpack.c.l.b16 %v228
      %v512 = vunpack.c.h.b16 %v228
      %v513 = vunpack.c.l.b16 %v229
      %v514 = vunpack.c.l.b16 %v230
      %v515 = vunpack.c.h.b16 %v230
      %v516 = vunpack.c.l.b16 %v231
      %v517 = vunpack.c.l.b16 %v232
      %v518 = vunpack.c.h.b16 %v232
      %v519 = vunpack.c.l.b16 %v233
      %v520 = vunpack.c.l.b16 %v234
      %v521 = vunpack.c.h.b16 %v234
      %v522 = vunpack.c.l.b16 %v235
      %v523 = vunpack.c.l.b16 %v236
      %v524 = vunpack.c.h.b16 %v236
      %v525 = vunpack.c.l.b16 %v237
      %v526 = vunpack.c.l.b16 %v238
      %v527 = vunpack.c.h.b16 %v238
      %v528 = vunpack.c.l.b16 %v239
      %v529 = vunpack.c.l.b16 %v240
      %v530 = vunpack.c.h.b16 %v240
      %v531 = vunpack.c.l.b16 %v241
      %v532 = vunpack.c.l.b16 %v242
      %v533 = vunpack.c.h.b16 %v242
      %v534 = vunpack.c.l.b16 %v243
      %v535 = vunpack.c.l.b16 %v244
      %v536 = vunpack.c.h.b16 %v244
      %v537 = vunpack.c.l.b16 %v245
      %v538 = vunpack.c.l.b16 %v246
      %v539 = vunpack.c.h.b16 %v246
      %v540 = vunpack.c.l.b16 %v247
      %v541 = vunpack.c.l.b16 %v248
      %v542 = vunpack.c.h.b16 %v248
      %v543 = vunpack.c.l.b16 %v249
      %v544 = vunpack.c.l.b16 %v250
      %v545 = vunpack.c.h.b16 %v250
      %v546 = vunpack.c.l.b16 %v251
      %v547 = vunpack.c.l.b16 %v252
      %v548 = vunpack.c.h.b16 %v252
      %v549 = vunpack.c.l.b16 %v253
      %v550 = vunpack.c.l.b16 %v254
      %v551 = vunpack.c.h.b16 %v254
      %v552 = vunpack.c.l.b16 %v255
      %v553 = vunpack.c.l.b16 %v256
      %v554 = vunpack.c.h.b16 %v256
      %v555 = vunpack.c.l.b16 %v257
      %v556 = vunpack.c.l.b16 %v258
      %v557 = vunpack.c.h.b16 %v258
      %v558 = vunpack.c.l.b16 %v259
      %v559 = vunpack.c.l.b16 %v260
      %v560 = vunpack.c.h.b16 %v260
      %v561 = vunpack.c.l.b16 %v261
      %v562 = vunpack.c.l.b16 %v262
      %v563 = vunpack.c.h.b16 %v262
      %v564 = vunpack.c.l.b16 %v263
      %v565 = vunpack.c.l.b16 %v264
      %v566 = vunpack.c.h.b16 %v264
      %v567 = vunpack.c.l.b16 %v265
      %v568 = vunpack.c.l.b16 %v266
      %v569 = vunpack.c.h.b16 %v266
      %v570 = vunpack.c.l.b16 %v267
      %v571 = vunpack.c.l.b16 %v268
      %v572 = vunpack.c.h.b16 %v268
      %v573 = vunpack.c.l.b16 %v269
      %v574 = vunpack.c.l.b16 %v270
      %v575 = vunpack.c.h.b16 %v270
      %v576 = vunpack.c.l.b16 %v271
      %v577 = vunpack.c.l.b16 %v272
      %v578 = vunpack.c.h.b16 %v272
      %v579 = vunpack.c.l.b16 %v273
      %v580 = vunpack.c.l.b16 %v274
      %v581 = vunpack.c.h.b16 %v274
      %v582 = vunpack.c.l.b16 %v275
      %v583 = vunpack.c.l.b16 %v276
      %v584 = vunpack.c.h.b16 %v276
      %v585 = vunpack.c.l.b16 %v277
      %v586 = vunpack.c.l.b16 %v278
      %v587 = vunpack.c.h.b16 %v278
      %v588 = vunpack.c.l.b16 %v279
      %v589 = vunpack.c.l.b16 %v280
      %v590 = vunpack.c.h.b16 %v280
      %v591 = vunpack.c.l.b16 %v281
      %v592 = vunpack.c.l.b16 %v282
      %v593 = vunpack.c.h.b16 %v282
      %v594 = vunpack.c.l.b16 %v283
      %v595 = vunpack.c.l.b16 %v284
      %v596 = vunpack.c.h.b16 %v284
      %v597 = vunpack.c.l.b16 %v285
      %v598 = vunpack.c.l.b16 %v286
      %v599 = vunpack.c.h.b16 %v286
      %v600 = vunpack.c.l.b16 %v287
      %v601 = vpack.c.b16 %v442, %v439
      %v602 = vpack.c.b16 %v443, %v440
      %v603 = vpack.c.b16 %v444, %v441
      %v604 = vpack.c.b16 %v448, %v445
      %v605 = vpack.c.b16 %v449, %v446
      %v606 = vpack.c.b16 %v450, %v447
      %v607 = vpack.c.b16 %v454, %v451
      %v608 = vpack.c.b16 %v455, %v452
      %v609 = vpack.c.b16 %v456, %v453
      %v610 = vpack.c.b16 %v460, %v457
      %v611 = vpack.c.b16 %v461, %v458
      %v612 = vpack.c.b16 %v462, %v459
      %v613 = vpack.c.b16 %v466, %v463
      %v614 = vpack.c.b16 %v467, %v464
      %v615 = vpack.c.b16 %v468, %v465
      %v616 = vpack.c.b16 %v472, %v469
      %v617 = vpack.c.b16 %v473, %v470
      %v618 = vpack.c.b16 %v474, %v471
      %v619 = vpack.c.b16 %v478, %v475
      %v620 = vpack.c.b16 %v479, %v476
      %v621 = vpack.c.b16 %v480, %v477
      %v622 = vpack.c.b16 %v484, %v481
      %v623 = vpack.c.b16 %v485, %v482
      %v624 = vpack.c.b16 %v486, %v483
      %v625 = vpack.c.b16 %v490, %v487
      %v626 = vpack.c.b16 %v491, %v488
      %v627 = vpack.c.b16 %v492, %v489
      %v628 = vpack.c.b16 %v496, %v493
      %v629 = vpack.c.b16 %v497, %v494
      %v630 = vpack.c.b16 %v498, %v495
      %v631 = vpack.c.b16 %v502, %v499
      %v632 = vpack.c.b16 %v503, %v500
      %v633 = vpack.c.b16 %v504, %v501
      %v634 = vpack.c.b16 %v508, %v505
      %v635 = vpack.c.b16 %v509, %v506
      %v636 = vpack.c.b16 %v510, %v507
      %v637 = vpack.c.b16 %v514, %v511
      %v638 = vpack.c.b16 %v515, %v512
      %v639 = vpack.c.b16 %v516, %v513
      %v640 = vpack.c.b16 %v520, %v517
      %v641 = vpack.c.b16 %v521, %v518
      %v642 = vpack.c.b16 %v522, %v519
      %v643 = vpack.c.b16 %v526, %v523
      %v644 = vpack.c.b16 %v527, %v524
      %v645 = vpack.c.b16 %v528, %v525
      %v646 = vpack.c.b16 %v532, %v529
      %v647 = vpack.c.b16 %v533, %v530
      %v648 = vpack.c.b16 %v534, %v531
      %v649 = vpack.c.b16 %v538, %v535
      %v650 = vpack.c.b16 %v539, %v536
      %v651 = vpack.c.b16 %v540, %v537
      %v652 = vpack.c.b16 %v544, %v541
      %v653 = vpack.c.b16 %v545, %v542
      %v654 = vpack.c.b16 %v546, %v543
      %v655 = vpack.c.b16 %v550, %v547
      %v656 = vpack.c.b16 %v551, %v548
      %v657 = vpack.c.b16 %v552, %v549
      %v658 = vpack.c.b16 %v556, %v553
      %v659 = vpack.c.b16 %v557, %v554
      %v660 = vpack.c.b16 %v558, %v555
      %v661 = vpack.c.b16 %v562, %v559
      %v662 = vpack.c.b16 %v563, %v560
      %v663 = vpack.c.b16 %v564, %v561
      %v664 = vpack.c.b16 %v568, %v565
      %v665 = vpack.c.b16 %v569, %v566
      %v666 = vpack.c.b16 %v570, %v567
      %v667 = vpack.c.b16 %v574, %v571
      %v668 = vpack.c.b16 %v575, %v572
      %v669 = vpack.c.b16 %v576, %v573
      %v670 = vpack.c.b16 %v580, %v577
      %v671 = vpack.c.b16 %v581, %v578
      %v672 = vpack.c.b16 %v582, %v579
      %v673 = vpack.c.b16 %v586, %v583
      %v674 = vpack.c.b16 %v587, %v584
      %v675 = vpack.c.b16 %v588, %v585
      %v676 = vpack.c.b16 %v592, %v589
      %v677 = vpack.c.b16 %v593, %v590
      %v678 = vpack.c.b16 %v594, %v591
      %v679 = vpack.c.b16 %v598, %v595
      %v680 = vpack.c.b16 %v599, %v596
      %v681 = vpack.c.b16 %v600, %v597
      %v772 = vunpack.c.l.b16 %v288
      %v773 = vunpack.c.l.b16 %v289
      %v774 = vunpack.c.l.b16 %v290
      %v775 = vunpack.c.l.b16 %v291
      %v776 = vunpack.c.l.b16 %v292
      %v777 = vunpack.c.l.b16 %v293
      %v778 = vunpack.c.l.b16 %v294
      %v779 = vunpack.c.l.b16 %v295
      %v780 = vunpack.c.l.b16 %v296
      %v781 = vunpack.c.l.b16 %v297
      %v782 = vunpack.c.l.b16 %v298
      %v783 = vunpack.c.l.b16 %v299
      %v784 = vunpack.c.l.b16 %v300
      %v785 = vunpack.c.l.b16 %v301
      %v786 = vunpack.c.l.b16 %v302
      %v787 = vunpack.c.l.b16 %v303
      %v788 = vunpack.c.l.b16 %v304
      %v789 = vunpack.c.l.b16 %v305
      %v790 = vunpack.c.l.b16 %v306
      %v791 = vunpack.c.l.b16 %v307
      %v792 = vunpack.c.l.b16 %v308
      %v793 = vunpack.c.l.b16 %v309
      %v794 = vunpack.c.l.b16 %v310
      %v795 = vunpack.c.l.b16 %v311
      %v796 = vunpack.c.l.b16 %v312
      %v797 = vunpack.c.l.b16 %v313
      %v798 = vunpack.c.l.b16 %v314
      %v799 = vunpack.c.l.b16 %v315
      %v800 = vunpack.c.l.b16 %v316
      %v801 = vunpack.c.l.b16 %v317
      %v802 = vunpack.c.l.b16 %v318
      %v803 = vunpack.c.l.b16 %v319
      %v804 = vunpack.c.l.b16 %v320
      %v805 = vunpack.c.l.b16 %v321
      %v806 = vunpack.c.l.b16 %v322
      %v807 = vunpack.c.l.b16 %v323
      %v808 = vpack.c.b16 %v773, %v772
      %v809 = vpack.c.b16 %v775, %v774
      %v810 = vpack.c.b16 %v777, %v776
      %v811 = vpack.c.b16 %v779, %v778
      %v812 = vpack.c.b16 %v781, %v780
      %v813 = vpack.c.b16 %v783, %v782
      %v814 = vpack.c.b16 %v785, %v784
      %v815 = vpack.c.b16 %v787, %v786
      %v816 = vpack.c.b16 %v789, %v788
      %v817 = vpack.c.b16 %v791, %v790
      %v818 = vpack.c.b16 %v793, %v792
      %v819 = vpack.c.b16 %v795, %v794
      %v820 = vpack.c.b16 %v797, %v796
      %v821 = vpack.c.b16 %v799, %v798
      %v822 = vpack.c.b16 %v801, %v800
      %v823 = vpack.c.b16 %v803, %v802
      %v824 = vpack.c.b16 %v805, %v804
      %v825 = vpack.c.b16 %v807, %v806
      %vm844 = vcmask 261120
      %v846 = vsel %vm844, %v603, 0
      %v849 = vsel %vm844, %v606, 0
      %v852 = vsel %vm844, %v609, 0
      %v855 = vsel %vm844, %v612, 0
      %v858 = vsel %vm844, %v615, 0
      %v861 = vsel %vm844, %v618, 0
      %v864 = vsel %vm844, %v621, 0
      %v867 = vsel %vm844, %v624, 0
      %v870 = vsel %vm844, %v627, 0
      %v873 = vsel %vm844, %v630, 0
      %v876 = vsel %vm844, %v633, 0
      %v879 = vsel %vm844, %v636, 0
      %v882 = vsel %vm844, %v639, 0
      %v885 = vsel %vm844, %v642, 0
      %v888 = vsel %vm844, %v645, 0
      %v891 = vsel %vm844, %v648, 0
      %v894 = vsel %vm844, %v651, 0
      %v897 = vsel %vm844, %v654, 0
      %v900 = vsel %vm844, %v657, 0
      %v903 = vsel %vm844, %v660, 0
      %v906 = vsel %vm844, %v663, 0
      %v909 = vsel %vm844, %v666, 0
      %v912 = vsel %vm844, %v669, 0
      %v915 = vsel %vm844, %v672, 0
      %v918 = vsel %vm844, %v675, 0
      %v921 = vsel %vm844, %v678, 0
      %v924 = vsel %vm844, %v681, 0
      %926 = vmatprep.subr.bf16.mxu0 0
      %927 = vmatpush1.bf16.msra.mxu0 %v808
      %928 = vmatprep.subr.bf16.mxu0 0
      %929 = vmatpush1.bf16.msra.mxu0 %v809
      %930 = vmatprep.subr.bf16.mxu0 0
      %931 = vmatpush1.bf16.msra.mxu0 %v810
      %932 = vmatprep.subr.bf16.mxu0 0
      %933 = vmatpush1.bf16.msra.mxu0 %v811
      %934 = vmatprep.subr.bf16.mxu0 0
      %935 = vmatpush1.bf16.msra.mxu0 %v812
      %936 = vmatprep.subr.bf16.mxu0 0
      %937 = vmatpush1.bf16.msra.mxu0 %v813
      %938 = vmatprep.subr.bf16.mxu0 0
      %939 = vmatpush1.bf16.msra.mxu0 %v814
      %940 = vmatprep.subr.bf16.mxu0 0
      %941 = vmatpush1.bf16.msra.mxu0 %v815
      %942 = vmatprep.subr.bf16.mxu0 0
      %943 = vmatpush1.bf16.msra.mxu0 %v816
      %944 = vmatprep.subr.bf16.mxu0 0
      %945 = vmatpush1.bf16.msra.mxu0 %v817
      %946 = vmatprep.subr.bf16.mxu0 0
      %947 = vmatpush1.bf16.msra.mxu0 %v818
      %948 = vmatprep.subr.bf16.mxu0 0
      %949 = vmatpush1.bf16.msra.mxu0 %v819
      %950 = vmatprep.subr.bf16.mxu0 0
      %951 = vmatpush1.bf16.msra.mxu0 %v820
      %952 = vmatprep.subr.bf16.mxu0 0
      %953 = vmatpush1.bf16.msra.mxu0 %v821
      %954 = vmatprep.subr.bf16.mxu0 0
      %955 = vmatpush1.bf16.msra.mxu0 %v822
      %956 = vmatprep.subr.bf16.mxu0 0
      %957 = vmatpush1.bf16.msra.mxu0 %v823
      %958 = vmatprep.mubr.bf16.mxu0 %v602
      %959 = vmatmul.mubr.bf16.gmra.mrb[0].mxu0 %v601
      %v960 = vpop.f32.mrb[0].mxu0
      %v961 = vadd.f32 %v329, %v960
      %v962 = vpop.f32.mrb[0].mxu0
      %v963 = vpop.f32.mrb[0].mxu0
      %v964 = vadd.f32 %v329, %v963
      %v965 = vpop.f32.mrb[0].mxu0
      %966 = vmatprep.mubr.bf16.mxu0 %v605
      %967 = vmatmul.mubr.bf16.gmra.mrb[0].mxu0 %v604
      %v968 = vpop.f32.mrb[0].mxu0
      %v969 = vadd.f32 %v329, %v968
      %v970 = vpop.f32.mrb[0].mxu0
      %v971 = vpop.f32.mrb[0].mxu0
      %v972 = vadd.f32 %v329, %v971
      %v973 = vpop.f32.mrb[0].mxu0
      %974 = vmatprep.mubr.bf16.mxu0 %v608
      %975 = vmatmul.mubr.bf16.gmra.mrb[0].mxu0 %v607
      %v976 = vpop.f32.mrb[0].mxu0
      %v977 = vadd.f32 %v329, %v976
      %v978 = vpop.f32.mrb[0].mxu0
      %v979 = vpop.f32.mrb[0].mxu0
      %v980 = vadd.f32 %v329, %v979
      %v981 = vpop.f32.mrb[0].mxu0
      %982 = vmatprep.mubr.bf16.mxu0 %v611
      %983 = vmatmul.mubr.bf16.gmra.mrb[0].mxu0 %v610
      %v984 = vpop.f32.mrb[0].mxu0
      %v985 = vadd.f32 %v329, %v984
      %v986 = vpop.f32.mrb[0].mxu0
      %v987 = vpop.f32.mrb[0].mxu0
      %v988 = vadd.f32 %v329, %v987
      %v989 = vpop.f32.mrb[0].mxu0
      %990 = vmatprep.mubr.bf16.mxu0 %v614
      %991 = vmatmul.mubr.bf16.gmra.mrb[0].mxu0 %v613
      %v992 = vpop.f32.mrb[0].mxu0
      %v993 = vadd.f32 %v329, %v992
      %v994 = vpop.f32.mrb[0].mxu0
      %v995 = vpop.f32.mrb[0].mxu0
      %v996 = vadd.f32 %v329, %v995
      %v997 = vpop.f32.mrb[0].mxu0
      %998 = vmatprep.mubr.bf16.mxu0 %v617
      %999 = vmatmul.mubr.bf16.gmra.mrb[0].mxu0 %v616
      %v1000 = vpop.f32.mrb[0].mxu0
      %v1001 = vadd.f32 %v329, %v1000
      %v1002 = vpop.f32.mrb[0].mxu0
      %v1003 = vpop.f32.mrb[0].mxu0
      %v1004 = vadd.f32 %v329, %v1003
      %v1005 = vpop.f32.mrb[0].mxu0
      %1006 = vmatprep.mubr.bf16.mxu0 %v620
      %1007 = vmatmul.mubr.bf16.gmra.mrb[0].mxu0 %v619
      %v1008 = vpop.f32.mrb[0].mxu0
      %v1009 = vadd.f32 %v329, %v1008
      %v1010 = vpop.f32.mrb[0].mxu0
      %v1011 = vpop.f32.mrb[0].mxu0
      %v1012 = vadd.f32 %v329, %v1011
      %v1013 = vpop.f32.mrb[0].mxu0
      %1014 = vmatprep.mubr.bf16.mxu0 %v623
      %1015 = vmatmul.mubr.bf16.gmra.mrb[0].mxu0 %v622
      %v1016 = vpop.f32.mrb[0].mxu0
      %v1017 = vadd.f32 %v329, %v1016
      %v1018 = vpop.f32.mrb[0].mxu0
      %v1019 = vpop.f32.mrb[0].mxu0
      %v1020 = vadd.f32 %v329, %v1019
      %v1021 = vpop.f32.mrb[0].mxu0
      %1022 = vmatprep.mubr.bf16.mxu0 %v626
      %1023 = vmatmul.mubr.bf16.gmra.mrb[0].mxu0 %v625
      %v1024 = vpop.f32.mrb[0].mxu0
      %v1025 = vadd.f32 %v329, %v1024
      %v1026 = vpop.f32.mrb[0].mxu0
      %v1027 = vpop.f32.mrb[0].mxu0
      %v1028 = vadd.f32 %v329, %v1027
      %v1029 = vpop.f32.mrb[0].mxu0
      %1030 = vmatprep.mubr.bf16.mxu0 %v629
      %1031 = vmatmul.mubr.bf16.gmra.mrb[0].mxu0 %v628
      %v1032 = vpop.f32.mrb[0].mxu0
      %v1033 = vadd.f32 %v329, %v1032
      %v1034 = vpop.f32.mrb[0].mxu0
      %v1035 = vpop.f32.mrb[0].mxu0
      %v1036 = vadd.f32 %v329, %v1035
      %v1037 = vpop.f32.mrb[0].mxu0
      %1038 = vmatprep.mubr.bf16.mxu0 %v632
      %1039 = vmatmul.mubr.bf16.gmra.mrb[0].mxu0 %v631
      %v1040 = vpop.f32.mrb[0].mxu0
      %v1041 = vadd.f32 %v329, %v1040
      %v1042 = vpop.f32.mrb[0].mxu0
      %v1043 = vpop.f32.mrb[0].mxu0
      %v1044 = vadd.f32 %v329, %v1043
      %v1045 = vpop.f32.mrb[0].mxu0
      %1046 = vmatprep.mubr.bf16.mxu0 %v635
      %1047 = vmatmul.mubr.bf16.gmra.mrb[0].mxu0 %v634
      %v1048 = vpop.f32.mrb[0].mxu0
      %v1049 = vadd.f32 %v329, %v1048
      %v1050 = vpop.f32.mrb[0].mxu0
      %v1051 = vpop.f32.mrb[0].mxu0
      %v1052 = vadd.f32 %v329, %v1051
      %v1053 = vpop.f32.mrb[0].mxu0
      %1054 = vmatprep.mubr.bf16.mxu0 %v638
      %1055 = vmatmul.mubr.bf16.gmra.mrb[0].mxu0 %v637
      %v1056 = vpop.f32.mrb[0].mxu0
      %v1057 = vadd.f32 %v329, %v1056
      %v1058 = vpop.f32.mrb[0].mxu0
      %v1059 = vpop.f32.mrb[0].mxu0
      %v1060 = vadd.f32 %v329, %v1059
      %v1061 = vpop.f32.mrb[0].mxu0
      %1062 = vmatprep.mubr.bf16.mxu0 %v641
      %1063 = vmatmul.mubr.bf16.gmra.mrb[0].mxu0 %v640
      %v1064 = vpop.f32.mrb[0].mxu0
      %v1065 = vadd.f32 %v329, %v1064
      %v1066 = vpop.f32.mrb[0].mxu0
      %v1067 = vpop.f32.mrb[0].mxu0
      %v1068 = vadd.f32 %v329, %v1067
      %v1069 = vpop.f32.mrb[0].mxu0
      %1070 = vmatprep.mubr.bf16.mxu0 %v644
      %1071 = vmatmul.mubr.bf16.gmra.mrb[0].mxu0 %v643
      %v1072 = vpop.f32.mrb[0].mxu0
      %v1073 = vadd.f32 %v329, %v1072
      %v1074 = vpop.f32.mrb[0].mxu0
      %v1075 = vpop.f32.mrb[0].mxu0
      %v1076 = vadd.f32 %v329, %v1075
      %v1077 = vpop.f32.mrb[0].mxu0
      %1078 = vmatprep.mubr.bf16.mxu0 %v647
      %1079 = vmatmul.mubr.bf16.gmra.mrb[0].mxu0 %v646
      %v1080 = vpop.f32.mrb[0].mxu0
      %v1081 = vadd.f32 %v329, %v1080
      %v1082 = vpop.f32.mrb[0].mxu0
      %v1083 = vpop.f32.mrb[0].mxu0
      %v1084 = vadd.f32 %v329, %v1083
      %v1085 = vpop.f32.mrb[0].mxu0
      %1086 = vmatprep.mubr.bf16.mxu0 %v650
      %1087 = vmatmul.mubr.bf16.gmra.mrb[0].mxu0 %v649
      %v1088 = vpop.f32.mrb[0].mxu0
      %v1089 = vadd.f32 %v329, %v1088
      %v1090 = vpop.f32.mrb[0].mxu0
      %v1091 = vpop.f32.mrb[0].mxu0
      %v1092 = vadd.f32 %v329, %v1091
      %v1093 = vpop.f32.mrb[0].mxu0
      %1094 = vmatprep.mubr.bf16.mxu0 %v653
      %1095 = vmatmul.mubr.bf16.gmra.mrb[0].mxu0 %v652
      %v1096 = vpop.f32.mrb[0].mxu0
      %v1097 = vadd.f32 %v329, %v1096
      %v1098 = vpop.f32.mrb[0].mxu0
      %v1099 = vpop.f32.mrb[0].mxu0
      %v1100 = vadd.f32 %v329, %v1099
      %v1101 = vpop.f32.mrb[0].mxu0
      %1102 = vmatprep.mubr.bf16.mxu0 %v656
      %1103 = vmatmul.mubr.bf16.gmra.mrb[0].mxu0 %v655
      %v1104 = vpop.f32.mrb[0].mxu0
      %v1105 = vadd.f32 %v329, %v1104
      %v1106 = vpop.f32.mrb[0].mxu0
      %v1107 = vpop.f32.mrb[0].mxu0
      %v1108 = vadd.f32 %v329, %v1107
      %v1109 = vpop.f32.mrb[0].mxu0
      %1110 = vmatprep.mubr.bf16.mxu0 %v659
      %1111 = vmatmul.mubr.bf16.gmra.mrb[0].mxu0 %v658
      %v1112 = vpop.f32.mrb[0].mxu0
      %v1113 = vadd.f32 %v329, %v1112
      %v1114 = vpop.f32.mrb[0].mxu0
      %v1115 = vpop.f32.mrb[0].mxu0
      %v1116 = vadd.f32 %v329, %v1115
      %v1117 = vpop.f32.mrb[0].mxu0
      %1118 = vmatprep.mubr.bf16.mxu0 %v662
      %1119 = vmatmul.mubr.bf16.gmra.mrb[0].mxu0 %v661
      %v1120 = vpop.f32.mrb[0].mxu0
      %v1121 = vadd.f32 %v329, %v1120
      %v1122 = vpop.f32.mrb[0].mxu0
      %v1123 = vpop.f32.mrb[0].mxu0
      %v1124 = vadd.f32 %v329, %v1123
      %v1125 = vpop.f32.mrb[0].mxu0
      %1126 = vmatprep.mubr.bf16.mxu0 %v665
      %1127 = vmatmul.mubr.bf16.gmra.mrb[0].mxu0 %v664
      %v1128 = vpop.f32.mrb[0].mxu0
      %v1129 = vadd.f32 %v329, %v1128
      %v1130 = vpop.f32.mrb[0].mxu0
      %v1131 = vpop.f32.mrb[0].mxu0
      %v1132 = vadd.f32 %v329, %v1131
      %v1133 = vpop.f32.mrb[0].mxu0
      %1134 = vmatprep.mubr.bf16.mxu0 %v668
      %1135 = vmatmul.mubr.bf16.gmra.mrb[0].mxu0 %v667
      %v1136 = vpop.f32.mrb[0].mxu0
      %v1137 = vadd.f32 %v329, %v1136
      %v1138 = vpop.f32.mrb[0].mxu0
      %v1139 = vpop.f32.mrb[0].mxu0
      %v1140 = vadd.f32 %v329, %v1139
      %v1141 = vpop.f32.mrb[0].mxu0
      %1142 = vmatprep.mubr.bf16.mxu0 %v671
      %1143 = vmatmul.mubr.bf16.gmra.mrb[0].mxu0 %v670
      %v1144 = vpop.f32.mrb[0].mxu0
      %v1145 = vadd.f32 %v329, %v1144
      %v1146 = vpop.f32.mrb[0].mxu0
      %v1147 = vpop.f32.mrb[0].mxu0
      %v1148 = vadd.f32 %v329, %v1147
      %v1149 = vpop.f32.mrb[0].mxu0
      %1150 = vmatprep.mubr.bf16.mxu0 %v674
      %1151 = vmatmul.mubr.bf16.gmra.mrb[0].mxu0 %v673
      %v1152 = vpop.f32.mrb[0].mxu0
      %v1153 = vadd.f32 %v329, %v1152
      %v1154 = vpop.f32.mrb[0].mxu0
      %v1155 = vpop.f32.mrb[0].mxu0
      %v1156 = vadd.f32 %v329, %v1155
      %v1157 = vpop.f32.mrb[0].mxu0
      %1158 = vmatprep.mubr.bf16.mxu0 %v677
      %1159 = vmatmul.mubr.bf16.gmra.mrb[0].mxu0 %v676
      %v1160 = vpop.f32.mrb[0].mxu0
      %v1161 = vadd.f32 %v329, %v1160
      %v1162 = vpop.f32.mrb[0].mxu0
      %v1163 = vpop.f32.mrb[0].mxu0
      %v1164 = vadd.f32 %v329, %v1163
      %v1165 = vpop.f32.mrb[0].mxu0
      %1166 = vmatprep.mubr.bf16.mxu0 %v680
      %1167 = vmatmul.mubr.bf16.gmra.mrb[0].mxu0 %v679
      %v1168 = vpop.f32.mrb[0].mxu0
      %v1169 = vadd.f32 %v329, %v1168
      %v1170 = vpop.f32.mrb[0].mxu0
      %v1171 = vpop.f32.mrb[0].mxu0
      %v1172 = vadd.f32 %v329, %v1171
      %v1173 = vpop.f32.mrb[0].mxu0
      %1174 = vdwg.mxu0
      %1175 = vmatprep.subr.bf16.mxu0 0
      %1176 = vmatpush1.bf16.msra.mxu0 %v824
      %1177 = vmatprep.subr.bf16.mxu0 0
      %1178 = vmatpush1.bf16.msra.mxu0 %v825
      %1179 = vmatprep.subr.bf16.mxu0 0
      %1180 = vmatpush1.bf16.msra.mxu0 0
      %1181 = vmatprep.subr.bf16.mxu0 0
      %1182 = vmatpush1.bf16.msra.mxu0 0
      %1183 = vmatprep.subr.bf16.mxu0 0
      %1184 = vmatpush1.bf16.msra.mxu0 0
      %1185 = vmatprep.subr.bf16.mxu0 0
      %1186 = vmatpush1.bf16.msra.mxu0 0
      %1187 = vmatprep.subr.bf16.mxu0 0
      %1188 = vmatpush1.bf16.msra.mxu0 0
      %1189 = vmatprep.subr.bf16.mxu0 0
      %1190 = vmatpush1.bf16.msra.mxu0 0
      %1191 = vmatprep.subr.bf16.mxu0 0
      %1192 = vmatpush1.bf16.msra.mxu0 0
      %1193 = vmatprep.subr.bf16.mxu0 0
      %1194 = vmatpush1.bf16.msra.mxu0 0
      %1195 = vmatprep.subr.bf16.mxu0 0
      %1196 = vmatpush1.bf16.msra.mxu0 0
      %1197 = vmatprep.subr.bf16.mxu0 0
      %1198 = vmatpush1.bf16.msra.mxu0 0
      %1199 = vmatprep.subr.bf16.mxu0 0
      %1200 = vmatpush1.bf16.msra.mxu0 0
      %1201 = vmatprep.subr.bf16.mxu0 0
      %1202 = vmatpush1.bf16.msra.mxu0 0
      %1203 = vmatprep.subr.bf16.mxu0 0
      %1204 = vmatpush1.bf16.msra.mxu0 0
      %1205 = vmatprep.subr.bf16.mxu0 0
      %1206 = vmatpush1.bf16.msra.mxu0 0
      %1207 = vmatprep.mubr.bf16.mxu0 0
      %1208 = vmatmul.mubr.bf16.gmra.mrb[0].mxu0 %v846
      %v1209 = vpop.f32.mrb[0].mxu0
      %v1210 = vadd.f32 %v961, %v1209
      %v1211 = vpop.f32.mrb[0].mxu0
      %v1212 = vpop.f32.mrb[0].mxu0
      %v1213 = vadd.f32 %v964, %v1212
      %v1214 = vpop.f32.mrb[0].mxu0
      %1215 = vmatprep.mubr.bf16.mxu0 0
      %1216 = vmatmul.mubr.bf16.gmra.mrb[0].mxu0 %v849
      %v1217 = vpop.f32.mrb[0].mxu0
      %v1218 = vadd.f32 %v969, %v1217
      %v1219 = vpop.f32.mrb[0].mxu0
      %v1220 = vpop.f32.mrb[0].mxu0
      %v1221 = vadd.f32 %v972, %v1220
      %v1222 = vpop.f32.mrb[0].mxu0
      %1223 = vmatprep.mubr.bf16.mxu0 0
      %1224 = vmatmul.mubr.bf16.gmra.mrb[0].mxu0 %v852
      %v1225 = vpop.f32.mrb[0].mxu0
      %v1226 = vadd.f32 %v977, %v1225
      %v1227 = vpop.f32.mrb[0].mxu0
      %v1228 = vpop.f32.mrb[0].mxu0
      %v1229 = vadd.f32 %v980, %v1228
      %v1230 = vpop.f32.mrb[0].mxu0
      %1231 = vmatprep.mubr.bf16.mxu0 0
      %1232 = vmatmul.mubr.bf16.gmra.mrb[0].mxu0 %v855
      %v1233 = vpop.f32.mrb[0].mxu0
      %v1234 = vadd.f32 %v985, %v1233
      %v1235 = vpop.f32.mrb[0].mxu0
      %v1236 = vpop.f32.mrb[0].mxu0
      %v1237 = vadd.f32 %v988, %v1236
      %v1238 = vpop.f32.mrb[0].mxu0
      %1239 = vmatprep.mubr.bf16.mxu0 0
      %1240 = vmatmul.mubr.bf16.gmra.mrb[0].mxu0 %v858
      %v1241 = vpop.f32.mrb[0].mxu0
      %v1242 = vadd.f32 %v993, %v1241
      %v1243 = vpop.f32.mrb[0].mxu0
      %v1244 = vpop.f32.mrb[0].mxu0
      %v1245 = vadd.f32 %v996, %v1244
      %v1246 = vpop.f32.mrb[0].mxu0
      %1247 = vmatprep.mubr.bf16.mxu0 0
      %1248 = vmatmul.mubr.bf16.gmra.mrb[0].mxu0 %v861
      %v1249 = vpop.f32.mrb[0].mxu0
      %v1250 = vadd.f32 %v1001, %v1249
      %v1251 = vpop.f32.mrb[0].mxu0
      %v1252 = vpop.f32.mrb[0].mxu0
      %v1253 = vadd.f32 %v1004, %v1252
      %v1254 = vpop.f32.mrb[0].mxu0
      %1255 = vmatprep.mubr.bf16.mxu0 0
      %1256 = vmatmul.mubr.bf16.gmra.mrb[0].mxu0 %v864
      %v1257 = vpop.f32.mrb[0].mxu0
      %v1258 = vadd.f32 %v1009, %v1257
      %v1259 = vpop.f32.mrb[0].mxu0
      %v1260 = vpop.f32.mrb[0].mxu0
      %v1261 = vadd.f32 %v1012, %v1260
      %v1262 = vpop.f32.mrb[0].mxu0
      %1263 = vmatprep.mubr.bf16.mxu0 0
      %1264 = vmatmul.mubr.bf16.gmra.mrb[0].mxu0 %v867
      %v1265 = vpop.f32.mrb[0].mxu0
      %v1266 = vadd.f32 %v1017, %v1265
      %v1267 = vpop.f32.mrb[0].mxu0
      %v1268 = vpop.f32.mrb[0].mxu0
      %v1269 = vadd.f32 %v1020, %v1268
      %v1270 = vpop.f32.mrb[0].mxu0
      %1271 = vmatprep.mubr.bf16.mxu0 0
      %1272 = vmatmul.mubr.bf16.gmra.mrb[0].mxu0 %v870
      %v1273 = vpop.f32.mrb[0].mxu0
      %v1274 = vadd.f32 %v1025, %v1273
      %v1275 = vpop.f32.mrb[0].mxu0
      %v1276 = vpop.f32.mrb[0].mxu0
      %v1277 = vadd.f32 %v1028, %v1276
      %v1278 = vpop.f32.mrb[0].mxu0
      %1279 = vmatprep.mubr.bf16.mxu0 0
      %1280 = vmatmul.mubr.bf16.gmra.mrb[0].mxu0 %v873
      %v1281 = vpop.f32.mrb[0].mxu0
      %v1282 = vadd.f32 %v1033, %v1281
      %v1283 = vpop.f32.mrb[0].mxu0
      %v1284 = vpop.f32.mrb[0].mxu0
      %v1285 = vadd.f32 %v1036, %v1284
      %v1286 = vpop.f32.mrb[0].mxu0
      %1287 = vmatprep.mubr.bf16.mxu0 0
      %1288 = vmatmul.mubr.bf16.gmra.mrb[0].mxu0 %v876
      %v1289 = vpop.f32.mrb[0].mxu0
      %v1290 = vadd.f32 %v1041, %v1289
      %v1291 = vpop.f32.mrb[0].mxu0
      %v1292 = vpop.f32.mrb[0].mxu0
      %v1293 = vadd.f32 %v1044, %v1292
      %v1294 = vpop.f32.mrb[0].mxu0
      %1295 = vmatprep.mubr.bf16.mxu0 0
      %1296 = vmatmul.mubr.bf16.gmra.mrb[0].mxu0 %v879
      %v1297 = vpop.f32.mrb[0].mxu0
      %v1298 = vadd.f32 %v1049, %v1297
      %v1299 = vpop.f32.mrb[0].mxu0
      %v1300 = vpop.f32.mrb[0].mxu0
      %v1301 = vadd.f32 %v1052, %v1300
      %v1302 = vpop.f32.mrb[0].mxu0
      %1303 = vmatprep.mubr.bf16.mxu0 0
      %1304 = vmatmul.mubr.bf16.gmra.mrb[0].mxu0 %v882
      %v1305 = vpop.f32.mrb[0].mxu0
      %v1306 = vadd.f32 %v1057, %v1305
      %v1307 = vpop.f32.mrb[0].mxu0
      %v1308 = vpop.f32.mrb[0].mxu0
      %v1309 = vadd.f32 %v1060, %v1308
      %v1310 = vpop.f32.mrb[0].mxu0
      %1311 = vmatprep.mubr.bf16.mxu0 0
      %1312 = vmatmul.mubr.bf16.gmra.mrb[0].mxu0 %v885
      %v1313 = vpop.f32.mrb[0].mxu0
      %v1314 = vadd.f32 %v1065, %v1313
      %v1315 = vpop.f32.mrb[0].mxu0
      %v1316 = vpop.f32.mrb[0].mxu0
      %v1317 = vadd.f32 %v1068, %v1316
      %v1318 = vpop.f32.mrb[0].mxu0
      %1319 = vmatprep.mubr.bf16.mxu0 0
      %1320 = vmatmul.mubr.bf16.gmra.mrb[0].mxu0 %v888
      %v1321 = vpop.f32.mrb[0].mxu0
      %v1322 = vadd.f32 %v1073, %v1321
      %v1323 = vpop.f32.mrb[0].mxu0
      %v1324 = vpop.f32.mrb[0].mxu0
      %v1325 = vadd.f32 %v1076, %v1324
      %v1326 = vpop.f32.mrb[0].mxu0
      %1327 = vmatprep.mubr.bf16.mxu0 0
      %1328 = vmatmul.mubr.bf16.gmra.mrb[0].mxu0 %v891
      %v1329 = vpop.f32.mrb[0].mxu0
      %v1330 = vadd.f32 %v1081, %v1329
      %v1331 = vpop.f32.mrb[0].mxu0
      %v1332 = vpop.f32.mrb[0].mxu0
      %v1333 = vadd.f32 %v1084, %v1332
      %v1334 = vpop.f32.mrb[0].mxu0
      %1335 = vmatprep.mubr.bf16.mxu0 0
      %1336 = vmatmul.mubr.bf16.gmra.mrb[0].mxu0 %v894
      %v1337 = vpop.f32.mrb[0].mxu0
      %v1338 = vadd.f32 %v1089, %v1337
      %v1339 = vpop.f32.mrb[0].mxu0
      %v1340 = vpop.f32.mrb[0].mxu0
      %v1341 = vadd.f32 %v1092, %v1340
      %v1342 = vpop.f32.mrb[0].mxu0
      %1343 = vmatprep.mubr.bf16.mxu0 0
      %1344 = vmatmul.mubr.bf16.gmra.mrb[0].mxu0 %v897
      %v1345 = vpop.f32.mrb[0].mxu0
      %v1346 = vadd.f32 %v1097, %v1345
      %v1347 = vpop.f32.mrb[0].mxu0
      %v1348 = vpop.f32.mrb[0].mxu0
      %v1349 = vadd.f32 %v1100, %v1348
      %v1350 = vpop.f32.mrb[0].mxu0
      %1351 = vmatprep.mubr.bf16.mxu0 0
      %1352 = vmatmul.mubr.bf16.gmra.mrb[0].mxu0 %v900
      %v1353 = vpop.f32.mrb[0].mxu0
      %v1354 = vadd.f32 %v1105, %v1353
      %v1355 = vpop.f32.mrb[0].mxu0
      %v1356 = vpop.f32.mrb[0].mxu0
      %v1357 = vadd.f32 %v1108, %v1356
      %v1358 = vpop.f32.mrb[0].mxu0
      %1359 = vmatprep.mubr.bf16.mxu0 0
      %1360 = vmatmul.mubr.bf16.gmra.mrb[0].mxu0 %v903
      %v1361 = vpop.f32.mrb[0].mxu0
      %v1362 = vadd.f32 %v1113, %v1361
      %v1363 = vpop.f32.mrb[0].mxu0
      %v1364 = vpop.f32.mrb[0].mxu0
      %v1365 = vadd.f32 %v1116, %v1364
      %v1366 = vpop.f32.mrb[0].mxu0
      %1367 = vmatprep.mubr.bf16.mxu0 0
      %1368 = vmatmul.mubr.bf16.gmra.mrb[0].mxu0 %v906
      %v1369 = vpop.f32.mrb[0].mxu0
      %v1370 = vadd.f32 %v1121, %v1369
      %v1371 = vpop.f32.mrb[0].mxu0
      %v1372 = vpop.f32.mrb[0].mxu0
      %v1373 = vadd.f32 %v1124, %v1372
      %v1374 = vpop.f32.mrb[0].mxu0
      %1375 = vmatprep.mubr.bf16.mxu0 0
      %1376 = vmatmul.mubr.bf16.gmra.mrb[0].mxu0 %v909
      %v1377 = vpop.f32.mrb[0].mxu0
      %v1378 = vadd.f32 %v1129, %v1377
      %v1379 = vpop.f32.mrb[0].mxu0
      %v1380 = vpop.f32.mrb[0].mxu0
      %v1381 = vadd.f32 %v1132, %v1380
      %v1382 = vpop.f32.mrb[0].mxu0
      %1383 = vmatprep.mubr.bf16.mxu0 0
      %1384 = vmatmul.mubr.bf16.gmra.mrb[0].mxu0 %v912
      %v1385 = vpop.f32.mrb[0].mxu0
      %v1386 = vadd.f32 %v1137, %v1385
      %v1387 = vpop.f32.mrb[0].mxu0
      %v1388 = vpop.f32.mrb[0].mxu0
      %v1389 = vadd.f32 %v1140, %v1388
      %v1390 = vpop.f32.mrb[0].mxu0
      %1391 = vmatprep.mubr.bf16.mxu0 0
      %1392 = vmatmul.mubr.bf16.gmra.mrb[0].mxu0 %v915
      %v1393 = vpop.f32.mrb[0].mxu0
      %v1394 = vadd.f32 %v1145, %v1393
      %v1395 = vpop.f32.mrb[0].mxu0
      %v1396 = vpop.f32.mrb[0].mxu0
      %v1397 = vadd.f32 %v1148, %v1396
      %v1398 = vpop.f32.mrb[0].mxu0
      %1399 = vmatprep.mubr.bf16.mxu0 0
      %1400 = vmatmul.mubr.bf16.gmra.mrb[0].mxu0 %v918
      %v1401 = vpop.f32.mrb[0].mxu0
      %v1402 = vadd.f32 %v1153, %v1401
      %v1403 = vpop.f32.mrb[0].mxu0
      %v1404 = vpop.f32.mrb[0].mxu0
      %v1405 = vadd.f32 %v1156, %v1404
      %v1406 = vpop.f32.mrb[0].mxu0
      %1407 = vmatprep.mubr.bf16.mxu0 0
      %1408 = vmatmul.mubr.bf16.gmra.mrb[0].mxu0 %v921
      %v1409 = vpop.f32.mrb[0].mxu0
      %v1410 = vadd.f32 %v1161, %v1409
      %v1411 = vpop.f32.mrb[0].mxu0
      %v1412 = vpop.f32.mrb[0].mxu0
      %v1413 = vadd.f32 %v1164, %v1412
      %v1414 = vpop.f32.mrb[0].mxu0
      %1415 = vmatprep.mubr.bf16.mxu0 0
      %1416 = vmatmul.mubr.bf16.gmra.mrb[0].mxu0 %v924
      %v1417 = vpop.f32.mrb[0].mxu0
      %v1418 = vadd.f32 %v1169, %v1417
      %v1419 = vpop.f32.mrb[0].mxu0
      %v1420 = vpop.f32.mrb[0].mxu0
      %v1421 = vadd.f32 %v1172, %v1420
      %v1422 = vpop.f32.mrb[0].mxu0
      %1423 = vdwg.mxu0
      %v1424 = vsub.f32 0.0, %v1210
      %v1425 = vsub.f32 0.0, %v1213
      %v1426 = vsub.f32 0.0, %v1218
      %v1427 = vsub.f32 0.0, %v1221
      %v1428 = vsub.f32 0.0, %v1226
      %v1429 = vsub.f32 0.0, %v1229
      %v1430 = vsub.f32 0.0, %v1234
      %v1431 = vsub.f32 0.0, %v1237
      %v1432 = vsub.f32 0.0, %v1242
      %v1433 = vsub.f32 0.0, %v1245
      %v1434 = vsub.f32 0.0, %v1250
      %v1435 = vsub.f32 0.0, %v1253
      %v1436 = vsub.f32 0.0, %v1258
      %v1437 = vsub.f32 0.0, %v1261
      %v1438 = vsub.f32 0.0, %v1266
      %v1439 = vsub.f32 0.0, %v1269
      %v1440 = vsub.f32 0.0, %v1274
      %v1441 = vsub.f32 0.0, %v1277
      %v1442 = vsub.f32 0.0, %v1282
      %v1443 = vsub.f32 0.0, %v1285
      %v1444 = vsub.f32 0.0, %v1290
      %v1445 = vsub.f32 0.0, %v1293
      %v1446 = vsub.f32 0.0, %v1298
      %v1447 = vsub.f32 0.0, %v1301
      %v1448 = vsub.f32 0.0, %v1306
      %v1449 = vsub.f32 0.0, %v1309
      %v1450 = vsub.f32 0.0, %v1314
      %v1451 = vsub.f32 0.0, %v1317
      %v1452 = vsub.f32 0.0, %v1322
      %v1453 = vsub.f32 0.0, %v1325
      %v1454 = vsub.f32 0.0, %v1330
      %v1455 = vsub.f32 0.0, %v1333
      %v1456 = vsub.f32 0.0, %v1338
      %v1457 = vsub.f32 0.0, %v1341
      %v1458 = vsub.f32 0.0, %v1346
      %v1459 = vsub.f32 0.0, %v1349
      %v1460 = vsub.f32 0.0, %v1354
      %v1461 = vsub.f32 0.0, %v1357
      %v1462 = vsub.f32 0.0, %v1362
      %v1463 = vsub.f32 0.0, %v1365
      %v1464 = vsub.f32 0.0, %v1370
      %v1465 = vsub.f32 0.0, %v1373
      %v1466 = vsub.f32 0.0, %v1378
      %v1467 = vsub.f32 0.0, %v1381
      %v1468 = vsub.f32 0.0, %v1386
      %v1469 = vsub.f32 0.0, %v1389
      %v1470 = vsub.f32 0.0, %v1394
      %v1471 = vsub.f32 0.0, %v1397
      %v1472 = vsub.f32 0.0, %v1402
      %v1473 = vsub.f32 0.0, %v1405
      %v1474 = vsub.f32 0.0, %v1410
      %v1475 = vsub.f32 0.0, %v1413
      %v1476 = vsub.f32 0.0, %v1418
      %v1477 = vsub.f32 0.0, %v1421
      %v1478 = vmul.f32 %v1424, 1.442695
      %v1479 = vpow.pop %v1478
      %v1480 = vmul.f32 %v1425, 1.442695
      %v1481 = vpow.pop %v1480
      %v1482 = vmul.f32 %v1426, 1.442695
      %v1483 = vpow.pop %v1482
      %v1484 = vmul.f32 %v1427, 1.442695
      %v1485 = vpow.pop %v1484
      %v1486 = vmul.f32 %v1428, 1.442695
      %v1487 = vpow.pop %v1486
      %v1488 = vmul.f32 %v1429, 1.442695
      %v1489 = vpow.pop %v1488
      %v1490 = vmul.f32 %v1430, 1.442695
      %v1491 = vpow.pop %v1490
      %v1492 = vmul.f32 %v1431, 1.442695
      %v1493 = vpow.pop %v1492
      %v1494 = vmul.f32 %v1432, 1.442695
      %v1495 = vpow.pop %v1494
      %v1496 = vmul.f32 %v1433, 1.442695
      %v1497 = vpow.pop %v1496
      %v1498 = vmul.f32 %v1434, 1.442695
      %v1499 = vpow.pop %v1498
      %v1500 = vmul.f32 %v1435, 1.442695
      %v1501 = vpow.pop %v1500
      %v1502 = vmul.f32 %v1436, 1.442695
      %v1503 = vpow.pop %v1502
      %v1504 = vmul.f32 %v1437, 1.442695
      %v1505 = vpow.pop %v1504
      %v1506 = vmul.f32 %v1438, 1.442695
      %v1507 = vpow.pop %v1506
      %v1508 = vmul.f32 %v1439, 1.442695
      %v1509 = vpow.pop %v1508
      %v1510 = vmul.f32 %v1440, 1.442695
      %v1511 = vpow.pop %v1510
      %v1512 = vmul.f32 %v1441, 1.442695
      %v1513 = vpow.pop %v1512
      %v1514 = vmul.f32 %v1442, 1.442695
      %v1515 = vpow.pop %v1514
      %v1516 = vmul.f32 %v1443, 1.442695
      %v1517 = vpow.pop %v1516
      %v1518 = vmul.f32 %v1444, 1.442695
      %v1519 = vpow.pop %v1518
      %v1520 = vmul.f32 %v1445, 1.442695
      %v1521 = vpow.pop %v1520
      %v1522 = vmul.f32 %v1446, 1.442695
      %v1523 = vpow.pop %v1522
      %v1524 = vmul.f32 %v1447, 1.442695
      %v1525 = vpow.pop %v1524
      %v1526 = vmul.f32 %v1448, 1.442695
      %v1527 = vpow.pop %v1526
      %v1528 = vmul.f32 %v1449, 1.442695
      %v1529 = vpow.pop %v1528
      %v1530 = vmul.f32 %v1450, 1.442695
      %v1531 = vpow.pop %v1530
      %v1532 = vmul.f32 %v1451, 1.442695
      %v1533 = vpow.pop %v1532
      %v1534 = vmul.f32 %v1452, 1.442695
      %v1535 = vpow.pop %v1534
      %v1536 = vmul.f32 %v1453, 1.442695
      %v1537 = vpow.pop %v1536
      %v1538 = vmul.f32 %v1454, 1.442695
      %v1539 = vpow.pop %v1538
      %v1540 = vmul.f32 %v1455, 1.442695
      %v1541 = vpow.pop %v1540
      %v1542 = vmul.f32 %v1456, 1.442695
      %v1543 = vpow.pop %v1542
      %v1544 = vmul.f32 %v1457, 1.442695
      %v1545 = vpow.pop %v1544
      %v1546 = vmul.f32 %v1458, 1.442695
      %v1547 = vpow.pop %v1546
      %v1548 = vmul.f32 %v1459, 1.442695
      %v1549 = vpow.pop %v1548
      %v1550 = vmul.f32 %v1460, 1.442695
      %v1551 = vpow.pop %v1550
      %v1552 = vmul.f32 %v1461, 1.442695
      %v1553 = vpow.pop %v1552
      %v1554 = vmul.f32 %v1462, 1.442695
      %v1555 = vpow.pop %v1554
      %v1556 = vmul.f32 %v1463, 1.442695
      %v1557 = vpow.pop %v1556
      %v1558 = vmul.f32 %v1464, 1.442695
      %v1559 = vpow.pop %v1558
      %v1560 = vmul.f32 %v1465, 1.442695
      %v1561 = vpow.pop %v1560
      %v1562 = vmul.f32 %v1466, 1.442695
      %v1563 = vpow.pop %v1562
      %v1564 = vmul.f32 %v1467, 1.442695
      %v1565 = vpow.pop %v1564
      %v1566 = vmul.f32 %v1468, 1.442695
      %v1567 = vpow.pop %v1566
      %v1568 = vmul.f32 %v1469, 1.442695
      %v1569 = vpow.pop %v1568
      %v1570 = vmul.f32 %v1470, 1.442695
      %v1571 = vpow.pop %v1570
      %v1572 = vmul.f32 %v1471, 1.442695
      %v1573 = vpow.pop %v1572
      %v1574 = vmul.f32 %v1472, 1.442695
      %v1575 = vpow.pop %v1574
      %v1576 = vmul.f32 %v1473, 1.442695
      %v1577 = vpow.pop %v1576
      %v1578 = vmul.f32 %v1474, 1.442695
      %v1579 = vpow.pop %v1578
      %v1580 = vmul.f32 %v1475, 1.442695
      %v1581 = vpow.pop %v1580
      %v1582 = vmul.f32 %v1476, 1.442695
      %v1583 = vpow.pop %v1582
      %v1584 = vmul.f32 %v1477, 1.442695
      %v1585 = vpow.pop %v1584
      %v1586 = vadd.f32 %v1479, 1.0
      %v1587 = vadd.f32 %v1481, 1.0
      %v1588 = vadd.f32 %v1483, 1.0
      %v1589 = vadd.f32 %v1485, 1.0
      %v1590 = vadd.f32 %v1487, 1.0
      %v1591 = vadd.f32 %v1489, 1.0
      %v1592 = vadd.f32 %v1491, 1.0
      %v1593 = vadd.f32 %v1493, 1.0
      %v1594 = vadd.f32 %v1495, 1.0
      %v1595 = vadd.f32 %v1497, 1.0
      %v1596 = vadd.f32 %v1499, 1.0
      %v1597 = vadd.f32 %v1501, 1.0
      %v1598 = vadd.f32 %v1503, 1.0
      %v1599 = vadd.f32 %v1505, 1.0
      %v1600 = vadd.f32 %v1507, 1.0
      %v1601 = vadd.f32 %v1509, 1.0
      %v1602 = vadd.f32 %v1511, 1.0
      %v1603 = vadd.f32 %v1513, 1.0
      %v1604 = vadd.f32 %v1515, 1.0
      %v1605 = vadd.f32 %v1517, 1.0
      %v1606 = vadd.f32 %v1519, 1.0
      %v1607 = vadd.f32 %v1521, 1.0
      %v1608 = vadd.f32 %v1523, 1.0
      %v1609 = vadd.f32 %v1525, 1.0
      %v1610 = vadd.f32 %v1527, 1.0
      %v1611 = vadd.f32 %v1529, 1.0
      %v1612 = vadd.f32 %v1531, 1.0
      %v1613 = vadd.f32 %v1533, 1.0
      %v1614 = vadd.f32 %v1535, 1.0
      %v1615 = vadd.f32 %v1537, 1.0
      %v1616 = vadd.f32 %v1539, 1.0
      %v1617 = vadd.f32 %v1541, 1.0
      %v1618 = vadd.f32 %v1543, 1.0
      %v1619 = vadd.f32 %v1545, 1.0
      %v1620 = vadd.f32 %v1547, 1.0
      %v1621 = vadd.f32 %v1549, 1.0
      %v1622 = vadd.f32 %v1551, 1.0
      %v1623 = vadd.f32 %v1553, 1.0
      %v1624 = vadd.f32 %v1555, 1.0
      %v1625 = vadd.f32 %v1557, 1.0
      %v1626 = vadd.f32 %v1559, 1.0
      %v1627 = vadd.f32 %v1561, 1.0
      %v1628 = vadd.f32 %v1563, 1.0
      %v1629 = vadd.f32 %v1565, 1.0
      %v1630 = vadd.f32 %v1567, 1.0
      %v1631 = vadd.f32 %v1569, 1.0
      %v1632 = vadd.f32 %v1571, 1.0
      %v1633 = vadd.f32 %v1573, 1.0
      %v1634 = vadd.f32 %v1575, 1.0
      %v1635 = vadd.f32 %v1577, 1.0
      %v1636 = vadd.f32 %v1579, 1.0
      %v1637 = vadd.f32 %v1581, 1.0
      %v1638 = vadd.f32 %v1583, 1.0
      %v1639 = vadd.f32 %v1585, 1.0
      %v1640 = vrcp.pop %v1586
      %v1641 = vrcp.pop %v1587
      %v1642 = vrcp.pop %v1588
      %v1643 = vrcp.pop %v1589
      %v1644 = vrcp.pop %v1590
      %v1645 = vrcp.pop %v1591
      %v1646 = vrcp.pop %v1592
      %v1647 = vrcp.pop %v1593
      %v1648 = vrcp.pop %v1594
      %v1649 = vrcp.pop %v1595
      %v1650 = vrcp.pop %v1596
      %v1651 = vrcp.pop %v1597
      %v1652 = vrcp.pop %v1598
      %v1653 = vrcp.pop %v1599
      %v1654 = vrcp.pop %v1600
      %v1655 = vrcp.pop %v1601
      %v1656 = vrcp.pop %v1602
      %v1657 = vrcp.pop %v1603
      %v1658 = vrcp.pop %v1604
      %v1659 = vrcp.pop %v1605
      %v1660 = vrcp.pop %v1606
      %v1661 = vrcp.pop %v1607
      %v1662 = vrcp.pop %v1608
      %v1663 = vrcp.pop %v1609
      %v1664 = vrcp.pop %v1610
      %v1665 = vrcp.pop %v1611
      %v1666 = vrcp.pop %v1612
      %v1667 = vrcp.pop %v1613
      %v1668 = vrcp.pop %v1614
      %v1669 = vrcp.pop %v1615
      %v1670 = vrcp.pop %v1616
      %v1671 = vrcp.pop %v1617
      %v1672 = vrcp.pop %v1618
      %v1673 = vrcp.pop %v1619
      %v1674 = vrcp.pop %v1620
      %v1675 = vrcp.pop %v1621
      %v1676 = vrcp.pop %v1622
      %v1677 = vrcp.pop %v1623
      %v1678 = vrcp.pop %v1624
      %v1679 = vrcp.pop %v1625
      %v1680 = vrcp.pop %v1626
      %v1681 = vrcp.pop %v1627
      %v1682 = vrcp.pop %v1628
      %v1683 = vrcp.pop %v1629
      %v1684 = vrcp.pop %v1630
      %v1685 = vrcp.pop %v1631
      %v1686 = vrcp.pop %v1632
      %v1687 = vrcp.pop %v1633
      %v1688 = vrcp.pop %v1634
      %v1689 = vrcp.pop %v1635
      %v1690 = vrcp.pop %v1636
      %v1691 = vrcp.pop %v1637
      %v1692 = vrcp.pop %v1638
      %v1693 = vrcp.pop %v1639
      %vm1694 = vcmask 7168
      %1695 = vst.msk [vmem:[%s177] sm:$0xff] %vm1694, %v1640
      %1696 = vst.msk [vmem:[%s177 + $0x8] sm:$0xff] %vm1694, %v1641
      %1697 = vst.msk [vmem:[%s177 + $0x10] sm:$0xff] %vm1694, %v1642
      %1698 = vst.msk [vmem:[%s177 + $0x18] sm:$0xff] %vm1694, %v1643
      %1699 = vst.msk [vmem:[%s177 + $0x20] sm:$0xff] %vm1694, %v1644
      %1700 = vst.msk [vmem:[%s177 + $0x28] sm:$0xff] %vm1694, %v1645
      %1701 = vst.msk [vmem:[%s177 + $0x30] sm:$0xff] %vm1694, %v1646
      %1702 = vst.msk [vmem:[%s177 + $0x38] sm:$0xff] %vm1694, %v1647
      %1703 = vst.msk [vmem:[%s177 + $0x40] sm:$0xff] %vm1694, %v1648
      %1704 = vst.msk [vmem:[%s177 + $0x48] sm:$0xff] %vm1694, %v1649
      %1705 = vst.msk [vmem:[%s177 + $0x50] sm:$0xff] %vm1694, %v1650
      %1706 = vst.msk [vmem:[%s177 + $0x58] sm:$0xff] %vm1694, %v1651
      %1707 = vst.msk [vmem:[%s177 + $0x60] sm:$0xff] %vm1694, %v1652
      %1708 = vst.msk [vmem:[%s177 + $0x68] sm:$0xff] %vm1694, %v1653
      %1709 = vst.msk [vmem:[%s177 + $0x70] sm:$0xff] %vm1694, %v1654
      %1710 = vst.msk [vmem:[%s177 + $0x78] sm:$0xff] %vm1694, %v1655
      %1711 = vst.msk [vmem:[%s177 + $0x80] sm:$0xff] %vm1694, %v1656
      %1712 = vst.msk [vmem:[%s177 + $0x88] sm:$0xff] %vm1694, %v1657
      %1713 = vst.msk [vmem:[%s177 + $0x90] sm:$0xff] %vm1694, %v1658
      %1714 = vst.msk [vmem:[%s177 + $0x98] sm:$0xff] %vm1694, %v1659
      %1715 = vst.msk [vmem:[%s177 + $0xa0] sm:$0xff] %vm1694, %v1660
      %1716 = vst.msk [vmem:[%s177 + $0xa8] sm:$0xff] %vm1694, %v1661
      %1717 = vst.msk [vmem:[%s177 + $0xb0] sm:$0xff] %vm1694, %v1662
      %1718 = vst.msk [vmem:[%s177 + $0xb8] sm:$0xff] %vm1694, %v1663
      %1719 = vst.msk [vmem:[%s177 + $0xc0] sm:$0xff] %vm1694, %v1664
      %1720 = vst.msk [vmem:[%s177 + $0xc8] sm:$0xff] %vm1694, %v1665
      %1721 = vst.msk [vmem:[%s177 + $0xd0] sm:$0xff] %vm1694, %v1666
      %1722 = vst.msk [vmem:[%s177 + $0xd8] sm:$0xff] %vm1694, %v1667
      %1723 = vst.msk [vmem:[%s177 + $0xe0] sm:$0xff] %vm1694, %v1668
      %1724 = vst.msk [vmem:[%s177 + $0xe8] sm:$0xff] %vm1694, %v1669
      %1725 = vst.msk [vmem:[%s177 + $0xf0] sm:$0xff] %vm1694, %v1670
      %1726 = vst.msk [vmem:[%s177 + $0xf8] sm:$0xff] %vm1694, %v1671
      %1727 = vst.msk [vmem:[%s177 + $0x100] sm:$0xff] %vm1694, %v1672
      %1728 = vst.msk [vmem:[%s177 + $0x108] sm:$0xff] %vm1694, %v1673
      %1729 = vst.msk [vmem:[%s177 + $0x110] sm:$0xff] %vm1694, %v1674
      %1730 = vst.msk [vmem:[%s177 + $0x118] sm:$0xff] %vm1694, %v1675
      %1731 = vst.msk [vmem:[%s177 + $0x120] sm:$0xff] %vm1694, %v1676
      %1732 = vst.msk [vmem:[%s177 + $0x128] sm:$0xff] %vm1694, %v1677
      %1733 = vst.msk [vmem:[%s177 + $0x130] sm:$0xff] %vm1694, %v1678
      %1734 = vst.msk [vmem:[%s177 + $0x138] sm:$0xff] %vm1694, %v1679
      %1735 = vst.msk [vmem:[%s177 + $0x140] sm:$0xff] %vm1694, %v1680
      %1736 = vst.msk [vmem:[%s177 + $0x148] sm:$0xff] %vm1694, %v1681
      %1737 = vst.msk [vmem:[%s177 + $0x150] sm:$0xff] %vm1694, %v1682
      %1738 = vst.msk [vmem:[%s177 + $0x158] sm:$0xff] %vm1694, %v1683
      %1739 = vst.msk [vmem:[%s177 + $0x160] sm:$0xff] %vm1694, %v1684
      %1740 = vst.msk [vmem:[%s177 + $0x168] sm:$0xff] %vm1694, %v1685
      %1741 = vst.msk [vmem:[%s177 + $0x170] sm:$0xff] %vm1694, %v1686
      %1742 = vst.msk [vmem:[%s177 + $0x178] sm:$0xff] %vm1694, %v1687
      %1743 = vst.msk [vmem:[%s177 + $0x180] sm:$0xff] %vm1694, %v1688
      %1744 = vst.msk [vmem:[%s177 + $0x188] sm:$0xff] %vm1694, %v1689
      %1745 = vst.msk [vmem:[%s177 + $0x190] sm:$0xff] %vm1694, %v1690
      %1746 = vst.msk [vmem:[%s177 + $0x198] sm:$0xff] %vm1694, %v1691
      %1747 = vst.msk [vmem:[%s177 + $0x1a0] sm:$0xff] %vm1694, %v1692
      %1748 = vst.msk [vmem:[%s177 + $0x1a8] sm:$0xff] %vm1694, %v1693
      %s1749 = smul.u32 54, %s16
      %p1750 = scmp.lt.s32.totalorder %s1749, 215
      %s1751 = scalar_select %p1750, %s1749, 215
      %s1752 = smul.addr %s1751, 8
      %s1753 = scalar_lea.vmem %s3, %s1752
      // Predicated region
      $region33: #{vae_forward.17} parent=31 // pred_check
        %p1754 = pneg %p102
      $region34: #{vae_forward.17} parent=31 // pred_check_branch
        %1756 = sbr.rel (%p1754) target = $region36
      $region35: #{vae_forward.17} parent=31 // pred_region
        %s1757 = smul.u32 54, %s16
      $region36: #{vae_forward.17} parent=31 // pred_fallthru
        _
    $region32: #{vae_forward.17} parent=5 // pred_fallthru
      _
    %p1758 = scmp.le.s32.totalorder 2, %s11
    // Predicated region
    $region37: #{vae_forward.17} parent=5 // pred_check
      %p1759 = pneg %p1758
    $region38: #{vae_forward.17} parent=5 // pred_check_branch
      %1761 = sbr.rel (%p1759) target = $region40
    $region39: #{vae_forward.17} parent=5 // pred_region
      %s1762 = ssub.s32 %s11, 2
      // Predicated region
      $region41: #{vae_forward.17} parent=39 // pred_check
        %p1763 = pneg %p108
      $region42: #{vae_forward.17} parent=39 // pred_check_branch
        %1765 = sbr.rel (%p1763) target = $region44
      $region43: #{vae_forward.17} parent=39 // pred_region
        %s1766 = smul.u32 54, %s17
        %p1767 = scmp.lt.s32.totalorder %s1766, 215
        %s1768 = scalar_select %p1767, %s1766, 215
        %s1769 = smul.addr %s1768, 8
        %s1770 = scalar_lea.vmem %s3, %s1769
      $region44: #{vae_forward.17} parent=39 // pred_fallthru
        _
    $region40: #{vae_forward.17} parent=5 // pred_fallthru
      _
  $region6: #{vae_forward.17} parent=0 // loop_footer
    %s15 = sadd.s32 1, %s11
  $region7: #{vae_forward.17} parent=0 // loop_footer_branch
    %10 = sbr.rel target = $region3
  $region8: #{vae_forward.17} parent=0 // loop_exit
    _

</llo_original>
